<compile_context>
chip_gen: v5e
topology: v5e:2x2
jax: 0.10.0
libtpu: 0.0.40
codegen_flags: <defaults>
</compile_context>

<pallas_src>
import functools

import jax
import jax.numpy as jnp
from jax.experimental import pallas as pl
from jax.experimental.pallas import tpu as pltpu

CLASSES = 50030
RADIX = 2
HEAD_TN = 12544          # 50176 = 4 * 12544 -> 4 lane-dense grid steps (even, megacore friendly)
HEAD_TN_INNER = 1792     # in-kernel sub-tile (12544 = 7 * 1792); bounds dequant intermediates
FEAT_ROWS = 8            # head LHS rows (batch padded to the 8-sublane tile)


def _round_up(x, m):
    return (x + m - 1) // m * m


_VMEM_SPEC = pl.BlockSpec(memory_space=pltpu.MemorySpace.VMEM)


# ------------------------------------------------------------------
# Pallas kernels
# ------------------------------------------------------------------
def _conv_affine_kernel(x_ref, w_ref, s_ref, b_ref, o_ref, *, relu):
    """y = (x @ w) * scale + bias [+ relu]; bf16 MXU matmul, f32 accumulate."""
    y = jnp.dot(x_ref[...].astype(jnp.bfloat16), w_ref[...],
                preferred_element_type=jnp.float32)
    y = y * s_ref[...] + b_ref[...]
    if relu:
        y = jnp.maximum(y, 0.0)
    o_ref[...] = y.astype(o_ref.dtype)


def _stem_conv1_kernel(p_ref, w0_ref, s0_ref, b0_ref, w1_ref, s1_ref, b1_ref,
                       x_ref, y_ref):
    """stem 3x3 conv (+BN+ReLU) chained with the bottleneck 1x1 conv1 (+BN+ReLU)."""
    y0 = jnp.dot(p_ref[...].astype(jnp.bfloat16), w0_ref[...],
                 preferred_element_type=jnp.float32)
    y0 = jnp.maximum(y0 * s0_ref[...] + b0_ref[...], 0.0)
    x_ref[...] = y0.astype(x_ref.dtype)                    # stem output (residual branch)
    y1 = jnp.dot(y0.astype(jnp.bfloat16), w1_ref[...],
                 preferred_element_type=jnp.float32)
    y1 = jnp.maximum(y1 * s1_ref[...] + b1_ref[...], 0.0)
    y_ref[...] = y1.astype(y_ref.dtype)                    # conv1 output


def _splat_fused_kernel(s01_ref, w1_ref, fs_ref, fb_ref, w2_ref, b2_ref, o_ref,
                        *, batch):
    """GAP(s0)+GAP(s1) -> fc1 -> BN -> ReLU -> fc2 -> rSoftMax -> s0*a0 + s1*a1.

    s01_ref holds the two radix splits lane-adjacent: (batch, HW, 2C).
    fc1 weight is pre-stacked [W1; W1] so it consumes the un-summed [gap0 || gap1].
    """
    c2 = s01_ref.shape[-1]
    c = c2 // 2
    gap = jnp.mean(s01_ref[...].astype(jnp.float32), axis=1)        # (batch, 2C)
    z = jnp.dot(gap.astype(jnp.bfloat16), w1_ref[...],
                preferred_element_type=jnp.float32)
    z = jnp.maximum(z * fs_ref[...] + fb_ref[...], 0.0)
    a = jnp.dot(z.astype(jnp.bfloat16), w2_ref[...],
                preferred_element_type=jnp.float32) + b2_ref[...]
    a0 = a[:, :c]
    a1 = a[:, c:]
    m = jnp.maximum(a0, a1)
    e0 = jnp.exp(a0 - m)
    e1 = jnp.exp(a1 - m)
    inv = 1.0 / (e0 + e1)
    a0 = e0 * inv
    a1 = e1 * inv
    for b in range(batch):                                           # static unroll (batch <= 8)
        s_b = s01_ref[b].astype(jnp.float32)                         # (HW, 2C)
        o_ref[b] = (s_b[:, :c] * a0[b:b + 1, :]
                    + s_b[:, c:] * a1[b:b + 1, :]).astype(o_ref.dtype)


def _residual_gap_kernel(a_ref, wa_ref, sa_ref, ba_ref,
                         b_ref, wb_ref, sb_ref, bb_ref, f_ref, *, batch, hw):
    """relu(bn3(a @ w3) + bn_down(b @ w_down)) followed by per-sample global avg pool."""
    ya = jnp.dot(a_ref[...].astype(jnp.bfloat16), wa_ref[...],
                 preferred_element_type=jnp.float32)
    yb = jnp.dot(b_ref[...].astype(jnp.bfloat16), wb_ref[...],
                 preferred_element_type=jnp.float32)
    y = jnp.maximum(ya * sa_ref[...] + ba_ref[...]
                    + yb * sb_ref[...] + bb_ref[...], 0.0)
    f_ref[...] = jnp.zeros_like(f_ref)
    for i in range(batch):                                           # static unroll
        f_ref[i:i + 1, :] = jnp.mean(y[i * hw:(i + 1) * hw, :], axis=0,
                                     keepdims=True)


def _head_kernel(x_ref, w_ref, s_ref, b_ref, o_ref):
    """Logits tile: (x @ dequant(w)) * col_scale + bias, streamed in lane sub-tiles.

    Weight may be int8 (v5/v6: per-column symmetric quant; |q| <= 127 is exact in bf16)
    or bf16 (v7x / other backends).  Single K step, no accumulator scratch.
    """
    x = x_ref[...].astype(jnp.bfloat16)
    n = o_ref.shape[-1]
    for t in range(n // HEAD_TN_INNER):
        lo = t * HEAD_TN_INNER
        hi = lo + HEAD_TN_INNER
        w = w_ref[:, lo:hi]
        if w.dtype == jnp.int8:
            w = w.astype(jnp.float32).astype(jnp.bfloat16)
        y = jnp.dot(x, w, preferred_element_type=jnp.float32)
        o_ref[:, lo:hi] = y * s_ref[:, lo:hi] + b_ref[:, lo:hi]


# ------------------------------------------------------------------
# Wrappers
# ------------------------------------------------------------------
def im2col(x, kh, kw, stride, pad):
    # x: (B, H, W, C) NHWC
    # TODO(synk): at real ResNeSt-101 sizes do this inside the conv kernel instead of
    # materializing the kh*kw-inflated patch array in JAX.
    if pad:
        x = jnp.pad(x, ((0, 0), (pad, pad), (pad, pad), (0, 0)))
    B, H, W, C = x.shape
    Ho = (H - kh) // stride + 1
    Wo = (W - kw) // stride + 1
    cols = []
    for i in range(kh):
        for j in range(kw):
            cols.append(x[:, i:i + stride * Ho:stride, j:j + stride * Wo:stride, :])
    return jnp.concatenate(cols, axis=-1)  # (B, Ho, Wo, kh*kw*C)


def _flatten_pad(patch, Kp):
    B, Ho, Wo, P = patch.shape
    a = patch.reshape(B * Ho * Wo, P)
    if Kp > P:
        a = jnp.pad(a, ((0, 0), (0, Kp - P)))
    M = a.shape[0]
    Mp = _round_up(M, 8)
    if Mp > M:
        a = jnp.pad(a, ((0, Mp - M), (0, 0)))
    return a, M, (B, Ho, Wo)


def conv_bn(x, p, kh, kw, stride, pad, relu, out_dtype=jnp.bfloat16):
    """Conv (im2col + fused matmul) with BN affine and optional ReLU fused in."""
    a, M, (B, Ho, Wo) = _flatten_pad(im2col(x, kh, kw, stride, pad), p['w2d'].shape[0])
    cout = p['w2d'].shape[1]
    out = pl.pallas_call(
        functools.partial(_conv_affine_kernel, relu=relu),
        out_shape=jax.ShapeDtypeStruct((a.shape[0], cout), out_dtype),
        in_specs=[_VMEM_SPEC] * 4,
        out_specs=_VMEM_SPEC,
    )(a, p['w2d'], p['scale'], p['bias'])
    return out[:M].reshape(B, Ho, Wo, cout)


def stem_conv1(x, p_stem, p_conv1):
    """Fused stem 3x3/s2 conv + bottleneck 1x1 conv1 (both with BN+ReLU folded)."""
    a, M, (B, Ho, Wo) = _flatten_pad(im2col(x, 3, 3, 2, 1), p_stem['w2d'].shape[0])
    c_stem = p_stem['w2d'].shape[1]
    c1 = p_conv1['w2d'].shape[1]
    xs, y1 = pl.pallas_call(
        _stem_conv1_kernel,
        out_shape=(jax.ShapeDtypeStruct((a.shape[0], c_stem), jnp.bfloat16),
                   jax.ShapeDtypeStruct((a.shape[0], c1), jnp.bfloat16)),
        in_specs=[_VMEM_SPEC] * 7,
        out_specs=[_VMEM_SPEC, _VMEM_SPEC],
    )(a, p_stem['w2d'], p_stem['scale'], p_stem['bias'],
      p_conv1['w2d'], p_conv1['scale'], p_conv1['bias'])
    return xs[:M], y1[:M].reshape(B, Ho, Wo, c1)


def splat_conv2d(x, p):
    """SplAtConv2d (radix=2, cardinality=1): merged block-diag conv + fused attention."""
    B, H, W, C = x.shape
    s01 = conv_bn(x, p['conv'], kh=3, kw=3, stride=1, pad=1, relu=True)   # (B,H,W,2C)
    s01 = s01.reshape(B, H * W, 2 * C)
    Bp = _round_up(max(B, 8), 8)
    if Bp > B:
        s01 = jnp.pad(s01, ((0, Bp - B), (0, 0), (0, 0)))
    out = pl.pallas_call(
        functools.partial(_splat_fused_kernel, batch=Bp),
        out_shape=jax.ShapeDtypeStruct((Bp, H * W, C), jnp.bfloat16),
        in_specs=[_VMEM_SPEC] * 6,
        out_specs=_VMEM_SPEC,
    )(s01, p['fc1_w'], p['fc1_s'], p['fc1_b'], p['fc2_w'], p['fc2_b'])
    return out[:B].reshape(B, H, W, C)


def residual_gap(a_flat, pa, b_flat, pb, batch, hw):
    """Fused conv3(1x1) + downsample(1x1) + add + relu + global avg pool -> head feat."""
    M = a_flat.shape[0]
    Mp = _round_up(M, 8)
    if Mp > M:
        a_flat = jnp.pad(a_flat, ((0, Mp - M), (0, 0)))
        b_flat = jnp.pad(b_flat, ((0, Mp - M), (0, 0)))
    cout = pa['w2d'].shape[1]
    feat_rows = _round_up(max(batch, FEAT_ROWS), 8)
    return pl.pallas_call(
        functools.partial(_residual_gap_kernel, batch=batch, hw=hw),
        out_shape=jax.ShapeDtypeStruct((feat_rows, cout), jnp.float32),
        in_specs=[_VMEM_SPEC] * 8,
        out_specs=_VMEM_SPEC,
    )(a_flat, pa['w2d'], pa['scale'], pa['bias'],
      b_flat, pb['w2d'], pb['scale'], pb['bias'])


def head_matmul(feat, w_q, w_s, b, tn=HEAD_TN):
    """50030-class head: full-K single step, 4 lane-dense parallel grid steps."""
    Mp, K = feat.shape
    Kw, Np = w_q.shape
    assert Kw == K and Np % tn == 0 and tn % HEAD_TN_INNER == 0
    flops = 2 * Mp * K * Np
    bytes_acc = (K * Np * w_q.dtype.itemsize + Mp * K * feat.dtype.itemsize
                 + Np * 8 + Mp * Np * 4)
    return pl.pallas_call(
        _head_kernel,
        out_shape=jax.ShapeDtypeStruct((Mp, Np), jnp.float32),
        grid_spec=pltpu.PrefetchScalarGridSpec(
            num_scalar_prefetch=0,
            grid=(Np // tn,),
            in_specs=[pl.BlockSpec((Mp, K), lambda j: (0, 0)),
                      pl.BlockSpec((K, tn), lambda j: (0, j)),
                      pl.BlockSpec((1, tn), lambda j: (0, j)),
                      pl.BlockSpec((1, tn), lambda j: (0, j))],
            out_specs=pl.BlockSpec((Mp, tn), lambda j: (0, j))),
        compiler_params=pltpu.CompilerParams(
            dimension_semantics=("parallel",)),
        cost_estimate=pl.CostEstimate(flops=flops, transcendentals=0,
                                      bytes_accessed=bytes_acc),
    )(feat, w_q, w_s, b)


# ------------------------------------------------------------------
# Full forward
# ------------------------------------------------------------------
def classifier_forward(params, x_nchw):
    # NCHW (PyTorch convention) -> NHWC internally; returns logits (B, classes) f32
    x = jnp.transpose(x_nchw, (0, 2, 3, 1)).astype(jnp.float32)
    B = x.shape[0]

    # stem conv 3x3/s2 + bottleneck conv1 1x1 (BN+ReLU folded), one fused kernel
    x_stem, y1 = stem_conv1(x, params['stem'], params['conv1'])
    _, Ho, Wo, _ = y1.shape

    # ResNeSt split-attention block: merged radix conv + fused GAP/fc/rSoftMax/combine
    out = splat_conv2d(y1, params['splat'])

    # 1x1 expand + 1x1 downsample + residual add + ReLU + global avg pool, one kernel
    feat = residual_gap(out.reshape(B * Ho * Wo, -1), params['conv3'],
                        x_stem, params['down'], batch=B, hw=Ho * Wo)

    # 50030-class head (int8-quantized weight on v5/v6, bf16 elsewhere), bias fused
    logits = head_matmul(feat, params['fc_w'], params['fc_s'], params['fc_b'])
    return logits[:B, :CLASSES]


# ------------------------------------------------------------------
# Deterministic synthetic parameters (+ one-time prepare: BN fold, bf16/int8,
# weight reshape/merge/pre-pad — no per-forward work on constants)
# ------------------------------------------------------------------
def _conv_w(key, kh, kw, cin, cout):
    return jax.random.normal(key, (kh, kw, cin, cout), jnp.float32) * ((kh * kw * cin) ** -0.5)


def _bn(key, c):
    k1, k2, k3, k4 = jax.random.split(key, 4)
    return dict(
        gamma=1.0 + 0.1 * jax.random.normal(k1, (c,), jnp.float32),
        beta=0.1 * jax.random.normal(k2, (c,), jnp.float32),
        mean=0.1 * jax.random.normal(k3, (c,), jnp.float32),
        var=1.0 + 0.1 * jnp.abs(jax.random.normal(k4, (c,), jnp.float32)),
    )


def init_params(key):
    stem_c, gw, planes_exp, inter = 32, 16, 64, 32  # inter = max(gw*radix//4, 32)
    ks = list(jax.random.split(key, 20))
    return dict(
        stem=dict(w=_conv_w(ks[0], 3, 3, 3, stem_c), bn=_bn(ks[1], stem_c)),
        conv1=dict(w=_conv_w(ks[2], 1, 1, stem_c, gw), bn=_bn(ks[3], gw)),
        splat=dict(
            conv_w=[_conv_w(ks[4], 3, 3, gw // RADIX, gw),
                    _conv_w(ks[5], 3, 3, gw // RADIX, gw)],
            bn0=_bn(ks[6], gw * RADIX),
            fc1_w=jax.random.normal(ks[7], (gw, inter), jnp.float32) * (gw ** -0.5),
            fc1_b=0.01 * jax.random.normal(ks[8], (inter,), jnp.float32),
            bn1=_bn(ks[9], inter),
            fc2_w=jax.random.normal(ks[10], (inter, gw * RADIX), jnp.float32) * (inter ** -0.5),
            fc2_b=0.01 * jax.random.normal(ks[11], (gw * RADIX,), jnp.float32),
        ),
        conv3=dict(w=_conv_w(ks[12], 1, 1, gw, planes_exp), bn=_bn(ks[13], planes_exp)),
        down=dict(w=_conv_w(ks[14], 1, 1, stem_c, planes_exp), bn=_bn(ks[15], planes_exp)),
        fc_w=jax.random.normal(ks[16], (planes_exp, CLASSES), jnp.float32) * (planes_exp ** -0.5),
        fc_b=0.01 * jax.random.normal(ks[17], (CLASSES,), jnp.float32),
    )


def _fold_bn(bn, eps=1e-5):
    s = bn['gamma'] / jnp.sqrt(bn['var'] + eps)
    b = bn['beta'] - bn['mean'] * s
    return s, b


def _prep_conv(w, bn, scale=None, bias=None):
    kh, kw, cin, cout = w.shape
    P = kh * kw * cin
    Kp = _round_up(P, 8)
    w2 = w.reshape(P, cout)
    if Kp > P:
        w2 = jnp.pad(w2, ((0, Kp - P), (0, 0)))
    if scale is None:
        scale, bias = _fold_bn(bn)
    return dict(w2d=w2.astype(jnp.bfloat16),
                scale=scale.reshape(1, cout).astype(jnp.float32),
                bias=bias.reshape(1, cout).astype(jnp.float32))


def _use_int8_head():
    # int8 head weights on v5*/v6* (int-friendly MXU, slow HBM); bf16 on v7x (no int
    # MXU path there) and any other/unknown backend.
    try:
        kind = jax.devices()[0].device_kind.lower()
    except Exception:
        return False
    return ("v5" in kind) or ("v6" in kind)


def prepare_params(raw):
    p = dict(
        stem=_prep_conv(raw['stem']['w'], raw['stem']['bn']),
        conv1=_prep_conv(raw['conv1']['w'], raw['conv1']['bn']),
        conv3=_prep_conv(raw['conv3']['w'], raw['conv3']['bn']),
        down=_prep_conv(raw['down']['w'], raw['down']['bn']),
    )
    sp = raw['splat']
    gw = raw['conv1']['w'].shape[-1]
    cin_g = gw // RADIX
    # Merge the two radix grouped 3x3 convs into one block-diagonal weight so a single
    # matmul emits s0||s1 lane-adjacent (one launch, 2x output lane width).
    wm = jnp.zeros((3, 3, gw, gw * RADIX), jnp.float32)
    for g in range(RADIX):
        wm = wm.at[:, :, g * cin_g:(g + 1) * cin_g, g * gw:(g + 1) * gw].set(
            sp['conv_w'][g])
    s0, b0 = _fold_bn(sp['bn0'])
    s1, b1 = _fold_bn(sp['bn1'])
    inter = sp['fc1_w'].shape[1]
    crad = sp['fc2_w'].shape[1]
    p['splat'] = dict(
        conv=_prep_conv(wm, None, scale=s0, bias=b0),
        # fc1 applied to the un-summed [gap0 || gap1]: stack W1 twice along rows
        fc1_w=jnp.concatenate([sp['fc1_w'], sp['fc1_w']], axis=0).astype(jnp.bfloat16),
        fc1_s=s1.reshape(1, inter).astype(jnp.float32),
        # BN applied to (z + fc1_bias): s*z + (s*fc1_b + (beta - mean*s))
        fc1_b=(s1 * sp['fc1_b'] + b1).reshape(1, inter).astype(jnp.float32),
        fc2_w=sp['fc2_w'].astype(jnp.bfloat16),
        fc2_b=sp['fc2_b'].reshape(1, crad).astype(jnp.float32),
    )
    # head: pre-pad N once at init to a multiple of HEAD_TN; per-column int8 quant on
    # v5/v6, bf16 elsewhere; f32 per-column scale + bias applied in the kernel epilogue
    K = raw['fc_w'].shape[0]
    Np = _round_up(CLASSES, HEAD_TN)
    w = raw['fc_w']
    if _use_int8_head():
        col_scale = jnp.maximum(jnp.max(jnp.abs(w), axis=0), 1e-8) / 127.0
        q = jnp.clip(jnp.round(w / col_scale[None, :]), -127.0, 127.0).astype(jnp.int8)
        p['fc_w'] = jnp.zeros((K, Np), jnp.int8).at[:, :CLASSES].set(q)
        p['fc_s'] = jnp.zeros((1, Np), jnp.float32).at[:, :CLASSES].set(col_scale)
    else:
        p['fc_w'] = jnp.zeros((K, Np), jnp.bfloat16).at[:, :CLASSES].set(
            w.astype(jnp.bfloat16))
        p['fc_s'] = jnp.zeros((1, Np), jnp.float32).at[:, :CLASSES].set(
            jnp.ones((CLASSES,), jnp.float32))
    p['fc_b'] = jnp.zeros((1, Np), jnp.float32).at[:, :CLASSES].set(raw['fc_b'])
    return p


if __name__ == "__main__":
    key = jax.random.PRNGKey(0)
    pkey, xkey = jax.random.split(key)
    params = prepare_params(init_params(pkey))
    x = jax.random.normal(xkey, (2, 3, 16, 16), jnp.float32)  # NCHW, like torch input
    fwd = jax.jit(classifier_forward)
    y = fwd(params, x)
    jax.block_until_ready(y)
    assert y.shape == (2, CLASSES) and y.dtype == jnp.float32
    print("KERNEL_OK")
</pallas_src>

<mosaic_0001>
module attributes {stable_mosaic.version = 11 : i64} {
  func.func @_stem_conv1_kernel(%arg0: memref<128x32xf32, #tpu.memory_space<vmem>>, %arg1: memref<32x32xbf16, #tpu.memory_space<vmem>>, %arg2: memref<1x32xf32, #tpu.memory_space<vmem>>, %arg3: memref<1x32xf32, #tpu.memory_space<vmem>>, %arg4: memref<32x16xbf16, #tpu.memory_space<vmem>>, %arg5: memref<1x16xf32, #tpu.memory_space<vmem>>, %arg6: memref<1x16xf32, #tpu.memory_space<vmem>>, %arg7: memref<128x32xbf16, #tpu.memory_space<vmem>>, %arg8: memref<128x16xbf16, #tpu.memory_space<vmem>>) attributes {dimension_semantics = [], scalar_prefetch = 0 : i64, scratch_operands = 0 : i64, tpu.core_type = #tpu.core_type<tc>} {
    %c0 = arith.constant 0 : index
    %c0_0 = arith.constant 0 : index
    %0 = vector.load %arg0[%c0, %c0_0] : memref<128x32xf32, #tpu.memory_space<vmem>>, vector<128x32xf32>
    %1 = arith.truncf %0 : vector<128x32xf32> to vector<128x32xbf16>
    %c0_1 = arith.constant 0 : index
    %c0_2 = arith.constant 0 : index
    %2 = vector.load %arg1[%c0_1, %c0_2] : memref<32x32xbf16, #tpu.memory_space<vmem>>, vector<32x32xbf16>
    %cst = arith.constant dense<0.000000e+00> : vector<128x32xf32>
    %3 = tpu.matmul %1, %2, %cst {dimension_numbers = #tpu.dot_dimension_numbers<[1], [0], [0], [1], [0, 0, 1, 1], [], []>} : vector<128x32xbf16>, vector<32x32xbf16>, vector<128x32xf32> -> vector<128x32xf32>
    %c0_3 = arith.constant 0 : index
    %c0_4 = arith.constant 0 : index
    %4 = vector.load %arg2[%c0_3, %c0_4] : memref<1x32xf32, #tpu.memory_space<vmem>>, vector<1x32xf32>
    %5 = vector.broadcast %4 : vector<1x32xf32> to vector<128x32xf32>
    %6 = arith.mulf %3, %5 : vector<128x32xf32>
    %c0_5 = arith.constant 0 : index
    %c0_6 = arith.constant 0 : index
    %7 = vector.load %arg3[%c0_5, %c0_6] : memref<1x32xf32, #tpu.memory_space<vmem>>, vector<1x32xf32>
    %8 = vector.broadcast %7 : vector<1x32xf32> to vector<128x32xf32>
    %9 = arith.addf %6, %8 : vector<128x32xf32>
    %cst_7 = arith.constant 0.000000e+00 : f32
    %10 = vector.broadcast %cst_7 : f32 to vector<128x32xf32>
    %11 = arith.maximumf %9, %10 : vector<128x32xf32>
    %12 = arith.truncf %11 : vector<128x32xf32> to vector<128x32xbf16>
    %c0_8 = arith.constant 0 : index
    %c0_9 = arith.constant 0 : index
    %13 = vector.load %arg7[%c0_8, %c0_9] : memref<128x32xbf16, #tpu.memory_space<vmem>>, vector<128x32xbf16>
    tpu.vector_store %arg7[%c0_8, %c0_9], %12 {strides = array<i32>} : memref<128x32xbf16, #tpu.memory_space<vmem>>, vector<128x32xbf16>,
    %14 = arith.truncf %11 : vector<128x32xf32> to vector<128x32xbf16>
    %c0_10 = arith.constant 0 : index
    %c0_11 = arith.constant 0 : index
    %15 = vector.load %arg4[%c0_10, %c0_11] : memref<32x16xbf16, #tpu.memory_space<vmem>>, vector<32x16xbf16>
    %cst_12 = arith.constant dense<0.000000e+00> : vector<128x16xf32>
    %16 = tpu.matmul %14, %15, %cst_12 {dimension_numbers = #tpu.dot_dimension_numbers<[1], [0], [0], [1], [0, 0, 1, 1], [], []>} : vector<128x32xbf16>, vector<32x16xbf16>, vector<128x16xf32> -> vector<128x16xf32>
    %c0_13 = arith.constant 0 : index
    %c0_14 = arith.constant 0 : index
    %17 = vector.load %arg5[%c0_13, %c0_14] : memref<1x16xf32, #tpu.memory_space<vmem>>, vector<1x16xf32>
    %18 = vector.broadcast %17 : vector<1x16xf32> to vector<128x16xf32>
    %19 = arith.mulf %16, %18 : vector<128x16xf32>
    %c0_15 = arith.constant 0 : index
    %c0_16 = arith.constant 0 : index
    %20 = vector.load %arg6[%c0_15, %c0_16] : memref<1x16xf32, #tpu.memory_space<vmem>>, vector<1x16xf32>
    %21 = vector.broadcast %20 : vector<1x16xf32> to vector<128x16xf32>
    %22 = arith.addf %19, %21 : vector<128x16xf32>
    %cst_17 = arith.constant 0.000000e+00 : f32
    %23 = vector.broadcast %cst_17 : f32 to vector<128x16xf32>
    %24 = arith.maximumf %22, %23 : vector<128x16xf32>
    %25 = arith.truncf %24 : vector<128x16xf32> to vector<128x16xbf16>
    %c0_18 = arith.constant 0 : index
    %c0_19 = arith.constant 0 : index
    %26 = vector.load %arg8[%c0_18, %c0_19] : memref<128x16xbf16, #tpu.memory_space<vmem>>, vector<128x16xbf16>
    tpu.vector_store %arg8[%c0_18, %c0_19], %25 {strides = array<i32>} : memref<128x16xbf16, #tpu.memory_space<vmem>>, vector<128x16xbf16>,
    return
  }
}

module attributes {stable_mosaic.version = 11 : i64} {
  func.func @_splat_fused_kernel(%arg0: memref<8x64x32xbf16, #tpu.memory_space<vmem>>, %arg1: memref<32x32xbf16, #tpu.memory_space<vmem>>, %arg2: memref<1x32xf32, #tpu.memory_space<vmem>>, %arg3: memref<1x32xf32, #tpu.memory_space<vmem>>, %arg4: memref<32x32xbf16, #tpu.memory_space<vmem>>, %arg5: memref<1x32xf32, #tpu.memory_space<vmem>>, %arg6: memref<8x64x16xbf16, #tpu.memory_space<vmem>>) attributes {dimension_semantics = [], scalar_prefetch = 0 : i64, scratch_operands = 0 : i64, tpu.core_type = #tpu.core_type<tc>} {
    %c0 = arith.constant 0 : index
    %c0_0 = arith.constant 0 : index
    %c0_1 = arith.constant 0 : index
    %0 = vector.load %arg0[%c0, %c0_0, %c0_1] : memref<8x64x32xbf16, #tpu.memory_space<vmem>>, vector<8x64x32xbf16>
    %1 = arith.extf %0 : vector<8x64x32xbf16> to vector<8x64x32xf32>
    %cst = arith.constant dense<0.000000e+00> : vector<8x32xf32>
    %2 = vector.multi_reduction <add>, %1, %cst [1] : vector<8x64x32xf32> to vector<8x32xf32>
    %cst_2 = arith.constant 6.400000e+01 : f32
    %3 = vector.broadcast %cst_2 : f32 to vector<8x32xf32>
    %4 = arith.divf %2, %3 : vector<8x32xf32>
    %5 = arith.truncf %4 : vector<8x32xf32> to vector<8x32xbf16>
    %c0_3 = arith.constant 0 : index
    %c0_4 = arith.constant 0 : index
    %6 = vector.load %arg1[%c0_3, %c0_4] : memref<32x32xbf16, #tpu.memory_space<vmem>>, vector<32x32xbf16>
    %cst_5 = arith.constant dense<0.000000e+00> : vector<8x32xf32>
    %7 = tpu.matmul %5, %6, %cst_5 {dimension_numbers = #tpu.dot_dimension_numbers<[1], [0], [0], [1], [0, 0, 1, 1], [], []>} : vector<8x32xbf16>, vector<32x32xbf16>, vector<8x32xf32> -> vector<8x32xf32>
    %c0_6 = arith.constant 0 : index
    %c0_7 = arith.constant 0 : index
    %8 = vector.load %arg2[%c0_6, %c0_7] : memref<1x32xf32, #tpu.memory_space<vmem>>, vector<1x32xf32>
    %9 = vector.broadcast %8 : vector<1x32xf32> to vector<8x32xf32>
    %10 = arith.mulf %7, %9 : vector<8x32xf32>
    %c0_8 = arith.constant 0 : index
    %c0_9 = arith.constant 0 : index
    %11 = vector.load %arg3[%c0_8, %c0_9] : memref<1x32xf32, #tpu.memory_space<vmem>>, vector<1x32xf32>
    %12 = vector.broadcast %11 : vector<1x32xf32> to vector<8x32xf32>
    %13 = arith.addf %10, %12 : vector<8x32xf32>
    %cst_10 = arith.constant 0.000000e+00 : f32
    %14 = vector.broadcast %cst_10 : f32 to vector<8x32xf32>
    %15 = arith.maximumf %13, %14 : vector<8x32xf32>
    %16 = arith.truncf %15 : vector<8x32xf32> to vector<8x32xbf16>
    %c0_11 = arith.constant 0 : index
    %c0_12 = arith.constant 0 : index
    %17 = vector.load %arg4[%c0_11, %c0_12] : memref<32x32xbf16, #tpu.memory_space<vmem>>, vector<32x32xbf16>
    %cst_13 = arith.constant dense<0.000000e+00> : vector<8x32xf32>
    %18 = tpu.matmul %16, %17, %cst_13 {dimension_numbers = #tpu.dot_dimension_numbers<[1], [0], [0], [1], [0, 0, 1, 1], [], []>} : vector<8x32xbf16>, vector<32x32xbf16>, vector<8x32xf32> -> vector<8x32xf32>
    %c0_14 = arith.constant 0 : index
    %c0_15 = arith.constant 0 : index
    %19 = vector.load %arg5[%c0_14, %c0_15] : memref<1x32xf32, #tpu.memory_space<vmem>>, vector<1x32xf32>
    %20 = vector.broadcast %19 : vector<1x32xf32> to vector<8x32xf32>
    %21 = arith.addf %18, %20 : vector<8x32xf32>
    %22 = vector.extract_strided_slice %21 {offsets = [0, 0], sizes = [8, 16], strides = [1, 1]} : vector<8x32xf32> to vector<8x16xf32>
    %23 = vector.extract_strided_slice %21 {offsets = [0, 16], sizes = [8, 16], strides = [1, 1]} : vector<8x32xf32> to vector<8x16xf32>
    %24 = arith.maximumf %22, %23 : vector<8x16xf32>
    %25 = arith.subf %22, %24 : vector<8x16xf32>
    %26 = math.exp %25 : vector<8x16xf32>
    %27 = arith.subf %23, %24 : vector<8x16xf32>
    %28 = math.exp %27 : vector<8x16xf32>
    %29 = arith.addf %26, %28 : vector<8x16xf32>
    %cst_16 = arith.constant 1.000000e+00 : f32
    %30 = vector.broadcast %cst_16 : f32 to vector<8x16xf32>
    %31 = arith.divf %30, %29 : vector<8x16xf32>
    %32 = arith.mulf %26, %31 : vector<8x16xf32>
    %33 = arith.mulf %28, %31 : vector<8x16xf32>
    %c0_17 = arith.constant 0 : index
    %c0_18 = arith.constant 0 : index
    %c0_19 = arith.constant 0 : index
    %34 = vector.load %arg0[%c0_17, %c0_18, %c0_19] : memref<8x64x32xbf16, #tpu.memory_space<vmem>>, vector<1x64x32xbf16>
    %35 = vector.shape_cast %34 : vector<1x64x32xbf16> to vector<64x32xbf16>
    %36 = arith.extf %35 : vector<64x32xbf16> to vector<64x32xf32>
    %37 = vector.extract_strided_slice %36 {offsets = [0, 0], sizes = [64, 16], strides = [1, 1]} : vector<64x32xf32> to vector<64x16xf32>
    %38 = vector.extract_strided_slice %32 {offsets = [0, 0], sizes = [1, 16], strides = [1, 1]} : vector<8x16xf32> to vector<1x16xf32>
    %39 = vector.broadcast %38 : vector<1x16xf32> to vector<64x16xf32>
    %40 = arith.mulf %37, %39 : vector<64x16xf32>
    %41 = vector.extract_strided_slice %36 {offsets = [0, 16], sizes = [64, 16], strides = [1, 1]} : vector<64x32xf32> to vector<64x16xf32>
    %42 = vector.extract_strided_slice %33 {offsets = [0, 0], sizes = [1, 16], strides = [1, 1]} : vector<8x16xf32> to vector<1x16xf32>
    %43 = vector.broadcast %42 : vector<1x16xf32> to vector<64x16xf32>
    %44 = arith.mulf %41, %43 : vector<64x16xf32>
    %45 = arith.addf %40, %44 : vector<64x16xf32>
    %46 = arith.truncf %45 : vector<64x16xf32> to vector<64x16xbf16>
    %c0_20 = arith.constant 0 : index
    %c0_21 = arith.constant 0 : index
    %c0_22 = arith.constant 0 : index
    %47 = vector.load %arg6[%c0_20, %c0_21, %c0_22] : memref<8x64x16xbf16, #tpu.memory_space<vmem>>, vector<1x64x16xbf16>
    %48 = vector.shape_cast %47 : vector<1x64x16xbf16> to vector<64x16xbf16>
    %49 = vector.shape_cast %46 : vector<64x16xbf16> to vector<1x64x16xbf16>
    tpu.vector_store %arg6[%c0_20, %c0_21, %c0_22], %49 {strides = array<i32>} : memref<8x64x16xbf16, #tpu.memory_space<vmem>>, vector<1x64x16xbf16>,
    %c1 = arith.constant 1 : index
    %c0_23 = arith.constant 0 : index
    %c0_24 = arith.constant 0 : index
    %50 = vector.load %arg0[%c1, %c0_23, %c0_24] : memref<8x64x32xbf16, #tpu.memory_space<vmem>>, vector<1x64x32xbf16>
    %51 = vector.shape_cast %50 : vector<1x64x32xbf16> to vector<64x32xbf16>
    %52 = arith.extf %51 : vector<64x32xbf16> to vector<64x32xf32>
    %53 = vector.extract_strided_slice %52 {offsets = [0, 0], sizes = [64, 16], strides = [1, 1]} : vector<64x32xf32> to vector<64x16xf32>
    %54 = vector.extract_strided_slice %32 {offsets = [1, 0], sizes = [1, 16], strides = [1, 1]} : vector<8x16xf32> to vector<1x16xf32>
    %55 = vector.broadcast %54 : vector<1x16xf32> to vector<64x16xf32>
    %56 = arith.mulf %53, %55 : vector<64x16xf32>
    %57 = vector.extract_strided_slice %52 {offsets = [0, 16], sizes = [64, 16], strides = [1, 1]} : vector<64x32xf32> to vector<64x16xf32>
    %58 = vector.extract_strided_slice %33 {offsets = [1, 0], sizes = [1, 16], strides = [1, 1]} : vector<8x16xf32> to vector<1x16xf32>
    %59 = vector.broadcast %58 : vector<1x16xf32> to vector<64x16xf32>
    %60 = arith.mulf %57, %59 : vector<64x16xf32>
    %61 = arith.addf %56, %60 : vector<64x16xf32>
    %62 = arith.truncf %61 : vector<64x16xf32> to vector<64x16xbf16>
    %c1_25 = arith.constant 1 : index
    %c0_26 = arith.constant 0 : index
    %c0_27 = arith.constant 0 : index
    %63 = vector.load %arg6[%c1_25, %c0_26, %c0_27] : memref<8x64x16xbf16, #tpu.memory_space<vmem>>, vector<1x64x16xbf16>
    %64 = vector.shape_cast %63 : vector<1x64x16xbf16> to vector<64x16xbf16>
    %65 = vector.shape_cast %62 : vector<64x16xbf16> to vector<1x64x16xbf16>
    tpu.vector_store %arg6[%c1_25, %c0_26, %c0_27], %65 {strides = array<i32>} : memref<8x64x16xbf16, #tpu.memory_space<vmem>>, vector<1x64x16xbf16>,
    %c2 = arith.constant 2 : index
    %c0_28 = arith.constant 0 : index
    %c0_29 = arith.constant 0 : index
    %66 = vector.load %arg0[%c2, %c0_28, %c0_29] : memref<8x64x32xbf16, #tpu.memory_space<vmem>>, vector<1x64x32xbf16>
    %67 = vector.shape_cast %66 : vector<1x64x32xbf16> to vector<64x32xbf16>
    %68 = arith.extf %67 : vector<64x32xbf16> to vector<64x32xf32>
    %69 = vector.extract_strided_slice %68 {offsets = [0, 0], sizes = [64, 16], strides = [1, 1]} : vector<64x32xf32> to vector<64x16xf32>
    %70 = vector.extract_strided_slice %32 {offsets = [2, 0], sizes = [1, 16], strides = [1, 1]} : vector<8x16xf32> to vector<1x16xf32>
    %71 = vector.broadcast %70 : vector<1x16xf32> to vector<64x16xf32>
    %72 = arith.mulf %69, %71 : vector<64x16xf32>
    %73 = vector.extract_strided_slice %68 {offsets = [0, 16], sizes = [64, 16], strides = [1, 1]} : vector<64x32xf32> to vector<64x16xf32>
    %74 = vector.extract_strided_slice %33 {offsets = [2, 0], sizes = [1, 16], strides = [1, 1]} : vector<8x16xf32> to vector<1x16xf32>
    %75 = vector.broadcast %74 : vector<1x16xf32> to vector<64x16xf32>
    %76 = arith.mulf %73, %75 : vector<64x16xf32>
    %77 = arith.addf %72, %76 : vector<64x16xf32>
    %78 = arith.truncf %77 : vector<64x16xf32> to vector<64x16xbf16>
    %c2_30 = arith.constant 2 : index
    %c0_31 = arith.constant 0 : index
    %c0_32 = arith.constant 0 : index
    %79 = vector.load %arg6[%c2_30, %c0_31, %c0_32] : memref<8x64x16xbf16, #tpu.memory_space<vmem>>, vector<1x64x16xbf16>
    %80 = vector.shape_cast %79 : vector<1x64x16xbf16> to vector<64x16xbf16>
    %81 = vector.shape_cast %78 : vector<64x16xbf16> to vector<1x64x16xbf16>
    tpu.vector_store %arg6[%c2_30, %c0_31, %c0_32], %81 {strides = array<i32>} : memref<8x64x16xbf16, #tpu.memory_space<vmem>>, vector<1x64x16xbf16>,
    %c3 = arith.constant 3 : index
    %c0_33 = arith.constant 0 : index
    %c0_34 = arith.constant 0 : index
    %82 = vector.load %arg0[%c3, %c0_33, %c0_34] : memref<8x64x32xbf16, #tpu.memory_space<vmem>>, vector<1x64x32xbf16>
    %83 = vector.shape_cast %82 : vector<1x64x32xbf16> to vector<64x32xbf16>
    %84 = arith.extf %83 : vector<64x32xbf16> to vector<64x32xf32>
    %85 = vector.extract_strided_slice %84 {offsets = [0, 0], sizes = [64, 16], strides = [1, 1]} : vector<64x32xf32> to vector<64x16xf32>
    %86 = vector.extract_strided_slice %32 {offsets = [3, 0], sizes = [1, 16], strides = [1, 1]} : vector<8x16xf32> to vector<1x16xf32>
    %87 = vector.broadcast %86 : vector<1x16xf32> to vector<64x16xf32>
    %88 = arith.mulf %85, %87 : vector<64x16xf32>
    %89 = vector.extract_strided_slice %84 {offsets = [0, 16], sizes = [64, 16], strides = [1, 1]} : vector<64x32xf32> to vector<64x16xf32>
    %90 = vector.extract_strided_slice %33 {offsets = [3, 0], sizes = [1, 16], strides = [1, 1]} : vector<8x16xf32> to vector<1x16xf32>
    %91 = vector.broadcast %90 : vector<1x16xf32> to vector<64x16xf32>
    %92 = arith.mulf %89, %91 : vector<64x16xf32>
    %93 = arith.addf %88, %92 : vector<64x16xf32>
    %94 = arith.truncf %93 : vector<64x16xf32> to vector<64x16xbf16>
    %c3_35 = arith.constant 3 : index
    %c0_36 = arith.constant 0 : index
    %c0_37 = arith.constant 0 : index
    %95 = vector.load %arg6[%c3_35, %c0_36, %c0_37] : memref<8x64x16xbf16, #tpu.memory_space<vmem>>, vector<1x64x16xbf16>
    %96 = vector.shape_cast %95 : vector<1x64x16xbf16> to vector<64x16xbf16>
    %97 = vector.shape_cast %94 : vector<64x16xbf16> to vector<1x64x16xbf16>
    tpu.vector_store %arg6[%c3_35, %c0_36, %c0_37], %97 {strides = array<i32>} : memref<8x64x16xbf16, #tpu.memory_space<vmem>>, vector<1x64x16xbf16>,
    %c4 = arith.constant 4 : index
    %c0_38 = arith.constant 0 : index
    %c0_39 = arith.constant 0 : index
    %98 = vector.load %arg0[%c4, %c0_38, %c0_39] : memref<8x64x32xbf16, #tpu.memory_space<vmem>>, vector<1x64x32xbf16>
    %99 = vector.shape_cast %98 : vector<1x64x32xbf16> to vector<64x32xbf16>
    %100 = arith.extf %99 : vector<64x32xbf16> to vector<64x32xf32>
    %101 = vector.extract_strided_slice %100 {offsets = [0, 0], sizes = [64, 16], strides = [1, 1]} : vector<64x32xf32> to vector<64x16xf32>
    %102 = vector.extract_strided_slice %32 {offsets = [4, 0], sizes = [1, 16], strides = [1, 1]} : vector<8x16xf32> to vector<1x16xf32>
    %103 = vector.broadcast %102 : vector<1x16xf32> to vector<64x16xf32>
    %104 = arith.mulf %101, %103 : vector<64x16xf32>
    %105 = vector.extract_strided_slice %100 {offsets = [0, 16], sizes = [64, 16], strides = [1, 1]} : vector<64x32xf32> to vector<64x16xf32>
    %106 = vector.extract_strided_slice %33 {offsets = [4, 0], sizes = [1, 16], strides = [1, 1]} : vector<8x16xf32> to vector<1x16xf32>
    %107 = vector.broadcast %106 : vector<1x16xf32> to vector<64x16xf32>
    %108 = arith.mulf %105, %107 : vector<64x16xf32>
    %109 = arith.addf %104, %108 : vector<64x16xf32>
    %110 = arith.truncf %109 : vector<64x16xf32> to vector<64x16xbf16>
    %c4_40 = arith.constant 4 : index
    %c0_41 = arith.constant 0 : index
    %c0_42 = arith.constant 0 : index
    %111 = vector.load %arg6[%c4_40, %c0_41, %c0_42] : memref<8x64x16xbf16, #tpu.memory_space<vmem>>, vector<1x64x16xbf16>
    %112 = vector.shape_cast %111 : vector<1x64x16xbf16> to vector<64x16xbf16>
    %113 = vector.shape_cast %110 : vector<64x16xbf16> to vector<1x64x16xbf16>
    tpu.vector_store %arg6[%c4_40, %c0_41, %c0_42], %113 {strides = array<i32>} : memref<8x64x16xbf16, #tpu.memory_space<vmem>>, vector<1x64x16xbf16>,
    %c5 = arith.constant 5 : index
    %c0_43 = arith.constant 0 : index
    %c0_44 = arith.constant 0 : index
    %114 = vector.load %arg0[%c5, %c0_43, %c0_44] : memref<8x64x32xbf16, #tpu.memory_space<vmem>>, vector<1x64x32xbf16>
    %115 = vector.shape_cast %114 : vector<1x64x32xbf16> to vector<64x32xbf16>
    %116 = arith.extf %115 : vector<64x32xbf16> to vector<64x32xf32>
    %117 = vector.extract_strided_slice %116 {offsets = [0, 0], sizes = [64, 16], strides = [1, 1]} : vector<64x32xf32> to vector<64x16xf32>
    %118 = vector.extract_strided_slice %32 {offsets = [5, 0], sizes = [1, 16], strides = [1, 1]} : vector<8x16xf32> to vector<1x16xf32>
    %119 = vector.broadcast %118 : vector<1x16xf32> to vector<64x16xf32>
    %120 = arith.mulf %117, %119 : vector<64x16xf32>
    %121 = vector.extract_strided_slice %116 {offsets = [0, 16], sizes = [64, 16], strides = [1, 1]} : vector<64x32xf32> to vector<64x16xf32>
    %122 = vector.extract_strided_slice %33 {offsets = [5, 0], sizes = [1, 16], strides = [1, 1]} : vector<8x16xf32> to vector<1x16xf32>
    %123 = vector.broadcast %122 : vector<1x16xf32> to vector<64x16xf32>
    %124 = arith.mulf %121, %123 : vector<64x16xf32>
    %125 = arith.addf %120, %124 : vector<64x16xf32>
    %126 = arith.truncf %125 : vector<64x16xf32> to vector<64x16xbf16>
    %c5_45 = arith.constant 5 : index
    %c0_46 = arith.constant 0 : index
    %c0_47 = arith.constant 0 : index
    %127 = vector.load %arg6[%c5_45, %c0_46, %c0_47] : memref<8x64x16xbf16, #tpu.memory_space<vmem>>, vector<1x64x16xbf16>
    %128 = vector.shape_cast %127 : vector<1x64x16xbf16> to vector<64x16xbf16>
    %129 = vector.shape_cast %126 : vector<64x16xbf16> to vector<1x64x16xbf16>
    tpu.vector_store %arg6[%c5_45, %c0_46, %c0_47], %129 {strides = array<i32>} : memref<8x64x16xbf16, #tpu.memory_space<vmem>>, vector<1x64x16xbf16>,
    %c6 = arith.constant 6 : index
    %c0_48 = arith.constant 0 : index
    %c0_49 = arith.constant 0 : index
    %130 = vector.load %arg0[%c6, %c0_48, %c0_49] : memref<8x64x32xbf16, #tpu.memory_space<vmem>>, vector<1x64x32xbf16>
    %131 = vector.shape_cast %130 : vector<1x64x32xbf16> to vector<64x32xbf16>
    %132 = arith.extf %131 : vector<64x32xbf16> to vector<64x32xf32>
    %133 = vector.extract_strided_slice %132 {offsets = [0, 0], sizes = [64, 16], strides = [1, 1]} : vector<64x32xf32> to vector<64x16xf32>
    %134 = vector.extract_strided_slice %32 {offsets = [6, 0], sizes = [1, 16], strides = [1, 1]} : vector<8x16xf32> to vector<1x16xf32>
    %135 = vector.broadcast %134 : vector<1x16xf32> to vector<64x16xf32>
    %136 = arith.mulf %133, %135 : vector<64x16xf32>
    %137 = vector.extract_strided_slice %132 {offsets = [0, 16], sizes = [64, 16], strides = [1, 1]} : vector<64x32xf32> to vector<64x16xf32>
    %138 = vector.extract_strided_slice %33 {offsets = [6, 0], sizes = [1, 16], strides = [1, 1]} : vector<8x16xf32> to vector<1x16xf32>
    %139 = vector.broadcast %138 : vector<1x16xf32> to vector<64x16xf32>
    %140 = arith.mulf %137, %139 : vector<64x16xf32>
    %141 = arith.addf %136, %140 : vector<64x16xf32>
    %142 = arith.truncf %141 : vector<64x16xf32> to vector<64x16xbf16>
    %c6_50 = arith.constant 6 : index
    %c0_51 = arith.constant 0 : index
    %c0_52 = arith.constant 0 : index
    %143 = vector.load %arg6[%c6_50, %c0_51, %c0_52] : memref<8x64x16xbf16, #tpu.memory_space<vmem>>, vector<1x64x16xbf16>
    %144 = vector.shape_cast %143 : vector<1x64x16xbf16> to vector<64x16xbf16>
    %145 = vector.shape_cast %142 : vector<64x16xbf16> to vector<1x64x16xbf16>
    tpu.vector_store %arg6[%c6_50, %c0_51, %c0_52], %145 {strides = array<i32>} : memref<8x64x16xbf16, #tpu.memory_space<vmem>>, vector<1x64x16xbf16>,
    %c7 = arith.constant 7 : index
    %c0_53 = arith.constant 0 : index
    %c0_54 = arith.constant 0 : index
    %146 = vector.load %arg0[%c7, %c0_53, %c0_54] : memref<8x64x32xbf16, #tpu.memory_space<vmem>>, vector<1x64x32xbf16>
    %147 = vector.shape_cast %146 : vector<1x64x32xbf16> to vector<64x32xbf16>
    %148 = arith.extf %147 : vector<64x32xbf16> to vector<64x32xf32>
    %149 = vector.extract_strided_slice %148 {offsets = [0, 0], sizes = [64, 16], strides = [1, 1]} : vector<64x32xf32> to vector<64x16xf32>
    %150 = vector.extract_strided_slice %32 {offsets = [7, 0], sizes = [1, 16], strides = [1, 1]} : vector<8x16xf32> to vector<1x16xf32>
    %151 = vector.broadcast %150 : vector<1x16xf32> to vector<64x16xf32>
    %152 = arith.mulf %149, %151 : vector<64x16xf32>
    %153 = vector.extract_strided_slice %148 {offsets = [0, 16], sizes = [64, 16], strides = [1, 1]} : vector<64x32xf32> to vector<64x16xf32>
    %154 = vector.extract_strided_slice %33 {offsets = [7, 0], sizes = [1, 16], strides = [1, 1]} : vector<8x16xf32> to vector<1x16xf32>
    %155 = vector.broadcast %154 : vector<1x16xf32> to vector<64x16xf32>
    %156 = arith.mulf %153, %155 : vector<64x16xf32>
    %157 = arith.addf %152, %156 : vector<64x16xf32>
    %158 = arith.truncf %157 : vector<64x16xf32> to vector<64x16xbf16>
    %c7_55 = arith.constant 7 : index
    %c0_56 = arith.constant 0 : index
    %c0_57 = arith.constant 0 : index
    %159 = vector.load %arg6[%c7_55, %c0_56, %c0_57] : memref<8x64x16xbf16, #tpu.memory_space<vmem>>, vector<1x64x16xbf16>
    %160 = vector.shape_cast %159 : vector<1x64x16xbf16> to vector<64x16xbf16>
    %161 = vector.shape_cast %158 : vector<64x16xbf16> to vector<1x64x16xbf16>
    tpu.vector_store %arg6[%c7_55, %c0_56, %c0_57], %161 {strides = array<i32>} : memref<8x64x16xbf16, #tpu.memory_space<vmem>>, vector<1x64x16xbf16>,
    return
  }
}

module attributes {stable_mosaic.version = 11 : i64} {
  func.func @_conv_affine_kernel(%arg0: memref<128x144xbf16, #tpu.memory_space<vmem>>, %arg1: memref<144x32xbf16, #tpu.memory_space<vmem>>, %arg2: memref<1x32xf32, #tpu.memory_space<vmem>>, %arg3: memref<1x32xf32, #tpu.memory_space<vmem>>, %arg4: memref<128x32xbf16, #tpu.memory_space<vmem>>) attributes {dimension_semantics = [], scalar_prefetch = 0 : i64, scratch_operands = 0 : i64, tpu.core_type = #tpu.core_type<tc>} {
    %c0 = arith.constant 0 : index
    %c0_0 = arith.constant 0 : index
    %0 = vector.load %arg0[%c0, %c0_0] : memref<128x144xbf16, #tpu.memory_space<vmem>>, vector<128x144xbf16>
    %c0_1 = arith.constant 0 : index
    %c0_2 = arith.constant 0 : index
    %1 = vector.load %arg1[%c0_1, %c0_2] : memref<144x32xbf16, #tpu.memory_space<vmem>>, vector<144x32xbf16>
    %cst = arith.constant dense<0.000000e+00> : vector<128x32xf32>
    %2 = tpu.matmul %0, %1, %cst {dimension_numbers = #tpu.dot_dimension_numbers<[1], [0], [0], [1], [0, 0, 1, 1], [], []>} : vector<128x144xbf16>, vector<144x32xbf16>, vector<128x32xf32> -> vector<128x32xf32>
    %c0_3 = arith.constant 0 : index
    %c0_4 = arith.constant 0 : index
    %3 = vector.load %arg2[%c0_3, %c0_4] : memref<1x32xf32, #tpu.memory_space<vmem>>, vector<1x32xf32>
    %4 = vector.broadcast %3 : vector<1x32xf32> to vector<128x32xf32>
    %5 = arith.mulf %2, %4 : vector<128x32xf32>
    %c0_5 = arith.constant 0 : index
    %c0_6 = arith.constant 0 : index
    %6 = vector.load %arg3[%c0_5, %c0_6] : memref<1x32xf32, #tpu.memory_space<vmem>>, vector<1x32xf32>
    %7 = vector.broadcast %6 : vector<1x32xf32> to vector<128x32xf32>
    %8 = arith.addf %5, %7 : vector<128x32xf32>
    %cst_7 = arith.constant 0.000000e+00 : f32
    %9 = vector.broadcast %cst_7 : f32 to vector<128x32xf32>
    %10 = arith.maximumf %8, %9 : vector<128x32xf32>
    %11 = arith.truncf %10 : vector<128x32xf32> to vector<128x32xbf16>
    %c0_8 = arith.constant 0 : index
    %c0_9 = arith.constant 0 : index
    %12 = vector.load %arg4[%c0_8, %c0_9] : memref<128x32xbf16, #tpu.memory_space<vmem>>, vector<128x32xbf16>
    tpu.vector_store %arg4[%c0_8, %c0_9], %11 {strides = array<i32>} : memref<128x32xbf16, #tpu.memory_space<vmem>>, vector<128x32xbf16>,
    return
  }
}

module attributes {stable_mosaic.version = 11 : i64} {
  func.func @_residual_gap_kernel(%arg0: memref<128x16xbf16, #tpu.memory_space<vmem>>, %arg1: memref<16x64xbf16, #tpu.memory_space<vmem>>, %arg2: memref<1x64xf32, #tpu.memory_space<vmem>>, %arg3: memref<1x64xf32, #tpu.memory_space<vmem>>, %arg4: memref<128x32xbf16, #tpu.memory_space<vmem>>, %arg5: memref<32x64xbf16, #tpu.memory_space<vmem>>, %arg6: memref<1x64xf32, #tpu.memory_space<vmem>>, %arg7: memref<1x64xf32, #tpu.memory_space<vmem>>, %arg8: memref<8x64xf32, #tpu.memory_space<vmem>>) attributes {dimension_semantics = [], scalar_prefetch = 0 : i64, scratch_operands = 0 : i64, tpu.core_type = #tpu.core_type<tc>} {
    %c0 = arith.constant 0 : index
    %c0_0 = arith.constant 0 : index
    %0 = vector.load %arg0[%c0, %c0_0] : memref<128x16xbf16, #tpu.memory_space<vmem>>, vector<128x16xbf16>
    %c0_1 = arith.constant 0 : index
    %c0_2 = arith.constant 0 : index
    %1 = vector.load %arg1[%c0_1, %c0_2] : memref<16x64xbf16, #tpu.memory_space<vmem>>, vector<16x64xbf16>
    %cst = arith.constant dense<0.000000e+00> : vector<128x64xf32>
    %2 = tpu.matmul %0, %1, %cst {dimension_numbers = #tpu.dot_dimension_numbers<[1], [0], [0], [1], [0, 0, 1, 1], [], []>} : vector<128x16xbf16>, vector<16x64xbf16>, vector<128x64xf32> -> vector<128x64xf32>
    %c0_3 = arith.constant 0 : index
    %c0_4 = arith.constant 0 : index
    %3 = vector.load %arg4[%c0_3, %c0_4] : memref<128x32xbf16, #tpu.memory_space<vmem>>, vector<128x32xbf16>
    %c0_5 = arith.constant 0 : index
    %c0_6 = arith.constant 0 : index
    %4 = vector.load %arg5[%c0_5, %c0_6] : memref<32x64xbf16, #tpu.memory_space<vmem>>, vector<32x64xbf16>
    %cst_7 = arith.constant dense<0.000000e+00> : vector<128x64xf32>
    %5 = tpu.matmul %3, %4, %cst_7 {dimension_numbers = #tpu.dot_dimension_numbers<[1], [0], [0], [1], [0, 0, 1, 1], [], []>} : vector<128x32xbf16>, vector<32x64xbf16>, vector<128x64xf32> -> vector<128x64xf32>
    %c0_8 = arith.constant 0 : index
    %c0_9 = arith.constant 0 : index
    %6 = vector.load %arg2[%c0_8, %c0_9] : memref<1x64xf32, #tpu.memory_space<vmem>>, vector<1x64xf32>
    %7 = vector.broadcast %6 : vector<1x64xf32> to vector<128x64xf32>
    %8 = arith.mulf %2, %7 : vector<128x64xf32>
    %c0_10 = arith.constant 0 : index
    %c0_11 = arith.constant 0 : index
    %9 = vector.load %arg3[%c0_10, %c0_11] : memref<1x64xf32, #tpu.memory_space<vmem>>, vector<1x64xf32>
    %10 = vector.broadcast %9 : vector<1x64xf32> to vector<128x64xf32>
    %11 = arith.addf %8, %10 : vector<128x64xf32>
    %c0_12 = arith.constant 0 : index
    %c0_13 = arith.constant 0 : index
    %12 = vector.load %arg6[%c0_12, %c0_13] : memref<1x64xf32, #tpu.memory_space<vmem>>, vector<1x64xf32>
    %13 = vector.broadcast %12 : vector<1x64xf32> to vector<128x64xf32>
    %14 = arith.mulf %5, %13 : vector<128x64xf32>
    %15 = arith.addf %11, %14 : vector<128x64xf32>
    %c0_14 = arith.constant 0 : index
    %c0_15 = arith.constant 0 : index
    %16 = vector.load %arg7[%c0_14, %c0_15] : memref<1x64xf32, #tpu.memory_space<vmem>>, vector<1x64xf32>
    %17 = vector.broadcast %16 : vector<1x64xf32> to vector<128x64xf32>
    %18 = arith.addf %15, %17 : vector<128x64xf32>
    %cst_16 = arith.constant 0.000000e+00 : f32
    %19 = vector.broadcast %cst_16 : f32 to vector<128x64xf32>
    %20 = arith.maximumf %18, %19 : vector<128x64xf32>
    %cst_17 = arith.constant 0.000000e+00 : f32
    %21 = vector.broadcast %cst_17 : f32 to vector<8x64xf32>
    %c0_18 = arith.constant 0 : index
    %c0_19 = arith.constant 0 : index
    %22 = vector.load %arg8[%c0_18, %c0_19] : memref<8x64xf32, #tpu.memory_space<vmem>>, vector<8x64xf32>
    tpu.vector_store %arg8[%c0_18, %c0_19], %21 {strides = array<i32>} : memref<8x64xf32, #tpu.memory_space<vmem>>, vector<8x64xf32>,
    %23 = vector.extract_strided_slice %20 {offsets = [0, 0], sizes = [64, 64], strides = [1, 1]} : vector<128x64xf32> to vector<64x64xf32>
    %cst_20 = arith.constant dense<0.000000e+00> : vector<64xf32>
    %24 = vector.multi_reduction <add>, %23, %cst_20 [0] : vector<64x64xf32> to vector<64xf32>
    %25 = vector.shape_cast %24 : vector<64xf32> to vector<1x64xf32>
    %cst_21 = arith.constant 6.400000e+01 : f32
    %26 = vector.broadcast %cst_21 : f32 to vector<1x64xf32>
    %27 = arith.divf %25, %26 : vector<1x64xf32>
    %c0_22 = arith.constant 0 : index
    %c0_23 = arith.constant 0 : index
    %28 = vector.load %arg8[%c0_22, %c0_23] : memref<8x64xf32, #tpu.memory_space<vmem>>, vector<1x64xf32>
    tpu.vector_store %arg8[%c0_22, %c0_23], %27 {strides = array<i32>} : memref<8x64xf32, #tpu.memory_space<vmem>>, vector<1x64xf32>,
    %29 = vector.extract_strided_slice %20 {offsets = [64, 0], sizes = [64, 64], strides = [1, 1]} : vector<128x64xf32> to vector<64x64xf32>
    %cst_24 = arith.constant dense<0.000000e+00> : vector<64xf32>
    %30 = vector.multi_reduction <add>, %29, %cst_24 [0] : vector<64x64xf32> to vector<64xf32>
    %31 = vector.shape_cast %30 : vector<64xf32> to vector<1x64xf32>
    %cst_25 = arith.constant 6.400000e+01 : f32
    %32 = vector.broadcast %cst_25 : f32 to vector<1x64xf32>
    %33 = arith.divf %31, %32 : vector<1x64xf32>
    %c1 = arith.constant 1 : index
    %c0_26 = arith.constant 0 : index
    %34 = vector.load %arg8[%c1, %c0_26] : memref<8x64xf32, #tpu.memory_space<vmem>>, vector<1x64xf32>
    tpu.vector_store %arg8[%c1, %c0_26], %33 {strides = array<i32>} : memref<8x64xf32, #tpu.memory_space<vmem>>, vector<1x64xf32>,
    return
  }
}

module attributes {stable_mosaic.version = 11 : i64} {
  func.func @_head_kernel(%arg0: i32, %arg1: memref<8x64xf32, #tpu.memory_space<vmem>>, %arg2: memref<64x12544xbf16, #tpu.memory_space<vmem>>, %arg3: memref<1x12544xf32, #tpu.memory_space<vmem>>, %arg4: memref<1x12544xf32, #tpu.memory_space<vmem>>, %arg5: memref<8x12544xf32, #tpu.memory_space<vmem>>) attributes {dimension_semantics = [#tpu.dimension_semantics<parallel>], iteration_bounds = array<i64: 4>, scalar_prefetch = 0 : i64, scratch_operands = 0 : i64, tpu.core_type = #tpu.core_type<tc>, window_params = [{pipeline_mode = #tpu.pipeline_mode<synchronous>, transform_indices = @transform_0, window_bounds = array<i64: 8, 64>}, {transform_indices = @transform_1, window_bounds = array<i64: 64, 12544>}, {transform_indices = @transform_2, window_bounds = array<i64: 1, 12544>}, {transform_indices = @transform_3, window_bounds = array<i64: 1, 12544>}, {transform_indices = @transform_4, window_bounds = array<i64: 8, 12544>}]} {
    %c0 = arith.constant 0 : index
    %c0_0 = arith.constant 0 : index
    %0 = vector.load %arg1[%c0, %c0_0] : memref<8x64xf32, #tpu.memory_space<vmem>>, vector<8x64xf32>
    %1 = arith.truncf %0 : vector<8x64xf32> to vector<8x64xbf16>
    %c0_1 = arith.constant 0 : index
    %c0_2 = arith.constant 0 : index
    %2 = vector.load %arg2[%c0_1, %c0_2] : memref<64x12544xbf16, #tpu.memory_space<vmem>>, vector<64x1792xbf16>
    %cst = arith.constant dense<0.000000e+00> : vector<8x1792xf32>
    %3 = tpu.matmul %1, %2, %cst {dimension_numbers = #tpu.dot_dimension_numbers<[1], [0], [0], [1], [0, 0, 1, 1], [], []>} : vector<8x64xbf16>, vector<64x1792xbf16>, vector<8x1792xf32> -> vector<8x1792xf32>
    %c0_3 = arith.constant 0 : index
    %c0_4 = arith.constant 0 : index
    %4 = vector.load %arg3[%c0_3, %c0_4] : memref<1x12544xf32, #tpu.memory_space<vmem>>, vector<1x1792xf32>
    %5 = vector.broadcast %4 : vector<1x1792xf32> to vector<8x1792xf32>
    %6 = arith.mulf %3, %5 : vector<8x1792xf32>
    %c0_5 = arith.constant 0 : index
    %c0_6 = arith.constant 0 : index
    %7 = vector.load %arg4[%c0_5, %c0_6] : memref<1x12544xf32, #tpu.memory_space<vmem>>, vector<1x1792xf32>
    %8 = vector.broadcast %7 : vector<1x1792xf32> to vector<8x1792xf32>
    %9 = arith.addf %6, %8 : vector<8x1792xf32>
    %c0_7 = arith.constant 0 : index
    %c0_8 = arith.constant 0 : index
    %10 = vector.load %arg5[%c0_7, %c0_8] : memref<8x12544xf32, #tpu.memory_space<vmem>>, vector<8x1792xf32>
    tpu.vector_store %arg5[%c0_7, %c0_8], %9 {strides = array<i32>} : memref<8x12544xf32, #tpu.memory_space<vmem>>, vector<8x1792xf32>,
    %c0_9 = arith.constant 0 : index
    %c1792 = arith.constant 1792 : index
    %11 = vector.load %arg2[%c0_9, %c1792] : memref<64x12544xbf16, #tpu.memory_space<vmem>>, vector<64x1792xbf16>
    %cst_10 = arith.constant dense<0.000000e+00> : vector<8x1792xf32>
    %12 = tpu.matmul %1, %11, %cst_10 {dimension_numbers = #tpu.dot_dimension_numbers<[1], [0], [0], [1], [0, 0, 1, 1], [], []>} : vector<8x64xbf16>, vector<64x1792xbf16>, vector<8x1792xf32> -> vector<8x1792xf32>
    %c0_11 = arith.constant 0 : index
    %c1792_12 = arith.constant 1792 : index
    %13 = vector.load %arg3[%c0_11, %c1792_12] : memref<1x12544xf32, #tpu.memory_space<vmem>>, vector<1x1792xf32>
    %14 = vector.broadcast %13 : vector<1x1792xf32> to vector<8x1792xf32>
    %15 = arith.mulf %12, %14 : vector<8x1792xf32>
    %c0_13 = arith.constant 0 : index
    %c1792_14 = arith.constant 1792 : index
    %16 = vector.load %arg4[%c0_13, %c1792_14] : memref<1x12544xf32, #tpu.memory_space<vmem>>, vector<1x1792xf32>
    %17 = vector.broadcast %16 : vector<1x1792xf32> to vector<8x1792xf32>
    %18 = arith.addf %15, %17 : vector<8x1792xf32>
    %c0_15 = arith.constant 0 : index
    %c1792_16 = arith.constant 1792 : index
    %19 = vector.load %arg5[%c0_15, %c1792_16] : memref<8x12544xf32, #tpu.memory_space<vmem>>, vector<8x1792xf32>
    tpu.vector_store %arg5[%c0_15, %c1792_16], %18 {strides = array<i32>} : memref<8x12544xf32, #tpu.memory_space<vmem>>, vector<8x1792xf32>,
    %c0_17 = arith.constant 0 : index
    %c3584 = arith.constant 3584 : index
    %20 = vector.load %arg2[%c0_17, %c3584] : memref<64x12544xbf16, #tpu.memory_space<vmem>>, vector<64x1792xbf16>
    %cst_18 = arith.constant dense<0.000000e+00> : vector<8x1792xf32>
    %21 = tpu.matmul %1, %20, %cst_18 {dimension_numbers = #tpu.dot_dimension_numbers<[1], [0], [0], [1], [0, 0, 1, 1], [], []>} : vector<8x64xbf16>, vector<64x1792xbf16>, vector<8x1792xf32> -> vector<8x1792xf32>
    %c0_19 = arith.constant 0 : index
    %c3584_20 = arith.constant 3584 : index
    %22 = vector.load %arg3[%c0_19, %c3584_20] : memref<1x12544xf32, #tpu.memory_space<vmem>>, vector<1x1792xf32>
    %23 = vector.broadcast %22 : vector<1x1792xf32> to vector<8x1792xf32>
    %24 = arith.mulf %21, %23 : vector<8x1792xf32>
    %c0_21 = arith.constant 0 : index
    %c3584_22 = arith.constant 3584 : index
    %25 = vector.load %arg4[%c0_21, %c3584_22] : memref<1x12544xf32, #tpu.memory_space<vmem>>, vector<1x1792xf32>
    %26 = vector.broadcast %25 : vector<1x1792xf32> to vector<8x1792xf32>
    %27 = arith.addf %24, %26 : vector<8x1792xf32>
    %c0_23 = arith.constant 0 : index
    %c3584_24 = arith.constant 3584 : index
    %28 = vector.load %arg5[%c0_23, %c3584_24] : memref<8x12544xf32, #tpu.memory_space<vmem>>, vector<8x1792xf32>
    tpu.vector_store %arg5[%c0_23, %c3584_24], %27 {strides = array<i32>} : memref<8x12544xf32, #tpu.memory_space<vmem>>, vector<8x1792xf32>,
    %c0_25 = arith.constant 0 : index
    %c5376 = arith.constant 5376 : index
    %29 = vector.load %arg2[%c0_25, %c5376] : memref<64x12544xbf16, #tpu.memory_space<vmem>>, vector<64x1792xbf16>
    %cst_26 = arith.constant dense<0.000000e+00> : vector<8x1792xf32>
    %30 = tpu.matmul %1, %29, %cst_26 {dimension_numbers = #tpu.dot_dimension_numbers<[1], [0], [0], [1], [0, 0, 1, 1], [], []>} : vector<8x64xbf16>, vector<64x1792xbf16>, vector<8x1792xf32> -> vector<8x1792xf32>
    %c0_27 = arith.constant 0 : index
    %c5376_28 = arith.constant 5376 : index
    %31 = vector.load %arg3[%c0_27, %c5376_28] : memref<1x12544xf32, #tpu.memory_space<vmem>>, vector<1x1792xf32>
    %32 = vector.broadcast %31 : vector<1x1792xf32> to vector<8x1792xf32>
    %33 = arith.mulf %30, %32 : vector<8x1792xf32>
    %c0_29 = arith.constant 0 : index
    %c5376_30 = arith.constant 5376 : index
    %34 = vector.load %arg4[%c0_29, %c5376_30] : memref<1x12544xf32, #tpu.memory_space<vmem>>, vector<1x1792xf32>
    %35 = vector.broadcast %34 : vector<1x1792xf32> to vector<8x1792xf32>
    %36 = arith.addf %33, %35 : vector<8x1792xf32>
    %c0_31 = arith.constant 0 : index
    %c5376_32 = arith.constant 5376 : index
    %37 = vector.load %arg5[%c0_31, %c5376_32] : memref<8x12544xf32, #tpu.memory_space<vmem>>, vector<8x1792xf32>
    tpu.vector_store %arg5[%c0_31, %c5376_32], %36 {strides = array<i32>} : memref<8x12544xf32, #tpu.memory_space<vmem>>, vector<8x1792xf32>,
    %c0_33 = arith.constant 0 : index
    %c7168 = arith.constant 7168 : index
    %38 = vector.load %arg2[%c0_33, %c7168] : memref<64x12544xbf16, #tpu.memory_space<vmem>>, vector<64x1792xbf16>
    %cst_34 = arith.constant dense<0.000000e+00> : vector<8x1792xf32>
    %39 = tpu.matmul %1, %38, %cst_34 {dimension_numbers = #tpu.dot_dimension_numbers<[1], [0], [0], [1], [0, 0, 1, 1], [], []>} : vector<8x64xbf16>, vector<64x1792xbf16>, vector<8x1792xf32> -> vector<8x1792xf32>
    %c0_35 = arith.constant 0 : index
    %c7168_36 = arith.constant 7168 : index
    %40 = vector.load %arg3[%c0_35, %c7168_36] : memref<1x12544xf32, #tpu.memory_space<vmem>>, vector<1x1792xf32>
    %41 = vector.broadcast %40 : vector<1x1792xf32> to vector<8x1792xf32>
    %42 = arith.mulf %39, %41 : vector<8x1792xf32>
    %c0_37 = arith.constant 0 : index
    %c7168_38 = arith.constant 7168 : index
    %43 = vector.load %arg4[%c0_37, %c7168_38] : memref<1x12544xf32, #tpu.memory_space<vmem>>, vector<1x1792xf32>
    %44 = vector.broadcast %43 : vector<1x1792xf32> to vector<8x1792xf32>
    %45 = arith.addf %42, %44 : vector<8x1792xf32>
    %c0_39 = arith.constant 0 : index
    %c7168_40 = arith.constant 7168 : index
    %46 = vector.load %arg5[%c0_39, %c7168_40] : memref<8x12544xf32, #tpu.memory_space<vmem>>, vector<8x1792xf32>
    tpu.vector_store %arg5[%c0_39, %c7168_40], %45 {strides = array<i32>} : memref<8x12544xf32, #tpu.memory_space<vmem>>, vector<8x1792xf32>,
    %c0_41 = arith.constant 0 : index
    %c8960 = arith.constant 8960 : index
    %47 = vector.load %arg2[%c0_41, %c8960] : memref<64x12544xbf16, #tpu.memory_space<vmem>>, vector<64x1792xbf16>
    %cst_42 = arith.constant dense<0.000000e+00> : vector<8x1792xf32>
    %48 = tpu.matmul %1, %47, %cst_42 {dimension_numbers = #tpu.dot_dimension_numbers<[1], [0], [0], [1], [0, 0, 1, 1], [], []>} : vector<8x64xbf16>, vector<64x1792xbf16>, vector<8x1792xf32> -> vector<8x1792xf32>
    %c0_43 = arith.constant 0 : index
    %c8960_44 = arith.constant 8960 : index
    %49 = vector.load %arg3[%c0_43, %c8960_44] : memref<1x12544xf32, #tpu.memory_space<vmem>>, vector<1x1792xf32>
    %50 = vector.broadcast %49 : vector<1x1792xf32> to vector<8x1792xf32>
    %51 = arith.mulf %48, %50 : vector<8x1792xf32>
    %c0_45 = arith.constant 0 : index
    %c8960_46 = arith.constant 8960 : index
    %52 = vector.load %arg4[%c0_45, %c8960_46] : memref<1x12544xf32, #tpu.memory_space<vmem>>, vector<1x1792xf32>
    %53 = vector.broadcast %52 : vector<1x1792xf32> to vector<8x1792xf32>
    %54 = arith.addf %51, %53 : vector<8x1792xf32>
    %c0_47 = arith.constant 0 : index
    %c8960_48 = arith.constant 8960 : index
    %55 = vector.load %arg5[%c0_47, %c8960_48] : memref<8x12544xf32, #tpu.memory_space<vmem>>, vector<8x1792xf32>
    tpu.vector_store %arg5[%c0_47, %c8960_48], %54 {strides = array<i32>} : memref<8x12544xf32, #tpu.memory_space<vmem>>, vector<8x1792xf32>,
    %c0_49 = arith.constant 0 : index
    %c10752 = arith.constant 10752 : index
    %56 = vector.load %arg2[%c0_49, %c10752] : memref<64x12544xbf16, #tpu.memory_space<vmem>>, vector<64x1792xbf16>
    %cst_50 = arith.constant dense<0.000000e+00> : vector<8x1792xf32>
    %57 = tpu.matmul %1, %56, %cst_50 {dimension_numbers = #tpu.dot_dimension_numbers<[1], [0], [0], [1], [0, 0, 1, 1], [], []>} : vector<8x64xbf16>, vector<64x1792xbf16>, vector<8x1792xf32> -> vector<8x1792xf32>
    %c0_51 = arith.constant 0 : index
    %c10752_52 = arith.constant 10752 : index
    %58 = vector.load %arg3[%c0_51, %c10752_52] : memref<1x12544xf32, #tpu.memory_space<vmem>>, vector<1x1792xf32>
    %59 = vector.broadcast %58 : vector<1x1792xf32> to vector<8x1792xf32>
    %60 = arith.mulf %57, %59 : vector<8x1792xf32>
    %c0_53 = arith.constant 0 : index
    %c10752_54 = arith.constant 10752 : index
    %61 = vector.load %arg4[%c0_53, %c10752_54] : memref<1x12544xf32, #tpu.memory_space<vmem>>, vector<1x1792xf32>
    %62 = vector.broadcast %61 : vector<1x1792xf32> to vector<8x1792xf32>
    %63 = arith.addf %60, %62 : vector<8x1792xf32>
    %c0_55 = arith.constant 0 : index
    %c10752_56 = arith.constant 10752 : index
    %64 = vector.load %arg5[%c0_55, %c10752_56] : memref<8x12544xf32, #tpu.memory_space<vmem>>, vector<8x1792xf32>
    tpu.vector_store %arg5[%c0_55, %c10752_56], %63 {strides = array<i32>} : memref<8x12544xf32, #tpu.memory_space<vmem>>, vector<8x1792xf32>,
    return
  }
  func.func @transform_0(%arg0: i32) -> (i32, i32) {
    %c0_i32 = arith.constant 0 : i32
    %c0_i32_0 = arith.constant 0 : i32
    %c0_i32_1 = arith.constant 0 : i32
    return %c0_i32, %c0_i32_0 : i32, i32
  }
  func.func @transform_1(%arg0: i32) -> (i32, i32) {
    %c0_i32 = arith.constant 0 : i32
    %c0_i32_0 = arith.constant 0 : i32
    return %c0_i32, %arg0 : i32, i32
  }
  func.func @transform_2(%arg0: i32) -> (i32, i32) {
    %c0_i32 = arith.constant 0 : i32
    %c0_i32_0 = arith.constant 0 : i32
    return %c0_i32, %arg0 : i32, i32
  }
  func.func @transform_3(%arg0: i32) -> (i32, i32) {
    %c0_i32 = arith.constant 0 : i32
    %c0_i32_0 = arith.constant 0 : i32
    return %c0_i32, %arg0 : i32, i32
  }
  func.func @transform_4(%arg0: i32) -> (i32, i32) {
    %c0_i32 = arith.constant 0 : i32
    %c0_i32_0 = arith.constant 0 : i32
    return %c0_i32, %arg0 : i32, i32
  }
}

</mosaic_0001>

<llo_original>
// kernel: classifier_forward.5
$region0: #{classifier_forward.5}
  #allocation0 [shape = 'u32[]', space=smem, size = 0x4, offset = 0x4, fixed_abs, tag = 'smem constant byte address 0x4 - core index']
  #allocation1 [shape = 'u32[72,128]{1,0:T(1,128)}', space=vmem, size = 0x9000, scoped, tag = 'internal scratch']
  %s0 = inlined_call_operand.vmem [shape: f32[128,32], index: 0, kind: input, shape index: {}]
  %s1 = inlined_call_operand.hbm [shape: bf16[32,32], index: 1, kind: input, shape index: {}]
  %s2 = inlined_call_operand.hbm [shape: f32[1,32], index: 2, kind: input, shape index: {}]
  %s3 = inlined_call_operand.hbm [shape: f32[1,32], index: 3, kind: input, shape index: {}]
  %s4 = inlined_call_operand.vmem [shape: bf16[32,16], index: 4, kind: input, shape index: {}]
  %s5 = inlined_call_operand.hbm [shape: f32[1,16], index: 5, kind: input, shape index: {}]
  %s6 = inlined_call_operand.hbm [shape: f32[1,16], index: 6, kind: input, shape index: {}]
  %s7 = inlined_call_operand.vmem [shape: bf16[128,32], index: 7, kind: output, shape index: {0}]
  %s8 = inlined_call_operand.vmem [shape: bf16[128,16], index: 8, kind: output, shape index: {1}]
  %9 = xla_tuple %s7, %s8
  %s10 = sld [smem:[#allocation0]]
  $region66: #{classifier_forward.5} parent=0
    _
  %s12 = ssub.s32 1, %s10
  %s13 = scalar_select 0, %s12, %s10
  $region1: #{classifier_forward.5} parent=0
    #allocation2 [shape = 'u8[8192]{0}', space=vmem, size = 0x2000, scoped, tag = 'input window, operand 1, single buffered']
    #allocation3 [shape = 's32[1]{0}', space=sflag, size = 0x4, scoped, tag = 'scoped memory for classifier_forward.5']
    #allocation4 [shape = 'u8[512]{0}', space=vmem, size = 0x400, scoped, tag = 'input window, operand 2, single buffered']
    #allocation5 [shape = 's32[1]{0}', space=sflag, size = 0x4, scoped, tag = 'scoped memory for classifier_forward.5']
    #allocation6 [shape = 'u8[512]{0}', space=vmem, size = 0x400, scoped, tag = 'input window, operand 3, single buffered']
    #allocation7 [shape = 'u8[512]{0}', space=vmem, size = 0x400, scoped, tag = 'input window, operand 5, single buffered']
    #allocation8 [shape = 's32[1]{0}', space=sflag, size = 0x4, scoped, tag = 'scoped memory for classifier_forward.5']
    #allocation9 [shape = 'u8[512]{0}', space=vmem, size = 0x400, scoped, tag = 'input window, operand 6, single buffered']
    %14 = vsyncpa [#allocation3], 0
    %15 = vsyncpa [#allocation5], 0
    %16 = vsyncpa [#allocation8], 0
    // Predicated region
    $region2: #{classifier_forward.5} parent=1 // pred_check
      _
    $region3: #{classifier_forward.5} parent=1 // pred_check_branch
      %18 = sbr.rel (0) target = $region5
    $region4: #{classifier_forward.5} parent=1 // pred_region
      _
    $region5: #{classifier_forward.5} parent=1 // pred_fallthru
      _
    // Predicated region
    $region6: #{classifier_forward.5} parent=1 // pred_check
      _
    $region7: #{classifier_forward.5} parent=1 // pred_check_branch
      %20 = sbr.rel (0) target = $region9
    $region8: #{classifier_forward.5} parent=1 // pred_region
      %22 = vsyncadd [#allocation3], 0
      %s23 = sshll.u32 %s1, 4
      %s24 = int_to_ptr.hbm [resolvable:$true] %s23
      %s25 = sshll.u32 [#allocation2], 4
      %s26 = int_to_ptr.vmem [resolvable:$true] %s25
      %31 = dma.hbm_to_vmem [thread:$0]  %s24, 256, %s26, [#allocation3], 64, 64, 4
    $region9: #{classifier_forward.5} parent=1 // pred_fallthru
      _
    // Predicated region
    $region10: #{classifier_forward.5} parent=1 // pred_check
      _
    $region11: #{classifier_forward.5} parent=1 // pred_check_branch
      %33 = sbr.rel (0) target = $region13
    $region12: #{classifier_forward.5} parent=1 // pred_region
      %35 = vsyncadd [#allocation5], 0
      %s37 = sshll.u32 %s2, 4
      %s38 = int_to_ptr.hbm [resolvable:$true] %s37
      %s39 = sshll.u32 [#allocation4], 4
      %s40 = int_to_ptr.vmem [resolvable:$true] %s39
      %42 = dma.hbm_to_vmem [thread:$0]  %s38, 16, %s40, [#allocation5]
    $region13: #{classifier_forward.5} parent=1 // pred_fallthru
      _
    // Predicated region
    $region14: #{classifier_forward.5} parent=1 // pred_check
      _
    $region15: #{classifier_forward.5} parent=1 // pred_check_branch
      %44 = sbr.rel (0) target = $region17
    $region16: #{classifier_forward.5} parent=1 // pred_region
      %46 = vsyncadd [#allocation5], 0
      %s48 = sshll.u32 %s3, 4
      %s49 = int_to_ptr.hbm [resolvable:$true] %s48
      %s50 = sshll.u32 [#allocation6], 4
      %s51 = int_to_ptr.vmem [resolvable:$true] %s50
      %53 = dma.hbm_to_vmem [thread:$0]  %s49, 16, %s51, [#allocation5]
    $region17: #{classifier_forward.5} parent=1 // pred_fallthru
      _
    // Predicated region
    $region18: #{classifier_forward.5} parent=1 // pred_check
      _
    $region19: #{classifier_forward.5} parent=1 // pred_check_branch
      %55 = sbr.rel (0) target = $region21
    $region20: #{classifier_forward.5} parent=1 // pred_region
      _
    $region21: #{classifier_forward.5} parent=1 // pred_fallthru
      _
    // Predicated region
    $region22: #{classifier_forward.5} parent=1 // pred_check
      _
    $region23: #{classifier_forward.5} parent=1 // pred_check_branch
      %57 = sbr.rel (0) target = $region25
    $region24: #{classifier_forward.5} parent=1 // pred_region
      %59 = vsyncadd [#allocation8], 0
      %s61 = sshll.u32 %s5, 4
      %s62 = int_to_ptr.hbm [resolvable:$true] %s61
      %s63 = sshll.u32 [#allocation7], 4
      %s64 = int_to_ptr.vmem [resolvable:$true] %s63
      %66 = dma.hbm_to_vmem [thread:$0]  %s62, 16, %s64, [#allocation8]
    $region25: #{classifier_forward.5} parent=1 // pred_fallthru
      _
    // Predicated region
    $region26: #{classifier_forward.5} parent=1 // pred_check
      _
    $region27: #{classifier_forward.5} parent=1 // pred_check_branch
      %68 = sbr.rel (0) target = $region29
    $region28: #{classifier_forward.5} parent=1 // pred_region
      %70 = vsyncadd [#allocation8], 0
      %s72 = sshll.u32 %s6, 4
      %s73 = int_to_ptr.hbm [resolvable:$true] %s72
      %s74 = sshll.u32 [#allocation9], 4
      %s75 = int_to_ptr.vmem [resolvable:$true] %s74
      %77 = dma.hbm_to_vmem [thread:$0]  %s73, 16, %s75, [#allocation8]
    $region29: #{classifier_forward.5} parent=1 // pred_fallthru
      _
    // Predicated region
    $region30: #{classifier_forward.5} parent=1 // pred_check
      _
    $region31: #{classifier_forward.5} parent=1 // pred_check_branch
      %79 = sbr.rel (0) target = $region33
    $region32: #{classifier_forward.5} parent=1 // pred_region
      %81 = dma.done [#allocation3], 256
    $region33: #{classifier_forward.5} parent=1 // pred_fallthru
      _
    // Predicated region
    $region34: #{classifier_forward.5} parent=1 // pred_check
      _
    $region35: #{classifier_forward.5} parent=1 // pred_check_branch
      %83 = sbr.rel (0) target = $region37
    $region36: #{classifier_forward.5} parent=1 // pred_region
      %85 = dma.done [#allocation5], 16
    $region37: #{classifier_forward.5} parent=1 // pred_fallthru
      _
    // Predicated region
    $region38: #{classifier_forward.5} parent=1 // pred_check
      _
    $region39: #{classifier_forward.5} parent=1 // pred_check_branch
      %87 = sbr.rel (0) target = $region41
    $region40: #{classifier_forward.5} parent=1 // pred_region
      %89 = dma.done [#allocation5], 16
    $region41: #{classifier_forward.5} parent=1 // pred_fallthru
      _
    // Predicated region
    $region42: #{classifier_forward.5} parent=1 // pred_check
      _
    $region43: #{classifier_forward.5} parent=1 // pred_check_branch
      %91 = sbr.rel (0) target = $region45
    $region44: #{classifier_forward.5} parent=1 // pred_region
      %93 = dma.done [#allocation8], 16
    $region45: #{classifier_forward.5} parent=1 // pred_fallthru
      _
    // Predicated region
    $region46: #{classifier_forward.5} parent=1 // pred_check
      _
    $region47: #{classifier_forward.5} parent=1 // pred_check_branch
      %95 = sbr.rel (0) target = $region49
    $region48: #{classifier_forward.5} parent=1 // pred_region
      %97 = dma.done [#allocation8], 16
    $region49: #{classifier_forward.5} parent=1 // pred_fallthru
      _
    %v99 = vld [vmem:[%s0] sm:$0xff]
    %v100 = vld [vmem:[%s0 + $0x8] sm:$0xff]
    %v101 = vld [vmem:[%s0 + $0x10] sm:$0xff]
    %v102 = vld [vmem:[%s0 + $0x18] sm:$0xff]
    %v103 = vld [vmem:[%s0 + $0x20] sm:$0xff]
    %v104 = vld [vmem:[%s0 + $0x28] sm:$0xff]
    %v105 = vld [vmem:[%s0 + $0x30] sm:$0xff]
    %v106 = vld [vmem:[%s0 + $0x38] sm:$0xff]
    %v107 = vld [vmem:[%s0 + $0x40] sm:$0xff]
    %v108 = vld [vmem:[%s0 + $0x48] sm:$0xff]
    %v109 = vld [vmem:[%s0 + $0x50] sm:$0xff]
    %v110 = vld [vmem:[%s0 + $0x58] sm:$0xff]
    %v111 = vld [vmem:[%s0 + $0x60] sm:$0xff]
    %v112 = vld [vmem:[%s0 + $0x68] sm:$0xff]
    %v113 = vld [vmem:[%s0 + $0x70] sm:$0xff]
    %v114 = vld [vmem:[%s0 + $0x78] sm:$0xff]
    %v115 = vpack.c.bf16 %v100, %v99
    %v116 = vpack.c.bf16 %v102, %v101
    %v117 = vpack.c.bf16 %v104, %v103
    %v118 = vpack.c.bf16 %v106, %v105
    %v119 = vpack.c.bf16 %v108, %v107
    %v120 = vpack.c.bf16 %v110, %v109
    %v121 = vpack.c.bf16 %v112, %v111
    %v122 = vpack.c.bf16 %v114, %v113
    %v123 = vld [vmem:[#allocation2] sm:$0xf]
    %v124 = vld [vmem:[#allocation2 + $0x4] sm:$0xf]
    %v125 = vld [vmem:[#allocation2 + $0x8] sm:$0xf]
    %v126 = vld [vmem:[#allocation2 + $0xc] sm:$0xf]
    %v131 = vunpack.c.l.b16 %v123
    %v132 = vunpack.c.l.b16 %v124
    %v133 = vunpack.c.l.b16 %v125
    %v134 = vunpack.c.l.b16 %v126
    %v135 = vpack.c.b16 %v132, %v131
    %v136 = vpack.c.b16 %v134, %v133
    %vm139 = vcmask 261120
    %v141 = vsel %vm139, %v115, 0
    %v144 = vsel %vm139, %v116, 0
    %v147 = vsel %vm139, %v117, 0
    %v150 = vsel %vm139, %v118, 0
    %v153 = vsel %vm139, %v119, 0
    %v156 = vsel %vm139, %v120, 0
    %v159 = vsel %vm139, %v121, 0
    %v162 = vsel %vm139, %v122, 0
    %164 = vmatpush.bf16.msra.mxu0 0
    %165 = vmatpush.bf16.msra.mxu0 0
    %166 = vmatpush.bf16.msra.mxu0 0
    %167 = vmatpush.bf16.msra.mxu0 0
    %168 = vmatpush.bf16.msra.mxu0 0
    %169 = vmatpush.bf16.msra.mxu0 0
    %170 = vmatpush.bf16.msra.mxu0 %v136
    %171 = vmatpush.bf16.msra.mxu0 %v135
    %172 = vmatmul.bf16.gmra.mxu0 %v141
    %v173 = vpop.f32.mrf.mxu0
    %v174 = vadd.f32 0.0, %v173
    %v175 = vpop.f32.mrf.mxu0
    %v176 = vadd.f32 0.0, %v175
    %177 = vmatmul.bf16.gmra.mxu0 %v144
    %v178 = vpop.f32.mrf.mxu0
    %v179 = vadd.f32 0.0, %v178
    %v180 = vpop.f32.mrf.mxu0
    %v181 = vadd.f32 0.0, %v180
    %182 = vmatmul.bf16.gmra.mxu0 %v147
    %v183 = vpop.f32.mrf.mxu0
    %v184 = vadd.f32 0.0, %v183
    %v185 = vpop.f32.mrf.mxu0
    %v186 = vadd.f32 0.0, %v185
    %187 = vmatmul.bf16.gmra.mxu0 %v150
    %v188 = vpop.f32.mrf.mxu0
    %v189 = vadd.f32 0.0, %v188
    %v190 = vpop.f32.mrf.mxu0
    %v191 = vadd.f32 0.0, %v190
    %192 = vmatmul.bf16.gmra.mxu0 %v153
    %v193 = vpop.f32.mrf.mxu0
    %v194 = vadd.f32 0.0, %v193
    %v195 = vpop.f32.mrf.mxu0
    %v196 = vadd.f32 0.0, %v195
    %197 = vmatmul.bf16.gmra.mxu0 %v156
    %v198 = vpop.f32.mrf.mxu0
    %v199 = vadd.f32 0.0, %v198
    %v200 = vpop.f32.mrf.mxu0
    %v201 = vadd.f32 0.0, %v200
    %202 = vmatmul.bf16.gmra.mxu0 %v159
    %v203 = vpop.f32.mrf.mxu0
    %v204 = vadd.f32 0.0, %v203
    %v205 = vpop.f32.mrf.mxu0
    %v206 = vadd.f32 0.0, %v205
    %207 = vmatmul.bf16.gmra.mxu0 %v162
    %v208 = vpop.f32.mrf.mxu0
    %v209 = vadd.f32 0.0, %v208
    %v210 = vpop.f32.mrf.mxu0
    %v211 = vadd.f32 0.0, %v210
    %212 = vdwg.mxu0
    %v213 = vld [vmem:[#allocation4] sm:$0x1]
    %v215 = vperm.slane %v213, 0
    %v217 = vmul.f32 %v174, %v215
    %v218 = vmul.f32 %v176, %v215
    %v219 = vmul.f32 %v179, %v215
    %v220 = vmul.f32 %v181, %v215
    %v221 = vmul.f32 %v184, %v215
    %v222 = vmul.f32 %v186, %v215
    %v223 = vmul.f32 %v189, %v215
    %v224 = vmul.f32 %v191, %v215
    %v225 = vmul.f32 %v194, %v215
    %v226 = vmul.f32 %v196, %v215
    %v227 = vmul.f32 %v199, %v215
    %v228 = vmul.f32 %v201, %v215
    %v229 = vmul.f32 %v204, %v215
    %v230 = vmul.f32 %v206, %v215
    %v231 = vmul.f32 %v209, %v215
    %v232 = vmul.f32 %v211, %v215
    %v233 = vld [vmem:[#allocation6] sm:$0x1]
    %v235 = vperm.slane %v233, 0
    %v237 = vadd.f32 %v217, %v235
    %v238 = vadd.f32 %v218, %v235
    %v239 = vadd.f32 %v219, %v235
    %v240 = vadd.f32 %v220, %v235
    %v241 = vadd.f32 %v221, %v235
    %v242 = vadd.f32 %v222, %v235
    %v243 = vadd.f32 %v223, %v235
    %v244 = vadd.f32 %v224, %v235
    %v245 = vadd.f32 %v225, %v235
    %v246 = vadd.f32 %v226, %v235
    %v247 = vadd.f32 %v227, %v235
    %v248 = vadd.f32 %v228, %v235
    %v249 = vadd.f32 %v229, %v235
    %v250 = vadd.f32 %v230, %v235
    %v251 = vadd.f32 %v231, %v235
    %v252 = vadd.f32 %v232, %v235
    %v253 = vmax.f32 %v237, 0.0
    %v254 = vmax.f32 %v238, 0.0
    %v255 = vmax.f32 %v239, 0.0
    %v256 = vmax.f32 %v240, 0.0
    %v257 = vmax.f32 %v241, 0.0
    %v258 = vmax.f32 %v242, 0.0
    %v259 = vmax.f32 %v243, 0.0
    %v260 = vmax.f32 %v244, 0.0
    %v261 = vmax.f32 %v245, 0.0
    %v262 = vmax.f32 %v246, 0.0
    %v263 = vmax.f32 %v247, 0.0
    %v264 = vmax.f32 %v248, 0.0
    %v265 = vmax.f32 %v249, 0.0
    %v266 = vmax.f32 %v250, 0.0
    %v267 = vmax.f32 %v251, 0.0
    %v268 = vmax.f32 %v252, 0.0
    %v269 = vpack.c.bf16 %v253, %v253
    %v270 = vpack.c.bf16 %v254, %v254
    %v271 = vpack.c.bf16 %v255, %v255
    %v272 = vpack.c.bf16 %v256, %v256
    %v273 = vpack.c.bf16 %v257, %v257
    %v274 = vpack.c.bf16 %v258, %v258
    %v275 = vpack.c.bf16 %v259, %v259
    %v276 = vpack.c.bf16 %v260, %v260
    %v277 = vpack.c.bf16 %v261, %v261
    %v278 = vpack.c.bf16 %v262, %v262
    %v279 = vpack.c.bf16 %v263, %v263
    %v280 = vpack.c.bf16 %v264, %v264
    %v281 = vpack.c.bf16 %v265, %v265
    %v282 = vpack.c.bf16 %v266, %v266
    %v283 = vpack.c.bf16 %v267, %v267
    %v284 = vpack.c.bf16 %v268, %v268
    %vm285 = vcmask 257024
    %286 = vst.msk [vmem:[%s7] sm:$0xf] %vm285, %v269
    %287 = vst.msk [vmem:[%s7 + $0x4] sm:$0xf] %vm285, %v270
    %288 = vst.msk [vmem:[%s7 + $0x8] sm:$0xf] %vm285, %v271
    %289 = vst.msk [vmem:[%s7 + $0xc] sm:$0xf] %vm285, %v272
    %290 = vst.msk [vmem:[%s7 + $0x10] sm:$0xf] %vm285, %v273
    %291 = vst.msk [vmem:[%s7 + $0x14] sm:$0xf] %vm285, %v274
    %292 = vst.msk [vmem:[%s7 + $0x18] sm:$0xf] %vm285, %v275
    %293 = vst.msk [vmem:[%s7 + $0x1c] sm:$0xf] %vm285, %v276
    %294 = vst.msk [vmem:[%s7 + $0x20] sm:$0xf] %vm285, %v277
    %295 = vst.msk [vmem:[%s7 + $0x24] sm:$0xf] %vm285, %v278
    %296 = vst.msk [vmem:[%s7 + $0x28] sm:$0xf] %vm285, %v279
    %297 = vst.msk [vmem:[%s7 + $0x2c] sm:$0xf] %vm285, %v280
    %298 = vst.msk [vmem:[%s7 + $0x30] sm:$0xf] %vm285, %v281
    %299 = vst.msk [vmem:[%s7 + $0x34] sm:$0xf] %vm285, %v282
    %300 = vst.msk [vmem:[%s7 + $0x38] sm:$0xf] %vm285, %v283
    %301 = vst.msk [vmem:[%s7 + $0x3c] sm:$0xf] %vm285, %v284
    %v302 = vld [vmem:[%s4] sm:$0xf]
    %v303 = vld [vmem:[%s4 + $0x4] sm:$0xf]
    %v304 = vld [vmem:[%s4 + $0x8] sm:$0xf]
    %v305 = vld [vmem:[%s4 + $0xc] sm:$0xf]
    %v322 = vunpack.c.l.b16 %v269
    %v323 = vunpack.c.l.b16 %v270
    %v324 = vunpack.c.l.b16 %v271
    %v325 = vunpack.c.l.b16 %v272
    %v326 = vunpack.c.l.b16 %v273
    %v327 = vunpack.c.l.b16 %v274
    %v328 = vunpack.c.l.b16 %v275
    %v329 = vunpack.c.l.b16 %v276
    %v330 = vunpack.c.l.b16 %v277
    %v331 = vunpack.c.l.b16 %v278
    %v332 = vunpack.c.l.b16 %v279
    %v333 = vunpack.c.l.b16 %v280
    %v334 = vunpack.c.l.b16 %v281
    %v335 = vunpack.c.l.b16 %v282
    %v336 = vunpack.c.l.b16 %v283
    %v337 = vunpack.c.l.b16 %v284
    %v338 = vpack.c.b16 %v323, %v322
    %v339 = vpack.c.b16 %v325, %v324
    %v340 = vpack.c.b16 %v327, %v326
    %v341 = vpack.c.b16 %v329, %v328
    %v342 = vpack.c.b16 %v331, %v330
    %v343 = vpack.c.b16 %v333, %v332
    %v344 = vpack.c.b16 %v335, %v334
    %v345 = vpack.c.b16 %v337, %v336
    %v350 = vunpack.c.l.b16 %v302
    %v351 = vunpack.c.l.b16 %v303
    %v352 = vunpack.c.l.b16 %v304
    %v353 = vunpack.c.l.b16 %v305
    %v354 = vpack.c.b16 %v351, %v350
    %v355 = vpack.c.b16 %v353, %v352
    %v359 = vsel %vm139, %v338, 0
    %v362 = vsel %vm139, %v339, 0
    %v365 = vsel %vm139, %v340, 0
    %v368 = vsel %vm139, %v341, 0
    %v371 = vsel %vm139, %v342, 0
    %v374 = vsel %vm139, %v343, 0
    %v377 = vsel %vm139, %v344, 0
    %v380 = vsel %vm139, %v345, 0
    %382 = vmatpush.bf16.msra.mxu0 0
    %383 = vmatpush.bf16.msra.mxu0 0
    %384 = vmatpush.bf16.msra.mxu0 0
    %385 = vmatpush.bf16.msra.mxu0 0
    %386 = vmatpush.bf16.msra.mxu0 0
    %387 = vmatpush.bf16.msra.mxu0 0
    %388 = vmatpush.bf16.msra.mxu0 %v355
    %389 = vmatpush.bf16.msra.mxu0 %v354
    %390 = vmatmul.bf16.gmra.mxu0 %v359
    %v391 = vpop.f32.mrf.mxu0
    %v392 = vadd.f32 0.0, %v391
    %v393 = vpop.f32.mrf.mxu0
    %v394 = vadd.f32 0.0, %v393
    %395 = vmatmul.bf16.gmra.mxu0 %v362
    %v396 = vpop.f32.mrf.mxu0
    %v397 = vadd.f32 0.0, %v396
    %v398 = vpop.f32.mrf.mxu0
    %v399 = vadd.f32 0.0, %v398
    %400 = vmatmul.bf16.gmra.mxu0 %v365
    %v401 = vpop.f32.mrf.mxu0
    %v402 = vadd.f32 0.0, %v401
    %v403 = vpop.f32.mrf.mxu0
    %v404 = vadd.f32 0.0, %v403
    %405 = vmatmul.bf16.gmra.mxu0 %v368
    %v406 = vpop.f32.mrf.mxu0
    %v407 = vadd.f32 0.0, %v406
    %v408 = vpop.f32.mrf.mxu0
    %v409 = vadd.f32 0.0, %v408
    %410 = vmatmul.bf16.gmra.mxu0 %v371
    %v411 = vpop.f32.mrf.mxu0
    %v412 = vadd.f32 0.0, %v411
    %v413 = vpop.f32.mrf.mxu0
    %v414 = vadd.f32 0.0, %v413
    %415 = vmatmul.bf16.gmra.mxu0 %v374
    %v416 = vpop.f32.mrf.mxu0
    %v417 = vadd.f32 0.0, %v416
    %v418 = vpop.f32.mrf.mxu0
    %v419 = vadd.f32 0.0, %v418
    %420 = vmatmul.bf16.gmra.mxu0 %v377
    %v421 = vpop.f32.mrf.mxu0
    %v422 = vadd.f32 0.0, %v421
    %v423 = vpop.f32.mrf.mxu0
    %v424 = vadd.f32 0.0, %v423
    %425 = vmatmul.bf16.gmra.mxu0 %v380
    %v426 = vpop.f32.mrf.mxu0
    %v427 = vadd.f32 0.0, %v426
    %v428 = vpop.f32.mrf.mxu0
    %v429 = vadd.f32 0.0, %v428
    %430 = vdwg.mxu0
    %v431 = vld [vmem:[#allocation7] sm:$0x1]
    %v433 = vperm.slane %v431, 0
    %v435 = vmul.f32 %v392, %v433
    %v436 = vmul.f32 %v394, %v433
    %v437 = vmul.f32 %v397, %v433
    %v438 = vmul.f32 %v399, %v433
    %v439 = vmul.f32 %v402, %v433
    %v440 = vmul.f32 %v404, %v433
    %v441 = vmul.f32 %v407, %v433
    %v442 = vmul.f32 %v409, %v433
    %v443 = vmul.f32 %v412, %v433
    %v444 = vmul.f32 %v414, %v433
    %v445 = vmul.f32 %v417, %v433
    %v446 = vmul.f32 %v419, %v433
    %v447 = vmul.f32 %v422, %v433
    %v448 = vmul.f32 %v424, %v433
    %v449 = vmul.f32 %v427, %v433
    %v450 = vmul.f32 %v429, %v433
    %v451 = vld [vmem:[#allocation9] sm:$0x1]
    %v453 = vperm.slane %v451, 0
    %v455 = vadd.f32 %v435, %v453
    %v456 = vadd.f32 %v436, %v453
    %v457 = vadd.f32 %v437, %v453
    %v458 = vadd.f32 %v438, %v453
    %v459 = vadd.f32 %v439, %v453
    %v460 = vadd.f32 %v440, %v453
    %v461 = vadd.f32 %v441, %v453
    %v462 = vadd.f32 %v442, %v453
    %v463 = vadd.f32 %v443, %v453
    %v464 = vadd.f32 %v444, %v453
    %v465 = vadd.f32 %v445, %v453
    %v466 = vadd.f32 %v446, %v453
    %v467 = vadd.f32 %v447, %v453
    %v468 = vadd.f32 %v448, %v453
    %v469 = vadd.f32 %v449, %v453
    %v470 = vadd.f32 %v450, %v453
    %v471 = vmax.f32 %v455, 0.0
    %v472 = vmax.f32 %v456, 0.0
    %v473 = vmax.f32 %v457, 0.0
    %v474 = vmax.f32 %v458, 0.0
    %v475 = vmax.f32 %v459, 0.0
    %v476 = vmax.f32 %v460, 0.0
    %v477 = vmax.f32 %v461, 0.0
    %v478 = vmax.f32 %v462, 0.0
    %v479 = vmax.f32 %v463, 0.0
    %v480 = vmax.f32 %v464, 0.0
    %v481 = vmax.f32 %v465, 0.0
    %v482 = vmax.f32 %v466, 0.0
    %v483 = vmax.f32 %v467, 0.0
    %v484 = vmax.f32 %v468, 0.0
    %v485 = vmax.f32 %v469, 0.0
    %v486 = vmax.f32 %v470, 0.0
    %v487 = vpack.c.bf16 %v471, %v471
    %v488 = vpack.c.bf16 %v472, %v472
    %v489 = vpack.c.bf16 %v473, %v473
    %v490 = vpack.c.bf16 %v474, %v474
    %v491 = vpack.c.bf16 %v475, %v475
    %v492 = vpack.c.bf16 %v476, %v476
    %v493 = vpack.c.bf16 %v477, %v477
    %v494 = vpack.c.bf16 %v478, %v478
    %v495 = vpack.c.bf16 %v479, %v479
    %v496 = vpack.c.bf16 %v480, %v480
    %v497 = vpack.c.bf16 %v481, %v481
    %v498 = vpack.c.bf16 %v482, %v482
    %v499 = vpack.c.bf16 %v483, %v483
    %v500 = vpack.c.bf16 %v484, %v484
    %v501 = vpack.c.bf16 %v485, %v485
    %v502 = vpack.c.bf16 %v486, %v486
    %vm503 = vcmask 125952
    %504 = vst.msk [vmem:[%s8] sm:$0xf] %vm503, %v487
    %505 = vst.msk [vmem:[%s8 + $0x4] sm:$0xf] %vm503, %v488
    %506 = vst.msk [vmem:[%s8 + $0x8] sm:$0xf] %vm503, %v489
    %507 = vst.msk [vmem:[%s8 + $0xc] sm:$0xf] %vm503, %v490
    %508 = vst.msk [vmem:[%s8 + $0x10] sm:$0xf] %vm503, %v491
    %509 = vst.msk [vmem:[%s8 + $0x14] sm:$0xf] %vm503, %v492
    %510 = vst.msk [vmem:[%s8 + $0x18] sm:$0xf] %vm503, %v493
    %511 = vst.msk [vmem:[%s8 + $0x1c] sm:$0xf] %vm503, %v494
    %512 = vst.msk [vmem:[%s8 + $0x20] sm:$0xf] %vm503, %v495
    %513 = vst.msk [vmem:[%s8 + $0x24] sm:$0xf] %vm503, %v496
    %514 = vst.msk [vmem:[%s8 + $0x28] sm:$0xf] %vm503, %v497
    %515 = vst.msk [vmem:[%s8 + $0x2c] sm:$0xf] %vm503, %v498
    %516 = vst.msk [vmem:[%s8 + $0x30] sm:$0xf] %vm503, %v499
    %517 = vst.msk [vmem:[%s8 + $0x34] sm:$0xf] %vm503, %v500
    %518 = vst.msk [vmem:[%s8 + $0x38] sm:$0xf] %vm503, %v501
    %519 = vst.msk [vmem:[%s8 + $0x3c] sm:$0xf] %vm503, %v502
    // Predicated region
    $region50: #{classifier_forward.5} parent=1 // pred_check
      _
    $region51: #{classifier_forward.5} parent=1 // pred_check_branch
      %521 = sbr.rel (0) target = $region53
    $region52: #{classifier_forward.5} parent=1 // pred_region
      _
    $region53: #{classifier_forward.5} parent=1 // pred_fallthru
      _
    // Predicated region
    $region54: #{classifier_forward.5} parent=1 // pred_check
      _
    $region55: #{classifier_forward.5} parent=1 // pred_check_branch
      %523 = sbr.rel (0) target = $region57
    $region56: #{classifier_forward.5} parent=1 // pred_region
      _
    $region57: #{classifier_forward.5} parent=1 // pred_fallthru
      _
    // Predicated region
    $region58: #{classifier_forward.5} parent=1 // pred_check
      _
    $region59: #{classifier_forward.5} parent=1 // pred_check_branch
      %525 = sbr.rel (0) target = $region61
    $region60: #{classifier_forward.5} parent=1 // pred_region
      _
    $region61: #{classifier_forward.5} parent=1 // pred_fallthru
      _
    // Predicated region
    $region62: #{classifier_forward.5} parent=1 // pred_check
      _
    $region63: #{classifier_forward.5} parent=1 // pred_check_branch
      %527 = sbr.rel (0) target = $region65
    $region64: #{classifier_forward.5} parent=1 // pred_region
      _
    $region65: #{classifier_forward.5} parent=1 // pred_fallthru
      _
    %528 = vsyncpa [#allocation3], 1
    %529 = vsyncpa [#allocation5], 1
    %530 = vsyncpa [#allocation8], 1

// kernel: classifier_forward.6
$region0: #{classifier_forward.6}
  #allocation0 [shape = 'u32[]', space=smem, size = 0x4, offset = 0x4, fixed_abs, tag = 'smem constant byte address 0x4 - core index']
  #allocation1 [shape = 'u32[72,128]{1,0:T(1,128)}', space=vmem, size = 0x9000, scoped, tag = 'internal scratch']
  %s0 = inlined_call_operand.vmem [shape: bf16[128,144], index: 0, kind: input, shape index: {}]
  %s1 = inlined_call_operand.vmem [shape: bf16[144,32], index: 1, kind: input, shape index: {}]
  %s2 = inlined_call_operand.hbm [shape: f32[1,32], index: 2, kind: input, shape index: {}]
  %s3 = inlined_call_operand.hbm [shape: f32[1,32], index: 3, kind: input, shape index: {}]
  %s4 = inlined_call_operand.vmem [shape: bf16[128,32], index: 4, kind: output, shape index: {}]
  %s5 = sld [smem:[#allocation0]]
  $region34: #{classifier_forward.6} parent=0
    _
  %s7 = ssub.s32 1, %s5
  %s8 = scalar_select 0, %s7, %s5
  $region1: #{classifier_forward.6} parent=0
    #allocation2 [shape = 'u8[512]{0}', space=vmem, size = 0x400, scoped, tag = 'input window, operand 2, single buffered']
    #allocation3 [shape = 's32[1]{0}', space=sflag, size = 0x4, scoped, tag = 'scoped memory for classifier_forward.6']
    #allocation4 [shape = 'u8[512]{0}', space=vmem, size = 0x400, scoped, tag = 'input window, operand 3, single buffered']
    #allocation5 [shape = 's32[1]{0}', space=sflag, size = 0x4, scoped, tag = 'scoped memory for classifier_forward.6']
    %9 = vsyncpa [#allocation3], 0
    %10 = vsyncpa [#allocation5], 0
    // Predicated region
    $region2: #{classifier_forward.6} parent=1 // pred_check
      _
    $region3: #{classifier_forward.6} parent=1 // pred_check_branch
      %12 = sbr.rel (0) target = $region5
    $region4: #{classifier_forward.6} parent=1 // pred_region
      _
    $region5: #{classifier_forward.6} parent=1 // pred_fallthru
      _
    // Predicated region
    $region6: #{classifier_forward.6} parent=1 // pred_check
      _
    $region7: #{classifier_forward.6} parent=1 // pred_check_branch
      %14 = sbr.rel (0) target = $region9
    $region8: #{classifier_forward.6} parent=1 // pred_region
      _
    $region9: #{classifier_forward.6} parent=1 // pred_fallthru
      _
    // Predicated region
    $region10: #{classifier_forward.6} parent=1 // pred_check
      _
    $region11: #{classifier_forward.6} parent=1 // pred_check_branch
      %16 = sbr.rel (0) target = $region13
    $region12: #{classifier_forward.6} parent=1 // pred_region
      %18 = vsyncadd [#allocation3], 0
      %s20 = sshll.u32 %s2, 4
      %s21 = int_to_ptr.hbm [resolvable:$true] %s20
      %s22 = sshll.u32 [#allocation2], 4
      %s23 = int_to_ptr.vmem [resolvable:$true] %s22
      %25 = dma.hbm_to_vmem [thread:$0]  %s21, 16, %s23, [#allocation3]
    $region13: #{classifier_forward.6} parent=1 // pred_fallthru
      _
    // Predicated region
    $region14: #{classifier_forward.6} parent=1 // pred_check
      _
    $region15: #{classifier_forward.6} parent=1 // pred_check_branch
      %27 = sbr.rel (0) target = $region17
    $region16: #{classifier_forward.6} parent=1 // pred_region
      %29 = vsyncadd [#allocation5], 0
      %s31 = sshll.u32 %s3, 4
      %s32 = int_to_ptr.hbm [resolvable:$true] %s31
      %s33 = sshll.u32 [#allocation4], 4
      %s34 = int_to_ptr.vmem [resolvable:$true] %s33
      %36 = dma.hbm_to_vmem [thread:$0]  %s32, 16, %s34, [#allocation5]
    $region17: #{classifier_forward.6} parent=1 // pred_fallthru
      _
    // Predicated region
    $region18: #{classifier_forward.6} parent=1 // pred_check
      _
    $region19: #{classifier_forward.6} parent=1 // pred_check_branch
      %38 = sbr.rel (0) target = $region21
    $region20: #{classifier_forward.6} parent=1 // pred_region
      %40 = dma.done [#allocation3], 16
    $region21: #{classifier_forward.6} parent=1 // pred_fallthru
      _
    // Predicated region
    $region22: #{classifier_forward.6} parent=1 // pred_check
      _
    $region23: #{classifier_forward.6} parent=1 // pred_check_branch
      %42 = sbr.rel (0) target = $region25
    $region24: #{classifier_forward.6} parent=1 // pred_region
      %44 = dma.done [#allocation5], 16
    $region25: #{classifier_forward.6} parent=1 // pred_fallthru
      _
    %v46 = vld [vmem:[%s0] sm:$0xff]
    %v47 = vld [vmem:[%s0 + $0x8] sm:$0xff]
    %v48 = vld [vmem:[%s0 + $0x10] sm:$0xff]
    %v49 = vld [vmem:[%s0 + $0x18] sm:$0xff]
    %v50 = vld [vmem:[%s0 + $0x20] sm:$0xff]
    %v51 = vld [vmem:[%s0 + $0x28] sm:$0xff]
    %v52 = vld [vmem:[%s0 + $0x30] sm:$0xff]
    %v53 = vld [vmem:[%s0 + $0x38] sm:$0xff]
    %v54 = vld [vmem:[%s0 + $0x40] sm:$0xff]
    %v55 = vld [vmem:[%s0 + $0x48] sm:$0xff]
    %v56 = vld [vmem:[%s0 + $0x50] sm:$0xff]
    %v57 = vld [vmem:[%s0 + $0x58] sm:$0xff]
    %v58 = vld [vmem:[%s0 + $0x60] sm:$0xff]
    %v59 = vld [vmem:[%s0 + $0x68] sm:$0xff]
    %v60 = vld [vmem:[%s0 + $0x70] sm:$0xff]
    %v61 = vld [vmem:[%s0 + $0x78] sm:$0xff]
    %v62 = vld [vmem:[%s1] sm:$0xf]
    %v63 = vld [vmem:[%s1 + $0x4] sm:$0xf]
    %v64 = vld [vmem:[%s1 + $0x8] sm:$0xf]
    %v65 = vld [vmem:[%s1 + $0xc] sm:$0xf]
    %v66 = vld [vmem:[%s1 + $0x10] sm:$0xf]
    %v67 = vld [vmem:[%s1 + $0x14] sm:$0xf]
    %v68 = vld [vmem:[%s1 + $0x18] sm:$0xf]
    %v69 = vld [vmem:[%s1 + $0x1c] sm:$0xf]
    %v70 = vld [vmem:[%s1 + $0x20] sm:$0xf]
    %v71 = vld [vmem:[%s1 + $0x24] sm:$0xf]
    %v72 = vld [vmem:[%s1 + $0x28] sm:$0xf]
    %v73 = vld [vmem:[%s1 + $0x2c] sm:$0xf]
    %v74 = vld [vmem:[%s1 + $0x30] sm:$0xf]
    %v75 = vld [vmem:[%s1 + $0x34] sm:$0xf]
    %v76 = vld [vmem:[%s1 + $0x38] sm:$0xf]
    %v77 = vld [vmem:[%s1 + $0x3c] sm:$0xf]
    %v78 = vld [vmem:[%s1 + $0x40] sm:$0xf]
    %v79 = vld [vmem:[%s1 + $0x44] sm:$0xf]
    %v96 = vunpack.c.l.b16 %v46
    %v97 = vunpack.c.h.b16 %v46
    %v98 = vunpack.c.l.b16 %v47
    %v99 = vunpack.c.h.b16 %v47
    %v100 = vunpack.c.l.b16 %v48
    %v101 = vunpack.c.h.b16 %v48
    %v102 = vunpack.c.l.b16 %v49
    %v103 = vunpack.c.h.b16 %v49
    %v104 = vunpack.c.l.b16 %v50
    %v105 = vunpack.c.h.b16 %v50
    %v106 = vunpack.c.l.b16 %v51
    %v107 = vunpack.c.h.b16 %v51
    %v108 = vunpack.c.l.b16 %v52
    %v109 = vunpack.c.h.b16 %v52
    %v110 = vunpack.c.l.b16 %v53
    %v111 = vunpack.c.h.b16 %v53
    %v112 = vunpack.c.l.b16 %v54
    %v113 = vunpack.c.h.b16 %v54
    %v114 = vunpack.c.l.b16 %v55
    %v115 = vunpack.c.h.b16 %v55
    %v116 = vunpack.c.l.b16 %v56
    %v117 = vunpack.c.h.b16 %v56
    %v118 = vunpack.c.l.b16 %v57
    %v119 = vunpack.c.h.b16 %v57
    %v120 = vunpack.c.l.b16 %v58
    %v121 = vunpack.c.h.b16 %v58
    %v122 = vunpack.c.l.b16 %v59
    %v123 = vunpack.c.h.b16 %v59
    %v124 = vunpack.c.l.b16 %v60
    %v125 = vunpack.c.h.b16 %v60
    %v126 = vunpack.c.l.b16 %v61
    %v127 = vunpack.c.h.b16 %v61
    %v128 = vpack.c.b16 %v98, %v96
    %v129 = vpack.c.b16 %v99, %v97
    %v130 = vpack.c.b16 %v102, %v100
    %v131 = vpack.c.b16 %v103, %v101
    %v132 = vpack.c.b16 %v106, %v104
    %v133 = vpack.c.b16 %v107, %v105
    %v134 = vpack.c.b16 %v110, %v108
    %v135 = vpack.c.b16 %v111, %v109
    %v136 = vpack.c.b16 %v114, %v112
    %v137 = vpack.c.b16 %v115, %v113
    %v138 = vpack.c.b16 %v118, %v116
    %v139 = vpack.c.b16 %v119, %v117
    %v140 = vpack.c.b16 %v122, %v120
    %v141 = vpack.c.b16 %v123, %v121
    %v142 = vpack.c.b16 %v126, %v124
    %v143 = vpack.c.b16 %v127, %v125
    %v170 = vunpack.c.l.b16 %v62
    %v171 = vunpack.c.l.b16 %v63
    %v172 = vunpack.c.l.b16 %v64
    %v173 = vunpack.c.l.b16 %v65
    %v174 = vunpack.c.l.b16 %v66
    %v175 = vunpack.c.l.b16 %v67
    %v176 = vunpack.c.l.b16 %v68
    %v177 = vunpack.c.l.b16 %v69
    %v178 = vunpack.c.l.b16 %v70
    %v179 = vunpack.c.l.b16 %v71
    %v180 = vunpack.c.l.b16 %v72
    %v181 = vunpack.c.l.b16 %v73
    %v182 = vunpack.c.l.b16 %v74
    %v183 = vunpack.c.l.b16 %v75
    %v184 = vunpack.c.l.b16 %v76
    %v185 = vunpack.c.l.b16 %v77
    %v186 = vunpack.c.l.b16 %v78
    %v187 = vunpack.c.l.b16 %v79
    %v188 = vpack.c.b16 %v171, %v170
    %v189 = vpack.c.b16 %v173, %v172
    %v190 = vpack.c.b16 %v175, %v174
    %v191 = vpack.c.b16 %v177, %v176
    %v192 = vpack.c.b16 %v179, %v178
    %v193 = vpack.c.b16 %v181, %v180
    %v194 = vpack.c.b16 %v183, %v182
    %v195 = vpack.c.b16 %v185, %v184
    %v196 = vpack.c.b16 %v187, %v186
    %vm206 = vcmask 130048
    %v208 = vsel %vm206, %v129, 0
    %v211 = vsel %vm206, %v131, 0
    %v214 = vsel %vm206, %v133, 0
    %v217 = vsel %vm206, %v135, 0
    %v220 = vsel %vm206, %v137, 0
    %v223 = vsel %vm206, %v139, 0
    %v226 = vsel %vm206, %v141, 0
    %v229 = vsel %vm206, %v143, 0
    %231 = vmatpush.bf16.msra.mxu0 %v195
    %232 = vmatpush.bf16.msra.mxu0 %v194
    %233 = vmatpush.bf16.msra.mxu0 %v193
    %234 = vmatpush.bf16.msra.mxu0 %v192
    %235 = vmatpush.bf16.msra.mxu0 %v191
    %236 = vmatpush.bf16.msra.mxu0 %v190
    %237 = vmatpush.bf16.msra.mxu0 %v189
    %238 = vmatpush.bf16.msra.mxu0 %v188
    %239 = vmatmul.bf16.gmra.mxu0 %v128
    %v240 = vpop.f32.mrf.mxu0
    %v241 = vadd.f32 0.0, %v240
    %v242 = vpop.f32.mrf.mxu0
    %v243 = vadd.f32 0.0, %v242
    %244 = vmatmul.bf16.gmra.mxu0 %v130
    %v245 = vpop.f32.mrf.mxu0
    %v246 = vadd.f32 0.0, %v245
    %v247 = vpop.f32.mrf.mxu0
    %v248 = vadd.f32 0.0, %v247
    %249 = vmatmul.bf16.gmra.mxu0 %v132
    %v250 = vpop.f32.mrf.mxu0
    %v251 = vadd.f32 0.0, %v250
    %v252 = vpop.f32.mrf.mxu0
    %v253 = vadd.f32 0.0, %v252
    %254 = vmatmul.bf16.gmra.mxu0 %v134
    %v255 = vpop.f32.mrf.mxu0
    %v256 = vadd.f32 0.0, %v255
    %v257 = vpop.f32.mrf.mxu0
    %v258 = vadd.f32 0.0, %v257
    %259 = vmatmul.bf16.gmra.mxu0 %v136
    %v260 = vpop.f32.mrf.mxu0
    %v261 = vadd.f32 0.0, %v260
    %v262 = vpop.f32.mrf.mxu0
    %v263 = vadd.f32 0.0, %v262
    %264 = vmatmul.bf16.gmra.mxu0 %v138
    %v265 = vpop.f32.mrf.mxu0
    %v266 = vadd.f32 0.0, %v265
    %v267 = vpop.f32.mrf.mxu0
    %v268 = vadd.f32 0.0, %v267
    %269 = vmatmul.bf16.gmra.mxu0 %v140
    %v270 = vpop.f32.mrf.mxu0
    %v271 = vadd.f32 0.0, %v270
    %v272 = vpop.f32.mrf.mxu0
    %v273 = vadd.f32 0.0, %v272
    %274 = vmatmul.bf16.gmra.mxu0 %v142
    %v275 = vpop.f32.mrf.mxu0
    %v276 = vadd.f32 0.0, %v275
    %v277 = vpop.f32.mrf.mxu0
    %v278 = vadd.f32 0.0, %v277
    %279 = vdwg.mxu0
    %280 = vmatpush.bf16.msra.mxu0 0
    %281 = vmatpush.bf16.msra.mxu0 0
    %282 = vmatpush.bf16.msra.mxu0 0
    %283 = vmatpush.bf16.msra.mxu0 0
    %284 = vmatpush.bf16.msra.mxu0 0
    %285 = vmatpush.bf16.msra.mxu0 0
    %286 = vmatpush.bf16.msra.mxu0 0
    %287 = vmatpush.bf16.msra.mxu0 %v196
    %288 = vmatmul.bf16.gmra.mxu0 %v208
    %v289 = vpop.f32.mrf.mxu0
    %v290 = vadd.f32 %v241, %v289
    %v291 = vpop.f32.mrf.mxu0
    %v292 = vadd.f32 %v243, %v291
    %293 = vmatmul.bf16.gmra.mxu0 %v211
    %v294 = vpop.f32.mrf.mxu0
    %v295 = vadd.f32 %v246, %v294
    %v296 = vpop.f32.mrf.mxu0
    %v297 = vadd.f32 %v248, %v296
    %298 = vmatmul.bf16.gmra.mxu0 %v214
    %v299 = vpop.f32.mrf.mxu0
    %v300 = vadd.f32 %v251, %v299
    %v301 = vpop.f32.mrf.mxu0
    %v302 = vadd.f32 %v253, %v301
    %303 = vmatmul.bf16.gmra.mxu0 %v217
    %v304 = vpop.f32.mrf.mxu0
    %v305 = vadd.f32 %v256, %v304
    %v306 = vpop.f32.mrf.mxu0
    %v307 = vadd.f32 %v258, %v306
    %308 = vmatmul.bf16.gmra.mxu0 %v220
    %v309 = vpop.f32.mrf.mxu0
    %v310 = vadd.f32 %v261, %v309
    %v311 = vpop.f32.mrf.mxu0
    %v312 = vadd.f32 %v263, %v311
    %313 = vmatmul.bf16.gmra.mxu0 %v223
    %v314 = vpop.f32.mrf.mxu0
    %v315 = vadd.f32 %v266, %v314
    %v316 = vpop.f32.mrf.mxu0
    %v317 = vadd.f32 %v268, %v316
    %318 = vmatmul.bf16.gmra.mxu0 %v226
    %v319 = vpop.f32.mrf.mxu0
    %v320 = vadd.f32 %v271, %v319
    %v321 = vpop.f32.mrf.mxu0
    %v322 = vadd.f32 %v273, %v321
    %323 = vmatmul.bf16.gmra.mxu0 %v229
    %v324 = vpop.f32.mrf.mxu0
    %v325 = vadd.f32 %v276, %v324
    %v326 = vpop.f32.mrf.mxu0
    %v327 = vadd.f32 %v278, %v326
    %328 = vdwg.mxu0
    %v329 = vld [vmem:[#allocation2] sm:$0x1]
    %v331 = vperm.slane %v329, 0
    %v333 = vmul.f32 %v290, %v331
    %v334 = vmul.f32 %v292, %v331
    %v335 = vmul.f32 %v295, %v331
    %v336 = vmul.f32 %v297, %v331
    %v337 = vmul.f32 %v300, %v331
    %v338 = vmul.f32 %v302, %v331
    %v339 = vmul.f32 %v305, %v331
    %v340 = vmul.f32 %v307, %v331
    %v341 = vmul.f32 %v310, %v331
    %v342 = vmul.f32 %v312, %v331
    %v343 = vmul.f32 %v315, %v331
    %v344 = vmul.f32 %v317, %v331
    %v345 = vmul.f32 %v320, %v331
    %v346 = vmul.f32 %v322, %v331
    %v347 = vmul.f32 %v325, %v331
    %v348 = vmul.f32 %v327, %v331
    %v349 = vld [vmem:[#allocation4] sm:$0x1]
    %v351 = vperm.slane %v349, 0
    %v353 = vadd.f32 %v333, %v351
    %v354 = vadd.f32 %v334, %v351
    %v355 = vadd.f32 %v335, %v351
    %v356 = vadd.f32 %v336, %v351
    %v357 = vadd.f32 %v337, %v351
    %v358 = vadd.f32 %v338, %v351
    %v359 = vadd.f32 %v339, %v351
    %v360 = vadd.f32 %v340, %v351
    %v361 = vadd.f32 %v341, %v351
    %v362 = vadd.f32 %v342, %v351
    %v363 = vadd.f32 %v343, %v351
    %v364 = vadd.f32 %v344, %v351
    %v365 = vadd.f32 %v345, %v351
    %v366 = vadd.f32 %v346, %v351
    %v367 = vadd.f32 %v347, %v351
    %v368 = vadd.f32 %v348, %v351
    %v369 = vmax.f32 %v353, 0.0
    %v370 = vmax.f32 %v354, 0.0
    %v371 = vmax.f32 %v355, 0.0
    %v372 = vmax.f32 %v356, 0.0
    %v373 = vmax.f32 %v357, 0.0
    %v374 = vmax.f32 %v358, 0.0
    %v375 = vmax.f32 %v359, 0.0
    %v376 = vmax.f32 %v360, 0.0
    %v377 = vmax.f32 %v361, 0.0
    %v378 = vmax.f32 %v362, 0.0
    %v379 = vmax.f32 %v363, 0.0
    %v380 = vmax.f32 %v364, 0.0
    %v381 = vmax.f32 %v365, 0.0
    %v382 = vmax.f32 %v366, 0.0
    %v383 = vmax.f32 %v367, 0.0
    %v384 = vmax.f32 %v368, 0.0
    %v385 = vpack.c.bf16 %v369, %v369
    %v386 = vpack.c.bf16 %v370, %v370
    %v387 = vpack.c.bf16 %v371, %v371
    %v388 = vpack.c.bf16 %v372, %v372
    %v389 = vpack.c.bf16 %v373, %v373
    %v390 = vpack.c.bf16 %v374, %v374
    %v391 = vpack.c.bf16 %v375, %v375
    %v392 = vpack.c.bf16 %v376, %v376
    %v393 = vpack.c.bf16 %v377, %v377
    %v394 = vpack.c.bf16 %v378, %v378
    %v395 = vpack.c.bf16 %v379, %v379
    %v396 = vpack.c.bf16 %v380, %v380
    %v397 = vpack.c.bf16 %v381, %v381
    %v398 = vpack.c.bf16 %v382, %v382
    %v399 = vpack.c.bf16 %v383, %v383
    %v400 = vpack.c.bf16 %v384, %v384
    %vm401 = vcmask 257024
    %402 = vst.msk [vmem:[%s4] sm:$0xf] %vm401, %v385
    %403 = vst.msk [vmem:[%s4 + $0x4] sm:$0xf] %vm401, %v386
    %404 = vst.msk [vmem:[%s4 + $0x8] sm:$0xf] %vm401, %v387
    %405 = vst.msk [vmem:[%s4 + $0xc] sm:$0xf] %vm401, %v388
    %406 = vst.msk [vmem:[%s4 + $0x10] sm:$0xf] %vm401, %v389
    %407 = vst.msk [vmem:[%s4 + $0x14] sm:$0xf] %vm401, %v390
    %408 = vst.msk [vmem:[%s4 + $0x18] sm:$0xf] %vm401, %v391
    %409 = vst.msk [vmem:[%s4 + $0x1c] sm:$0xf] %vm401, %v392
    %410 = vst.msk [vmem:[%s4 + $0x20] sm:$0xf] %vm401, %v393
    %411 = vst.msk [vmem:[%s4 + $0x24] sm:$0xf] %vm401, %v394
    %412 = vst.msk [vmem:[%s4 + $0x28] sm:$0xf] %vm401, %v395
    %413 = vst.msk [vmem:[%s4 + $0x2c] sm:$0xf] %vm401, %v396
    %414 = vst.msk [vmem:[%s4 + $0x30] sm:$0xf] %vm401, %v397
    %415 = vst.msk [vmem:[%s4 + $0x34] sm:$0xf] %vm401, %v398
    %416 = vst.msk [vmem:[%s4 + $0x38] sm:$0xf] %vm401, %v399
    %417 = vst.msk [vmem:[%s4 + $0x3c] sm:$0xf] %vm401, %v400
    // Predicated region
    $region26: #{classifier_forward.6} parent=1 // pred_check
      _
    $region27: #{classifier_forward.6} parent=1 // pred_check_branch
      %419 = sbr.rel (0) target = $region29
    $region28: #{classifier_forward.6} parent=1 // pred_region
      _
    $region29: #{classifier_forward.6} parent=1 // pred_fallthru
      _
    // Predicated region
    $region30: #{classifier_forward.6} parent=1 // pred_check
      _
    $region31: #{classifier_forward.6} parent=1 // pred_check_branch
      %421 = sbr.rel (0) target = $region33
    $region32: #{classifier_forward.6} parent=1 // pred_region
      _
    $region33: #{classifier_forward.6} parent=1 // pred_fallthru
      _
    %422 = vsyncpa [#allocation3], 1
    %423 = vsyncpa [#allocation5], 1

// kernel: classifier_forward.7
$region0: #{classifier_forward.7}
  #allocation0 [shape = 'u32[]', space=smem, size = 0x4, offset = 0x4, fixed_abs, tag = 'smem constant byte address 0x4 - core index']
  #allocation1 [shape = 'u32[72,128]{1,0:T(1,128)}', space=vmem, size = 0x9000, scoped, tag = 'internal scratch']
  %s0 = inlined_call_operand.vmem [shape: bf16[8,64,32], index: 0, kind: input, shape index: {}]
  %s1 = inlined_call_operand.hbm [shape: bf16[32,32], index: 1, kind: input, shape index: {}]
  %s2 = inlined_call_operand.hbm [shape: f32[1,32], index: 2, kind: input, shape index: {}]
  %s3 = inlined_call_operand.hbm [shape: f32[1,32], index: 3, kind: input, shape index: {}]
  %s4 = inlined_call_operand.hbm [shape: bf16[32,32], index: 4, kind: input, shape index: {}]
  %s5 = inlined_call_operand.hbm [shape: f32[1,32], index: 5, kind: input, shape index: {}]
  %s6 = inlined_call_operand.vmem [shape: bf16[8,64,16], index: 6, kind: output, shape index: {}]
  %s7 = sld [smem:[#allocation0]]
  $region54: #{classifier_forward.7} parent=0
    _
  %s9 = ssub.s32 1, %s7
  %s10 = scalar_select 0, %s9, %s7
  $region1: #{classifier_forward.7} parent=0
    #allocation2 [shape = 'u8[8192]{0}', space=vmem, size = 0x2000, scoped, tag = 'input window, operand 1, single buffered']
    #allocation3 [shape = 's32[1]{0}', space=sflag, size = 0x4, scoped, tag = 'scoped memory for classifier_forward.7']
    #allocation4 [shape = 'u8[512]{0}', space=vmem, size = 0x400, scoped, tag = 'input window, operand 2, single buffered']
    #allocation5 [shape = 's32[1]{0}', space=sflag, size = 0x4, scoped, tag = 'scoped memory for classifier_forward.7']
    #allocation6 [shape = 'u8[512]{0}', space=vmem, size = 0x400, scoped, tag = 'input window, operand 3, single buffered']
    #allocation7 [shape = 'u8[8192]{0}', space=vmem, size = 0x2000, scoped, tag = 'input window, operand 4, single buffered']
    #allocation8 [shape = 's32[1]{0}', space=sflag, size = 0x4, scoped, tag = 'scoped memory for classifier_forward.7']
    #allocation9 [shape = 'u8[512]{0}', space=vmem, size = 0x400, scoped, tag = 'input window, operand 5, single buffered']
    %11 = vsyncpa [#allocation3], 0
    %12 = vsyncpa [#allocation5], 0
    %13 = vsyncpa [#allocation8], 0
    // Predicated region
    $region2: #{classifier_forward.7} parent=1 // pred_check
      _
    $region3: #{classifier_forward.7} parent=1 // pred_check_branch
      %15 = sbr.rel (0) target = $region5
    $region4: #{classifier_forward.7} parent=1 // pred_region
      _
    $region5: #{classifier_forward.7} parent=1 // pred_fallthru
      _
    // Predicated region
    $region6: #{classifier_forward.7} parent=1 // pred_check
      _
    $region7: #{classifier_forward.7} parent=1 // pred_check_branch
      %17 = sbr.rel (0) target = $region9
    $region8: #{classifier_forward.7} parent=1 // pred_region
      %19 = vsyncadd [#allocation3], 0
      %s20 = sshll.u32 %s1, 4
      %s21 = int_to_ptr.hbm [resolvable:$true] %s20
      %s22 = sshll.u32 [#allocation2], 4
      %s23 = int_to_ptr.vmem [resolvable:$true] %s22
      %28 = dma.hbm_to_vmem [thread:$0]  %s21, 256, %s23, [#allocation3], 64, 64, 4
    $region9: #{classifier_forward.7} parent=1 // pred_fallthru
      _
    // Predicated region
    $region10: #{classifier_forward.7} parent=1 // pred_check
      _
    $region11: #{classifier_forward.7} parent=1 // pred_check_branch
      %30 = sbr.rel (0) target = $region13
    $region12: #{classifier_forward.7} parent=1 // pred_region
      %32 = vsyncadd [#allocation5], 0
      %s34 = sshll.u32 %s2, 4
      %s35 = int_to_ptr.hbm [resolvable:$true] %s34
      %s36 = sshll.u32 [#allocation4], 4
      %s37 = int_to_ptr.vmem [resolvable:$true] %s36
      %39 = dma.hbm_to_vmem [thread:$0]  %s35, 16, %s37, [#allocation5]
    $region13: #{classifier_forward.7} parent=1 // pred_fallthru
      _
    // Predicated region
    $region14: #{classifier_forward.7} parent=1 // pred_check
      _
    $region15: #{classifier_forward.7} parent=1 // pred_check_branch
      %41 = sbr.rel (0) target = $region17
    $region16: #{classifier_forward.7} parent=1 // pred_region
      %43 = vsyncadd [#allocation5], 0
      %s45 = sshll.u32 %s3, 4
      %s46 = int_to_ptr.hbm [resolvable:$true] %s45
      %s47 = sshll.u32 [#allocation6], 4
      %s48 = int_to_ptr.vmem [resolvable:$true] %s47
      %50 = dma.hbm_to_vmem [thread:$0]  %s46, 16, %s48, [#allocation5]
    $region17: #{classifier_forward.7} parent=1 // pred_fallthru
      _
    // Predicated region
    $region18: #{classifier_forward.7} parent=1 // pred_check
      _
    $region19: #{classifier_forward.7} parent=1 // pred_check_branch
      %52 = sbr.rel (0) target = $region21
    $region20: #{classifier_forward.7} parent=1 // pred_region
      %54 = vsyncadd [#allocation8], 0
      %s55 = sshll.u32 %s4, 4
      %s56 = int_to_ptr.hbm [resolvable:$true] %s55
      %s57 = sshll.u32 [#allocation7], 4
      %s58 = int_to_ptr.vmem [resolvable:$true] %s57
      %63 = dma.hbm_to_vmem [thread:$0]  %s56, 256, %s58, [#allocation8], 64, 64, 4
    $region21: #{classifier_forward.7} parent=1 // pred_fallthru
      _
    // Predicated region
    $region22: #{classifier_forward.7} parent=1 // pred_check
      _
    $region23: #{classifier_forward.7} parent=1 // pred_check_branch
      %65 = sbr.rel (0) target = $region25
    $region24: #{classifier_forward.7} parent=1 // pred_region
      %67 = vsyncadd [#allocation8], 0
      %s69 = sshll.u32 %s5, 4
      %s70 = int_to_ptr.hbm [resolvable:$true] %s69
      %s71 = sshll.u32 [#allocation9], 4
      %s72 = int_to_ptr.vmem [resolvable:$true] %s71
      %74 = dma.hbm_to_vmem [thread:$0]  %s70, 16, %s72, [#allocation8]
    $region25: #{classifier_forward.7} parent=1 // pred_fallthru
      _
    // Predicated region
    $region26: #{classifier_forward.7} parent=1 // pred_check
      _
    $region27: #{classifier_forward.7} parent=1 // pred_check_branch
      %76 = sbr.rel (0) target = $region29
    $region28: #{classifier_forward.7} parent=1 // pred_region
      %78 = dma.done [#allocation3], 256
    $region29: #{classifier_forward.7} parent=1 // pred_fallthru
      _
    // Predicated region
    $region30: #{classifier_forward.7} parent=1 // pred_check
      _
    $region31: #{classifier_forward.7} parent=1 // pred_check_branch
      %80 = sbr.rel (0) target = $region33
    $region32: #{classifier_forward.7} parent=1 // pred_region
      %82 = dma.done [#allocation5], 16
    $region33: #{classifier_forward.7} parent=1 // pred_fallthru
      _
    // Predicated region
    $region34: #{classifier_forward.7} parent=1 // pred_check
      _
    $region35: #{classifier_forward.7} parent=1 // pred_check_branch
      %84 = sbr.rel (0) target = $region37
    $region36: #{classifier_forward.7} parent=1 // pred_region
      %86 = dma.done [#allocation5], 16
    $region37: #{classifier_forward.7} parent=1 // pred_fallthru
      _
    // Predicated region
    $region38: #{classifier_forward.7} parent=1 // pred_check
      _
    $region39: #{classifier_forward.7} parent=1 // pred_check_branch
      %88 = sbr.rel (0) target = $region41
    $region40: #{classifier_forward.7} parent=1 // pred_region
      %90 = dma.done [#allocation8], 256
    $region41: #{classifier_forward.7} parent=1 // pred_fallthru
      _
    // Predicated region
    $region42: #{classifier_forward.7} parent=1 // pred_check
      _
    $region43: #{classifier_forward.7} parent=1 // pred_check_branch
      %92 = sbr.rel (0) target = $region45
    $region44: #{classifier_forward.7} parent=1 // pred_region
      %94 = dma.done [#allocation8], 16
    $region45: #{classifier_forward.7} parent=1 // pred_fallthru
      _
    %v96 = vld [vmem:[%s0] sm:$0xf]
    %v97 = vld [vmem:[%s0 + $0x4] sm:$0xf]
    %v98 = vld [vmem:[%s0 + $0x8] sm:$0xf]
    %v99 = vld [vmem:[%s0 + $0xc] sm:$0xf]
    %v100 = vld [vmem:[%s0 + $0x10] sm:$0xf]
    %v101 = vld [vmem:[%s0 + $0x14] sm:$0xf]
    %v102 = vld [vmem:[%s0 + $0x18] sm:$0xf]
    %v103 = vld [vmem:[%s0 + $0x1c] sm:$0xf]
    %v104 = vld [vmem:[%s0 + $0x20] sm:$0xf]
    %v105 = vld [vmem:[%s0 + $0x24] sm:$0xf]
    %v106 = vld [vmem:[%s0 + $0x28] sm:$0xf]
    %v107 = vld [vmem:[%s0 + $0x2c] sm:$0xf]
    %v108 = vld [vmem:[%s0 + $0x30] sm:$0xf]
    %v109 = vld [vmem:[%s0 + $0x34] sm:$0xf]
    %v110 = vld [vmem:[%s0 + $0x38] sm:$0xf]
    %v111 = vld [vmem:[%s0 + $0x3c] sm:$0xf]
    %v112 = vld [vmem:[%s0 + $0x40] sm:$0xf]
    %v113 = vld [vmem:[%s0 + $0x44] sm:$0xf]
    %v114 = vld [vmem:[%s0 + $0x48] sm:$0xf]
    %v115 = vld [vmem:[%s0 + $0x4c] sm:$0xf]
    %v116 = vld [vmem:[%s0 + $0x50] sm:$0xf]
    %v117 = vld [vmem:[%s0 + $0x54] sm:$0xf]
    %v118 = vld [vmem:[%s0 + $0x58] sm:$0xf]
    %v119 = vld [vmem:[%s0 + $0x5c] sm:$0xf]
    %v120 = vld [vmem:[%s0 + $0x60] sm:$0xf]
    %v121 = vld [vmem:[%s0 + $0x64] sm:$0xf]
    %v122 = vld [vmem:[%s0 + $0x68] sm:$0xf]
    %v123 = vld [vmem:[%s0 + $0x6c] sm:$0xf]
    %v124 = vld [vmem:[%s0 + $0x70] sm:$0xf]
    %v125 = vld [vmem:[%s0 + $0x74] sm:$0xf]
    %v126 = vld [vmem:[%s0 + $0x78] sm:$0xf]
    %v127 = vld [vmem:[%s0 + $0x7c] sm:$0xf]
    %v128 = vld [vmem:[%s0 + $0x80] sm:$0xf]
    %v129 = vld [vmem:[%s0 + $0x84] sm:$0xf]
    %v130 = vld [vmem:[%s0 + $0x88] sm:$0xf]
    %v131 = vld [vmem:[%s0 + $0x8c] sm:$0xf]
    %v132 = vld [vmem:[%s0 + $0x90] sm:$0xf]
    %v133 = vld [vmem:[%s0 + $0x94] sm:$0xf]
    %v134 = vld [vmem:[%s0 + $0x98] sm:$0xf]
    %v135 = vld [vmem:[%s0 + $0x9c] sm:$0xf]
    %v136 = vld [vmem:[%s0 + $0xa0] sm:$0xf]
    %v137 = vld [vmem:[%s0 + $0xa4] sm:$0xf]
    %v138 = vld [vmem:[%s0 + $0xa8] sm:$0xf]
    %v139 = vld [vmem:[%s0 + $0xac] sm:$0xf]
    %v140 = vld [vmem:[%s0 + $0xb0] sm:$0xf]
    %v141 = vld [vmem:[%s0 + $0xb4] sm:$0xf]
    %v142 = vld [vmem:[%s0 + $0xb8] sm:$0xf]
    %v143 = vld [vmem:[%s0 + $0xbc] sm:$0xf]
    %v144 = vld [vmem:[%s0 + $0xc0] sm:$0xf]
    %v145 = vld [vmem:[%s0 + $0xc4] sm:$0xf]
    %v146 = vld [vmem:[%s0 + $0xc8] sm:$0xf]
    %v147 = vld [vmem:[%s0 + $0xcc] sm:$0xf]
    %v148 = vld [vmem:[%s0 + $0xd0] sm:$0xf]
    %v149 = vld [vmem:[%s0 + $0xd4] sm:$0xf]
    %v150 = vld [vmem:[%s0 + $0xd8] sm:$0xf]
    %v151 = vld [vmem:[%s0 + $0xdc] sm:$0xf]
    %v152 = vld [vmem:[%s0 + $0xe0] sm:$0xf]
    %v153 = vld [vmem:[%s0 + $0xe4] sm:$0xf]
    %v154 = vld [vmem:[%s0 + $0xe8] sm:$0xf]
    %v155 = vld [vmem:[%s0 + $0xec] sm:$0xf]
    %v156 = vld [vmem:[%s0 + $0xf0] sm:$0xf]
    %v157 = vld [vmem:[%s0 + $0xf4] sm:$0xf]
    %v158 = vld [vmem:[%s0 + $0xf8] sm:$0xf]
    %v159 = vld [vmem:[%s0 + $0xfc] sm:$0xf]
    %v160 = vunpack.c.l.bf16 %v96
    %v161 = vunpack.c.l.bf16 %v97
    %v162 = vunpack.c.l.bf16 %v98
    %v163 = vunpack.c.l.bf16 %v99
    %v164 = vunpack.c.l.bf16 %v100
    %v165 = vunpack.c.l.bf16 %v101
    %v166 = vunpack.c.l.bf16 %v102
    %v167 = vunpack.c.l.bf16 %v103
    %v168 = vunpack.c.l.bf16 %v104
    %v169 = vunpack.c.l.bf16 %v105
    %v170 = vunpack.c.l.bf16 %v106
    %v171 = vunpack.c.l.bf16 %v107
    %v172 = vunpack.c.l.bf16 %v108
    %v173 = vunpack.c.l.bf16 %v109
    %v174 = vunpack.c.l.bf16 %v110
    %v175 = vunpack.c.l.bf16 %v111
    %v176 = vunpack.c.l.bf16 %v112
    %v177 = vunpack.c.l.bf16 %v113
    %v178 = vunpack.c.l.bf16 %v114
    %v179 = vunpack.c.l.bf16 %v115
    %v180 = vunpack.c.l.bf16 %v116
    %v181 = vunpack.c.l.bf16 %v117
    %v182 = vunpack.c.l.bf16 %v118
    %v183 = vunpack.c.l.bf16 %v119
    %v184 = vunpack.c.l.bf16 %v120
    %v185 = vunpack.c.l.bf16 %v121
    %v186 = vunpack.c.l.bf16 %v122
    %v187 = vunpack.c.l.bf16 %v123
    %v188 = vunpack.c.l.bf16 %v124
    %v189 = vunpack.c.l.bf16 %v125
    %v190 = vunpack.c.l.bf16 %v126
    %v191 = vunpack.c.l.bf16 %v127
    %v192 = vunpack.c.l.bf16 %v128
    %v193 = vunpack.c.l.bf16 %v129
    %v194 = vunpack.c.l.bf16 %v130
    %v195 = vunpack.c.l.bf16 %v131
    %v196 = vunpack.c.l.bf16 %v132
    %v197 = vunpack.c.l.bf16 %v133
    %v198 = vunpack.c.l.bf16 %v134
    %v199 = vunpack.c.l.bf16 %v135
    %v200 = vunpack.c.l.bf16 %v136
    %v201 = vunpack.c.l.bf16 %v137
    %v202 = vunpack.c.l.bf16 %v138
    %v203 = vunpack.c.l.bf16 %v139
    %v204 = vunpack.c.l.bf16 %v140
    %v205 = vunpack.c.l.bf16 %v141
    %v206 = vunpack.c.l.bf16 %v142
    %v207 = vunpack.c.l.bf16 %v143
    %v208 = vunpack.c.l.bf16 %v144
    %v209 = vunpack.c.l.bf16 %v145
    %v210 = vunpack.c.l.bf16 %v146
    %v211 = vunpack.c.l.bf16 %v147
    %v212 = vunpack.c.l.bf16 %v148
    %v213 = vunpack.c.l.bf16 %v149
    %v214 = vunpack.c.l.bf16 %v150
    %v215 = vunpack.c.l.bf16 %v151
    %v216 = vunpack.c.l.bf16 %v152
    %v217 = vunpack.c.l.bf16 %v153
    %v218 = vunpack.c.l.bf16 %v154
    %v219 = vunpack.c.l.bf16 %v155
    %v220 = vunpack.c.l.bf16 %v156
    %v221 = vunpack.c.l.bf16 %v157
    %v222 = vunpack.c.l.bf16 %v158
    %v223 = vunpack.c.l.bf16 %v159
    %vm224 = vcmask 261120
    %v225 = vsel %vm224, %v160, 0.0
    %v226 = vsel %vm224, %v161, 0.0
    %v227 = vadd.f32 %v225, %v226
    %v228 = vsel %vm224, %v162, 0.0
    %v229 = vadd.f32 %v227, %v228
    %v230 = vsel %vm224, %v163, 0.0
    %v231 = vadd.f32 %v229, %v230
    %v232 = vsel %vm224, %v164, 0.0
    %v233 = vadd.f32 %v231, %v232
    %v234 = vsel %vm224, %v165, 0.0
    %v235 = vadd.f32 %v233, %v234
    %v236 = vsel %vm224, %v166, 0.0
    %v237 = vadd.f32 %v235, %v236
    %v238 = vsel %vm224, %v167, 0.0
    %v239 = vadd.f32 %v237, %v238
    %v240 = vrot.slane %v239, 4
    %v241 = vadd.f32 %v239, %v240
    %v242 = vrot.slane %v241, 2
    %v243 = vadd.f32 %v241, %v242
    %v244 = vrot.slane %v243, 1
    %v245 = vadd.f32 %v243, %v244
    %v246 = vsel %vm224, %v168, 0.0
    %v247 = vsel %vm224, %v169, 0.0
    %v248 = vadd.f32 %v246, %v247
    %v249 = vsel %vm224, %v170, 0.0
    %v250 = vadd.f32 %v248, %v249
    %v251 = vsel %vm224, %v171, 0.0
    %v252 = vadd.f32 %v250, %v251
    %v253 = vsel %vm224, %v172, 0.0
    %v254 = vadd.f32 %v252, %v253
    %v255 = vsel %vm224, %v173, 0.0
    %v256 = vadd.f32 %v254, %v255
    %v257 = vsel %vm224, %v174, 0.0
    %v258 = vadd.f32 %v256, %v257
    %v259 = vsel %vm224, %v175, 0.0
    %v260 = vadd.f32 %v258, %v259
    %v261 = vrot.slane %v260, 4
    %v262 = vadd.f32 %v260, %v261
    %v263 = vrot.slane %v262, 2
    %v264 = vadd.f32 %v262, %v263
    %v265 = vrot.slane %v264, 1
    %v266 = vadd.f32 %v264, %v265
    %v267 = vsel %vm224, %v176, 0.0
    %v268 = vsel %vm224, %v177, 0.0
    %v269 = vadd.f32 %v267, %v268
    %v270 = vsel %vm224, %v178, 0.0
    %v271 = vadd.f32 %v269, %v270
    %v272 = vsel %vm224, %v179, 0.0
    %v273 = vadd.f32 %v271, %v272
    %v274 = vsel %vm224, %v180, 0.0
    %v275 = vadd.f32 %v273, %v274
    %v276 = vsel %vm224, %v181, 0.0
    %v277 = vadd.f32 %v275, %v276
    %v278 = vsel %vm224, %v182, 0.0
    %v279 = vadd.f32 %v277, %v278
    %v280 = vsel %vm224, %v183, 0.0
    %v281 = vadd.f32 %v279, %v280
    %v282 = vrot.slane %v281, 4
    %v283 = vadd.f32 %v281, %v282
    %v284 = vrot.slane %v283, 2
    %v285 = vadd.f32 %v283, %v284
    %v286 = vrot.slane %v285, 1
    %v287 = vadd.f32 %v285, %v286
    %v288 = vsel %vm224, %v184, 0.0
    %v289 = vsel %vm224, %v185, 0.0
    %v290 = vadd.f32 %v288, %v289
    %v291 = vsel %vm224, %v186, 0.0
    %v292 = vadd.f32 %v290, %v291
    %v293 = vsel %vm224, %v187, 0.0
    %v294 = vadd.f32 %v292, %v293
    %v295 = vsel %vm224, %v188, 0.0
    %v296 = vadd.f32 %v294, %v295
    %v297 = vsel %vm224, %v189, 0.0
    %v298 = vadd.f32 %v296, %v297
    %v299 = vsel %vm224, %v190, 0.0
    %v300 = vadd.f32 %v298, %v299
    %v301 = vsel %vm224, %v191, 0.0
    %v302 = vadd.f32 %v300, %v301
    %v303 = vrot.slane %v302, 4
    %v304 = vadd.f32 %v302, %v303
    %v305 = vrot.slane %v304, 2
    %v306 = vadd.f32 %v304, %v305
    %v307 = vrot.slane %v306, 1
    %v308 = vadd.f32 %v306, %v307
    %v309 = vsel %vm224, %v192, 0.0
    %v310 = vsel %vm224, %v193, 0.0
    %v311 = vadd.f32 %v309, %v310
    %v312 = vsel %vm224, %v194, 0.0
    %v313 = vadd.f32 %v311, %v312
    %v314 = vsel %vm224, %v195, 0.0
    %v315 = vadd.f32 %v313, %v314
    %v316 = vsel %vm224, %v196, 0.0
    %v317 = vadd.f32 %v315, %v316
    %v318 = vsel %vm224, %v197, 0.0
    %v319 = vadd.f32 %v317, %v318
    %v320 = vsel %vm224, %v198, 0.0
    %v321 = vadd.f32 %v319, %v320
    %v322 = vsel %vm224, %v199, 0.0
    %v323 = vadd.f32 %v321, %v322
    %v324 = vrot.slane %v323, 4
    %v325 = vadd.f32 %v323, %v324
    %v326 = vrot.slane %v325, 2
    %v327 = vadd.f32 %v325, %v326
    %v328 = vrot.slane %v327, 1
    %v329 = vadd.f32 %v327, %v328
    %v330 = vsel %vm224, %v200, 0.0
    %v331 = vsel %vm224, %v201, 0.0
    %v332 = vadd.f32 %v330, %v331
    %v333 = vsel %vm224, %v202, 0.0
    %v334 = vadd.f32 %v332, %v333
    %v335 = vsel %vm224, %v203, 0.0
    %v336 = vadd.f32 %v334, %v335
    %v337 = vsel %vm224, %v204, 0.0
    %v338 = vadd.f32 %v336, %v337
    %v339 = vsel %vm224, %v205, 0.0
    %v340 = vadd.f32 %v338, %v339
    %v341 = vsel %vm224, %v206, 0.0
    %v342 = vadd.f32 %v340, %v341
    %v343 = vsel %vm224, %v207, 0.0
    %v344 = vadd.f32 %v342, %v343
    %v345 = vrot.slane %v344, 4
    %v346 = vadd.f32 %v344, %v345
    %v347 = vrot.slane %v346, 2
    %v348 = vadd.f32 %v346, %v347
    %v349 = vrot.slane %v348, 1
    %v350 = vadd.f32 %v348, %v349
    %v351 = vsel %vm224, %v208, 0.0
    %v352 = vsel %vm224, %v209, 0.0
    %v353 = vadd.f32 %v351, %v352
    %v354 = vsel %vm224, %v210, 0.0
    %v355 = vadd.f32 %v353, %v354
    %v356 = vsel %vm224, %v211, 0.0
    %v357 = vadd.f32 %v355, %v356
    %v358 = vsel %vm224, %v212, 0.0
    %v359 = vadd.f32 %v357, %v358
    %v360 = vsel %vm224, %v213, 0.0
    %v361 = vadd.f32 %v359, %v360
    %v362 = vsel %vm224, %v214, 0.0
    %v363 = vadd.f32 %v361, %v362
    %v364 = vsel %vm224, %v215, 0.0
    %v365 = vadd.f32 %v363, %v364
    %v366 = vrot.slane %v365, 4
    %v367 = vadd.f32 %v365, %v366
    %v368 = vrot.slane %v367, 2
    %v369 = vadd.f32 %v367, %v368
    %v370 = vrot.slane %v369, 1
    %v371 = vadd.f32 %v369, %v370
    %v372 = vsel %vm224, %v216, 0.0
    %v373 = vsel %vm224, %v217, 0.0
    %v374 = vadd.f32 %v372, %v373
    %v375 = vsel %vm224, %v218, 0.0
    %v376 = vadd.f32 %v374, %v375
    %v377 = vsel %vm224, %v219, 0.0
    %v378 = vadd.f32 %v376, %v377
    %v379 = vsel %vm224, %v220, 0.0
    %v380 = vadd.f32 %v378, %v379
    %v381 = vsel %vm224, %v221, 0.0
    %v382 = vadd.f32 %v380, %v381
    %v383 = vsel %vm224, %v222, 0.0
    %v384 = vadd.f32 %v382, %v383
    %v385 = vsel %vm224, %v223, 0.0
    %v386 = vadd.f32 %v384, %v385
    %v387 = vrot.slane %v386, 4
    %v388 = vadd.f32 %v386, %v387
    %v389 = vrot.slane %v388, 2
    %v390 = vadd.f32 %v388, %v389
    %v391 = vrot.slane %v390, 1
    %v392 = vadd.f32 %v390, %v391
    %v393 = vrcp.pop 64.0
    %v394 = vmul.f32 64.0, %v393
    %v395 = vsub.f32 1.0, %v394
    %v396 = vmul.f32 %v393, %v395
    %v397 = vadd.f32 %v393, %v396
    %vm398 = vweird.f32 %v393
    %v399 = vsel %vm398, %v393, %v397
    %v400 = vmul.f32 %v245, %v399
    %v401 = vmul.f32 %v266, %v399
    %v402 = vmul.f32 %v287, %v399
    %v403 = vmul.f32 %v308, %v399
    %v404 = vmul.f32 %v329, %v399
    %v405 = vmul.f32 %v350, %v399
    %v406 = vmul.f32 %v371, %v399
    %v407 = vmul.f32 %v392, %v399
    %v408 = vpack.c.bf16 %v400, %v400
    %v409 = vpack.c.bf16 %v401, %v401
    %v410 = vpack.c.bf16 %v402, %v402
    %v411 = vpack.c.bf16 %v403, %v403
    %v412 = vpack.c.bf16 %v404, %v404
    %v413 = vpack.c.bf16 %v405, %v405
    %v414 = vpack.c.bf16 %v406, %v406
    %v415 = vpack.c.bf16 %v407, %v407
    %v416 = vld [vmem:[#allocation2] sm:$0xf]
    %v417 = vld [vmem:[#allocation2 + $0x4] sm:$0xf]
    %v418 = vld [vmem:[#allocation2 + $0x8] sm:$0xf]
    %v419 = vld [vmem:[#allocation2 + $0xc] sm:$0xf]
    %v428 = vunpack.c.l.b16 %v408
    %v429 = vunpack.c.l.b16 %v409
    %v430 = vunpack.c.l.b16 %v410
    %v431 = vunpack.c.l.b16 %v411
    %v432 = vunpack.c.l.b16 %v412
    %v433 = vunpack.c.l.b16 %v413
    %v434 = vunpack.c.l.b16 %v414
    %v435 = vunpack.c.l.b16 %v415
    %vm436 = vcmask 1041409
    %v437 = vsel %vm436, %v429, %v428
    %vm438 = vcmask 1042434
    %v439 = vsel %vm438, %v430, %v437
    %vm440 = vcmask 1043459
    %v441 = vsel %vm440, %v431, %v439
    %vm442 = vcmask 1044484
    %v443 = vsel %vm442, %v432, %v441
    %vm444 = vcmask 1045509
    %v445 = vsel %vm444, %v433, %v443
    %vm446 = vcmask 1046534
    %v447 = vsel %vm446, %v434, %v445
    %vm448 = vcmask 1047559
    %v449 = vsel %vm448, %v435, %v447
    %v450 = vpack.c.b16 %v449, %v449
    %v455 = vunpack.c.l.b16 %v416
    %v456 = vunpack.c.l.b16 %v417
    %v457 = vunpack.c.l.b16 %v418
    %v458 = vunpack.c.l.b16 %v419
    %v459 = vpack.c.b16 %v456, %v455
    %v460 = vpack.c.b16 %v458, %v457
    %v464 = vsel %vm224, %v450, 0
    %466 = vmatpush.bf16.msra.mxu0 0
    %467 = vmatpush.bf16.msra.mxu0 0
    %468 = vmatpush.bf16.msra.mxu0 0
    %469 = vmatpush.bf16.msra.mxu0 0
    %470 = vmatpush.bf16.msra.mxu0 0
    %471 = vmatpush.bf16.msra.mxu0 0
    %472 = vmatpush.bf16.msra.mxu0 %v460
    %473 = vmatpush.bf16.msra.mxu0 %v459
    %474 = vmatmul.bf16.gmra.mxu0 %v464
    %v475 = vpop.f32.mrf.mxu0
    %v476 = vadd.f32 0.0, %v475
    %v477 = vpop.f32.mrf.mxu0
    %478 = vdwg.mxu0
    %v479 = vld [vmem:[#allocation4] sm:$0x1]
    %v481 = vperm.slane %v479, 0
    %v483 = vmul.f32 %v476, %v481
    %v484 = vld [vmem:[#allocation6] sm:$0x1]
    %v486 = vperm.slane %v484, 0
    %v488 = vadd.f32 %v483, %v486
    %v489 = vmax.f32 %v488, 0.0
    %v490 = vpack.c.bf16 %v489, %v489
    %v491 = vld [vmem:[#allocation7] sm:$0xf]
    %v492 = vld [vmem:[#allocation7 + $0x4] sm:$0xf]
    %v493 = vld [vmem:[#allocation7 + $0x8] sm:$0xf]
    %v494 = vld [vmem:[#allocation7 + $0xc] sm:$0xf]
    %v495 = vld [vmem:[#allocation9] sm:$0x1]
    %v497 = vperm.slane %v495, 0
    %v503 = vunpack.c.l.b16 %v491
    %v504 = vunpack.c.l.b16 %v492
    %v505 = vunpack.c.l.b16 %v493
    %v506 = vunpack.c.l.b16 %v494
    %v507 = vpack.c.b16 %v504, %v503
    %v508 = vpack.c.b16 %v506, %v505
    %v512 = vsel %vm224, %v490, 0
    %514 = vmatpush.bf16.msra.mxu0 0
    %515 = vmatpush.bf16.msra.mxu0 0
    %516 = vmatpush.bf16.msra.mxu0 0
    %517 = vmatpush.bf16.msra.mxu0 0
    %518 = vmatpush.bf16.msra.mxu0 0
    %519 = vmatpush.bf16.msra.mxu0 0
    %520 = vmatpush.bf16.msra.mxu0 %v508
    %521 = vmatpush.bf16.msra.mxu0 %v507
    %522 = vmatmul.bf16.gmra.mxu0 %v512
    %v523 = vpop.f32.mrf.mxu0
    %v524 = vadd.f32 %v497, %v523
    %v525 = vpop.f32.mrf.mxu0
    %526 = vdwg.mxu0
    %528 = vrot.lane.b32.xlu0 %v524, 112
    %v529 = vpop.permute.xlu0 %528
    %v531 = vmax.f32 %v524, %v529
    %v532 = vsub.f32 %v524, %v531
    %v533 = vmul.f32 %v532, 1.442695
    %v534 = vpow.pop %v533
    %536 = vrot.lane.b32.xlu0 %v531, 16
    %v537 = vpop.permute.xlu0 %536
    %v539 = vsub.f32 %v524, %v537
    %v540 = vmul.f32 %v539, 1.442695
    %v541 = vpow.pop %v540
    %543 = vrot.lane.b32.xlu0 %v541, 112
    %v544 = vpop.permute.xlu0 %543
    %v546 = vadd.f32 %v534, %v544
    %v547 = vrcp.pop %v546
    %v548 = vmul.f32 %v546, %v547
    %v549 = vsub.f32 1.0, %v548
    %v550 = vmul.f32 %v547, %v549
    %v551 = vadd.f32 %v547, %v550
    %vm552 = vweird.f32 %v546
    %vm553 = vweird.f32 %v547
    %vm554 = vmor %vm552, %vm553
    %v555 = vsel %vm554, %v547, %v551
    %v556 = vand.u32 2147483647, %v546
    %vm557 = vcmp.eq.f32.partialorder %v556, 8.507059e+37
    %v558 = vand.u32 %v546, 2147483648
    %v559 = vor.u32 1.1754944e-38, %v558
    %v560 = vsel %vm557, %v559, %v555
    %v561 = vmul.f32 1.0, %v560
    %v562 = vmul.f32 %v534, %v561
    %564 = vrot.lane.b32.xlu0 %v561, 16
    %v565 = vpop.permute.xlu0 %564
    %v567 = vmul.f32 %v541, %v565
    %v568 = vld [vmem:[%s0] sm:$0xf]
    %v569 = vld [vmem:[%s0 + $0x4] sm:$0xf]
    %v570 = vld [vmem:[%s0 + $0x8] sm:$0xf]
    %v571 = vld [vmem:[%s0 + $0xc] sm:$0xf]
    %v572 = vld [vmem:[%s0 + $0x10] sm:$0xf]
    %v573 = vld [vmem:[%s0 + $0x14] sm:$0xf]
    %v574 = vld [vmem:[%s0 + $0x18] sm:$0xf]
    %v575 = vld [vmem:[%s0 + $0x1c] sm:$0xf]
    %v576 = vunpack.c.l.bf16 %v568
    %v577 = vunpack.c.l.bf16 %v569
    %v578 = vunpack.c.l.bf16 %v570
    %v579 = vunpack.c.l.bf16 %v571
    %v580 = vunpack.c.l.bf16 %v572
    %v581 = vunpack.c.l.bf16 %v573
    %v582 = vunpack.c.l.bf16 %v574
    %v583 = vunpack.c.l.bf16 %v575
    %v584 = vperm.slane %v562, 0
    %v585 = vmul.f32 %v576, %v584
    %v586 = vmul.f32 %v577, %v584
    %v587 = vmul.f32 %v578, %v584
    %v588 = vmul.f32 %v579, %v584
    %v589 = vmul.f32 %v580, %v584
    %v590 = vmul.f32 %v581, %v584
    %v591 = vmul.f32 %v582, %v584
    %v592 = vmul.f32 %v583, %v584
    %v593 = vperm.slane %v567, 0
    %v594 = vmul.f32 %v576, %v593
    %v595 = vmul.f32 %v577, %v593
    %v596 = vmul.f32 %v578, %v593
    %v597 = vmul.f32 %v579, %v593
    %v598 = vmul.f32 %v580, %v593
    %v599 = vmul.f32 %v581, %v593
    %v600 = vmul.f32 %v582, %v593
    %v601 = vmul.f32 %v583, %v593
    %610 = vrot.lane.b32.xlu0 %v594, 112
    %v611 = vpop.permute.xlu0 %610
    %612 = vrot.lane.b32.xlu0 %v595, 112
    %v613 = vpop.permute.xlu0 %612
    %614 = vrot.lane.b32.xlu0 %v596, 112
    %v615 = vpop.permute.xlu0 %614
    %616 = vrot.lane.b32.xlu0 %v597, 112
    %v617 = vpop.permute.xlu0 %616
    %618 = vrot.lane.b32.xlu0 %v598, 112
    %v619 = vpop.permute.xlu0 %618
    %620 = vrot.lane.b32.xlu0 %v599, 112
    %v621 = vpop.permute.xlu0 %620
    %622 = vrot.lane.b32.xlu0 %v600, 112
    %v623 = vpop.permute.xlu0 %622
    %624 = vrot.lane.b32.xlu0 %v601, 112
    %v625 = vpop.permute.xlu0 %624
    %v634 = vadd.f32 %v585, %v611
    %v635 = vadd.f32 %v586, %v613
    %v636 = vadd.f32 %v587, %v615
    %v637 = vadd.f32 %v588, %v617
    %v638 = vadd.f32 %v589, %v619
    %v639 = vadd.f32 %v590, %v621
    %v640 = vadd.f32 %v591, %v623
    %v641 = vadd.f32 %v592, %v625
    %v642 = vpack.c.bf16 %v634, %v634
    %v643 = vpack.c.bf16 %v635, %v635
    %v644 = vpack.c.bf16 %v636, %v636
    %v645 = vpack.c.bf16 %v637, %v637
    %v646 = vpack.c.bf16 %v638, %v638
    %v647 = vpack.c.bf16 %v639, %v639
    %v648 = vpack.c.bf16 %v640, %v640
    %v649 = vpack.c.bf16 %v641, %v641
    %vm650 = vcmask 125952
    %651 = vst.msk [vmem:[%s6] sm:$0xf] %vm650, %v642
    %652 = vst.msk [vmem:[%s6 + $0x4] sm:$0xf] %vm650, %v643
    %653 = vst.msk [vmem:[%s6 + $0x8] sm:$0xf] %vm650, %v644
    %654 = vst.msk [vmem:[%s6 + $0xc] sm:$0xf] %vm650, %v645
    %655 = vst.msk [vmem:[%s6 + $0x10] sm:$0xf] %vm650, %v646
    %656 = vst.msk [vmem:[%s6 + $0x14] sm:$0xf] %vm650, %v647
    %657 = vst.msk [vmem:[%s6 + $0x18] sm:$0xf] %vm650, %v648
    %658 = vst.msk [vmem:[%s6 + $0x1c] sm:$0xf] %vm650, %v649
    %s659 = scalar_lea.vmem %s0, 32
    %v660 = vld [vmem:[%s659] sm:$0xf]
    %v661 = vld [vmem:[%s659 + $0x4] sm:$0xf]
    %v662 = vld [vmem:[%s659 + $0x8] sm:$0xf]
    %v663 = vld [vmem:[%s659 + $0xc] sm:$0xf]
    %v664 = vld [vmem:[%s659 + $0x10] sm:$0xf]
    %v665 = vld [vmem:[%s659 + $0x14] sm:$0xf]
    %v666 = vld [vmem:[%s659 + $0x18] sm:$0xf]
    %v667 = vld [vmem:[%s659 + $0x1c] sm:$0xf]
    %v668 = vunpack.c.l.bf16 %v660
    %v669 = vunpack.c.l.bf16 %v661
    %v670 = vunpack.c.l.bf16 %v662
    %v671 = vunpack.c.l.bf16 %v663
    %v672 = vunpack.c.l.bf16 %v664
    %v673 = vunpack.c.l.bf16 %v665
    %v674 = vunpack.c.l.bf16 %v666
    %v675 = vunpack.c.l.bf16 %v667
    %v676 = vperm.slane %v562, 1
    %v677 = vmul.f32 %v668, %v676
    %v678 = vmul.f32 %v669, %v676
    %v679 = vmul.f32 %v670, %v676
    %v680 = vmul.f32 %v671, %v676
    %v681 = vmul.f32 %v672, %v676
    %v682 = vmul.f32 %v673, %v676
    %v683 = vmul.f32 %v674, %v676
    %v684 = vmul.f32 %v675, %v676
    %v685 = vperm.slane %v567, 1
    %v686 = vmul.f32 %v668, %v685
    %v687 = vmul.f32 %v669, %v685
    %v688 = vmul.f32 %v670, %v685
    %v689 = vmul.f32 %v671, %v685
    %v690 = vmul.f32 %v672, %v685
    %v691 = vmul.f32 %v673, %v685
    %v692 = vmul.f32 %v674, %v685
    %v693 = vmul.f32 %v675, %v685
    %702 = vrot.lane.b32.xlu0 %v686, 112
    %v703 = vpop.permute.xlu0 %702
    %704 = vrot.lane.b32.xlu0 %v687, 112
    %v705 = vpop.permute.xlu0 %704
    %706 = vrot.lane.b32.xlu0 %v688, 112
    %v707 = vpop.permute.xlu0 %706
    %708 = vrot.lane.b32.xlu0 %v689, 112
    %v709 = vpop.permute.xlu0 %708
    %710 = vrot.lane.b32.xlu0 %v690, 112
    %v711 = vpop.permute.xlu0 %710
    %712 = vrot.lane.b32.xlu0 %v691, 112
    %v713 = vpop.permute.xlu0 %712
    %714 = vrot.lane.b32.xlu0 %v692, 112
    %v715 = vpop.permute.xlu0 %714
    %716 = vrot.lane.b32.xlu0 %v693, 112
    %v717 = vpop.permute.xlu0 %716
    %v726 = vadd.f32 %v677, %v703
    %v727 = vadd.f32 %v678, %v705
    %v728 = vadd.f32 %v679, %v707
    %v729 = vadd.f32 %v680, %v709
    %v730 = vadd.f32 %v681, %v711
    %v731 = vadd.f32 %v682, %v713
    %v732 = vadd.f32 %v683, %v715
    %v733 = vadd.f32 %v684, %v717
    %v734 = vpack.c.bf16 %v726, %v726
    %v735 = vpack.c.bf16 %v727, %v727
    %v736 = vpack.c.bf16 %v728, %v728
    %v737 = vpack.c.bf16 %v729, %v729
    %v738 = vpack.c.bf16 %v730, %v730
    %v739 = vpack.c.bf16 %v731, %v731
    %v740 = vpack.c.bf16 %v732, %v732
    %v741 = vpack.c.bf16 %v733, %v733
    %s742 = scalar_lea.vmem %s6, 32
    %743 = vst.msk [vmem:[%s742] sm:$0xf] %vm650, %v734
    %744 = vst.msk [vmem:[%s742 + $0x4] sm:$0xf] %vm650, %v735
    %745 = vst.msk [vmem:[%s742 + $0x8] sm:$0xf] %vm650, %v736
    %746 = vst.msk [vmem:[%s742 + $0xc] sm:$0xf] %vm650, %v737
    %747 = vst.msk [vmem:[%s742 + $0x10] sm:$0xf] %vm650, %v738
    %748 = vst.msk [vmem:[%s742 + $0x14] sm:$0xf] %vm650, %v739
    %749 = vst.msk [vmem:[%s742 + $0x18] sm:$0xf] %vm650, %v740
    %750 = vst.msk [vmem:[%s742 + $0x1c] sm:$0xf] %vm650, %v741
    %s751 = scalar_lea.vmem %s0, 64
    %v752 = vld [vmem:[%s751] sm:$0xf]
    %v753 = vld [vmem:[%s751 + $0x4] sm:$0xf]
    %v754 = vld [vmem:[%s751 + $0x8] sm:$0xf]
    %v755 = vld [vmem:[%s751 + $0xc] sm:$0xf]
    %v756 = vld [vmem:[%s751 + $0x10] sm:$0xf]
    %v757 = vld [vmem:[%s751 + $0x14] sm:$0xf]
    %v758 = vld [vmem:[%s751 + $0x18] sm:$0xf]
    %v759 = vld [vmem:[%s751 + $0x1c] sm:$0xf]
    %v760 = vunpack.c.l.bf16 %v752
    %v761 = vunpack.c.l.bf16 %v753
    %v762 = vunpack.c.l.bf16 %v754
    %v763 = vunpack.c.l.bf16 %v755
    %v764 = vunpack.c.l.bf16 %v756
    %v765 = vunpack.c.l.bf16 %v757
    %v766 = vunpack.c.l.bf16 %v758
    %v767 = vunpack.c.l.bf16 %v759
    %v768 = vperm.slane %v562, 2
    %v769 = vmul.f32 %v760, %v768
    %v770 = vmul.f32 %v761, %v768
    %v771 = vmul.f32 %v762, %v768
    %v772 = vmul.f32 %v763, %v768
    %v773 = vmul.f32 %v764, %v768
    %v774 = vmul.f32 %v765, %v768
    %v775 = vmul.f32 %v766, %v768
    %v776 = vmul.f32 %v767, %v768
    %v777 = vperm.slane %v567, 2
    %v778 = vmul.f32 %v760, %v777
    %v779 = vmul.f32 %v761, %v777
    %v780 = vmul.f32 %v762, %v777
    %v781 = vmul.f32 %v763, %v777
    %v782 = vmul.f32 %v764, %v777
    %v783 = vmul.f32 %v765, %v777
    %v784 = vmul.f32 %v766, %v777
    %v785 = vmul.f32 %v767, %v777
    %794 = vrot.lane.b32.xlu0 %v778, 112
    %v795 = vpop.permute.xlu0 %794
    %796 = vrot.lane.b32.xlu0 %v779, 112
    %v797 = vpop.permute.xlu0 %796
    %798 = vrot.lane.b32.xlu0 %v780, 112
    %v799 = vpop.permute.xlu0 %798
    %800 = vrot.lane.b32.xlu0 %v781, 112
    %v801 = vpop.permute.xlu0 %800
    %802 = vrot.lane.b32.xlu0 %v782, 112
    %v803 = vpop.permute.xlu0 %802
    %804 = vrot.lane.b32.xlu0 %v783, 112
    %v805 = vpop.permute.xlu0 %804
    %806 = vrot.lane.b32.xlu0 %v784, 112
    %v807 = vpop.permute.xlu0 %806
    %808 = vrot.lane.b32.xlu0 %v785, 112
    %v809 = vpop.permute.xlu0 %808
    %v818 = vadd.f32 %v769, %v795
    %v819 = vadd.f32 %v770, %v797
    %v820 = vadd.f32 %v771, %v799
    %v821 = vadd.f32 %v772, %v801
    %v822 = vadd.f32 %v773, %v803
    %v823 = vadd.f32 %v774, %v805
    %v824 = vadd.f32 %v775, %v807
    %v825 = vadd.f32 %v776, %v809
    %v826 = vpack.c.bf16 %v818, %v818
    %v827 = vpack.c.bf16 %v819, %v819
    %v828 = vpack.c.bf16 %v820, %v820
    %v829 = vpack.c.bf16 %v821, %v821
    %v830 = vpack.c.bf16 %v822, %v822
    %v831 = vpack.c.bf16 %v823, %v823
    %v832 = vpack.c.bf16 %v824, %v824
    %v833 = vpack.c.bf16 %v825, %v825
    %s834 = scalar_lea.vmem %s6, 64
    %835 = vst.msk [vmem:[%s834] sm:$0xf] %vm650, %v826
    %836 = vst.msk [vmem:[%s834 + $0x4] sm:$0xf] %vm650, %v827
    %837 = vst.msk [vmem:[%s834 + $0x8] sm:$0xf] %vm650, %v828
    %838 = vst.msk [vmem:[%s834 + $0xc] sm:$0xf] %vm650, %v829
    %839 = vst.msk [vmem:[%s834 + $0x10] sm:$0xf] %vm650, %v830
    %840 = vst.msk [vmem:[%s834 + $0x14] sm:$0xf] %vm650, %v831
    %841 = vst.msk [vmem:[%s834 + $0x18] sm:$0xf] %vm650, %v832
    %842 = vst.msk [vmem:[%s834 + $0x1c] sm:$0xf] %vm650, %v833
    %s843 = scalar_lea.vmem %s0, 96
    %v844 = vld [vmem:[%s843] sm:$0xf]
    %v845 = vld [vmem:[%s843 + $0x4] sm:$0xf]
    %v846 = vld [vmem:[%s843 + $0x8] sm:$0xf]
    %v847 = vld [vmem:[%s843 + $0xc] sm:$0xf]
    %v848 = vld [vmem:[%s843 + $0x10] sm:$0xf]
    %v849 = vld [vmem:[%s843 + $0x14] sm:$0xf]
    %v850 = vld [vmem:[%s843 + $0x18] sm:$0xf]
    %v851 = vld [vmem:[%s843 + $0x1c] sm:$0xf]
    %v852 = vunpack.c.l.bf16 %v844
    %v853 = vunpack.c.l.bf16 %v845
    %v854 = vunpack.c.l.bf16 %v846
    %v855 = vunpack.c.l.bf16 %v847
    %v856 = vunpack.c.l.bf16 %v848
    %v857 = vunpack.c.l.bf16 %v849
    %v858 = vunpack.c.l.bf16 %v850
    %v859 = vunpack.c.l.bf16 %v851
    %v860 = vperm.slane %v562, 3
    %v861 = vmul.f32 %v852, %v860
    %v862 = vmul.f32 %v853, %v860
    %v863 = vmul.f32 %v854, %v860
    %v864 = vmul.f32 %v855, %v860
    %v865 = vmul.f32 %v856, %v860
    %v866 = vmul.f32 %v857, %v860
    %v867 = vmul.f32 %v858, %v860
    %v868 = vmul.f32 %v859, %v860
    %v869 = vperm.slane %v567, 3
    %v870 = vmul.f32 %v852, %v869
    %v871 = vmul.f32 %v853, %v869
    %v872 = vmul.f32 %v854, %v869
    %v873 = vmul.f32 %v855, %v869
    %v874 = vmul.f32 %v856, %v869
    %v875 = vmul.f32 %v857, %v869
    %v876 = vmul.f32 %v858, %v869
    %v877 = vmul.f32 %v859, %v869
    %886 = vrot.lane.b32.xlu0 %v870, 112
    %v887 = vpop.permute.xlu0 %886
    %888 = vrot.lane.b32.xlu0 %v871, 112
    %v889 = vpop.permute.xlu0 %888
    %890 = vrot.lane.b32.xlu0 %v872, 112
    %v891 = vpop.permute.xlu0 %890
    %892 = vrot.lane.b32.xlu0 %v873, 112
    %v893 = vpop.permute.xlu0 %892
    %894 = vrot.lane.b32.xlu0 %v874, 112
    %v895 = vpop.permute.xlu0 %894
    %896 = vrot.lane.b32.xlu0 %v875, 112
    %v897 = vpop.permute.xlu0 %896
    %898 = vrot.lane.b32.xlu0 %v876, 112
    %v899 = vpop.permute.xlu0 %898
    %900 = vrot.lane.b32.xlu0 %v877, 112
    %v901 = vpop.permute.xlu0 %900
    %v910 = vadd.f32 %v861, %v887
    %v911 = vadd.f32 %v862, %v889
    %v912 = vadd.f32 %v863, %v891
    %v913 = vadd.f32 %v864, %v893
    %v914 = vadd.f32 %v865, %v895
    %v915 = vadd.f32 %v866, %v897
    %v916 = vadd.f32 %v867, %v899
    %v917 = vadd.f32 %v868, %v901
    %v918 = vpack.c.bf16 %v910, %v910
    %v919 = vpack.c.bf16 %v911, %v911
    %v920 = vpack.c.bf16 %v912, %v912
    %v921 = vpack.c.bf16 %v913, %v913
    %v922 = vpack.c.bf16 %v914, %v914
    %v923 = vpack.c.bf16 %v915, %v915
    %v924 = vpack.c.bf16 %v916, %v916
    %v925 = vpack.c.bf16 %v917, %v917
    %s926 = scalar_lea.vmem %s6, 96
    %927 = vst.msk [vmem:[%s926] sm:$0xf] %vm650, %v918
    %928 = vst.msk [vmem:[%s926 + $0x4] sm:$0xf] %vm650, %v919
    %929 = vst.msk [vmem:[%s926 + $0x8] sm:$0xf] %vm650, %v920
    %930 = vst.msk [vmem:[%s926 + $0xc] sm:$0xf] %vm650, %v921
    %931 = vst.msk [vmem:[%s926 + $0x10] sm:$0xf] %vm650, %v922
    %932 = vst.msk [vmem:[%s926 + $0x14] sm:$0xf] %vm650, %v923
    %933 = vst.msk [vmem:[%s926 + $0x18] sm:$0xf] %vm650, %v924
    %934 = vst.msk [vmem:[%s926 + $0x1c] sm:$0xf] %vm650, %v925
    %s935 = scalar_lea.vmem %s0, 128
    %v936 = vld [vmem:[%s935] sm:$0xf]
    %v937 = vld [vmem:[%s935 + $0x4] sm:$0xf]
    %v938 = vld [vmem:[%s935 + $0x8] sm:$0xf]
    %v939 = vld [vmem:[%s935 + $0xc] sm:$0xf]
    %v940 = vld [vmem:[%s935 + $0x10] sm:$0xf]
    %v941 = vld [vmem:[%s935 + $0x14] sm:$0xf]
    %v942 = vld [vmem:[%s935 + $0x18] sm:$0xf]
    %v943 = vld [vmem:[%s935 + $0x1c] sm:$0xf]
    %v944 = vunpack.c.l.bf16 %v936
    %v945 = vunpack.c.l.bf16 %v937
    %v946 = vunpack.c.l.bf16 %v938
    %v947 = vunpack.c.l.bf16 %v939
    %v948 = vunpack.c.l.bf16 %v940
    %v949 = vunpack.c.l.bf16 %v941
    %v950 = vunpack.c.l.bf16 %v942
    %v951 = vunpack.c.l.bf16 %v943
    %v952 = vperm.slane %v562, 4
    %v953 = vmul.f32 %v944, %v952
    %v954 = vmul.f32 %v945, %v952
    %v955 = vmul.f32 %v946, %v952
    %v956 = vmul.f32 %v947, %v952
    %v957 = vmul.f32 %v948, %v952
    %v958 = vmul.f32 %v949, %v952
    %v959 = vmul.f32 %v950, %v952
    %v960 = vmul.f32 %v951, %v952
    %v961 = vperm.slane %v567, 4
    %v962 = vmul.f32 %v944, %v961
    %v963 = vmul.f32 %v945, %v961
    %v964 = vmul.f32 %v946, %v961
    %v965 = vmul.f32 %v947, %v961
    %v966 = vmul.f32 %v948, %v961
    %v967 = vmul.f32 %v949, %v961
    %v968 = vmul.f32 %v950, %v961
    %v969 = vmul.f32 %v951, %v961
    %978 = vrot.lane.b32.xlu0 %v962, 112
    %v979 = vpop.permute.xlu0 %978
    %980 = vrot.lane.b32.xlu0 %v963, 112
    %v981 = vpop.permute.xlu0 %980
    %982 = vrot.lane.b32.xlu0 %v964, 112
    %v983 = vpop.permute.xlu0 %982
    %984 = vrot.lane.b32.xlu0 %v965, 112
    %v985 = vpop.permute.xlu0 %984
    %986 = vrot.lane.b32.xlu0 %v966, 112
    %v987 = vpop.permute.xlu0 %986
    %988 = vrot.lane.b32.xlu0 %v967, 112
    %v989 = vpop.permute.xlu0 %988
    %990 = vrot.lane.b32.xlu0 %v968, 112
    %v991 = vpop.permute.xlu0 %990
    %992 = vrot.lane.b32.xlu0 %v969, 112
    %v993 = vpop.permute.xlu0 %992
    %v1002 = vadd.f32 %v953, %v979
    %v1003 = vadd.f32 %v954, %v981
    %v1004 = vadd.f32 %v955, %v983
    %v1005 = vadd.f32 %v956, %v985
    %v1006 = vadd.f32 %v957, %v987
    %v1007 = vadd.f32 %v958, %v989
    %v1008 = vadd.f32 %v959, %v991
    %v1009 = vadd.f32 %v960, %v993
    %v1010 = vpack.c.bf16 %v1002, %v1002
    %v1011 = vpack.c.bf16 %v1003, %v1003
    %v1012 = vpack.c.bf16 %v1004, %v1004
    %v1013 = vpack.c.bf16 %v1005, %v1005
    %v1014 = vpack.c.bf16 %v1006, %v1006
    %v1015 = vpack.c.bf16 %v1007, %v1007
    %v1016 = vpack.c.bf16 %v1008, %v1008
    %v1017 = vpack.c.bf16 %v1009, %v1009
    %s1018 = scalar_lea.vmem %s6, 128
    %1019 = vst.msk [vmem:[%s1018] sm:$0xf] %vm650, %v1010
    %1020 = vst.msk [vmem:[%s1018 + $0x4] sm:$0xf] %vm650, %v1011
    %1021 = vst.msk [vmem:[%s1018 + $0x8] sm:$0xf] %vm650, %v1012
    %1022 = vst.msk [vmem:[%s1018 + $0xc] sm:$0xf] %vm650, %v1013
    %1023 = vst.msk [vmem:[%s1018 + $0x10] sm:$0xf] %vm650, %v1014
    %1024 = vst.msk [vmem:[%s1018 + $0x14] sm:$0xf] %vm650, %v1015
    %1025 = vst.msk [vmem:[%s1018 + $0x18] sm:$0xf] %vm650, %v1016
    %1026 = vst.msk [vmem:[%s1018 + $0x1c] sm:$0xf] %vm650, %v1017
    %s1027 = scalar_lea.vmem %s0, 160
    %v1028 = vld [vmem:[%s1027] sm:$0xf]
    %v1029 = vld [vmem:[%s1027 + $0x4] sm:$0xf]
    %v1030 = vld [vmem:[%s1027 + $0x8] sm:$0xf]
    %v1031 = vld [vmem:[%s1027 + $0xc] sm:$0xf]
    %v1032 = vld [vmem:[%s1027 + $0x10] sm:$0xf]
    %v1033 = vld [vmem:[%s1027 + $0x14] sm:$0xf]
    %v1034 = vld [vmem:[%s1027 + $0x18] sm:$0xf]
    %v1035 = vld [vmem:[%s1027 + $0x1c] sm:$0xf]
    %v1036 = vunpack.c.l.bf16 %v1028
    %v1037 = vunpack.c.l.bf16 %v1029
    %v1038 = vunpack.c.l.bf16 %v1030
    %v1039 = vunpack.c.l.bf16 %v1031
    %v1040 = vunpack.c.l.bf16 %v1032
    %v1041 = vunpack.c.l.bf16 %v1033
    %v1042 = vunpack.c.l.bf16 %v1034
    %v1043 = vunpack.c.l.bf16 %v1035
    %v1044 = vperm.slane %v562, 5
    %v1045 = vmul.f32 %v1036, %v1044
    %v1046 = vmul.f32 %v1037, %v1044
    %v1047 = vmul.f32 %v1038, %v1044
    %v1048 = vmul.f32 %v1039, %v1044
    %v1049 = vmul.f32 %v1040, %v1044
    %v1050 = vmul.f32 %v1041, %v1044
    %v1051 = vmul.f32 %v1042, %v1044
    %v1052 = vmul.f32 %v1043, %v1044
    %v1053 = vperm.slane %v567, 5
    %v1054 = vmul.f32 %v1036, %v1053
    %v1055 = vmul.f32 %v1037, %v1053
    %v1056 = vmul.f32 %v1038, %v1053
    %v1057 = vmul.f32 %v1039, %v1053
    %v1058 = vmul.f32 %v1040, %v1053
    %v1059 = vmul.f32 %v1041, %v1053
    %v1060 = vmul.f32 %v1042, %v1053
    %v1061 = vmul.f32 %v1043, %v1053
    %1070 = vrot.lane.b32.xlu0 %v1054, 112
    %v1071 = vpop.permute.xlu0 %1070
    %1072 = vrot.lane.b32.xlu0 %v1055, 112
    %v1073 = vpop.permute.xlu0 %1072
    %1074 = vrot.lane.b32.xlu0 %v1056, 112
    %v1075 = vpop.permute.xlu0 %1074
    %1076 = vrot.lane.b32.xlu0 %v1057, 112
    %v1077 = vpop.permute.xlu0 %1076
    %1078 = vrot.lane.b32.xlu0 %v1058, 112
    %v1079 = vpop.permute.xlu0 %1078
    %1080 = vrot.lane.b32.xlu0 %v1059, 112
    %v1081 = vpop.permute.xlu0 %1080
    %1082 = vrot.lane.b32.xlu0 %v1060, 112
    %v1083 = vpop.permute.xlu0 %1082
    %1084 = vrot.lane.b32.xlu0 %v1061, 112
    %v1085 = vpop.permute.xlu0 %1084
    %v1094 = vadd.f32 %v1045, %v1071
    %v1095 = vadd.f32 %v1046, %v1073
    %v1096 = vadd.f32 %v1047, %v1075
    %v1097 = vadd.f32 %v1048, %v1077
    %v1098 = vadd.f32 %v1049, %v1079
    %v1099 = vadd.f32 %v1050, %v1081
    %v1100 = vadd.f32 %v1051, %v1083
    %v1101 = vadd.f32 %v1052, %v1085
    %v1102 = vpack.c.bf16 %v1094, %v1094
    %v1103 = vpack.c.bf16 %v1095, %v1095
    %v1104 = vpack.c.bf16 %v1096, %v1096
    %v1105 = vpack.c.bf16 %v1097, %v1097
    %v1106 = vpack.c.bf16 %v1098, %v1098
    %v1107 = vpack.c.bf16 %v1099, %v1099
    %v1108 = vpack.c.bf16 %v1100, %v1100
    %v1109 = vpack.c.bf16 %v1101, %v1101
    %s1110 = scalar_lea.vmem %s6, 160
    %1111 = vst.msk [vmem:[%s1110] sm:$0xf] %vm650, %v1102
    %1112 = vst.msk [vmem:[%s1110 + $0x4] sm:$0xf] %vm650, %v1103
    %1113 = vst.msk [vmem:[%s1110 + $0x8] sm:$0xf] %vm650, %v1104
    %1114 = vst.msk [vmem:[%s1110 + $0xc] sm:$0xf] %vm650, %v1105
    %1115 = vst.msk [vmem:[%s1110 + $0x10] sm:$0xf] %vm650, %v1106
    %1116 = vst.msk [vmem:[%s1110 + $0x14] sm:$0xf] %vm650, %v1107
    %1117 = vst.msk [vmem:[%s1110 + $0x18] sm:$0xf] %vm650, %v1108
    %1118 = vst.msk [vmem:[%s1110 + $0x1c] sm:$0xf] %vm650, %v1109
    %s1119 = scalar_lea.vmem %s0, 192
    %v1120 = vld [vmem:[%s1119] sm:$0xf]
    %v1121 = vld [vmem:[%s1119 + $0x4] sm:$0xf]
    %v1122 = vld [vmem:[%s1119 + $0x8] sm:$0xf]
    %v1123 = vld [vmem:[%s1119 + $0xc] sm:$0xf]
    %v1124 = vld [vmem:[%s1119 + $0x10] sm:$0xf]
    %v1125 = vld [vmem:[%s1119 + $0x14] sm:$0xf]
    %v1126 = vld [vmem:[%s1119 + $0x18] sm:$0xf]
    %v1127 = vld [vmem:[%s1119 + $0x1c] sm:$0xf]
    %v1128 = vunpack.c.l.bf16 %v1120
    %v1129 = vunpack.c.l.bf16 %v1121
    %v1130 = vunpack.c.l.bf16 %v1122
    %v1131 = vunpack.c.l.bf16 %v1123
    %v1132 = vunpack.c.l.bf16 %v1124
    %v1133 = vunpack.c.l.bf16 %v1125
    %v1134 = vunpack.c.l.bf16 %v1126
    %v1135 = vunpack.c.l.bf16 %v1127
    %v1136 = vperm.slane %v562, 6
    %v1137 = vmul.f32 %v1128, %v1136
    %v1138 = vmul.f32 %v1129, %v1136
    %v1139 = vmul.f32 %v1130, %v1136
    %v1140 = vmul.f32 %v1131, %v1136
    %v1141 = vmul.f32 %v1132, %v1136
    %v1142 = vmul.f32 %v1133, %v1136
    %v1143 = vmul.f32 %v1134, %v1136
    %v1144 = vmul.f32 %v1135, %v1136
    %v1145 = vperm.slane %v567, 6
    %v1146 = vmul.f32 %v1128, %v1145
    %v1147 = vmul.f32 %v1129, %v1145
    %v1148 = vmul.f32 %v1130, %v1145
    %v1149 = vmul.f32 %v1131, %v1145
    %v1150 = vmul.f32 %v1132, %v1145
    %v1151 = vmul.f32 %v1133, %v1145
    %v1152 = vmul.f32 %v1134, %v1145
    %v1153 = vmul.f32 %v1135, %v1145
    %1162 = vrot.lane.b32.xlu0 %v1146, 112
    %v1163 = vpop.permute.xlu0 %1162
    %1164 = vrot.lane.b32.xlu0 %v1147, 112
    %v1165 = vpop.permute.xlu0 %1164
    %1166 = vrot.lane.b32.xlu0 %v1148, 112
    %v1167 = vpop.permute.xlu0 %1166
    %1168 = vrot.lane.b32.xlu0 %v1149, 112
    %v1169 = vpop.permute.xlu0 %1168
    %1170 = vrot.lane.b32.xlu0 %v1150, 112
    %v1171 = vpop.permute.xlu0 %1170
    %1172 = vrot.lane.b32.xlu0 %v1151, 112
    %v1173 = vpop.permute.xlu0 %1172
    %1174 = vrot.lane.b32.xlu0 %v1152, 112
    %v1175 = vpop.permute.xlu0 %1174
    %1176 = vrot.lane.b32.xlu0 %v1153, 112
    %v1177 = vpop.permute.xlu0 %1176
    %v1186 = vadd.f32 %v1137, %v1163
    %v1187 = vadd.f32 %v1138, %v1165
    %v1188 = vadd.f32 %v1139, %v1167
    %v1189 = vadd.f32 %v1140, %v1169
    %v1190 = vadd.f32 %v1141, %v1171
    %v1191 = vadd.f32 %v1142, %v1173
    %v1192 = vadd.f32 %v1143, %v1175
    %v1193 = vadd.f32 %v1144, %v1177
    %v1194 = vpack.c.bf16 %v1186, %v1186
    %v1195 = vpack.c.bf16 %v1187, %v1187
    %v1196 = vpack.c.bf16 %v1188, %v1188
    %v1197 = vpack.c.bf16 %v1189, %v1189
    %v1198 = vpack.c.bf16 %v1190, %v1190
    %v1199 = vpack.c.bf16 %v1191, %v1191
    %v1200 = vpack.c.bf16 %v1192, %v1192
    %v1201 = vpack.c.bf16 %v1193, %v1193
    %s1202 = scalar_lea.vmem %s6, 192
    %1203 = vst.msk [vmem:[%s1202] sm:$0xf] %vm650, %v1194
    %1204 = vst.msk [vmem:[%s1202 + $0x4] sm:$0xf] %vm650, %v1195
    %1205 = vst.msk [vmem:[%s1202 + $0x8] sm:$0xf] %vm650, %v1196
    %1206 = vst.msk [vmem:[%s1202 + $0xc] sm:$0xf] %vm650, %v1197
    %1207 = vst.msk [vmem:[%s1202 + $0x10] sm:$0xf] %vm650, %v1198
    %1208 = vst.msk [vmem:[%s1202 + $0x14] sm:$0xf] %vm650, %v1199
    %1209 = vst.msk [vmem:[%s1202 + $0x18] sm:$0xf] %vm650, %v1200
    %1210 = vst.msk [vmem:[%s1202 + $0x1c] sm:$0xf] %vm650, %v1201
    %s1211 = scalar_lea.vmem %s0, 224
    %v1212 = vld [vmem:[%s1211] sm:$0xf]
    %v1213 = vld [vmem:[%s1211 + $0x4] sm:$0xf]
    %v1214 = vld [vmem:[%s1211 + $0x8] sm:$0xf]
    %v1215 = vld [vmem:[%s1211 + $0xc] sm:$0xf]
    %v1216 = vld [vmem:[%s1211 + $0x10] sm:$0xf]
    %v1217 = vld [vmem:[%s1211 + $0x14] sm:$0xf]
    %v1218 = vld [vmem:[%s1211 + $0x18] sm:$0xf]
    %v1219 = vld [vmem:[%s1211 + $0x1c] sm:$0xf]
    %v1220 = vunpack.c.l.bf16 %v1212
    %v1221 = vunpack.c.l.bf16 %v1213
    %v1222 = vunpack.c.l.bf16 %v1214
    %v1223 = vunpack.c.l.bf16 %v1215
    %v1224 = vunpack.c.l.bf16 %v1216
    %v1225 = vunpack.c.l.bf16 %v1217
    %v1226 = vunpack.c.l.bf16 %v1218
    %v1227 = vunpack.c.l.bf16 %v1219
    %v1228 = vperm.slane %v562, 7
    %v1229 = vmul.f32 %v1220, %v1228
    %v1230 = vmul.f32 %v1221, %v1228
    %v1231 = vmul.f32 %v1222, %v1228
    %v1232 = vmul.f32 %v1223, %v1228
    %v1233 = vmul.f32 %v1224, %v1228
    %v1234 = vmul.f32 %v1225, %v1228
    %v1235 = vmul.f32 %v1226, %v1228
    %v1236 = vmul.f32 %v1227, %v1228
    %v1237 = vperm.slane %v567, 7
    %v1238 = vmul.f32 %v1220, %v1237
    %v1239 = vmul.f32 %v1221, %v1237
    %v1240 = vmul.f32 %v1222, %v1237
    %v1241 = vmul.f32 %v1223, %v1237
    %v1242 = vmul.f32 %v1224, %v1237
    %v1243 = vmul.f32 %v1225, %v1237
    %v1244 = vmul.f32 %v1226, %v1237
    %v1245 = vmul.f32 %v1227, %v1237
    %1254 = vrot.lane.b32.xlu0 %v1238, 112
    %v1255 = vpop.permute.xlu0 %1254
    %1256 = vrot.lane.b32.xlu0 %v1239, 112
    %v1257 = vpop.permute.xlu0 %1256
    %1258 = vrot.lane.b32.xlu0 %v1240, 112
    %v1259 = vpop.permute.xlu0 %1258
    %1260 = vrot.lane.b32.xlu0 %v1241, 112
    %v1261 = vpop.permute.xlu0 %1260
    %1262 = vrot.lane.b32.xlu0 %v1242, 112
    %v1263 = vpop.permute.xlu0 %1262
    %1264 = vrot.lane.b32.xlu0 %v1243, 112
    %v1265 = vpop.permute.xlu0 %1264
    %1266 = vrot.lane.b32.xlu0 %v1244, 112
    %v1267 = vpop.permute.xlu0 %1266
    %1268 = vrot.lane.b32.xlu0 %v1245, 112
    %v1269 = vpop.permute.xlu0 %1268
    %v1278 = vadd.f32 %v1229, %v1255
    %v1279 = vadd.f32 %v1230, %v1257
    %v1280 = vadd.f32 %v1231, %v1259
    %v1281 = vadd.f32 %v1232, %v1261
    %v1282 = vadd.f32 %v1233, %v1263
    %v1283 = vadd.f32 %v1234, %v1265
    %v1284 = vadd.f32 %v1235, %v1267
    %v1285 = vadd.f32 %v1236, %v1269
    %v1286 = vpack.c.bf16 %v1278, %v1278
    %v1287 = vpack.c.bf16 %v1279, %v1279
    %v1288 = vpack.c.bf16 %v1280, %v1280
    %v1289 = vpack.c.bf16 %v1281, %v1281
    %v1290 = vpack.c.bf16 %v1282, %v1282
    %v1291 = vpack.c.bf16 %v1283, %v1283
    %v1292 = vpack.c.bf16 %v1284, %v1284
    %v1293 = vpack.c.bf16 %v1285, %v1285
    %s1294 = scalar_lea.vmem %s6, 224
    %1295 = vst.msk [vmem:[%s1294] sm:$0xf] %vm650, %v1286
    %1296 = vst.msk [vmem:[%s1294 + $0x4] sm:$0xf] %vm650, %v1287
    %1297 = vst.msk [vmem:[%s1294 + $0x8] sm:$0xf] %vm650, %v1288
    %1298 = vst.msk [vmem:[%s1294 + $0xc] sm:$0xf] %vm650, %v1289
    %1299 = vst.msk [vmem:[%s1294 + $0x10] sm:$0xf] %vm650, %v1290
    %1300 = vst.msk [vmem:[%s1294 + $0x14] sm:$0xf] %vm650, %v1291
    %1301 = vst.msk [vmem:[%s1294 + $0x18] sm:$0xf] %vm650, %v1292
    %1302 = vst.msk [vmem:[%s1294 + $0x1c] sm:$0xf] %vm650, %v1293
    // Predicated region
    $region46: #{classifier_forward.7} parent=1 // pred_check
      _
    $region47: #{classifier_forward.7} parent=1 // pred_check_branch
      %1304 = sbr.rel (0) target = $region49
    $region48: #{classifier_forward.7} parent=1 // pred_region
      _
    $region49: #{classifier_forward.7} parent=1 // pred_fallthru
      _
    // Predicated region
    $region50: #{classifier_forward.7} parent=1 // pred_check
      _
    $region51: #{classifier_forward.7} parent=1 // pred_check_branch
      %1306 = sbr.rel (0) target = $region53
    $region52: #{classifier_forward.7} parent=1 // pred_region
      _
    $region53: #{classifier_forward.7} parent=1 // pred_fallthru
      _
    %1307 = vsyncpa [#allocation3], 1
    %1308 = vsyncpa [#allocation5], 1
    %1309 = vsyncpa [#allocation8], 1

// kernel: classifier_forward.8
$region0: #{classifier_forward.8}
  #allocation0 [shape = 'u32[]', space=smem, size = 0x4, offset = 0x4, fixed_abs, tag = 'smem constant byte address 0x4 - core index']
  #allocation1 [shape = 'u32[72,128]{1,0:T(1,128)}', space=vmem, size = 0x9000, scoped, tag = 'internal scratch']
  %s0 = inlined_call_operand.vmem [shape: bf16[128,16], index: 0, kind: input, shape index: {}]
  %s1 = inlined_call_operand.hbm [shape: bf16[16,64], index: 1, kind: input, shape index: {}]
  %s2 = inlined_call_operand.hbm [shape: f32[1,64], index: 2, kind: input, shape index: {}]
  %s3 = inlined_call_operand.hbm [shape: f32[1,64], index: 3, kind: input, shape index: {}]
  %s4 = inlined_call_operand.vmem [shape: bf16[128,32], index: 4, kind: input, shape index: {}]
  %s5 = inlined_call_operand.hbm [shape: bf16[32,64], index: 5, kind: input, shape index: {}]
  %s6 = inlined_call_operand.hbm [shape: f32[1,64], index: 6, kind: input, shape index: {}]
  %s7 = inlined_call_operand.hbm [shape: f32[1,64], index: 7, kind: input, shape index: {}]
  %s8 = inlined_call_operand.vmem [shape: f32[8,64], index: 8, kind: output, shape index: {}]
  %s9 = sld [smem:[#allocation0]]
  $region66: #{classifier_forward.8} parent=0
    _
  %s11 = ssub.s32 1, %s9
  %s12 = scalar_select 0, %s11, %s9
  $region1: #{classifier_forward.8} parent=0
    #allocation2 [shape = 'u8[4096]{0}', space=vmem, size = 0x1000, scoped, tag = 'input window, operand 1, single buffered']
    #allocation3 [shape = 's32[1]{0}', space=sflag, size = 0x4, scoped, tag = 'scoped memory for classifier_forward.8']
    #allocation4 [shape = 'u8[512]{0}', space=vmem, size = 0x400, scoped, tag = 'input window, operand 2, single buffered']
    #allocation5 [shape = 's32[1]{0}', space=sflag, size = 0x4, scoped, tag = 'scoped memory for classifier_forward.8']
    #allocation6 [shape = 'u8[512]{0}', space=vmem, size = 0x400, scoped, tag = 'input window, operand 3, single buffered']
    #allocation7 [shape = 'u8[8192]{0}', space=vmem, size = 0x2000, scoped, tag = 'input window, operand 5, single buffered']
    #allocation8 [shape = 's32[1]{0}', space=sflag, size = 0x4, scoped, tag = 'scoped memory for classifier_forward.8']
    #allocation9 [shape = 'u8[512]{0}', space=vmem, size = 0x400, scoped, tag = 'input window, operand 6, single buffered']
    #allocation10 [shape = 'u8[512]{0}', space=vmem, size = 0x400, scoped, tag = 'input window, operand 7, single buffered']
    #allocation11 [shape = 's32[1]{0}', space=sflag, size = 0x4, scoped, tag = 'scoped memory for classifier_forward.8']
    %13 = vsyncpa [#allocation3], 0
    %14 = vsyncpa [#allocation5], 0
    %15 = vsyncpa [#allocation8], 0
    %16 = vsyncpa [#allocation11], 0
    // Predicated region
    $region2: #{classifier_forward.8} parent=1 // pred_check
      _
    $region3: #{classifier_forward.8} parent=1 // pred_check_branch
      %18 = sbr.rel (0) target = $region5
    $region4: #{classifier_forward.8} parent=1 // pred_region
      _
    $region5: #{classifier_forward.8} parent=1 // pred_fallthru
      _
    // Predicated region
    $region6: #{classifier_forward.8} parent=1 // pred_check
      _
    $region7: #{classifier_forward.8} parent=1 // pred_check_branch
      %20 = sbr.rel (0) target = $region9
    $region8: #{classifier_forward.8} parent=1 // pred_region
      %22 = vsyncadd [#allocation3], 0
      %s23 = sshll.u32 %s1, 4
      %s24 = int_to_ptr.hbm [resolvable:$true] %s23
      %s25 = sshll.u32 [#allocation2], 4
      %s26 = int_to_ptr.vmem [resolvable:$true] %s25
      %31 = dma.hbm_to_vmem [thread:$0]  %s24, 128, %s26, [#allocation3], 64, 64, 4
    $region9: #{classifier_forward.8} parent=1 // pred_fallthru
      _
    // Predicated region
    $region10: #{classifier_forward.8} parent=1 // pred_check
      _
    $region11: #{classifier_forward.8} parent=1 // pred_check_branch
      %33 = sbr.rel (0) target = $region13
    $region12: #{classifier_forward.8} parent=1 // pred_region
      %35 = vsyncadd [#allocation5], 0
      %s37 = sshll.u32 %s2, 4
      %s38 = int_to_ptr.hbm [resolvable:$true] %s37
      %s39 = sshll.u32 [#allocation4], 4
      %s40 = int_to_ptr.vmem [resolvable:$true] %s39
      %42 = dma.hbm_to_vmem [thread:$0]  %s38, 16, %s40, [#allocation5]
    $region13: #{classifier_forward.8} parent=1 // pred_fallthru
      _
    // Predicated region
    $region14: #{classifier_forward.8} parent=1 // pred_check
      _
    $region15: #{classifier_forward.8} parent=1 // pred_check_branch
      %44 = sbr.rel (0) target = $region17
    $region16: #{classifier_forward.8} parent=1 // pred_region
      %46 = vsyncadd [#allocation5], 0
      %s48 = sshll.u32 %s3, 4
      %s49 = int_to_ptr.hbm [resolvable:$true] %s48
      %s50 = sshll.u32 [#allocation6], 4
      %s51 = int_to_ptr.vmem [resolvable:$true] %s50
      %53 = dma.hbm_to_vmem [thread:$0]  %s49, 16, %s51, [#allocation5]
    $region17: #{classifier_forward.8} parent=1 // pred_fallthru
      _
    // Predicated region
    $region18: #{classifier_forward.8} parent=1 // pred_check
      _
    $region19: #{classifier_forward.8} parent=1 // pred_check_branch
      %55 = sbr.rel (0) target = $region21
    $region20: #{classifier_forward.8} parent=1 // pred_region
      _
    $region21: #{classifier_forward.8} parent=1 // pred_fallthru
      _
    // Predicated region
    $region22: #{classifier_forward.8} parent=1 // pred_check
      _
    $region23: #{classifier_forward.8} parent=1 // pred_check_branch
      %57 = sbr.rel (0) target = $region25
    $region24: #{classifier_forward.8} parent=1 // pred_region
      %59 = vsyncadd [#allocation8], 0
      %s60 = sshll.u32 %s5, 4
      %s61 = int_to_ptr.hbm [resolvable:$true] %s60
      %s62 = sshll.u32 [#allocation7], 4
      %s63 = int_to_ptr.vmem [resolvable:$true] %s62
      %68 = dma.hbm_to_vmem [thread:$0]  %s61, 256, %s63, [#allocation8], 64, 64, 4
    $region25: #{classifier_forward.8} parent=1 // pred_fallthru
      _
    // Predicated region
    $region26: #{classifier_forward.8} parent=1 // pred_check
      _
    $region27: #{classifier_forward.8} parent=1 // pred_check_branch
      %70 = sbr.rel (0) target = $region29
    $region28: #{classifier_forward.8} parent=1 // pred_region
      %72 = vsyncadd [#allocation8], 0
      %s74 = sshll.u32 %s6, 4
      %s75 = int_to_ptr.hbm [resolvable:$true] %s74
      %s76 = sshll.u32 [#allocation9], 4
      %s77 = int_to_ptr.vmem [resolvable:$true] %s76
      %79 = dma.hbm_to_vmem [thread:$0]  %s75, 16, %s77, [#allocation8]
    $region29: #{classifier_forward.8} parent=1 // pred_fallthru
      _
    // Predicated region
    $region30: #{classifier_forward.8} parent=1 // pred_check
      _
    $region31: #{classifier_forward.8} parent=1 // pred_check_branch
      %81 = sbr.rel (0) target = $region33
    $region32: #{classifier_forward.8} parent=1 // pred_region
      %83 = vsyncadd [#allocation11], 0
      %s85 = sshll.u32 %s7, 4
      %s86 = int_to_ptr.hbm [resolvable:$true] %s85
      %s87 = sshll.u32 [#allocation10], 4
      %s88 = int_to_ptr.vmem [resolvable:$true] %s87
      %90 = dma.hbm_to_vmem [thread:$0]  %s86, 16, %s88, [#allocation11]
    $region33: #{classifier_forward.8} parent=1 // pred_fallthru
      _
    // Predicated region
    $region34: #{classifier_forward.8} parent=1 // pred_check
      _
    $region35: #{classifier_forward.8} parent=1 // pred_check_branch
      %92 = sbr.rel (0) target = $region37
    $region36: #{classifier_forward.8} parent=1 // pred_region
      %94 = dma.done [#allocation3], 128
    $region37: #{classifier_forward.8} parent=1 // pred_fallthru
      _
    // Predicated region
    $region38: #{classifier_forward.8} parent=1 // pred_check
      _
    $region39: #{classifier_forward.8} parent=1 // pred_check_branch
      %96 = sbr.rel (0) target = $region41
    $region40: #{classifier_forward.8} parent=1 // pred_region
      %98 = dma.done [#allocation5], 16
    $region41: #{classifier_forward.8} parent=1 // pred_fallthru
      _
    // Predicated region
    $region42: #{classifier_forward.8} parent=1 // pred_check
      _
    $region43: #{classifier_forward.8} parent=1 // pred_check_branch
      %100 = sbr.rel (0) target = $region45
    $region44: #{classifier_forward.8} parent=1 // pred_region
      %102 = dma.done [#allocation5], 16
    $region45: #{classifier_forward.8} parent=1 // pred_fallthru
      _
    // Predicated region
    $region46: #{classifier_forward.8} parent=1 // pred_check
      _
    $region47: #{classifier_forward.8} parent=1 // pred_check_branch
      %104 = sbr.rel (0) target = $region49
    $region48: #{classifier_forward.8} parent=1 // pred_region
      %106 = dma.done [#allocation8], 256
    $region49: #{classifier_forward.8} parent=1 // pred_fallthru
      _
    // Predicated region
    $region50: #{classifier_forward.8} parent=1 // pred_check
      _
    $region51: #{classifier_forward.8} parent=1 // pred_check_branch
      %108 = sbr.rel (0) target = $region53
    $region52: #{classifier_forward.8} parent=1 // pred_region
      %110 = dma.done [#allocation8], 16
    $region53: #{classifier_forward.8} parent=1 // pred_fallthru
      _
    // Predicated region
    $region54: #{classifier_forward.8} parent=1 // pred_check
      _
    $region55: #{classifier_forward.8} parent=1 // pred_check_branch
      %112 = sbr.rel (0) target = $region57
    $region56: #{classifier_forward.8} parent=1 // pred_region
      %114 = dma.done [#allocation11], 16
    $region57: #{classifier_forward.8} parent=1 // pred_fallthru
      _
    %v116 = vld [vmem:[%s0] sm:$0xf]
    %v117 = vld [vmem:[%s0 + $0x4] sm:$0xf]
    %v118 = vld [vmem:[%s0 + $0x8] sm:$0xf]
    %v119 = vld [vmem:[%s0 + $0xc] sm:$0xf]
    %v120 = vld [vmem:[%s0 + $0x10] sm:$0xf]
    %v121 = vld [vmem:[%s0 + $0x14] sm:$0xf]
    %v122 = vld [vmem:[%s0 + $0x18] sm:$0xf]
    %v123 = vld [vmem:[%s0 + $0x1c] sm:$0xf]
    %v124 = vld [vmem:[%s0 + $0x20] sm:$0xf]
    %v125 = vld [vmem:[%s0 + $0x24] sm:$0xf]
    %v126 = vld [vmem:[%s0 + $0x28] sm:$0xf]
    %v127 = vld [vmem:[%s0 + $0x2c] sm:$0xf]
    %v128 = vld [vmem:[%s0 + $0x30] sm:$0xf]
    %v129 = vld [vmem:[%s0 + $0x34] sm:$0xf]
    %v130 = vld [vmem:[%s0 + $0x38] sm:$0xf]
    %v131 = vld [vmem:[%s0 + $0x3c] sm:$0xf]
    %v132 = vld [vmem:[#allocation2] sm:$0xf]
    %v133 = vld [vmem:[#allocation2 + $0x4] sm:$0xf]
    %v150 = vunpack.c.l.b16 %v116
    %v151 = vunpack.c.l.b16 %v117
    %v152 = vunpack.c.l.b16 %v118
    %v153 = vunpack.c.l.b16 %v119
    %v154 = vunpack.c.l.b16 %v120
    %v155 = vunpack.c.l.b16 %v121
    %v156 = vunpack.c.l.b16 %v122
    %v157 = vunpack.c.l.b16 %v123
    %v158 = vunpack.c.l.b16 %v124
    %v159 = vunpack.c.l.b16 %v125
    %v160 = vunpack.c.l.b16 %v126
    %v161 = vunpack.c.l.b16 %v127
    %v162 = vunpack.c.l.b16 %v128
    %v163 = vunpack.c.l.b16 %v129
    %v164 = vunpack.c.l.b16 %v130
    %v165 = vunpack.c.l.b16 %v131
    %v166 = vpack.c.b16 %v151, %v150
    %v167 = vpack.c.b16 %v153, %v152
    %v168 = vpack.c.b16 %v155, %v154
    %v169 = vpack.c.b16 %v157, %v156
    %v170 = vpack.c.b16 %v159, %v158
    %v171 = vpack.c.b16 %v161, %v160
    %v172 = vpack.c.b16 %v163, %v162
    %v173 = vpack.c.b16 %v165, %v164
    %v176 = vunpack.c.l.b16 %v132
    %v177 = vunpack.c.l.b16 %v133
    %v178 = vpack.c.b16 %v177, %v176
    %vm180 = vcmask 130048
    %v182 = vsel %vm180, %v166, 0
    %v185 = vsel %vm180, %v167, 0
    %v188 = vsel %vm180, %v168, 0
    %v191 = vsel %vm180, %v169, 0
    %v194 = vsel %vm180, %v170, 0
    %v197 = vsel %vm180, %v171, 0
    %v200 = vsel %vm180, %v172, 0
    %v203 = vsel %vm180, %v173, 0
    %205 = vmatpush.bf16.msra.mxu0 0
    %206 = vmatpush.bf16.msra.mxu0 0
    %207 = vmatpush.bf16.msra.mxu0 0
    %208 = vmatpush.bf16.msra.mxu0 0
    %209 = vmatpush.bf16.msra.mxu0 0
    %210 = vmatpush.bf16.msra.mxu0 0
    %211 = vmatpush.bf16.msra.mxu0 0
    %212 = vmatpush.bf16.msra.mxu0 %v178
    %213 = vmatmul.bf16.gmra.mxu0 %v182
    %v214 = vpop.f32.mrf.mxu0
    %v215 = vadd.f32 0.0, %v214
    %v216 = vpop.f32.mrf.mxu0
    %v217 = vadd.f32 0.0, %v216
    %218 = vmatmul.bf16.gmra.mxu0 %v185
    %v219 = vpop.f32.mrf.mxu0
    %v220 = vadd.f32 0.0, %v219
    %v221 = vpop.f32.mrf.mxu0
    %v222 = vadd.f32 0.0, %v221
    %223 = vmatmul.bf16.gmra.mxu0 %v188
    %v224 = vpop.f32.mrf.mxu0
    %v225 = vadd.f32 0.0, %v224
    %v226 = vpop.f32.mrf.mxu0
    %v227 = vadd.f32 0.0, %v226
    %228 = vmatmul.bf16.gmra.mxu0 %v191
    %v229 = vpop.f32.mrf.mxu0
    %v230 = vadd.f32 0.0, %v229
    %v231 = vpop.f32.mrf.mxu0
    %v232 = vadd.f32 0.0, %v231
    %233 = vmatmul.bf16.gmra.mxu0 %v194
    %v234 = vpop.f32.mrf.mxu0
    %v235 = vadd.f32 0.0, %v234
    %v236 = vpop.f32.mrf.mxu0
    %v237 = vadd.f32 0.0, %v236
    %238 = vmatmul.bf16.gmra.mxu0 %v197
    %v239 = vpop.f32.mrf.mxu0
    %v240 = vadd.f32 0.0, %v239
    %v241 = vpop.f32.mrf.mxu0
    %v242 = vadd.f32 0.0, %v241
    %243 = vmatmul.bf16.gmra.mxu0 %v200
    %v244 = vpop.f32.mrf.mxu0
    %v245 = vadd.f32 0.0, %v244
    %v246 = vpop.f32.mrf.mxu0
    %v247 = vadd.f32 0.0, %v246
    %248 = vmatmul.bf16.gmra.mxu0 %v203
    %v249 = vpop.f32.mrf.mxu0
    %v250 = vadd.f32 0.0, %v249
    %v251 = vpop.f32.mrf.mxu0
    %v252 = vadd.f32 0.0, %v251
    %253 = vdwg.mxu0
    %v254 = vld [vmem:[%s4] sm:$0xf]
    %v255 = vld [vmem:[%s4 + $0x4] sm:$0xf]
    %v256 = vld [vmem:[%s4 + $0x8] sm:$0xf]
    %v257 = vld [vmem:[%s4 + $0xc] sm:$0xf]
    %v258 = vld [vmem:[%s4 + $0x10] sm:$0xf]
    %v259 = vld [vmem:[%s4 + $0x14] sm:$0xf]
    %v260 = vld [vmem:[%s4 + $0x18] sm:$0xf]
    %v261 = vld [vmem:[%s4 + $0x1c] sm:$0xf]
    %v262 = vld [vmem:[%s4 + $0x20] sm:$0xf]
    %v263 = vld [vmem:[%s4 + $0x24] sm:$0xf]
    %v264 = vld [vmem:[%s4 + $0x28] sm:$0xf]
    %v265 = vld [vmem:[%s4 + $0x2c] sm:$0xf]
    %v266 = vld [vmem:[%s4 + $0x30] sm:$0xf]
    %v267 = vld [vmem:[%s4 + $0x34] sm:$0xf]
    %v268 = vld [vmem:[%s4 + $0x38] sm:$0xf]
    %v269 = vld [vmem:[%s4 + $0x3c] sm:$0xf]
    %v270 = vld [vmem:[#allocation7] sm:$0xf]
    %v271 = vld [vmem:[#allocation7 + $0x4] sm:$0xf]
    %v272 = vld [vmem:[#allocation7 + $0x8] sm:$0xf]
    %v273 = vld [vmem:[#allocation7 + $0xc] sm:$0xf]
    %v290 = vunpack.c.l.b16 %v254
    %v291 = vunpack.c.l.b16 %v255
    %v292 = vunpack.c.l.b16 %v256
    %v293 = vunpack.c.l.b16 %v257
    %v294 = vunpack.c.l.b16 %v258
    %v295 = vunpack.c.l.b16 %v259
    %v296 = vunpack.c.l.b16 %v260
    %v297 = vunpack.c.l.b16 %v261
    %v298 = vunpack.c.l.b16 %v262
    %v299 = vunpack.c.l.b16 %v263
    %v300 = vunpack.c.l.b16 %v264
    %v301 = vunpack.c.l.b16 %v265
    %v302 = vunpack.c.l.b16 %v266
    %v303 = vunpack.c.l.b16 %v267
    %v304 = vunpack.c.l.b16 %v268
    %v305 = vunpack.c.l.b16 %v269
    %v306 = vpack.c.b16 %v291, %v290
    %v307 = vpack.c.b16 %v293, %v292
    %v308 = vpack.c.b16 %v295, %v294
    %v309 = vpack.c.b16 %v297, %v296
    %v310 = vpack.c.b16 %v299, %v298
    %v311 = vpack.c.b16 %v301, %v300
    %v312 = vpack.c.b16 %v303, %v302
    %v313 = vpack.c.b16 %v305, %v304
    %v318 = vunpack.c.l.b16 %v270
    %v319 = vunpack.c.l.b16 %v271
    %v320 = vunpack.c.l.b16 %v272
    %v321 = vunpack.c.l.b16 %v273
    %v322 = vpack.c.b16 %v319, %v318
    %v323 = vpack.c.b16 %v321, %v320
    %vm326 = vcmask 261120
    %v328 = vsel %vm326, %v306, 0
    %v331 = vsel %vm326, %v307, 0
    %v334 = vsel %vm326, %v308, 0
    %v337 = vsel %vm326, %v309, 0
    %v340 = vsel %vm326, %v310, 0
    %v343 = vsel %vm326, %v311, 0
    %v346 = vsel %vm326, %v312, 0
    %v349 = vsel %vm326, %v313, 0
    %351 = vmatpush.bf16.msra.mxu0 0
    %352 = vmatpush.bf16.msra.mxu0 0
    %353 = vmatpush.bf16.msra.mxu0 0
    %354 = vmatpush.bf16.msra.mxu0 0
    %355 = vmatpush.bf16.msra.mxu0 0
    %356 = vmatpush.bf16.msra.mxu0 0
    %357 = vmatpush.bf16.msra.mxu0 %v323
    %358 = vmatpush.bf16.msra.mxu0 %v322
    %359 = vmatmul.bf16.gmra.mxu0 %v328
    %v360 = vpop.f32.mrf.mxu0
    %v361 = vadd.f32 0.0, %v360
    %v362 = vpop.f32.mrf.mxu0
    %v363 = vadd.f32 0.0, %v362
    %364 = vmatmul.bf16.gmra.mxu0 %v331
    %v365 = vpop.f32.mrf.mxu0
    %v366 = vadd.f32 0.0, %v365
    %v367 = vpop.f32.mrf.mxu0
    %v368 = vadd.f32 0.0, %v367
    %369 = vmatmul.bf16.gmra.mxu0 %v334
    %v370 = vpop.f32.mrf.mxu0
    %v371 = vadd.f32 0.0, %v370
    %v372 = vpop.f32.mrf.mxu0
    %v373 = vadd.f32 0.0, %v372
    %374 = vmatmul.bf16.gmra.mxu0 %v337
    %v375 = vpop.f32.mrf.mxu0
    %v376 = vadd.f32 0.0, %v375
    %v377 = vpop.f32.mrf.mxu0
    %v378 = vadd.f32 0.0, %v377
    %379 = vmatmul.bf16.gmra.mxu0 %v340
    %v380 = vpop.f32.mrf.mxu0
    %v381 = vadd.f32 0.0, %v380
    %v382 = vpop.f32.mrf.mxu0
    %v383 = vadd.f32 0.0, %v382
    %384 = vmatmul.bf16.gmra.mxu0 %v343
    %v385 = vpop.f32.mrf.mxu0
    %v386 = vadd.f32 0.0, %v385
    %v387 = vpop.f32.mrf.mxu0
    %v388 = vadd.f32 0.0, %v387
    %389 = vmatmul.bf16.gmra.mxu0 %v346
    %v390 = vpop.f32.mrf.mxu0
    %v391 = vadd.f32 0.0, %v390
    %v392 = vpop.f32.mrf.mxu0
    %v393 = vadd.f32 0.0, %v392
    %394 = vmatmul.bf16.gmra.mxu0 %v349
    %v395 = vpop.f32.mrf.mxu0
    %v396 = vadd.f32 0.0, %v395
    %v397 = vpop.f32.mrf.mxu0
    %v398 = vadd.f32 0.0, %v397
    %399 = vdwg.mxu0
    %v400 = vld [vmem:[#allocation4] sm:$0x1]
    %v402 = vperm.slane %v400, 0
    %v404 = vmul.f32 %v215, %v402
    %v405 = vmul.f32 %v217, %v402
    %v406 = vmul.f32 %v220, %v402
    %v407 = vmul.f32 %v222, %v402
    %v408 = vmul.f32 %v225, %v402
    %v409 = vmul.f32 %v227, %v402
    %v410 = vmul.f32 %v230, %v402
    %v411 = vmul.f32 %v232, %v402
    %v412 = vmul.f32 %v235, %v402
    %v413 = vmul.f32 %v237, %v402
    %v414 = vmul.f32 %v240, %v402
    %v415 = vmul.f32 %v242, %v402
    %v416 = vmul.f32 %v245, %v402
    %v417 = vmul.f32 %v247, %v402
    %v418 = vmul.f32 %v250, %v402
    %v419 = vmul.f32 %v252, %v402
    %v420 = vld [vmem:[#allocation6] sm:$0x1]
    %v422 = vperm.slane %v420, 0
    %v424 = vadd.f32 %v404, %v422
    %v425 = vadd.f32 %v405, %v422
    %v426 = vadd.f32 %v406, %v422
    %v427 = vadd.f32 %v407, %v422
    %v428 = vadd.f32 %v408, %v422
    %v429 = vadd.f32 %v409, %v422
    %v430 = vadd.f32 %v410, %v422
    %v431 = vadd.f32 %v411, %v422
    %v432 = vadd.f32 %v412, %v422
    %v433 = vadd.f32 %v413, %v422
    %v434 = vadd.f32 %v414, %v422
    %v435 = vadd.f32 %v415, %v422
    %v436 = vadd.f32 %v416, %v422
    %v437 = vadd.f32 %v417, %v422
    %v438 = vadd.f32 %v418, %v422
    %v439 = vadd.f32 %v419, %v422
    %v440 = vld [vmem:[#allocation9] sm:$0x1]
    %v442 = vperm.slane %v440, 0
    %v444 = vmul.f32 %v361, %v442
    %v445 = vmul.f32 %v363, %v442
    %v446 = vmul.f32 %v366, %v442
    %v447 = vmul.f32 %v368, %v442
    %v448 = vmul.f32 %v371, %v442
    %v449 = vmul.f32 %v373, %v442
    %v450 = vmul.f32 %v376, %v442
    %v451 = vmul.f32 %v378, %v442
    %v452 = vmul.f32 %v381, %v442
    %v453 = vmul.f32 %v383, %v442
    %v454 = vmul.f32 %v386, %v442
    %v455 = vmul.f32 %v388, %v442
    %v456 = vmul.f32 %v391, %v442
    %v457 = vmul.f32 %v393, %v442
    %v458 = vmul.f32 %v396, %v442
    %v459 = vmul.f32 %v398, %v442
    %v460 = vadd.f32 %v424, %v444
    %v461 = vadd.f32 %v425, %v445
    %v462 = vadd.f32 %v426, %v446
    %v463 = vadd.f32 %v427, %v447
    %v464 = vadd.f32 %v428, %v448
    %v465 = vadd.f32 %v429, %v449
    %v466 = vadd.f32 %v430, %v450
    %v467 = vadd.f32 %v431, %v451
    %v468 = vadd.f32 %v432, %v452
    %v469 = vadd.f32 %v433, %v453
    %v470 = vadd.f32 %v434, %v454
    %v471 = vadd.f32 %v435, %v455
    %v472 = vadd.f32 %v436, %v456
    %v473 = vadd.f32 %v437, %v457
    %v474 = vadd.f32 %v438, %v458
    %v475 = vadd.f32 %v439, %v459
    %v476 = vld [vmem:[#allocation10] sm:$0x1]
    %v478 = vperm.slane %v476, 0
    %v480 = vadd.f32 %v460, %v478
    %v481 = vadd.f32 %v461, %v478
    %v482 = vadd.f32 %v462, %v478
    %v483 = vadd.f32 %v463, %v478
    %v484 = vadd.f32 %v464, %v478
    %v485 = vadd.f32 %v465, %v478
    %v486 = vadd.f32 %v466, %v478
    %v487 = vadd.f32 %v467, %v478
    %v488 = vadd.f32 %v468, %v478
    %v489 = vadd.f32 %v469, %v478
    %v490 = vadd.f32 %v470, %v478
    %v491 = vadd.f32 %v471, %v478
    %v492 = vadd.f32 %v472, %v478
    %v493 = vadd.f32 %v473, %v478
    %v494 = vadd.f32 %v474, %v478
    %v495 = vadd.f32 %v475, %v478
    %v496 = vmax.f32 %v480, 0.0
    %v497 = vmax.f32 %v481, 0.0
    %v498 = vmax.f32 %v482, 0.0
    %v499 = vmax.f32 %v483, 0.0
    %v500 = vmax.f32 %v484, 0.0
    %v501 = vmax.f32 %v485, 0.0
    %v502 = vmax.f32 %v486, 0.0
    %v503 = vmax.f32 %v487, 0.0
    %v504 = vmax.f32 %v488, 0.0
    %v505 = vmax.f32 %v489, 0.0
    %v506 = vmax.f32 %v490, 0.0
    %v507 = vmax.f32 %v491, 0.0
    %v508 = vmax.f32 %v492, 0.0
    %v509 = vmax.f32 %v493, 0.0
    %v510 = vmax.f32 %v494, 0.0
    %v511 = vmax.f32 %v495, 0.0
    %vm512 = vcmask 523264
    %513 = vst.msk [vmem:[%s8] sm:$0xff] %vm512, 0.0
    %v514 = vsel %vm512, %v496, 0.0
    %v515 = vsel %vm512, %v497, 0.0
    %v516 = vadd.f32 %v514, %v515
    %v517 = vsel %vm512, %v498, 0.0
    %v518 = vadd.f32 %v516, %v517
    %v519 = vsel %vm512, %v499, 0.0
    %v520 = vadd.f32 %v518, %v519
    %v521 = vsel %vm512, %v500, 0.0
    %v522 = vadd.f32 %v520, %v521
    %v523 = vsel %vm512, %v501, 0.0
    %v524 = vadd.f32 %v522, %v523
    %v525 = vsel %vm512, %v502, 0.0
    %v526 = vadd.f32 %v524, %v525
    %v527 = vsel %vm512, %v503, 0.0
    %v528 = vadd.f32 %v526, %v527
    %v529 = vrot.slane %v528, 4
    %v530 = vadd.f32 %v528, %v529
    %v531 = vrot.slane %v530, 2
    %v532 = vadd.f32 %v530, %v531
    %v533 = vrot.slane %v532, 1
    %v534 = vadd.f32 %v532, %v533
    %v535 = vrcp.pop 64.0
    %v536 = vmul.f32 64.0, %v535
    %v537 = vsub.f32 1.0, %v536
    %v538 = vmul.f32 %v535, %v537
    %v539 = vadd.f32 %v535, %v538
    %vm540 = vweird.f32 %v535
    %v541 = vsel %vm540, %v535, %v539
    %v542 = vmul.f32 %v534, %v541
    %vm543 = vcmask 516096
    %544 = vst.msk [vmem:[%s8] sm:$0x1] %vm543, %v542
    %v545 = vsel %vm512, %v504, 0.0
    %v546 = vsel %vm512, %v505, 0.0
    %v547 = vadd.f32 %v545, %v546
    %v548 = vsel %vm512, %v506, 0.0
    %v549 = vadd.f32 %v547, %v548
    %v550 = vsel %vm512, %v507, 0.0
    %v551 = vadd.f32 %v549, %v550
    %v552 = vsel %vm512, %v508, 0.0
    %v553 = vadd.f32 %v551, %v552
    %v554 = vsel %vm512, %v509, 0.0
    %v555 = vadd.f32 %v553, %v554
    %v556 = vsel %vm512, %v510, 0.0
    %v557 = vadd.f32 %v555, %v556
    %v558 = vsel %vm512, %v511, 0.0
    %v559 = vadd.f32 %v557, %v558
    %v560 = vrot.slane %v559, 4
    %v561 = vadd.f32 %v559, %v560
    %v562 = vrot.slane %v561, 2
    %v563 = vadd.f32 %v561, %v562
    %v564 = vrot.slane %v563, 1
    %v565 = vadd.f32 %v563, %v564
    %v566 = vmul.f32 %v565, %v541
    %567 = vst.msk [vmem:[%s8 + $0x1] sm:$0x1] %vm543, %v566
    // Predicated region
    $region58: #{classifier_forward.8} parent=1 // pred_check
      _
    $region59: #{classifier_forward.8} parent=1 // pred_check_branch
      %569 = sbr.rel (0) target = $region61
    $region60: #{classifier_forward.8} parent=1 // pred_region
      _
    $region61: #{classifier_forward.8} parent=1 // pred_fallthru
      _
    // Predicated region
    $region62: #{classifier_forward.8} parent=1 // pred_check
      _
    $region63: #{classifier_forward.8} parent=1 // pred_check_branch
      %571 = sbr.rel (0) target = $region65
    $region64: #{classifier_forward.8} parent=1 // pred_region
      _
    $region65: #{classifier_forward.8} parent=1 // pred_fallthru
      _
    %572 = vsyncpa [#allocation3], 1
    %573 = vsyncpa [#allocation5], 1
    %574 = vsyncpa [#allocation8], 1
    %575 = vsyncpa [#allocation11], 1

// kernel: classifier_forward.9
$region0: #{classifier_forward.9}
  #allocation0 [shape = 'u32[]', space=smem, size = 0x4, offset = 0x4, fixed_abs, tag = 'smem constant byte address 0x4 - core index']
  #allocation1 [shape = 'u32[72,128]{1,0:T(1,128)}', space=vmem, size = 0x9000, scoped, tag = 'internal scratch']
  %s0 = inlined_call_operand.vmem [shape: f32[8,64], index: 0, kind: input, shape index: {}]
  %s1 = inlined_call_operand.hbm [shape: bf16[64,50176], index: 1, kind: input, shape index: {}]
  %s2 = inlined_call_operand.hbm [shape: f32[1,50176], index: 2, kind: input, shape index: {}]
  %s3 = inlined_call_operand.hbm [shape: f32[1,50176], index: 3, kind: input, shape index: {}]
  %s4 = inlined_call_operand.vmem [shape: f32[8,50176], index: 4, kind: output, shape index: {}]
  %s5 = sld [smem:[#allocation0]]
  $region61: #{classifier_forward.9} parent=0
    _
  %s7 = ssub.s32 1, %s5
  %s8 = scalar_select 0, %s7, %s5
  $region1: #{classifier_forward.9} parent=0
    #allocation2 [shape = 'u8[3211264]{0}', space=vmem, size = 0x310000, scoped, tag = 'input window, operand 1']
    #allocation3 [shape = 's32[2]{0}', space=sflag, size = 0x8, scoped, tag = 'scoped memory for classifier_forward.9']
    #allocation4 [shape = 'u8[100352]{0}', space=vmem, size = 0x18800, scoped, tag = 'input window, operand 2']
    #allocation5 [shape = 's32[2]{0}', space=sflag, size = 0x8, scoped, tag = 'scoped memory for classifier_forward.9']
    #allocation6 [shape = 'u8[100352]{0}', space=vmem, size = 0x18800, scoped, tag = 'input window, operand 3']
    %9 = vsyncpa [#allocation3], 0
    %s10 = scalar_lea.sflag [#allocation3], 1
    %11 = vsyncpa %s10, 0
    %12 = vsyncpa [#allocation5], 0
    %s13 = scalar_lea.sflag [#allocation5], 1
    %14 = vsyncpa %s13, 0
    loop: start=0, step=1, limit=6
    $region2: #{classifier_forward.9} parent=1 // loop_pre_header
      _
    $region3: #{classifier_forward.9} parent=1 // loop_header
      %s16 = sphi 0, %s20
      %p17 = scmp.ge.s32.totalorder %s16, 6
      %s24 = sphi 0, %s24
      %s26 = sphi 0, %s24
      %s27 = sphi 0, %s26
      %s41 = sphi 0, %s27
      %s47 = sphi 0, %s49
      %s50 = sphi 0, %s47
      %s51 = sphi 0, %s50
      %s67 = sphi 0, %s51
      %s73 = sphi 0, %s75
      %s76 = sphi 0, %s73
      %s77 = sphi 0, %s76
      %s93 = sphi 0, %s77
      %s99 = sphi 0, %s101
      %s102 = sphi 0, %s99
      %s103 = sphi 0, %s102
      %s119 = sphi 0, %s103
      %s125 = sphi 0, %s127
      %s128 = sphi 0, %s125
      %s129 = sphi 0, %s128
      %s145 = sphi 0, %s129
    $region4: #{classifier_forward.9} parent=1 // loop_header_branch
      %19 = sbr.rel (%p17) target = $region8
    $region5: #{classifier_forward.9} parent=1 // loop_body
      %s21 = ssub.s32 %s16, 1
      %s22 = ssub.s32 %s16, 2
      %s23 = sadd.s32 %s16, 1
      %s25 = sadd.s32 %s24, 1
      %p28 = scmp.eq.s32.totalorder %s16, 3
      %p29 = scmp.ne.s32.totalorder %s24, %s26
      %p30 = scmp.eq.s32.totalorder %s16, 0
      %p31 = por %p29, %p30
      %p32 = scmp.ne.s32.totalorder %s24, %s26
      %p33 = scmp.eq.s32.totalorder %s21, 3
      %p34 = por %p32, %p33
      %p35 = scmp.ne.s32.totalorder %s26, %s27
      %p36 = scmp.eq.s32.totalorder %s21, 0
      %p37 = por %p35, %p36
      %p38 = scmp.ne.s32.totalorder %s26, %s27
      %p39 = scmp.eq.s32.totalorder %s22, 3
      %p40 = por %p38, %p39
      %p42 = scmp.ne.s32.totalorder %s27, %s41
      %p43 = scmp.eq.s32.totalorder %s22, 0
      %p44 = por %p42, %p43
      %s45 = ssub.s32 %s16, %s23
      %p46 = scmp.eq.s32.totalorder %s45, 0
      %s48 = sadd.s32 %s47, 1
      %s49 = scalar_select %p46, %s47, %s48
      %p52 = pneg %p46
      %p53 = scmp.eq.s32.totalorder %s16, 3
      %p54 = por %p52, %p53
      %p55 = scmp.ne.s32.totalorder %s47, %s50
      %p56 = scmp.eq.s32.totalorder %s16, 0
      %p57 = por %p55, %p56
      %p58 = scmp.ne.s32.totalorder %s47, %s50
      %p59 = scmp.eq.s32.totalorder %s21, 3
      %p60 = por %p58, %p59
      %p61 = scmp.ne.s32.totalorder %s50, %s51
      %p62 = scmp.eq.s32.totalorder %s21, 0
      %p63 = por %p61, %p62
      %p64 = scmp.ne.s32.totalorder %s50, %s51
      %p65 = scmp.eq.s32.totalorder %s22, 3
      %p66 = por %p64, %p65
      %p68 = scmp.ne.s32.totalorder %s51, %s67
      %p69 = scmp.eq.s32.totalorder %s22, 0
      %p70 = por %p68, %p69
      %s71 = ssub.s32 %s16, %s23
      %p72 = scmp.eq.s32.totalorder %s71, 0
      %s74 = sadd.s32 %s73, 1
      %s75 = scalar_select %p72, %s73, %s74
      %p78 = pneg %p72
      %p79 = scmp.eq.s32.totalorder %s16, 3
      %p80 = por %p78, %p79
      %p81 = scmp.ne.s32.totalorder %s73, %s76
      %p82 = scmp.eq.s32.totalorder %s16, 0
      %p83 = por %p81, %p82
      %p84 = scmp.ne.s32.totalorder %s73, %s76
      %p85 = scmp.eq.s32.totalorder %s21, 3
      %p86 = por %p84, %p85
      %p87 = scmp.ne.s32.totalorder %s76, %s77
      %p88 = scmp.eq.s32.totalorder %s21, 0
      %p89 = por %p87, %p88
      %p90 = scmp.ne.s32.totalorder %s76, %s77
      %p91 = scmp.eq.s32.totalorder %s22, 3
      %p92 = por %p90, %p91
      %p94 = scmp.ne.s32.totalorder %s77, %s93
      %p95 = scmp.eq.s32.totalorder %s22, 0
      %p96 = por %p94, %p95
      %s97 = ssub.s32 %s16, %s23
      %p98 = scmp.eq.s32.totalorder %s97, 0
      %s100 = sadd.s32 %s99, 1
      %s101 = scalar_select %p98, %s99, %s100
      %p104 = pneg %p98
      %p105 = scmp.eq.s32.totalorder %s16, 3
      %p106 = por %p104, %p105
      %p107 = scmp.ne.s32.totalorder %s99, %s102
      %p108 = scmp.eq.s32.totalorder %s16, 0
      %p109 = por %p107, %p108
      %p110 = scmp.ne.s32.totalorder %s99, %s102
      %p111 = scmp.eq.s32.totalorder %s21, 3
      %p112 = por %p110, %p111
      %p113 = scmp.ne.s32.totalorder %s102, %s103
      %p114 = scmp.eq.s32.totalorder %s21, 0
      %p115 = por %p113, %p114
      %p116 = scmp.ne.s32.totalorder %s102, %s103
      %p117 = scmp.eq.s32.totalorder %s22, 3
      %p118 = por %p116, %p117
      %p120 = scmp.ne.s32.totalorder %s103, %s119
      %p121 = scmp.eq.s32.totalorder %s22, 0
      %p122 = por %p120, %p121
      %s123 = ssub.s32 %s16, %s23
      %p124 = scmp.eq.s32.totalorder %s123, 0
      %s126 = sadd.s32 %s125, 1
      %s127 = scalar_select %p124, %s125, %s126
      %p130 = pneg %p124
      %p131 = scmp.eq.s32.totalorder %s16, 3
      %p132 = por %p130, %p131
      %p133 = scmp.ne.s32.totalorder %s125, %s128
      %p134 = scmp.eq.s32.totalorder %s16, 0
      %p135 = por %p133, %p134
      %p136 = scmp.ne.s32.totalorder %s125, %s128
      %p137 = scmp.eq.s32.totalorder %s21, 3
      %p138 = por %p136, %p137
      %p139 = scmp.ne.s32.totalorder %s128, %s129
      %p140 = scmp.eq.s32.totalorder %s21, 0
      %p141 = por %p139, %p140
      %p142 = scmp.ne.s32.totalorder %s128, %s129
      %p143 = scmp.eq.s32.totalorder %s22, 3
      %p144 = por %p142, %p143
      %p146 = scmp.ne.s32.totalorder %s129, %s145
      %p147 = scmp.eq.s32.totalorder %s22, 0
      %p148 = por %p146, %p147
      %p149 = scmp.le.s32.totalorder 1, %s16
      %p150 = scmp.lt.s32.totalorder %s16, 5
      %p151 = pnand %p149, %p150
      %p152 = pneg %p151
      // Predicated region
      $region9: #{classifier_forward.9} parent=5 // pred_check
        _
      $region10: #{classifier_forward.9} parent=5 // pred_check_branch
        %154 = sbr.rel (%p151) target = $region12
      $region11: #{classifier_forward.9} parent=5 // pred_region
        %s155 = ssub.s32 %s16, 1
        // Predicated region
        $region13: #{classifier_forward.9} parent=11 // pred_check
          %p156 = pneg %p37
        $region14: #{classifier_forward.9} parent=11 // pred_check_branch
          %158 = sbr.rel (%p156) target = $region16
        $region15: #{classifier_forward.9} parent=11 // pred_region
          _
        $region16: #{classifier_forward.9} parent=11 // pred_fallthru
          _
      $region12: #{classifier_forward.9} parent=5 // pred_fallthru
        _
      %p159 = scmp.lt.s32.totalorder %s16, 4
      // Predicated region
      $region17: #{classifier_forward.9} parent=5 // pred_check
        %p160 = pneg %p159
      $region18: #{classifier_forward.9} parent=5 // pred_check_branch
        %162 = sbr.rel (%p160) target = $region20
      $region19: #{classifier_forward.9} parent=5 // pred_region
        // Predicated region
        $region21: #{classifier_forward.9} parent=19 // pred_check
          %p163 = pneg %p57
        $region22: #{classifier_forward.9} parent=19 // pred_check_branch
          %165 = sbr.rel (%p163) target = $region24
        $region23: #{classifier_forward.9} parent=19 // pred_region
          %s166 = sand.u32 %s47, 1
          %s167 = scalar_lea.sflag [#allocation3], %s166
          %s168 = sand.u32 %s47, 1
          %s169 = smul.addr %s168, 3136
          %s170 = scalar_lea.vmem [#allocation2], %s169
          %s171 = smul.u32 98, %s16
          %173 = vsyncadd %s167, 0
          %s174 = smul.addr %s171, 4
          %s175 = scalar_lea.hbm %s1, %s174
          %s176 = sshll.u32 %s175, 4
          %s177 = int_to_ptr.hbm [resolvable:$true] %s176
          %s178 = sshll.u32 %s170, 4
          %s179 = int_to_ptr.vmem [resolvable:$true] %s178
          %184 = dma.hbm_to_vmem [thread:$0]  %s177, 50176, %s179, %s167, 25088, 6272, 392
        $region24: #{classifier_forward.9} parent=19 // pred_fallthru
          _
        // Predicated region
        $region25: #{classifier_forward.9} parent=19 // pred_check
          %p185 = pneg %p83
        $region26: #{classifier_forward.9} parent=19 // pred_check_branch
          %187 = sbr.rel (%p185) target = $region28
        $region27: #{classifier_forward.9} parent=19 // pred_region
          %s188 = sand.u32 %s16, 1
          %s189 = scalar_lea.sflag [#allocation5], %s188
          %s190 = sand.u32 %s73, 1
          %s191 = smul.addr %s190, 98
          %s192 = scalar_lea.vmem [#allocation4], %s191
          %s193 = smul.u32 98, %s16
          %195 = vsyncadd %s189, 0
          %s196 = scalar_lea.hbm %s2, %s193
          %s198 = sshll.u32 %s196, 4
          %s199 = int_to_ptr.hbm [resolvable:$true] %s198
          %s200 = sshll.u32 %s192, 4
          %s201 = int_to_ptr.vmem [resolvable:$true] %s200
          %203 = dma.hbm_to_vmem [thread:$0]  %s199, 1568, %s201, %s189
        $region28: #{classifier_forward.9} parent=19 // pred_fallthru
          _
        // Predicated region
        $region29: #{classifier_forward.9} parent=19 // pred_check
          %p204 = pneg %p109
        $region30: #{classifier_forward.9} parent=19 // pred_check_branch
          %206 = sbr.rel (%p204) target = $region32
        $region31: #{classifier_forward.9} parent=19 // pred_region
          %s207 = sand.u32 %s16, 1
          %s208 = scalar_lea.sflag [#allocation5], %s207
          %s209 = sand.u32 %s99, 1
          %s210 = smul.addr %s209, 98
          %s211 = scalar_lea.vmem [#allocation6], %s210
          %s212 = smul.u32 98, %s16
          %214 = vsyncadd %s208, 0
          %s215 = scalar_lea.hbm %s3, %s212
          %s217 = sshll.u32 %s215, 4
          %s218 = int_to_ptr.hbm [resolvable:$true] %s217
          %s219 = sshll.u32 %s211, 4
          %s220 = int_to_ptr.vmem [resolvable:$true] %s219
          %222 = dma.hbm_to_vmem [thread:$0]  %s218, 1568, %s220, %s208
        $region32: #{classifier_forward.9} parent=19 // pred_fallthru
          _
      $region20: #{classifier_forward.9} parent=5 // pred_fallthru
        _
      %p223 = scmp.le.s32.totalorder 1, %s16
      %p224 = scmp.lt.s32.totalorder %s16, 5
      %p225 = pnand %p223, %p224
      %p226 = pneg %p225
      // Predicated region
      $region33: #{classifier_forward.9} parent=5 // pred_check
        _
      $region34: #{classifier_forward.9} parent=5 // pred_check_branch
        %228 = sbr.rel (%p225) target = $region36
      $region35: #{classifier_forward.9} parent=5 // pred_region
        %s229 = ssub.s32 %s16, 1
        %s230 = sand.u32 %s50, 1
        %s231 = scalar_lea.sflag [#allocation3], %s230
        %s232 = sand.u32 %s50, 1
        %s233 = smul.addr %s232, 3136
        %s234 = scalar_lea.vmem [#allocation2], %s233
        // Predicated region
        $region37: #{classifier_forward.9} parent=35 // pred_check
          %p235 = pneg %p63
        $region38: #{classifier_forward.9} parent=35 // pred_check_branch
          %237 = sbr.rel (%p235) target = $region40
        $region39: #{classifier_forward.9} parent=35 // pred_region
          %239 = dma.done %s231, 50176
        $region40: #{classifier_forward.9} parent=35 // pred_fallthru
          _
        %s240 = sand.u32 %s21, 1
        %s241 = scalar_lea.sflag [#allocation5], %s240
        %s242 = sand.u32 %s76, 1
        %s243 = smul.addr %s242, 98
        %s244 = scalar_lea.vmem [#allocation4], %s243
        // Predicated region
        $region41: #{classifier_forward.9} parent=35 // pred_check
          %p245 = pneg %p89
        $region42: #{classifier_forward.9} parent=35 // pred_check_branch
          %247 = sbr.rel (%p245) target = $region44
        $region43: #{classifier_forward.9} parent=35 // pred_region
          %249 = dma.done %s241, 1568
        $region44: #{classifier_forward.9} parent=35 // pred_fallthru
          _
        %s250 = sand.u32 %s21, 1
        %s251 = scalar_lea.sflag [#allocation5], %s250
        %s252 = sand.u32 %s102, 1
        %s253 = smul.addr %s252, 98
        %s254 = scalar_lea.vmem [#allocation6], %s253
        // Predicated region
        $region45: #{classifier_forward.9} parent=35 // pred_check
          %p255 = pneg %p115
        $region46: #{classifier_forward.9} parent=35 // pred_check_branch
          %257 = sbr.rel (%p255) target = $region48
        $region47: #{classifier_forward.9} parent=35 // pred_region
          %259 = dma.done %s251, 1568
        $region48: #{classifier_forward.9} parent=35 // pred_fallthru
          _
        %p260 = pneg %p37
        %p261 = pneg %p34
        %s262 = sand.u32 %s50, 1
        %s263 = scalar_lea.sflag [#allocation3], %s262
        %s264 = sand.u32 %s50, 1
        %s265 = smul.addr %s264, 3136
        %s266 = scalar_lea.vmem [#allocation2], %s265
        %p267 = pneg %p63
        %p268 = pneg %p60
        %s269 = sand.u32 %s21, 1
        %s270 = scalar_lea.sflag [#allocation5], %s269
        %s271 = sand.u32 %s76, 1
        %s272 = smul.addr %s271, 98
        %s273 = scalar_lea.vmem [#allocation4], %s272
        %p274 = pneg %p89
        %p275 = pneg %p86
        %s276 = sand.u32 %s21, 1
        %s277 = scalar_lea.sflag [#allocation5], %s276
        %s278 = sand.u32 %s102, 1
        %s279 = smul.addr %s278, 98
        %s280 = scalar_lea.vmem [#allocation6], %s279
        %p281 = pneg %p115
        %p282 = pneg %p112
        %p283 = pneg %p141
        %p284 = pneg %p138
        %s285 = smul.u32 98, %s21
        %p286 = scmp.lt.s32.totalorder %s285, 391
        %s287 = scalar_select %p286, %s285, 391
        %s288 = smul.addr %s287, 8
        %s289 = scalar_lea.vmem %s4, %s288
        %s290 = smul.u32 98, %s21
        %s291 = smul.u32 98, %s21
        %s292 = smul.u32 98, %s21
        %s293 = smul.u32 98, %s21
        %p294 = scmp.lt.s32.totalorder %s293, 391
        %s295 = scalar_select %p294, %s293, 391
        %s296 = smul.addr %s295, 8
        %s297 = scalar_lea.vmem %s4, %s296
        %s298 = smul.u32 98, %s21
        %v300 = vld [vmem:[%s0] sm:$0xff]
        %v301 = vpack.c.bf16 %v300, %v300
        %v302 = vld [vmem:[%s234] sm:$0xff]
        %v303 = vld [vmem:[%s234 + $0x8] sm:$0xff]
        %v304 = vld [vmem:[%s234 + $0x10] sm:$0xff]
        %v305 = vld [vmem:[%s234 + $0x18] sm:$0xff]
        %v306 = vld [vmem:[%s234 + $0x20] sm:$0xff]
        %v307 = vld [vmem:[%s234 + $0x28] sm:$0xff]
        %v308 = vld [vmem:[%s234 + $0x30] sm:$0xff]
        %v309 = vld [vmem:[%s234 + $0x188] sm:$0xff]
        %v310 = vld [vmem:[%s234 + $0x190] sm:$0xff]
        %v311 = vld [vmem:[%s234 + $0x198] sm:$0xff]
        %v312 = vld [vmem:[%s234 + $0x1a0] sm:$0xff]
        %v313 = vld [vmem:[%s234 + $0x1a8] sm:$0xff]
        %v314 = vld [vmem:[%s234 + $0x1b0] sm:$0xff]
        %v315 = vld [vmem:[%s234 + $0x1b8] sm:$0xff]
        %v316 = vld [vmem:[%s234 + $0x310] sm:$0xff]
        %v317 = vld [vmem:[%s234 + $0x318] sm:$0xff]
        %v318 = vld [vmem:[%s234 + $0x320] sm:$0xff]
        %v319 = vld [vmem:[%s234 + $0x328] sm:$0xff]
        %v320 = vld [vmem:[%s234 + $0x330] sm:$0xff]
        %v321 = vld [vmem:[%s234 + $0x338] sm:$0xff]
        %v322 = vld [vmem:[%s234 + $0x340] sm:$0xff]
        %v323 = vld [vmem:[%s234 + $0x498] sm:$0xff]
        %v324 = vld [vmem:[%s234 + $0x4a0] sm:$0xff]
        %v325 = vld [vmem:[%s234 + $0x4a8] sm:$0xff]
        %v326 = vld [vmem:[%s234 + $0x4b0] sm:$0xff]
        %v327 = vld [vmem:[%s234 + $0x4b8] sm:$0xff]
        %v328 = vld [vmem:[%s234 + $0x4c0] sm:$0xff]
        %v329 = vld [vmem:[%s234 + $0x4c8] sm:$0xff]
        %v330 = vld [vmem:[%s234 + $0x620] sm:$0xff]
        %v331 = vld [vmem:[%s234 + $0x628] sm:$0xff]
        %v332 = vld [vmem:[%s234 + $0x630] sm:$0xff]
        %v333 = vld [vmem:[%s234 + $0x638] sm:$0xff]
        %v334 = vld [vmem:[%s234 + $0x640] sm:$0xff]
        %v335 = vld [vmem:[%s234 + $0x648] sm:$0xff]
        %v336 = vld [vmem:[%s234 + $0x650] sm:$0xff]
        %v337 = vld [vmem:[%s234 + $0x7a8] sm:$0xff]
        %v338 = vld [vmem:[%s234 + $0x7b0] sm:$0xff]
        %v339 = vld [vmem:[%s234 + $0x7b8] sm:$0xff]
        %v340 = vld [vmem:[%s234 + $0x7c0] sm:$0xff]
        %v341 = vld [vmem:[%s234 + $0x7c8] sm:$0xff]
        %v342 = vld [vmem:[%s234 + $0x7d0] sm:$0xff]
        %v343 = vld [vmem:[%s234 + $0x7d8] sm:$0xff]
        %v344 = vld [vmem:[%s234 + $0x930] sm:$0xff]
        %v345 = vld [vmem:[%s234 + $0x938] sm:$0xff]
        %v346 = vld [vmem:[%s234 + $0x940] sm:$0xff]
        %v347 = vld [vmem:[%s234 + $0x948] sm:$0xff]
        %v348 = vld [vmem:[%s234 + $0x950] sm:$0xff]
        %v349 = vld [vmem:[%s234 + $0x958] sm:$0xff]
        %v350 = vld [vmem:[%s234 + $0x960] sm:$0xff]
        %v351 = vld [vmem:[%s234 + $0xab8] sm:$0xff]
        %v352 = vld [vmem:[%s234 + $0xac0] sm:$0xff]
        %v353 = vld [vmem:[%s234 + $0xac8] sm:$0xff]
        %v354 = vld [vmem:[%s234 + $0xad0] sm:$0xff]
        %v355 = vld [vmem:[%s234 + $0xad8] sm:$0xff]
        %v356 = vld [vmem:[%s234 + $0xae0] sm:$0xff]
        %v357 = vld [vmem:[%s234 + $0xae8] sm:$0xff]
        %v414 = vunpack.c.l.b16 %v302
        %v415 = vunpack.c.h.b16 %v302
        %v416 = vunpack.c.l.b16 %v303
        %v417 = vunpack.c.h.b16 %v303
        %v418 = vunpack.c.l.b16 %v304
        %v419 = vunpack.c.h.b16 %v304
        %v420 = vunpack.c.l.b16 %v305
        %v421 = vunpack.c.h.b16 %v305
        %v422 = vunpack.c.l.b16 %v306
        %v423 = vunpack.c.h.b16 %v306
        %v424 = vunpack.c.l.b16 %v307
        %v425 = vunpack.c.h.b16 %v307
        %v426 = vunpack.c.l.b16 %v308
        %v427 = vunpack.c.h.b16 %v308
        %v428 = vunpack.c.l.b16 %v309
        %v429 = vunpack.c.h.b16 %v309
        %v430 = vunpack.c.l.b16 %v310
        %v431 = vunpack.c.h.b16 %v310
        %v432 = vunpack.c.l.b16 %v311
        %v433 = vunpack.c.h.b16 %v311
        %v434 = vunpack.c.l.b16 %v312
        %v435 = vunpack.c.h.b16 %v312
        %v436 = vunpack.c.l.b16 %v313
        %v437 = vunpack.c.h.b16 %v313
        %v438 = vunpack.c.l.b16 %v314
        %v439 = vunpack.c.h.b16 %v314
        %v440 = vunpack.c.l.b16 %v315
        %v441 = vunpack.c.h.b16 %v315
        %v442 = vunpack.c.l.b16 %v316
        %v443 = vunpack.c.h.b16 %v316
        %v444 = vunpack.c.l.b16 %v317
        %v445 = vunpack.c.h.b16 %v317
        %v446 = vunpack.c.l.b16 %v318
        %v447 = vunpack.c.h.b16 %v318
        %v448 = vunpack.c.l.b16 %v319
        %v449 = vunpack.c.h.b16 %v319
        %v450 = vunpack.c.l.b16 %v320
        %v451 = vunpack.c.h.b16 %v320
        %v452 = vunpack.c.l.b16 %v321
        %v453 = vunpack.c.h.b16 %v321
        %v454 = vunpack.c.l.b16 %v322
        %v455 = vunpack.c.h.b16 %v322
        %v456 = vunpack.c.l.b16 %v323
        %v457 = vunpack.c.h.b16 %v323
        %v458 = vunpack.c.l.b16 %v324
        %v459 = vunpack.c.h.b16 %v324
        %v460 = vunpack.c.l.b16 %v325
        %v461 = vunpack.c.h.b16 %v325
        %v462 = vunpack.c.l.b16 %v326
        %v463 = vunpack.c.h.b16 %v326
        %v464 = vunpack.c.l.b16 %v327
        %v465 = vunpack.c.h.b16 %v327
        %v466 = vunpack.c.l.b16 %v328
        %v467 = vunpack.c.h.b16 %v328
        %v468 = vunpack.c.l.b16 %v329
        %v469 = vunpack.c.h.b16 %v329
        %v470 = vunpack.c.l.b16 %v330
        %v471 = vunpack.c.h.b16 %v330
        %v472 = vunpack.c.l.b16 %v331
        %v473 = vunpack.c.h.b16 %v331
        %v474 = vunpack.c.l.b16 %v332
        %v475 = vunpack.c.h.b16 %v332
        %v476 = vunpack.c.l.b16 %v333
        %v477 = vunpack.c.h.b16 %v333
        %v478 = vunpack.c.l.b16 %v334
        %v479 = vunpack.c.h.b16 %v334
        %v480 = vunpack.c.l.b16 %v335
        %v481 = vunpack.c.h.b16 %v335
        %v482 = vunpack.c.l.b16 %v336
        %v483 = vunpack.c.h.b16 %v336
        %v484 = vunpack.c.l.b16 %v337
        %v485 = vunpack.c.h.b16 %v337
        %v486 = vunpack.c.l.b16 %v338
        %v487 = vunpack.c.h.b16 %v338
        %v488 = vunpack.c.l.b16 %v339
        %v489 = vunpack.c.h.b16 %v339
        %v490 = vunpack.c.l.b16 %v340
        %v491 = vunpack.c.h.b16 %v340
        %v492 = vunpack.c.l.b16 %v341
        %v493 = vunpack.c.h.b16 %v341
        %v494 = vunpack.c.l.b16 %v342
        %v495 = vunpack.c.h.b16 %v342
        %v496 = vunpack.c.l.b16 %v343
        %v497 = vunpack.c.h.b16 %v343
        %v498 = vunpack.c.l.b16 %v344
        %v499 = vunpack.c.h.b16 %v344
        %v500 = vunpack.c.l.b16 %v345
        %v501 = vunpack.c.h.b16 %v345
        %v502 = vunpack.c.l.b16 %v346
        %v503 = vunpack.c.h.b16 %v346
        %v504 = vunpack.c.l.b16 %v347
        %v505 = vunpack.c.h.b16 %v347
        %v506 = vunpack.c.l.b16 %v348
        %v507 = vunpack.c.h.b16 %v348
        %v508 = vunpack.c.l.b16 %v349
        %v509 = vunpack.c.h.b16 %v349
        %v510 = vunpack.c.l.b16 %v350
        %v511 = vunpack.c.h.b16 %v350
        %v512 = vunpack.c.l.b16 %v351
        %v513 = vunpack.c.h.b16 %v351
        %v514 = vunpack.c.l.b16 %v352
        %v515 = vunpack.c.h.b16 %v352
        %v516 = vunpack.c.l.b16 %v353
        %v517 = vunpack.c.h.b16 %v353
        %v518 = vunpack.c.l.b16 %v354
        %v519 = vunpack.c.h.b16 %v354
        %v520 = vunpack.c.l.b16 %v355
        %v521 = vunpack.c.h.b16 %v355
        %v522 = vunpack.c.l.b16 %v356
        %v523 = vunpack.c.h.b16 %v356
        %v524 = vunpack.c.l.b16 %v357
        %v525 = vunpack.c.h.b16 %v357
        %v526 = vpack.c.b16 %v428, %v414
        %v527 = vpack.c.b16 %v429, %v415
        %v528 = vpack.c.b16 %v430, %v416
        %v529 = vpack.c.b16 %v431, %v417
        %v530 = vpack.c.b16 %v432, %v418
        %v531 = vpack.c.b16 %v433, %v419
        %v532 = vpack.c.b16 %v434, %v420
        %v533 = vpack.c.b16 %v435, %v421
        %v534 = vpack.c.b16 %v436, %v422
        %v535 = vpack.c.b16 %v437, %v423
        %v536 = vpack.c.b16 %v438, %v424
        %v537 = vpack.c.b16 %v439, %v425
        %v538 = vpack.c.b16 %v440, %v426
        %v539 = vpack.c.b16 %v441, %v427
        %v540 = vpack.c.b16 %v456, %v442
        %v541 = vpack.c.b16 %v457, %v443
        %v542 = vpack.c.b16 %v458, %v444
        %v543 = vpack.c.b16 %v459, %v445
        %v544 = vpack.c.b16 %v460, %v446
        %v545 = vpack.c.b16 %v461, %v447
        %v546 = vpack.c.b16 %v462, %v448
        %v547 = vpack.c.b16 %v463, %v449
        %v548 = vpack.c.b16 %v464, %v450
        %v549 = vpack.c.b16 %v465, %v451
        %v550 = vpack.c.b16 %v466, %v452
        %v551 = vpack.c.b16 %v467, %v453
        %v552 = vpack.c.b16 %v468, %v454
        %v553 = vpack.c.b16 %v469, %v455
        %v554 = vpack.c.b16 %v484, %v470
        %v555 = vpack.c.b16 %v485, %v471
        %v556 = vpack.c.b16 %v486, %v472
        %v557 = vpack.c.b16 %v487, %v473
        %v558 = vpack.c.b16 %v488, %v474
        %v559 = vpack.c.b16 %v489, %v475
        %v560 = vpack.c.b16 %v490, %v476
        %v561 = vpack.c.b16 %v491, %v477
        %v562 = vpack.c.b16 %v492, %v478
        %v563 = vpack.c.b16 %v493, %v479
        %v564 = vpack.c.b16 %v494, %v480
        %v565 = vpack.c.b16 %v495, %v481
        %v566 = vpack.c.b16 %v496, %v482
        %v567 = vpack.c.b16 %v497, %v483
        %v568 = vpack.c.b16 %v512, %v498
        %v569 = vpack.c.b16 %v513, %v499
        %v570 = vpack.c.b16 %v514, %v500
        %v571 = vpack.c.b16 %v515, %v501
        %v572 = vpack.c.b16 %v516, %v502
        %v573 = vpack.c.b16 %v517, %v503
        %v574 = vpack.c.b16 %v518, %v504
        %v575 = vpack.c.b16 %v519, %v505
        %v576 = vpack.c.b16 %v520, %v506
        %v577 = vpack.c.b16 %v521, %v507
        %v578 = vpack.c.b16 %v522, %v508
        %v579 = vpack.c.b16 %v523, %v509
        %v580 = vpack.c.b16 %v524, %v510
        %v581 = vpack.c.b16 %v525, %v511
        %vm638 = vcmask 523264
        %v640 = vsel %vm638, %v301, 0
        %642 = vmatpush.bf16.msra.mxu0 0
        %643 = vmatpush.bf16.msra.mxu0 0
        %644 = vmatpush.bf16.msra.mxu0 0
        %645 = vmatpush.bf16.msra.mxu0 0
        %646 = vmatpush.bf16.msra.mxu0 %v568
        %647 = vmatpush.bf16.msra.mxu0 %v554
        %648 = vmatpush.bf16.msra.mxu0 %v540
        %649 = vmatpush.bf16.msra.mxu0 %v526
        %650 = vmatmul.bf16.gmra.mxu0 %v640
        %v651 = vpop.f32.mrf.mxu0
        %v652 = vadd.f32 0.0, %v651
        %v653 = vpop.f32.mrf.mxu0
        %654 = vdwg.mxu0
        %655 = vmatpush.bf16.msra.mxu0 0
        %656 = vmatpush.bf16.msra.mxu0 0
        %657 = vmatpush.bf16.msra.mxu0 0
        %658 = vmatpush.bf16.msra.mxu0 0
        %659 = vmatpush.bf16.msra.mxu0 %v569
        %660 = vmatpush.bf16.msra.mxu0 %v555
        %661 = vmatpush.bf16.msra.mxu0 %v541
        %662 = vmatpush.bf16.msra.mxu0 %v527
        %663 = vmatmul.bf16.gmra.mxu0 %v640
        %v664 = vpop.f32.mrf.mxu0
        %v665 = vadd.f32 0.0, %v664
        %v666 = vpop.f32.mrf.mxu0
        %667 = vdwg.mxu0
        %668 = vmatpush.bf16.msra.mxu0 0
        %669 = vmatpush.bf16.msra.mxu0 0
        %670 = vmatpush.bf16.msra.mxu0 0
        %671 = vmatpush.bf16.msra.mxu0 0
        %672 = vmatpush.bf16.msra.mxu0 %v570
        %673 = vmatpush.bf16.msra.mxu0 %v556
        %674 = vmatpush.bf16.msra.mxu0 %v542
        %675 = vmatpush.bf16.msra.mxu0 %v528
        %676 = vmatmul.bf16.gmra.mxu0 %v640
        %v677 = vpop.f32.mrf.mxu0
        %v678 = vadd.f32 0.0, %v677
        %v679 = vpop.f32.mrf.mxu0
        %680 = vdwg.mxu0
        %681 = vmatpush.bf16.msra.mxu0 0
        %682 = vmatpush.bf16.msra.mxu0 0
        %683 = vmatpush.bf16.msra.mxu0 0
        %684 = vmatpush.bf16.msra.mxu0 0
        %685 = vmatpush.bf16.msra.mxu0 %v571
        %686 = vmatpush.bf16.msra.mxu0 %v557
        %687 = vmatpush.bf16.msra.mxu0 %v543
        %688 = vmatpush.bf16.msra.mxu0 %v529
        %689 = vmatmul.bf16.gmra.mxu0 %v640
        %v690 = vpop.f32.mrf.mxu0
        %v691 = vadd.f32 0.0, %v690
        %v692 = vpop.f32.mrf.mxu0
        %693 = vdwg.mxu0
        %694 = vmatpush.bf16.msra.mxu0 0
        %695 = vmatpush.bf16.msra.mxu0 0
        %696 = vmatpush.bf16.msra.mxu0 0
        %697 = vmatpush.bf16.msra.mxu0 0
        %698 = vmatpush.bf16.msra.mxu0 %v572
        %699 = vmatpush.bf16.msra.mxu0 %v558
        %700 = vmatpush.bf16.msra.mxu0 %v544
        %701 = vmatpush.bf16.msra.mxu0 %v530
        %702 = vmatmul.bf16.gmra.mxu0 %v640
        %v703 = vpop.f32.mrf.mxu0
        %v704 = vadd.f32 0.0, %v703
        %v705 = vpop.f32.mrf.mxu0
        %706 = vdwg.mxu0
        %707 = vmatpush.bf16.msra.mxu0 0
        %708 = vmatpush.bf16.msra.mxu0 0
        %709 = vmatpush.bf16.msra.mxu0 0
        %710 = vmatpush.bf16.msra.mxu0 0
        %711 = vmatpush.bf16.msra.mxu0 %v573
        %712 = vmatpush.bf16.msra.mxu0 %v559
        %713 = vmatpush.bf16.msra.mxu0 %v545
        %714 = vmatpush.bf16.msra.mxu0 %v531
        %715 = vmatmul.bf16.gmra.mxu0 %v640
        %v716 = vpop.f32.mrf.mxu0
        %v717 = vadd.f32 0.0, %v716
        %v718 = vpop.f32.mrf.mxu0
        %719 = vdwg.mxu0
        %720 = vmatpush.bf16.msra.mxu0 0
        %721 = vmatpush.bf16.msra.mxu0 0
        %722 = vmatpush.bf16.msra.mxu0 0
        %723 = vmatpush.bf16.msra.mxu0 0
        %724 = vmatpush.bf16.msra.mxu0 %v574
        %725 = vmatpush.bf16.msra.mxu0 %v560
        %726 = vmatpush.bf16.msra.mxu0 %v546
        %727 = vmatpush.bf16.msra.mxu0 %v532
        %728 = vmatmul.bf16.gmra.mxu0 %v640
        %v729 = vpop.f32.mrf.mxu0
        %v730 = vadd.f32 0.0, %v729
        %v731 = vpop.f32.mrf.mxu0
        %732 = vdwg.mxu0
        %733 = vmatpush.bf16.msra.mxu0 0
        %734 = vmatpush.bf16.msra.mxu0 0
        %735 = vmatpush.bf16.msra.mxu0 0
        %736 = vmatpush.bf16.msra.mxu0 0
        %737 = vmatpush.bf16.msra.mxu0 %v575
        %738 = vmatpush.bf16.msra.mxu0 %v561
        %739 = vmatpush.bf16.msra.mxu0 %v547
        %740 = vmatpush.bf16.msra.mxu0 %v533
        %741 = vmatmul.bf16.gmra.mxu0 %v640
        %v742 = vpop.f32.mrf.mxu0
        %v743 = vadd.f32 0.0, %v742
        %v744 = vpop.f32.mrf.mxu0
        %745 = vdwg.mxu0
        %746 = vmatpush.bf16.msra.mxu0 0
        %747 = vmatpush.bf16.msra.mxu0 0
        %748 = vmatpush.bf16.msra.mxu0 0
        %749 = vmatpush.bf16.msra.mxu0 0
        %750 = vmatpush.bf16.msra.mxu0 %v576
        %751 = vmatpush.bf16.msra.mxu0 %v562
        %752 = vmatpush.bf16.msra.mxu0 %v548
        %753 = vmatpush.bf16.msra.mxu0 %v534
        %754 = vmatmul.bf16.gmra.mxu0 %v640
        %v755 = vpop.f32.mrf.mxu0
        %v756 = vadd.f32 0.0, %v755
        %v757 = vpop.f32.mrf.mxu0
        %758 = vdwg.mxu0
        %759 = vmatpush.bf16.msra.mxu0 0
        %760 = vmatpush.bf16.msra.mxu0 0
        %761 = vmatpush.bf16.msra.mxu0 0
        %762 = vmatpush.bf16.msra.mxu0 0
        %763 = vmatpush.bf16.msra.mxu0 %v577
        %764 = vmatpush.bf16.msra.mxu0 %v563
        %765 = vmatpush.bf16.msra.mxu0 %v549
        %766 = vmatpush.bf16.msra.mxu0 %v535
        %767 = vmatmul.bf16.gmra.mxu0 %v640
        %v768 = vpop.f32.mrf.mxu0
        %v769 = vadd.f32 0.0, %v768
        %v770 = vpop.f32.mrf.mxu0
        %771 = vdwg.mxu0
        %772 = vmatpush.bf16.msra.mxu0 0
        %773 = vmatpush.bf16.msra.mxu0 0
        %774 = vmatpush.bf16.msra.mxu0 0
        %775 = vmatpush.bf16.msra.mxu0 0
        %776 = vmatpush.bf16.msra.mxu0 %v578
        %777 = vmatpush.bf16.msra.mxu0 %v564
        %778 = vmatpush.bf16.msra.mxu0 %v550
        %779 = vmatpush.bf16.msra.mxu0 %v536
        %780 = vmatmul.bf16.gmra.mxu0 %v640
        %v781 = vpop.f32.mrf.mxu0
        %v782 = vadd.f32 0.0, %v781
        %v783 = vpop.f32.mrf.mxu0
        %784 = vdwg.mxu0
        %785 = vmatpush.bf16.msra.mxu0 0
        %786 = vmatpush.bf16.msra.mxu0 0
        %787 = vmatpush.bf16.msra.mxu0 0
        %788 = vmatpush.bf16.msra.mxu0 0
        %789 = vmatpush.bf16.msra.mxu0 %v579
        %790 = vmatpush.bf16.msra.mxu0 %v565
        %791 = vmatpush.bf16.msra.mxu0 %v551
        %792 = vmatpush.bf16.msra.mxu0 %v537
        %793 = vmatmul.bf16.gmra.mxu0 %v640
        %v794 = vpop.f32.mrf.mxu0
        %v795 = vadd.f32 0.0, %v794
        %v796 = vpop.f32.mrf.mxu0
        %797 = vdwg.mxu0
        %798 = vmatpush.bf16.msra.mxu0 0
        %799 = vmatpush.bf16.msra.mxu0 0
        %800 = vmatpush.bf16.msra.mxu0 0
        %801 = vmatpush.bf16.msra.mxu0 0
        %802 = vmatpush.bf16.msra.mxu0 %v580
        %803 = vmatpush.bf16.msra.mxu0 %v566
        %804 = vmatpush.bf16.msra.mxu0 %v552
        %805 = vmatpush.bf16.msra.mxu0 %v538
        %806 = vmatmul.bf16.gmra.mxu0 %v640
        %v807 = vpop.f32.mrf.mxu0
        %v808 = vadd.f32 0.0, %v807
        %v809 = vpop.f32.mrf.mxu0
        %810 = vdwg.mxu0
        %811 = vmatpush.bf16.msra.mxu0 0
        %812 = vmatpush.bf16.msra.mxu0 0
        %813 = vmatpush.bf16.msra.mxu0 0
        %814 = vmatpush.bf16.msra.mxu0 0
        %815 = vmatpush.bf16.msra.mxu0 %v581
        %816 = vmatpush.bf16.msra.mxu0 %v567
        %817 = vmatpush.bf16.msra.mxu0 %v553
        %818 = vmatpush.bf16.msra.mxu0 %v539
        %819 = vmatmul.bf16.gmra.mxu0 %v640
        %v820 = vpop.f32.mrf.mxu0
        %v821 = vadd.f32 0.0, %v820
        %v822 = vpop.f32.mrf.mxu0
        %823 = vdwg.mxu0
        %v824 = vld [vmem:[%s244] sm:$0xff]
        %v825 = vld [vmem:[%s244 + $0x8] sm:$0x3f]
        %v828 = vperm.slane %v824, 0
        %v829 = vperm.slane %v824, 1
        %v830 = vperm.slane %v824, 2
        %v831 = vperm.slane %v824, 3
        %v832 = vperm.slane %v824, 4
        %v833 = vperm.slane %v824, 5
        %v834 = vperm.slane %v824, 6
        %v835 = vperm.slane %v824, 7
        %v836 = vperm.slane %v825, 0
        %v837 = vperm.slane %v825, 1
        %v838 = vperm.slane %v825, 2
        %v839 = vperm.slane %v825, 3
        %v840 = vperm.slane %v825, 4
        %v841 = vperm.slane %v825, 5
        %v856 = vmul.f32 %v652, %v828
        %v857 = vmul.f32 %v665, %v829
        %v858 = vmul.f32 %v678, %v830
        %v859 = vmul.f32 %v691, %v831
        %v860 = vmul.f32 %v704, %v832
        %v861 = vmul.f32 %v717, %v833
        %v862 = vmul.f32 %v730, %v834
        %v863 = vmul.f32 %v743, %v835
        %v864 = vmul.f32 %v756, %v836
        %v865 = vmul.f32 %v769, %v837
        %v866 = vmul.f32 %v782, %v838
        %v867 = vmul.f32 %v795, %v839
        %v868 = vmul.f32 %v808, %v840
        %v869 = vmul.f32 %v821, %v841
        %v870 = vld [vmem:[%s254] sm:$0xff]
        %v871 = vld [vmem:[%s254 + $0x8] sm:$0x3f]
        %v874 = vperm.slane %v870, 0
        %v875 = vperm.slane %v870, 1
        %v876 = vperm.slane %v870, 2
        %v877 = vperm.slane %v870, 3
        %v878 = vperm.slane %v870, 4
        %v879 = vperm.slane %v870, 5
        %v880 = vperm.slane %v870, 6
        %v881 = vperm.slane %v870, 7
        %v882 = vperm.slane %v871, 0
        %v883 = vperm.slane %v871, 1
        %v884 = vperm.slane %v871, 2
        %v885 = vperm.slane %v871, 3
        %v886 = vperm.slane %v871, 4
        %v887 = vperm.slane %v871, 5
        %v902 = vadd.f32 %v856, %v874
        %v903 = vadd.f32 %v857, %v875
        %v904 = vadd.f32 %v858, %v876
        %v905 = vadd.f32 %v859, %v877
        %v906 = vadd.f32 %v860, %v878
        %v907 = vadd.f32 %v861, %v879
        %v908 = vadd.f32 %v862, %v880
        %v909 = vadd.f32 %v863, %v881
        %v910 = vadd.f32 %v864, %v882
        %v911 = vadd.f32 %v865, %v883
        %v912 = vadd.f32 %v866, %v884
        %v913 = vadd.f32 %v867, %v885
        %v914 = vadd.f32 %v868, %v886
        %v915 = vadd.f32 %v869, %v887
        %916 = vst [vmem:[%s297] sm:$0xff] %v902
        %917 = vst [vmem:[%s297 + $0x8] sm:$0xff] %v903
        %918 = vst [vmem:[%s297 + $0x10] sm:$0xff] %v904
        %919 = vst [vmem:[%s297 + $0x18] sm:$0xff] %v905
        %920 = vst [vmem:[%s297 + $0x20] sm:$0xff] %v906
        %921 = vst [vmem:[%s297 + $0x28] sm:$0xff] %v907
        %922 = vst [vmem:[%s297 + $0x30] sm:$0xff] %v908
        %923 = vst [vmem:[%s297 + $0x38] sm:$0xff] %v909
        %924 = vst [vmem:[%s297 + $0x40] sm:$0xff] %v910
        %925 = vst [vmem:[%s297 + $0x48] sm:$0xff] %v911
        %926 = vst [vmem:[%s297 + $0x50] sm:$0xff] %v912
        %927 = vst [vmem:[%s297 + $0x58] sm:$0xff] %v913
        %928 = vst [vmem:[%s297 + $0x60] sm:$0xff] %v914
        %929 = vst [vmem:[%s297 + $0x68] sm:$0xff] %v915
        %v930 = vld [vmem:[%s234 + $0x38] sm:$0xff]
        %v931 = vld [vmem:[%s234 + $0x40] sm:$0xff]
        %v932 = vld [vmem:[%s234 + $0x48] sm:$0xff]
        %v933 = vld [vmem:[%s234 + $0x50] sm:$0xff]
        %v934 = vld [vmem:[%s234 + $0x58] sm:$0xff]
        %v935 = vld [vmem:[%s234 + $0x60] sm:$0xff]
        %v936 = vld [vmem:[%s234 + $0x68] sm:$0xff]
        %v937 = vld [vmem:[%s234 + $0x1c0] sm:$0xff]
        %v938 = vld [vmem:[%s234 + $0x1c8] sm:$0xff]
        %v939 = vld [vmem:[%s234 + $0x1d0] sm:$0xff]
        %v940 = vld [vmem:[%s234 + $0x1d8] sm:$0xff]
        %v941 = vld [vmem:[%s234 + $0x1e0] sm:$0xff]
        %v942 = vld [vmem:[%s234 + $0x1e8] sm:$0xff]
        %v943 = vld [vmem:[%s234 + $0x1f0] sm:$0xff]
        %v944 = vld [vmem:[%s234 + $0x348] sm:$0xff]
        %v945 = vld [vmem:[%s234 + $0x350] sm:$0xff]
        %v946 = vld [vmem:[%s234 + $0x358] sm:$0xff]
        %v947 = vld [vmem:[%s234 + $0x360] sm:$0xff]
        %v948 = vld [vmem:[%s234 + $0x368] sm:$0xff]
        %v949 = vld [vmem:[%s234 + $0x370] sm:$0xff]
        %v950 = vld [vmem:[%s234 + $0x378] sm:$0xff]
        %v951 = vld [vmem:[%s234 + $0x4d0] sm:$0xff]
        %v952 = vld [vmem:[%s234 + $0x4d8] sm:$0xff]
        %v953 = vld [vmem:[%s234 + $0x4e0] sm:$0xff]
        %v954 = vld [vmem:[%s234 + $0x4e8] sm:$0xff]
        %v955 = vld [vmem:[%s234 + $0x4f0] sm:$0xff]
        %v956 = vld [vmem:[%s234 + $0x4f8] sm:$0xff]
        %v957 = vld [vmem:[%s234 + $0x500] sm:$0xff]
        %v958 = vld [vmem:[%s234 + $0x658] sm:$0xff]
        %v959 = vld [vmem:[%s234 + $0x660] sm:$0xff]
        %v960 = vld [vmem:[%s234 + $0x668] sm:$0xff]
        %v961 = vld [vmem:[%s234 + $0x670] sm:$0xff]
        %v962 = vld [vmem:[%s234 + $0x678] sm:$0xff]
        %v963 = vld [vmem:[%s234 + $0x680] sm:$0xff]
        %v964 = vld [vmem:[%s234 + $0x688] sm:$0xff]
        %v965 = vld [vmem:[%s234 + $0x7e0] sm:$0xff]
        %v966 = vld [vmem:[%s234 + $0x7e8] sm:$0xff]
        %v967 = vld [vmem:[%s234 + $0x7f0] sm:$0xff]
        %v968 = vld [vmem:[%s234 + $0x7f8] sm:$0xff]
        %v969 = vld [vmem:[%s234 + $0x800] sm:$0xff]
        %v970 = vld [vmem:[%s234 + $0x808] sm:$0xff]
        %v971 = vld [vmem:[%s234 + $0x810] sm:$0xff]
        %v972 = vld [vmem:[%s234 + $0x968] sm:$0xff]
        %v973 = vld [vmem:[%s234 + $0x970] sm:$0xff]
        %v974 = vld [vmem:[%s234 + $0x978] sm:$0xff]
        %v975 = vld [vmem:[%s234 + $0x980] sm:$0xff]
        %v976 = vld [vmem:[%s234 + $0x988] sm:$0xff]
        %v977 = vld [vmem:[%s234 + $0x990] sm:$0xff]
        %v978 = vld [vmem:[%s234 + $0x998] sm:$0xff]
        %v979 = vld [vmem:[%s234 + $0xaf0] sm:$0xff]
        %v980 = vld [vmem:[%s234 + $0xaf8] sm:$0xff]
        %v981 = vld [vmem:[%s234 + $0xb00] sm:$0xff]
        %v982 = vld [vmem:[%s234 + $0xb08] sm:$0xff]
        %v983 = vld [vmem:[%s234 + $0xb10] sm:$0xff]
        %v984 = vld [vmem:[%s234 + $0xb18] sm:$0xff]
        %v985 = vld [vmem:[%s234 + $0xb20] sm:$0xff]
        %v1042 = vunpack.c.l.b16 %v930
        %v1043 = vunpack.c.h.b16 %v930
        %v1044 = vunpack.c.l.b16 %v931
        %v1045 = vunpack.c.h.b16 %v931
        %v1046 = vunpack.c.l.b16 %v932
        %v1047 = vunpack.c.h.b16 %v932
        %v1048 = vunpack.c.l.b16 %v933
        %v1049 = vunpack.c.h.b16 %v933
        %v1050 = vunpack.c.l.b16 %v934
        %v1051 = vunpack.c.h.b16 %v934
        %v1052 = vunpack.c.l.b16 %v935
        %v1053 = vunpack.c.h.b16 %v935
        %v1054 = vunpack.c.l.b16 %v936
        %v1055 = vunpack.c.h.b16 %v936
        %v1056 = vunpack.c.l.b16 %v937
        %v1057 = vunpack.c.h.b16 %v937
        %v1058 = vunpack.c.l.b16 %v938
        %v1059 = vunpack.c.h.b16 %v938
        %v1060 = vunpack.c.l.b16 %v939
        %v1061 = vunpack.c.h.b16 %v939
        %v1062 = vunpack.c.l.b16 %v940
        %v1063 = vunpack.c.h.b16 %v940
        %v1064 = vunpack.c.l.b16 %v941
        %v1065 = vunpack.c.h.b16 %v941
        %v1066 = vunpack.c.l.b16 %v942
        %v1067 = vunpack.c.h.b16 %v942
        %v1068 = vunpack.c.l.b16 %v943
        %v1069 = vunpack.c.h.b16 %v943
        %v1070 = vunpack.c.l.b16 %v944
        %v1071 = vunpack.c.h.b16 %v944
        %v1072 = vunpack.c.l.b16 %v945
        %v1073 = vunpack.c.h.b16 %v945
        %v1074 = vunpack.c.l.b16 %v946
        %v1075 = vunpack.c.h.b16 %v946
        %v1076 = vunpack.c.l.b16 %v947
        %v1077 = vunpack.c.h.b16 %v947
        %v1078 = vunpack.c.l.b16 %v948
        %v1079 = vunpack.c.h.b16 %v948
        %v1080 = vunpack.c.l.b16 %v949
        %v1081 = vunpack.c.h.b16 %v949
        %v1082 = vunpack.c.l.b16 %v950
        %v1083 = vunpack.c.h.b16 %v950
        %v1084 = vunpack.c.l.b16 %v951
        %v1085 = vunpack.c.h.b16 %v951
        %v1086 = vunpack.c.l.b16 %v952
        %v1087 = vunpack.c.h.b16 %v952
        %v1088 = vunpack.c.l.b16 %v953
        %v1089 = vunpack.c.h.b16 %v953
        %v1090 = vunpack.c.l.b16 %v954
        %v1091 = vunpack.c.h.b16 %v954
        %v1092 = vunpack.c.l.b16 %v955
        %v1093 = vunpack.c.h.b16 %v955
        %v1094 = vunpack.c.l.b16 %v956
        %v1095 = vunpack.c.h.b16 %v956
        %v1096 = vunpack.c.l.b16 %v957
        %v1097 = vunpack.c.h.b16 %v957
        %v1098 = vunpack.c.l.b16 %v958
        %v1099 = vunpack.c.h.b16 %v958
        %v1100 = vunpack.c.l.b16 %v959
        %v1101 = vunpack.c.h.b16 %v959
        %v1102 = vunpack.c.l.b16 %v960
        %v1103 = vunpack.c.h.b16 %v960
        %v1104 = vunpack.c.l.b16 %v961
        %v1105 = vunpack.c.h.b16 %v961
        %v1106 = vunpack.c.l.b16 %v962
        %v1107 = vunpack.c.h.b16 %v962
        %v1108 = vunpack.c.l.b16 %v963
        %v1109 = vunpack.c.h.b16 %v963
        %v1110 = vunpack.c.l.b16 %v964
        %v1111 = vunpack.c.h.b16 %v964
        %v1112 = vunpack.c.l.b16 %v965
        %v1113 = vunpack.c.h.b16 %v965
        %v1114 = vunpack.c.l.b16 %v966
        %v1115 = vunpack.c.h.b16 %v966
        %v1116 = vunpack.c.l.b16 %v967
        %v1117 = vunpack.c.h.b16 %v967
        %v1118 = vunpack.c.l.b16 %v968
        %v1119 = vunpack.c.h.b16 %v968
        %v1120 = vunpack.c.l.b16 %v969
        %v1121 = vunpack.c.h.b16 %v969
        %v1122 = vunpack.c.l.b16 %v970
        %v1123 = vunpack.c.h.b16 %v970
        %v1124 = vunpack.c.l.b16 %v971
        %v1125 = vunpack.c.h.b16 %v971
        %v1126 = vunpack.c.l.b16 %v972
        %v1127 = vunpack.c.h.b16 %v972
        %v1128 = vunpack.c.l.b16 %v973
        %v1129 = vunpack.c.h.b16 %v973
        %v1130 = vunpack.c.l.b16 %v974
        %v1131 = vunpack.c.h.b16 %v974
        %v1132 = vunpack.c.l.b16 %v975
        %v1133 = vunpack.c.h.b16 %v975
        %v1134 = vunpack.c.l.b16 %v976
        %v1135 = vunpack.c.h.b16 %v976
        %v1136 = vunpack.c.l.b16 %v977
        %v1137 = vunpack.c.h.b16 %v977
        %v1138 = vunpack.c.l.b16 %v978
        %v1139 = vunpack.c.h.b16 %v978
        %v1140 = vunpack.c.l.b16 %v979
        %v1141 = vunpack.c.h.b16 %v979
        %v1142 = vunpack.c.l.b16 %v980
        %v1143 = vunpack.c.h.b16 %v980
        %v1144 = vunpack.c.l.b16 %v981
        %v1145 = vunpack.c.h.b16 %v981
        %v1146 = vunpack.c.l.b16 %v982
        %v1147 = vunpack.c.h.b16 %v982
        %v1148 = vunpack.c.l.b16 %v983
        %v1149 = vunpack.c.h.b16 %v983
        %v1150 = vunpack.c.l.b16 %v984
        %v1151 = vunpack.c.h.b16 %v984
        %v1152 = vunpack.c.l.b16 %v985
        %v1153 = vunpack.c.h.b16 %v985
        %v1154 = vpack.c.b16 %v1056, %v1042
        %v1155 = vpack.c.b16 %v1057, %v1043
        %v1156 = vpack.c.b16 %v1058, %v1044
        %v1157 = vpack.c.b16 %v1059, %v1045
        %v1158 = vpack.c.b16 %v1060, %v1046
        %v1159 = vpack.c.b16 %v1061, %v1047
        %v1160 = vpack.c.b16 %v1062, %v1048
        %v1161 = vpack.c.b16 %v1063, %v1049
        %v1162 = vpack.c.b16 %v1064, %v1050
        %v1163 = vpack.c.b16 %v1065, %v1051
        %v1164 = vpack.c.b16 %v1066, %v1052
        %v1165 = vpack.c.b16 %v1067, %v1053
        %v1166 = vpack.c.b16 %v1068, %v1054
        %v1167 = vpack.c.b16 %v1069, %v1055
        %v1168 = vpack.c.b16 %v1084, %v1070
        %v1169 = vpack.c.b16 %v1085, %v1071
        %v1170 = vpack.c.b16 %v1086, %v1072
        %v1171 = vpack.c.b16 %v1087, %v1073
        %v1172 = vpack.c.b16 %v1088, %v1074
        %v1173 = vpack.c.b16 %v1089, %v1075
        %v1174 = vpack.c.b16 %v1090, %v1076
        %v1175 = vpack.c.b16 %v1091, %v1077
        %v1176 = vpack.c.b16 %v1092, %v1078
        %v1177 = vpack.c.b16 %v1093, %v1079
        %v1178 = vpack.c.b16 %v1094, %v1080
        %v1179 = vpack.c.b16 %v1095, %v1081
        %v1180 = vpack.c.b16 %v1096, %v1082
        %v1181 = vpack.c.b16 %v1097, %v1083
        %v1182 = vpack.c.b16 %v1112, %v1098
        %v1183 = vpack.c.b16 %v1113, %v1099
        %v1184 = vpack.c.b16 %v1114, %v1100
        %v1185 = vpack.c.b16 %v1115, %v1101
        %v1186 = vpack.c.b16 %v1116, %v1102
        %v1187 = vpack.c.b16 %v1117, %v1103
        %v1188 = vpack.c.b16 %v1118, %v1104
        %v1189 = vpack.c.b16 %v1119, %v1105
        %v1190 = vpack.c.b16 %v1120, %v1106
        %v1191 = vpack.c.b16 %v1121, %v1107
        %v1192 = vpack.c.b16 %v1122, %v1108
        %v1193 = vpack.c.b16 %v1123, %v1109
        %v1194 = vpack.c.b16 %v1124, %v1110
        %v1195 = vpack.c.b16 %v1125, %v1111
        %v1196 = vpack.c.b16 %v1140, %v1126
        %v1197 = vpack.c.b16 %v1141, %v1127
        %v1198 = vpack.c.b16 %v1142, %v1128
        %v1199 = vpack.c.b16 %v1143, %v1129
        %v1200 = vpack.c.b16 %v1144, %v1130
        %v1201 = vpack.c.b16 %v1145, %v1131
        %v1202 = vpack.c.b16 %v1146, %v1132
        %v1203 = vpack.c.b16 %v1147, %v1133
        %v1204 = vpack.c.b16 %v1148, %v1134
        %v1205 = vpack.c.b16 %v1149, %v1135
        %v1206 = vpack.c.b16 %v1150, %v1136
        %v1207 = vpack.c.b16 %v1151, %v1137
        %v1208 = vpack.c.b16 %v1152, %v1138
        %v1209 = vpack.c.b16 %v1153, %v1139
        %1266 = vmatpush.bf16.msra.mxu0 0
        %1267 = vmatpush.bf16.msra.mxu0 0
        %1268 = vmatpush.bf16.msra.mxu0 0
        %1269 = vmatpush.bf16.msra.mxu0 0
        %1270 = vmatpush.bf16.msra.mxu0 %v1196
        %1271 = vmatpush.bf16.msra.mxu0 %v1182
        %1272 = vmatpush.bf16.msra.mxu0 %v1168
        %1273 = vmatpush.bf16.msra.mxu0 %v1154
        %1274 = vmatmul.bf16.gmra.mxu0 %v640
        %v1275 = vpop.f32.mrf.mxu0
        %v1276 = vadd.f32 0.0, %v1275
        %v1277 = vpop.f32.mrf.mxu0
        %1278 = vdwg.mxu0
        %1279 = vmatpush.bf16.msra.mxu0 0
        %1280 = vmatpush.bf16.msra.mxu0 0
        %1281 = vmatpush.bf16.msra.mxu0 0
        %1282 = vmatpush.bf16.msra.mxu0 0
        %1283 = vmatpush.bf16.msra.mxu0 %v1197
        %1284 = vmatpush.bf16.msra.mxu0 %v1183
        %1285 = vmatpush.bf16.msra.mxu0 %v1169
        %1286 = vmatpush.bf16.msra.mxu0 %v1155
        %1287 = vmatmul.bf16.gmra.mxu0 %v640
        %v1288 = vpop.f32.mrf.mxu0
        %v1289 = vadd.f32 0.0, %v1288
        %v1290 = vpop.f32.mrf.mxu0
        %1291 = vdwg.mxu0
        %1292 = vmatpush.bf16.msra.mxu0 0
        %1293 = vmatpush.bf16.msra.mxu0 0
        %1294 = vmatpush.bf16.msra.mxu0 0
        %1295 = vmatpush.bf16.msra.mxu0 0
        %1296 = vmatpush.bf16.msra.mxu0 %v1198
        %1297 = vmatpush.bf16.msra.mxu0 %v1184
        %1298 = vmatpush.bf16.msra.mxu0 %v1170
        %1299 = vmatpush.bf16.msra.mxu0 %v1156
        %1300 = vmatmul.bf16.gmra.mxu0 %v640
        %v1301 = vpop.f32.mrf.mxu0
        %v1302 = vadd.f32 0.0, %v1301
        %v1303 = vpop.f32.mrf.mxu0
        %1304 = vdwg.mxu0
        %1305 = vmatpush.bf16.msra.mxu0 0
        %1306 = vmatpush.bf16.msra.mxu0 0
        %1307 = vmatpush.bf16.msra.mxu0 0
        %1308 = vmatpush.bf16.msra.mxu0 0
        %1309 = vmatpush.bf16.msra.mxu0 %v1199
        %1310 = vmatpush.bf16.msra.mxu0 %v1185
        %1311 = vmatpush.bf16.msra.mxu0 %v1171
        %1312 = vmatpush.bf16.msra.mxu0 %v1157
        %1313 = vmatmul.bf16.gmra.mxu0 %v640
        %v1314 = vpop.f32.mrf.mxu0
        %v1315 = vadd.f32 0.0, %v1314
        %v1316 = vpop.f32.mrf.mxu0
        %1317 = vdwg.mxu0
        %1318 = vmatpush.bf16.msra.mxu0 0
        %1319 = vmatpush.bf16.msra.mxu0 0
        %1320 = vmatpush.bf16.msra.mxu0 0
        %1321 = vmatpush.bf16.msra.mxu0 0
        %1322 = vmatpush.bf16.msra.mxu0 %v1200
        %1323 = vmatpush.bf16.msra.mxu0 %v1186
        %1324 = vmatpush.bf16.msra.mxu0 %v1172
        %1325 = vmatpush.bf16.msra.mxu0 %v1158
        %1326 = vmatmul.bf16.gmra.mxu0 %v640
        %v1327 = vpop.f32.mrf.mxu0
        %v1328 = vadd.f32 0.0, %v1327
        %v1329 = vpop.f32.mrf.mxu0
        %1330 = vdwg.mxu0
        %1331 = vmatpush.bf16.msra.mxu0 0
        %1332 = vmatpush.bf16.msra.mxu0 0
        %1333 = vmatpush.bf16.msra.mxu0 0
        %1334 = vmatpush.bf16.msra.mxu0 0
        %1335 = vmatpush.bf16.msra.mxu0 %v1201
        %1336 = vmatpush.bf16.msra.mxu0 %v1187
        %1337 = vmatpush.bf16.msra.mxu0 %v1173
        %1338 = vmatpush.bf16.msra.mxu0 %v1159
        %1339 = vmatmul.bf16.gmra.mxu0 %v640
        %v1340 = vpop.f32.mrf.mxu0
        %v1341 = vadd.f32 0.0, %v1340
        %v1342 = vpop.f32.mrf.mxu0
        %1343 = vdwg.mxu0
        %1344 = vmatpush.bf16.msra.mxu0 0
        %1345 = vmatpush.bf16.msra.mxu0 0
        %1346 = vmatpush.bf16.msra.mxu0 0
        %1347 = vmatpush.bf16.msra.mxu0 0
        %1348 = vmatpush.bf16.msra.mxu0 %v1202
        %1349 = vmatpush.bf16.msra.mxu0 %v1188
        %1350 = vmatpush.bf16.msra.mxu0 %v1174
        %1351 = vmatpush.bf16.msra.mxu0 %v1160
        %1352 = vmatmul.bf16.gmra.mxu0 %v640
        %v1353 = vpop.f32.mrf.mxu0
        %v1354 = vadd.f32 0.0, %v1353
        %v1355 = vpop.f32.mrf.mxu0
        %1356 = vdwg.mxu0
        %1357 = vmatpush.bf16.msra.mxu0 0
        %1358 = vmatpush.bf16.msra.mxu0 0
        %1359 = vmatpush.bf16.msra.mxu0 0
        %1360 = vmatpush.bf16.msra.mxu0 0
        %1361 = vmatpush.bf16.msra.mxu0 %v1203
        %1362 = vmatpush.bf16.msra.mxu0 %v1189
        %1363 = vmatpush.bf16.msra.mxu0 %v1175
        %1364 = vmatpush.bf16.msra.mxu0 %v1161
        %1365 = vmatmul.bf16.gmra.mxu0 %v640
        %v1366 = vpop.f32.mrf.mxu0
        %v1367 = vadd.f32 0.0, %v1366
        %v1368 = vpop.f32.mrf.mxu0
        %1369 = vdwg.mxu0
        %1370 = vmatpush.bf16.msra.mxu0 0
        %1371 = vmatpush.bf16.msra.mxu0 0
        %1372 = vmatpush.bf16.msra.mxu0 0
        %1373 = vmatpush.bf16.msra.mxu0 0
        %1374 = vmatpush.bf16.msra.mxu0 %v1204
        %1375 = vmatpush.bf16.msra.mxu0 %v1190
        %1376 = vmatpush.bf16.msra.mxu0 %v1176
        %1377 = vmatpush.bf16.msra.mxu0 %v1162
        %1378 = vmatmul.bf16.gmra.mxu0 %v640
        %v1379 = vpop.f32.mrf.mxu0
        %v1380 = vadd.f32 0.0, %v1379
        %v1381 = vpop.f32.mrf.mxu0
        %1382 = vdwg.mxu0
        %1383 = vmatpush.bf16.msra.mxu0 0
        %1384 = vmatpush.bf16.msra.mxu0 0
        %1385 = vmatpush.bf16.msra.mxu0 0
        %1386 = vmatpush.bf16.msra.mxu0 0
        %1387 = vmatpush.bf16.msra.mxu0 %v1205
        %1388 = vmatpush.bf16.msra.mxu0 %v1191
        %1389 = vmatpush.bf16.msra.mxu0 %v1177
        %1390 = vmatpush.bf16.msra.mxu0 %v1163
        %1391 = vmatmul.bf16.gmra.mxu0 %v640
        %v1392 = vpop.f32.mrf.mxu0
        %v1393 = vadd.f32 0.0, %v1392
        %v1394 = vpop.f32.mrf.mxu0
        %1395 = vdwg.mxu0
        %1396 = vmatpush.bf16.msra.mxu0 0
        %1397 = vmatpush.bf16.msra.mxu0 0
        %1398 = vmatpush.bf16.msra.mxu0 0
        %1399 = vmatpush.bf16.msra.mxu0 0
        %1400 = vmatpush.bf16.msra.mxu0 %v1206
        %1401 = vmatpush.bf16.msra.mxu0 %v1192
        %1402 = vmatpush.bf16.msra.mxu0 %v1178
        %1403 = vmatpush.bf16.msra.mxu0 %v1164
        %1404 = vmatmul.bf16.gmra.mxu0 %v640
        %v1405 = vpop.f32.mrf.mxu0
        %v1406 = vadd.f32 0.0, %v1405
        %v1407 = vpop.f32.mrf.mxu0
        %1408 = vdwg.mxu0
        %1409 = vmatpush.bf16.msra.mxu0 0
        %1410 = vmatpush.bf16.msra.mxu0 0
        %1411 = vmatpush.bf16.msra.mxu0 0
        %1412 = vmatpush.bf16.msra.mxu0 0
        %1413 = vmatpush.bf16.msra.mxu0 %v1207
        %1414 = vmatpush.bf16.msra.mxu0 %v1193
        %1415 = vmatpush.bf16.msra.mxu0 %v1179
        %1416 = vmatpush.bf16.msra.mxu0 %v1165
        %1417 = vmatmul.bf16.gmra.mxu0 %v640
        %v1418 = vpop.f32.mrf.mxu0
        %v1419 = vadd.f32 0.0, %v1418
        %v1420 = vpop.f32.mrf.mxu0
        %1421 = vdwg.mxu0
        %1422 = vmatpush.bf16.msra.mxu0 0
        %1423 = vmatpush.bf16.msra.mxu0 0
        %1424 = vmatpush.bf16.msra.mxu0 0
        %1425 = vmatpush.bf16.msra.mxu0 0
        %1426 = vmatpush.bf16.msra.mxu0 %v1208
        %1427 = vmatpush.bf16.msra.mxu0 %v1194
        %1428 = vmatpush.bf16.msra.mxu0 %v1180
        %1429 = vmatpush.bf16.msra.mxu0 %v1166
        %1430 = vmatmul.bf16.gmra.mxu0 %v640
        %v1431 = vpop.f32.mrf.mxu0
        %v1432 = vadd.f32 0.0, %v1431
        %v1433 = vpop.f32.mrf.mxu0
        %1434 = vdwg.mxu0
        %1435 = vmatpush.bf16.msra.mxu0 0
        %1436 = vmatpush.bf16.msra.mxu0 0
        %1437 = vmatpush.bf16.msra.mxu0 0
        %1438 = vmatpush.bf16.msra.mxu0 0
        %1439 = vmatpush.bf16.msra.mxu0 %v1209
        %1440 = vmatpush.bf16.msra.mxu0 %v1195
        %1441 = vmatpush.bf16.msra.mxu0 %v1181
        %1442 = vmatpush.bf16.msra.mxu0 %v1167
        %1443 = vmatmul.bf16.gmra.mxu0 %v640
        %v1444 = vpop.f32.mrf.mxu0
        %v1445 = vadd.f32 0.0, %v1444
        %v1446 = vpop.f32.mrf.mxu0
        %1447 = vdwg.mxu0
        %v1448 = vld [vmem:[%s244 + $0xe] sm:$0xff]
        %v1449 = vld [vmem:[%s244 + $0x16] sm:$0x3f]
        %v1452 = vperm.slane %v1448, 0
        %v1453 = vperm.slane %v1448, 1
        %v1454 = vperm.slane %v1448, 2
        %v1455 = vperm.slane %v1448, 3
        %v1456 = vperm.slane %v1448, 4
        %v1457 = vperm.slane %v1448, 5
        %v1458 = vperm.slane %v1448, 6
        %v1459 = vperm.slane %v1448, 7
        %v1460 = vperm.slane %v1449, 0
        %v1461 = vperm.slane %v1449, 1
        %v1462 = vperm.slane %v1449, 2
        %v1463 = vperm.slane %v1449, 3
        %v1464 = vperm.slane %v1449, 4
        %v1465 = vperm.slane %v1449, 5
        %v1480 = vmul.f32 %v1276, %v1452
        %v1481 = vmul.f32 %v1289, %v1453
        %v1482 = vmul.f32 %v1302, %v1454
        %v1483 = vmul.f32 %v1315, %v1455
        %v1484 = vmul.f32 %v1328, %v1456
        %v1485 = vmul.f32 %v1341, %v1457
        %v1486 = vmul.f32 %v1354, %v1458
        %v1487 = vmul.f32 %v1367, %v1459
        %v1488 = vmul.f32 %v1380, %v1460
        %v1489 = vmul.f32 %v1393, %v1461
        %v1490 = vmul.f32 %v1406, %v1462
        %v1491 = vmul.f32 %v1419, %v1463
        %v1492 = vmul.f32 %v1432, %v1464
        %v1493 = vmul.f32 %v1445, %v1465
        %v1494 = vld [vmem:[%s254 + $0xe] sm:$0xff]
        %v1495 = vld [vmem:[%s254 + $0x16] sm:$0x3f]
        %v1498 = vperm.slane %v1494, 0
        %v1499 = vperm.slane %v1494, 1
        %v1500 = vperm.slane %v1494, 2
        %v1501 = vperm.slane %v1494, 3
        %v1502 = vperm.slane %v1494, 4
        %v1503 = vperm.slane %v1494, 5
        %v1504 = vperm.slane %v1494, 6
        %v1505 = vperm.slane %v1494, 7
        %v1506 = vperm.slane %v1495, 0
        %v1507 = vperm.slane %v1495, 1
        %v1508 = vperm.slane %v1495, 2
        %v1509 = vperm.slane %v1495, 3
        %v1510 = vperm.slane %v1495, 4
        %v1511 = vperm.slane %v1495, 5
        %v1526 = vadd.f32 %v1480, %v1498
        %v1527 = vadd.f32 %v1481, %v1499
        %v1528 = vadd.f32 %v1482, %v1500
        %v1529 = vadd.f32 %v1483, %v1501
        %v1530 = vadd.f32 %v1484, %v1502
        %v1531 = vadd.f32 %v1485, %v1503
        %v1532 = vadd.f32 %v1486, %v1504
        %v1533 = vadd.f32 %v1487, %v1505
        %v1534 = vadd.f32 %v1488, %v1506
        %v1535 = vadd.f32 %v1489, %v1507
        %v1536 = vadd.f32 %v1490, %v1508
        %v1537 = vadd.f32 %v1491, %v1509
        %v1538 = vadd.f32 %v1492, %v1510
        %v1539 = vadd.f32 %v1493, %v1511
        %1540 = vst [vmem:[%s297 + $0x70] sm:$0xff] %v1526
        %1541 = vst [vmem:[%s297 + $0x78] sm:$0xff] %v1527
        %1542 = vst [vmem:[%s297 + $0x80] sm:$0xff] %v1528
        %1543 = vst [vmem:[%s297 + $0x88] sm:$0xff] %v1529
        %1544 = vst [vmem:[%s297 + $0x90] sm:$0xff] %v1530
        %1545 = vst [vmem:[%s297 + $0x98] sm:$0xff] %v1531
        %1546 = vst [vmem:[%s297 + $0xa0] sm:$0xff] %v1532
        %1547 = vst [vmem:[%s297 + $0xa8] sm:$0xff] %v1533
        %1548 = vst [vmem:[%s297 + $0xb0] sm:$0xff] %v1534
        %1549 = vst [vmem:[%s297 + $0xb8] sm:$0xff] %v1535
        %1550 = vst [vmem:[%s297 + $0xc0] sm:$0xff] %v1536
        %1551 = vst [vmem:[%s297 + $0xc8] sm:$0xff] %v1537
        %1552 = vst [vmem:[%s297 + $0xd0] sm:$0xff] %v1538
        %1553 = vst [vmem:[%s297 + $0xd8] sm:$0xff] %v1539
        %v1554 = vld [vmem:[%s234 + $0x70] sm:$0xff]
        %v1555 = vld [vmem:[%s234 + $0x78] sm:$0xff]
        %v1556 = vld [vmem:[%s234 + $0x80] sm:$0xff]
        %v1557 = vld [vmem:[%s234 + $0x88] sm:$0xff]
        %v1558 = vld [vmem:[%s234 + $0x90] sm:$0xff]
        %v1559 = vld [vmem:[%s234 + $0x98] sm:$0xff]
        %v1560 = vld [vmem:[%s234 + $0xa0] sm:$0xff]
        %v1561 = vld [vmem:[%s234 + $0x1f8] sm:$0xff]
        %v1562 = vld [vmem:[%s234 + $0x200] sm:$0xff]
        %v1563 = vld [vmem:[%s234 + $0x208] sm:$0xff]
        %v1564 = vld [vmem:[%s234 + $0x210] sm:$0xff]
        %v1565 = vld [vmem:[%s234 + $0x218] sm:$0xff]
        %v1566 = vld [vmem:[%s234 + $0x220] sm:$0xff]
        %v1567 = vld [vmem:[%s234 + $0x228] sm:$0xff]
        %v1568 = vld [vmem:[%s234 + $0x380] sm:$0xff]
        %v1569 = vld [vmem:[%s234 + $0x388] sm:$0xff]
        %v1570 = vld [vmem:[%s234 + $0x390] sm:$0xff]
        %v1571 = vld [vmem:[%s234 + $0x398] sm:$0xff]
        %v1572 = vld [vmem:[%s234 + $0x3a0] sm:$0xff]
        %v1573 = vld [vmem:[%s234 + $0x3a8] sm:$0xff]
        %v1574 = vld [vmem:[%s234 + $0x3b0] sm:$0xff]
        %v1575 = vld [vmem:[%s234 + $0x508] sm:$0xff]
        %v1576 = vld [vmem:[%s234 + $0x510] sm:$0xff]
        %v1577 = vld [vmem:[%s234 + $0x518] sm:$0xff]
        %v1578 = vld [vmem:[%s234 + $0x520] sm:$0xff]
        %v1579 = vld [vmem:[%s234 + $0x528] sm:$0xff]
        %v1580 = vld [vmem:[%s234 + $0x530] sm:$0xff]
        %v1581 = vld [vmem:[%s234 + $0x538] sm:$0xff]
        %v1582 = vld [vmem:[%s234 + $0x690] sm:$0xff]
        %v1583 = vld [vmem:[%s234 + $0x698] sm:$0xff]
        %v1584 = vld [vmem:[%s234 + $0x6a0] sm:$0xff]
        %v1585 = vld [vmem:[%s234 + $0x6a8] sm:$0xff]
        %v1586 = vld [vmem:[%s234 + $0x6b0] sm:$0xff]
        %v1587 = vld [vmem:[%s234 + $0x6b8] sm:$0xff]
        %v1588 = vld [vmem:[%s234 + $0x6c0] sm:$0xff]
        %v1589 = vld [vmem:[%s234 + $0x818] sm:$0xff]
        %v1590 = vld [vmem:[%s234 + $0x820] sm:$0xff]
        %v1591 = vld [vmem:[%s234 + $0x828] sm:$0xff]
        %v1592 = vld [vmem:[%s234 + $0x830] sm:$0xff]
        %v1593 = vld [vmem:[%s234 + $0x838] sm:$0xff]
        %v1594 = vld [vmem:[%s234 + $0x840] sm:$0xff]
        %v1595 = vld [vmem:[%s234 + $0x848] sm:$0xff]
        %v1596 = vld [vmem:[%s234 + $0x9a0] sm:$0xff]
        %v1597 = vld [vmem:[%s234 + $0x9a8] sm:$0xff]
        %v1598 = vld [vmem:[%s234 + $0x9b0] sm:$0xff]
        %v1599 = vld [vmem:[%s234 + $0x9b8] sm:$0xff]
        %v1600 = vld [vmem:[%s234 + $0x9c0] sm:$0xff]
        %v1601 = vld [vmem:[%s234 + $0x9c8] sm:$0xff]
        %v1602 = vld [vmem:[%s234 + $0x9d0] sm:$0xff]
        %v1603 = vld [vmem:[%s234 + $0xb28] sm:$0xff]
        %v1604 = vld [vmem:[%s234 + $0xb30] sm:$0xff]
        %v1605 = vld [vmem:[%s234 + $0xb38] sm:$0xff]
        %v1606 = vld [vmem:[%s234 + $0xb40] sm:$0xff]
        %v1607 = vld [vmem:[%s234 + $0xb48] sm:$0xff]
        %v1608 = vld [vmem:[%s234 + $0xb50] sm:$0xff]
        %v1609 = vld [vmem:[%s234 + $0xb58] sm:$0xff]
        %v1666 = vunpack.c.l.b16 %v1554
        %v1667 = vunpack.c.h.b16 %v1554
        %v1668 = vunpack.c.l.b16 %v1555
        %v1669 = vunpack.c.h.b16 %v1555
        %v1670 = vunpack.c.l.b16 %v1556
        %v1671 = vunpack.c.h.b16 %v1556
        %v1672 = vunpack.c.l.b16 %v1557
        %v1673 = vunpack.c.h.b16 %v1557
        %v1674 = vunpack.c.l.b16 %v1558
        %v1675 = vunpack.c.h.b16 %v1558
        %v1676 = vunpack.c.l.b16 %v1559
        %v1677 = vunpack.c.h.b16 %v1559
        %v1678 = vunpack.c.l.b16 %v1560
        %v1679 = vunpack.c.h.b16 %v1560
        %v1680 = vunpack.c.l.b16 %v1561
        %v1681 = vunpack.c.h.b16 %v1561
        %v1682 = vunpack.c.l.b16 %v1562
        %v1683 = vunpack.c.h.b16 %v1562
        %v1684 = vunpack.c.l.b16 %v1563
        %v1685 = vunpack.c.h.b16 %v1563
        %v1686 = vunpack.c.l.b16 %v1564
        %v1687 = vunpack.c.h.b16 %v1564
        %v1688 = vunpack.c.l.b16 %v1565
        %v1689 = vunpack.c.h.b16 %v1565
        %v1690 = vunpack.c.l.b16 %v1566
        %v1691 = vunpack.c.h.b16 %v1566
        %v1692 = vunpack.c.l.b16 %v1567
        %v1693 = vunpack.c.h.b16 %v1567
        %v1694 = vunpack.c.l.b16 %v1568
        %v1695 = vunpack.c.h.b16 %v1568
        %v1696 = vunpack.c.l.b16 %v1569
        %v1697 = vunpack.c.h.b16 %v1569
        %v1698 = vunpack.c.l.b16 %v1570
        %v1699 = vunpack.c.h.b16 %v1570
        %v1700 = vunpack.c.l.b16 %v1571
        %v1701 = vunpack.c.h.b16 %v1571
        %v1702 = vunpack.c.l.b16 %v1572
        %v1703 = vunpack.c.h.b16 %v1572
        %v1704 = vunpack.c.l.b16 %v1573
        %v1705 = vunpack.c.h.b16 %v1573
        %v1706 = vunpack.c.l.b16 %v1574
        %v1707 = vunpack.c.h.b16 %v1574
        %v1708 = vunpack.c.l.b16 %v1575
        %v1709 = vunpack.c.h.b16 %v1575
        %v1710 = vunpack.c.l.b16 %v1576
        %v1711 = vunpack.c.h.b16 %v1576
        %v1712 = vunpack.c.l.b16 %v1577
        %v1713 = vunpack.c.h.b16 %v1577
        %v1714 = vunpack.c.l.b16 %v1578
        %v1715 = vunpack.c.h.b16 %v1578
        %v1716 = vunpack.c.l.b16 %v1579
        %v1717 = vunpack.c.h.b16 %v1579
        %v1718 = vunpack.c.l.b16 %v1580
        %v1719 = vunpack.c.h.b16 %v1580
        %v1720 = vunpack.c.l.b16 %v1581
        %v1721 = vunpack.c.h.b16 %v1581
        %v1722 = vunpack.c.l.b16 %v1582
        %v1723 = vunpack.c.h.b16 %v1582
        %v1724 = vunpack.c.l.b16 %v1583
        %v1725 = vunpack.c.h.b16 %v1583
        %v1726 = vunpack.c.l.b16 %v1584
        %v1727 = vunpack.c.h.b16 %v1584
        %v1728 = vunpack.c.l.b16 %v1585
        %v1729 = vunpack.c.h.b16 %v1585
        %v1730 = vunpack.c.l.b16 %v1586
        %v1731 = vunpack.c.h.b16 %v1586
        %v1732 = vunpack.c.l.b16 %v1587
        %v1733 = vunpack.c.h.b16 %v1587
        %v1734 = vunpack.c.l.b16 %v1588
        %v1735 = vunpack.c.h.b16 %v1588
        %v1736 = vunpack.c.l.b16 %v1589
        %v1737 = vunpack.c.h.b16 %v1589
        %v1738 = vunpack.c.l.b16 %v1590
        %v1739 = vunpack.c.h.b16 %v1590
        %v1740 = vunpack.c.l.b16 %v1591
        %v1741 = vunpack.c.h.b16 %v1591
        %v1742 = vunpack.c.l.b16 %v1592
        %v1743 = vunpack.c.h.b16 %v1592
        %v1744 = vunpack.c.l.b16 %v1593
        %v1745 = vunpack.c.h.b16 %v1593
        %v1746 = vunpack.c.l.b16 %v1594
        %v1747 = vunpack.c.h.b16 %v1594
        %v1748 = vunpack.c.l.b16 %v1595
        %v1749 = vunpack.c.h.b16 %v1595
        %v1750 = vunpack.c.l.b16 %v1596
        %v1751 = vunpack.c.h.b16 %v1596
        %v1752 = vunpack.c.l.b16 %v1597
        %v1753 = vunpack.c.h.b16 %v1597
        %v1754 = vunpack.c.l.b16 %v1598
        %v1755 = vunpack.c.h.b16 %v1598
        %v1756 = vunpack.c.l.b16 %v1599
        %v1757 = vunpack.c.h.b16 %v1599
        %v1758 = vunpack.c.l.b16 %v1600
        %v1759 = vunpack.c.h.b16 %v1600
        %v1760 = vunpack.c.l.b16 %v1601
        %v1761 = vunpack.c.h.b16 %v1601
        %v1762 = vunpack.c.l.b16 %v1602
        %v1763 = vunpack.c.h.b16 %v1602
        %v1764 = vunpack.c.l.b16 %v1603
        %v1765 = vunpack.c.h.b16 %v1603
        %v1766 = vunpack.c.l.b16 %v1604
        %v1767 = vunpack.c.h.b16 %v1604
        %v1768 = vunpack.c.l.b16 %v1605
        %v1769 = vunpack.c.h.b16 %v1605
        %v1770 = vunpack.c.l.b16 %v1606
        %v1771 = vunpack.c.h.b16 %v1606
        %v1772 = vunpack.c.l.b16 %v1607
        %v1773 = vunpack.c.h.b16 %v1607
        %v1774 = vunpack.c.l.b16 %v1608
        %v1775 = vunpack.c.h.b16 %v1608
        %v1776 = vunpack.c.l.b16 %v1609
        %v1777 = vunpack.c.h.b16 %v1609
        %v1778 = vpack.c.b16 %v1680, %v1666
        %v1779 = vpack.c.b16 %v1681, %v1667
        %v1780 = vpack.c.b16 %v1682, %v1668
        %v1781 = vpack.c.b16 %v1683, %v1669
        %v1782 = vpack.c.b16 %v1684, %v1670
        %v1783 = vpack.c.b16 %v1685, %v1671
        %v1784 = vpack.c.b16 %v1686, %v1672
        %v1785 = vpack.c.b16 %v1687, %v1673
        %v1786 = vpack.c.b16 %v1688, %v1674
        %v1787 = vpack.c.b16 %v1689, %v1675
        %v1788 = vpack.c.b16 %v1690, %v1676
        %v1789 = vpack.c.b16 %v1691, %v1677
        %v1790 = vpack.c.b16 %v1692, %v1678
        %v1791 = vpack.c.b16 %v1693, %v1679
        %v1792 = vpack.c.b16 %v1708, %v1694
        %v1793 = vpack.c.b16 %v1709, %v1695
        %v1794 = vpack.c.b16 %v1710, %v1696
        %v1795 = vpack.c.b16 %v1711, %v1697
        %v1796 = vpack.c.b16 %v1712, %v1698
        %v1797 = vpack.c.b16 %v1713, %v1699
        %v1798 = vpack.c.b16 %v1714, %v1700
        %v1799 = vpack.c.b16 %v1715, %v1701
        %v1800 = vpack.c.b16 %v1716, %v1702
        %v1801 = vpack.c.b16 %v1717, %v1703
        %v1802 = vpack.c.b16 %v1718, %v1704
        %v1803 = vpack.c.b16 %v1719, %v1705
        %v1804 = vpack.c.b16 %v1720, %v1706
        %v1805 = vpack.c.b16 %v1721, %v1707
        %v1806 = vpack.c.b16 %v1736, %v1722
        %v1807 = vpack.c.b16 %v1737, %v1723
        %v1808 = vpack.c.b16 %v1738, %v1724
        %v1809 = vpack.c.b16 %v1739, %v1725
        %v1810 = vpack.c.b16 %v1740, %v1726
        %v1811 = vpack.c.b16 %v1741, %v1727
        %v1812 = vpack.c.b16 %v1742, %v1728
        %v1813 = vpack.c.b16 %v1743, %v1729
        %v1814 = vpack.c.b16 %v1744, %v1730
        %v1815 = vpack.c.b16 %v1745, %v1731
        %v1816 = vpack.c.b16 %v1746, %v1732
        %v1817 = vpack.c.b16 %v1747, %v1733
        %v1818 = vpack.c.b16 %v1748, %v1734
        %v1819 = vpack.c.b16 %v1749, %v1735
        %v1820 = vpack.c.b16 %v1764, %v1750
        %v1821 = vpack.c.b16 %v1765, %v1751
        %v1822 = vpack.c.b16 %v1766, %v1752
        %v1823 = vpack.c.b16 %v1767, %v1753
        %v1824 = vpack.c.b16 %v1768, %v1754
        %v1825 = vpack.c.b16 %v1769, %v1755
        %v1826 = vpack.c.b16 %v1770, %v1756
        %v1827 = vpack.c.b16 %v1771, %v1757
        %v1828 = vpack.c.b16 %v1772, %v1758
        %v1829 = vpack.c.b16 %v1773, %v1759
        %v1830 = vpack.c.b16 %v1774, %v1760
        %v1831 = vpack.c.b16 %v1775, %v1761
        %v1832 = vpack.c.b16 %v1776, %v1762
        %v1833 = vpack.c.b16 %v1777, %v1763
        %1890 = vmatpush.bf16.msra.mxu0 0
        %1891 = vmatpush.bf16.msra.mxu0 0
        %1892 = vmatpush.bf16.msra.mxu0 0
        %1893 = vmatpush.bf16.msra.mxu0 0
        %1894 = vmatpush.bf16.msra.mxu0 %v1820
        %1895 = vmatpush.bf16.msra.mxu0 %v1806
        %1896 = vmatpush.bf16.msra.mxu0 %v1792
        %1897 = vmatpush.bf16.msra.mxu0 %v1778
        %1898 = vmatmul.bf16.gmra.mxu0 %v640
        %v1899 = vpop.f32.mrf.mxu0
        %v1900 = vadd.f32 0.0, %v1899
        %v1901 = vpop.f32.mrf.mxu0
        %1902 = vdwg.mxu0
        %1903 = vmatpush.bf16.msra.mxu0 0
        %1904 = vmatpush.bf16.msra.mxu0 0
        %1905 = vmatpush.bf16.msra.mxu0 0
        %1906 = vmatpush.bf16.msra.mxu0 0
        %1907 = vmatpush.bf16.msra.mxu0 %v1821
        %1908 = vmatpush.bf16.msra.mxu0 %v1807
        %1909 = vmatpush.bf16.msra.mxu0 %v1793
        %1910 = vmatpush.bf16.msra.mxu0 %v1779
        %1911 = vmatmul.bf16.gmra.mxu0 %v640
        %v1912 = vpop.f32.mrf.mxu0
        %v1913 = vadd.f32 0.0, %v1912
        %v1914 = vpop.f32.mrf.mxu0
        %1915 = vdwg.mxu0
        %1916 = vmatpush.bf16.msra.mxu0 0
        %1917 = vmatpush.bf16.msra.mxu0 0
        %1918 = vmatpush.bf16.msra.mxu0 0
        %1919 = vmatpush.bf16.msra.mxu0 0
        %1920 = vmatpush.bf16.msra.mxu0 %v1822
        %1921 = vmatpush.bf16.msra.mxu0 %v1808
        %1922 = vmatpush.bf16.msra.mxu0 %v1794
        %1923 = vmatpush.bf16.msra.mxu0 %v1780
        %1924 = vmatmul.bf16.gmra.mxu0 %v640
        %v1925 = vpop.f32.mrf.mxu0
        %v1926 = vadd.f32 0.0, %v1925
        %v1927 = vpop.f32.mrf.mxu0
        %1928 = vdwg.mxu0
        %1929 = vmatpush.bf16.msra.mxu0 0
        %1930 = vmatpush.bf16.msra.mxu0 0
        %1931 = vmatpush.bf16.msra.mxu0 0
        %1932 = vmatpush.bf16.msra.mxu0 0
        %1933 = vmatpush.bf16.msra.mxu0 %v1823
        %1934 = vmatpush.bf16.msra.mxu0 %v1809
        %1935 = vmatpush.bf16.msra.mxu0 %v1795
        %1936 = vmatpush.bf16.msra.mxu0 %v1781
        %1937 = vmatmul.bf16.gmra.mxu0 %v640
        %v1938 = vpop.f32.mrf.mxu0
        %v1939 = vadd.f32 0.0, %v1938
        %v1940 = vpop.f32.mrf.mxu0
        %1941 = vdwg.mxu0
        %1942 = vmatpush.bf16.msra.mxu0 0
        %1943 = vmatpush.bf16.msra.mxu0 0
        %1944 = vmatpush.bf16.msra.mxu0 0
        %1945 = vmatpush.bf16.msra.mxu0 0
        %1946 = vmatpush.bf16.msra.mxu0 %v1824
        %1947 = vmatpush.bf16.msra.mxu0 %v1810
        %1948 = vmatpush.bf16.msra.mxu0 %v1796
        %1949 = vmatpush.bf16.msra.mxu0 %v1782
        %1950 = vmatmul.bf16.gmra.mxu0 %v640
        %v1951 = vpop.f32.mrf.mxu0
        %v1952 = vadd.f32 0.0, %v1951
        %v1953 = vpop.f32.mrf.mxu0
        %1954 = vdwg.mxu0
        %1955 = vmatpush.bf16.msra.mxu0 0
        %1956 = vmatpush.bf16.msra.mxu0 0
        %1957 = vmatpush.bf16.msra.mxu0 0
        %1958 = vmatpush.bf16.msra.mxu0 0
        %1959 = vmatpush.bf16.msra.mxu0 %v1825
        %1960 = vmatpush.bf16.msra.mxu0 %v1811
        %1961 = vmatpush.bf16.msra.mxu0 %v1797
        %1962 = vmatpush.bf16.msra.mxu0 %v1783
        %1963 = vmatmul.bf16.gmra.mxu0 %v640
        %v1964 = vpop.f32.mrf.mxu0
        %v1965 = vadd.f32 0.0, %v1964
        %v1966 = vpop.f32.mrf.mxu0
        %1967 = vdwg.mxu0
        %1968 = vmatpush.bf16.msra.mxu0 0
        %1969 = vmatpush.bf16.msra.mxu0 0
        %1970 = vmatpush.bf16.msra.mxu0 0
        %1971 = vmatpush.bf16.msra.mxu0 0
        %1972 = vmatpush.bf16.msra.mxu0 %v1826
        %1973 = vmatpush.bf16.msra.mxu0 %v1812
        %1974 = vmatpush.bf16.msra.mxu0 %v1798
        %1975 = vmatpush.bf16.msra.mxu0 %v1784
        %1976 = vmatmul.bf16.gmra.mxu0 %v640
        %v1977 = vpop.f32.mrf.mxu0
        %v1978 = vadd.f32 0.0, %v1977
        %v1979 = vpop.f32.mrf.mxu0
        %1980 = vdwg.mxu0
        %1981 = vmatpush.bf16.msra.mxu0 0
        %1982 = vmatpush.bf16.msra.mxu0 0
        %1983 = vmatpush.bf16.msra.mxu0 0
        %1984 = vmatpush.bf16.msra.mxu0 0
        %1985 = vmatpush.bf16.msra.mxu0 %v1827
        %1986 = vmatpush.bf16.msra.mxu0 %v1813
        %1987 = vmatpush.bf16.msra.mxu0 %v1799
        %1988 = vmatpush.bf16.msra.mxu0 %v1785
        %1989 = vmatmul.bf16.gmra.mxu0 %v640
        %v1990 = vpop.f32.mrf.mxu0
        %v1991 = vadd.f32 0.0, %v1990
        %v1992 = vpop.f32.mrf.mxu0
        %1993 = vdwg.mxu0
        %1994 = vmatpush.bf16.msra.mxu0 0
        %1995 = vmatpush.bf16.msra.mxu0 0
        %1996 = vmatpush.bf16.msra.mxu0 0
        %1997 = vmatpush.bf16.msra.mxu0 0
        %1998 = vmatpush.bf16.msra.mxu0 %v1828
        %1999 = vmatpush.bf16.msra.mxu0 %v1814
        %2000 = vmatpush.bf16.msra.mxu0 %v1800
        %2001 = vmatpush.bf16.msra.mxu0 %v1786
        %2002 = vmatmul.bf16.gmra.mxu0 %v640
        %v2003 = vpop.f32.mrf.mxu0
        %v2004 = vadd.f32 0.0, %v2003
        %v2005 = vpop.f32.mrf.mxu0
        %2006 = vdwg.mxu0
        %2007 = vmatpush.bf16.msra.mxu0 0
        %2008 = vmatpush.bf16.msra.mxu0 0
        %2009 = vmatpush.bf16.msra.mxu0 0
        %2010 = vmatpush.bf16.msra.mxu0 0
        %2011 = vmatpush.bf16.msra.mxu0 %v1829
        %2012 = vmatpush.bf16.msra.mxu0 %v1815
        %2013 = vmatpush.bf16.msra.mxu0 %v1801
        %2014 = vmatpush.bf16.msra.mxu0 %v1787
        %2015 = vmatmul.bf16.gmra.mxu0 %v640
        %v2016 = vpop.f32.mrf.mxu0
        %v2017 = vadd.f32 0.0, %v2016
        %v2018 = vpop.f32.mrf.mxu0
        %2019 = vdwg.mxu0
        %2020 = vmatpush.bf16.msra.mxu0 0
        %2021 = vmatpush.bf16.msra.mxu0 0
        %2022 = vmatpush.bf16.msra.mxu0 0
        %2023 = vmatpush.bf16.msra.mxu0 0
        %2024 = vmatpush.bf16.msra.mxu0 %v1830
        %2025 = vmatpush.bf16.msra.mxu0 %v1816
        %2026 = vmatpush.bf16.msra.mxu0 %v1802
        %2027 = vmatpush.bf16.msra.mxu0 %v1788
        %2028 = vmatmul.bf16.gmra.mxu0 %v640
        %v2029 = vpop.f32.mrf.mxu0
        %v2030 = vadd.f32 0.0, %v2029
        %v2031 = vpop.f32.mrf.mxu0
        %2032 = vdwg.mxu0
        %2033 = vmatpush.bf16.msra.mxu0 0
        %2034 = vmatpush.bf16.msra.mxu0 0
        %2035 = vmatpush.bf16.msra.mxu0 0
        %2036 = vmatpush.bf16.msra.mxu0 0
        %2037 = vmatpush.bf16.msra.mxu0 %v1831
        %2038 = vmatpush.bf16.msra.mxu0 %v1817
        %2039 = vmatpush.bf16.msra.mxu0 %v1803
        %2040 = vmatpush.bf16.msra.mxu0 %v1789
        %2041 = vmatmul.bf16.gmra.mxu0 %v640
        %v2042 = vpop.f32.mrf.mxu0
        %v2043 = vadd.f32 0.0, %v2042
        %v2044 = vpop.f32.mrf.mxu0
        %2045 = vdwg.mxu0
        %2046 = vmatpush.bf16.msra.mxu0 0
        %2047 = vmatpush.bf16.msra.mxu0 0
        %2048 = vmatpush.bf16.msra.mxu0 0
        %2049 = vmatpush.bf16.msra.mxu0 0
        %2050 = vmatpush.bf16.msra.mxu0 %v1832
        %2051 = vmatpush.bf16.msra.mxu0 %v1818
        %2052 = vmatpush.bf16.msra.mxu0 %v1804
        %2053 = vmatpush.bf16.msra.mxu0 %v1790
        %2054 = vmatmul.bf16.gmra.mxu0 %v640
        %v2055 = vpop.f32.mrf.mxu0
        %v2056 = vadd.f32 0.0, %v2055
        %v2057 = vpop.f32.mrf.mxu0
        %2058 = vdwg.mxu0
        %2059 = vmatpush.bf16.msra.mxu0 0
        %2060 = vmatpush.bf16.msra.mxu0 0
        %2061 = vmatpush.bf16.msra.mxu0 0
        %2062 = vmatpush.bf16.msra.mxu0 0
        %2063 = vmatpush.bf16.msra.mxu0 %v1833
        %2064 = vmatpush.bf16.msra.mxu0 %v1819
        %2065 = vmatpush.bf16.msra.mxu0 %v1805
        %2066 = vmatpush.bf16.msra.mxu0 %v1791
        %2067 = vmatmul.bf16.gmra.mxu0 %v640
        %v2068 = vpop.f32.mrf.mxu0
        %v2069 = vadd.f32 0.0, %v2068
        %v2070 = vpop.f32.mrf.mxu0
        %2071 = vdwg.mxu0
        %v2072 = vld [vmem:[%s244 + $0x1c] sm:$0xff]
        %v2073 = vld [vmem:[%s244 + $0x24] sm:$0x3f]
        %v2076 = vperm.slane %v2072, 0
        %v2077 = vperm.slane %v2072, 1
        %v2078 = vperm.slane %v2072, 2
        %v2079 = vperm.slane %v2072, 3
        %v2080 = vperm.slane %v2072, 4
        %v2081 = vperm.slane %v2072, 5
        %v2082 = vperm.slane %v2072, 6
        %v2083 = vperm.slane %v2072, 7
        %v2084 = vperm.slane %v2073, 0
        %v2085 = vperm.slane %v2073, 1
        %v2086 = vperm.slane %v2073, 2
        %v2087 = vperm.slane %v2073, 3
        %v2088 = vperm.slane %v2073, 4
        %v2089 = vperm.slane %v2073, 5
        %v2104 = vmul.f32 %v1900, %v2076
        %v2105 = vmul.f32 %v1913, %v2077
        %v2106 = vmul.f32 %v1926, %v2078
        %v2107 = vmul.f32 %v1939, %v2079
        %v2108 = vmul.f32 %v1952, %v2080
        %v2109 = vmul.f32 %v1965, %v2081
        %v2110 = vmul.f32 %v1978, %v2082
        %v2111 = vmul.f32 %v1991, %v2083
        %v2112 = vmul.f32 %v2004, %v2084
        %v2113 = vmul.f32 %v2017, %v2085
        %v2114 = vmul.f32 %v2030, %v2086
        %v2115 = vmul.f32 %v2043, %v2087
        %v2116 = vmul.f32 %v2056, %v2088
        %v2117 = vmul.f32 %v2069, %v2089
        %v2118 = vld [vmem:[%s254 + $0x1c] sm:$0xff]
        %v2119 = vld [vmem:[%s254 + $0x24] sm:$0x3f]
        %v2122 = vperm.slane %v2118, 0
        %v2123 = vperm.slane %v2118, 1
        %v2124 = vperm.slane %v2118, 2
        %v2125 = vperm.slane %v2118, 3
        %v2126 = vperm.slane %v2118, 4
        %v2127 = vperm.slane %v2118, 5
        %v2128 = vperm.slane %v2118, 6
        %v2129 = vperm.slane %v2118, 7
        %v2130 = vperm.slane %v2119, 0
        %v2131 = vperm.slane %v2119, 1
        %v2132 = vperm.slane %v2119, 2
        %v2133 = vperm.slane %v2119, 3
        %v2134 = vperm.slane %v2119, 4
        %v2135 = vperm.slane %v2119, 5
        %v2150 = vadd.f32 %v2104, %v2122
        %v2151 = vadd.f32 %v2105, %v2123
        %v2152 = vadd.f32 %v2106, %v2124
        %v2153 = vadd.f32 %v2107, %v2125
        %v2154 = vadd.f32 %v2108, %v2126
        %v2155 = vadd.f32 %v2109, %v2127
        %v2156 = vadd.f32 %v2110, %v2128
        %v2157 = vadd.f32 %v2111, %v2129
        %v2158 = vadd.f32 %v2112, %v2130
        %v2159 = vadd.f32 %v2113, %v2131
        %v2160 = vadd.f32 %v2114, %v2132
        %v2161 = vadd.f32 %v2115, %v2133
        %v2162 = vadd.f32 %v2116, %v2134
        %v2163 = vadd.f32 %v2117, %v2135
        %2164 = vst [vmem:[%s297 + $0xe0] sm:$0xff] %v2150
        %2165 = vst [vmem:[%s297 + $0xe8] sm:$0xff] %v2151
        %2166 = vst [vmem:[%s297 + $0xf0] sm:$0xff] %v2152
        %2167 = vst [vmem:[%s297 + $0xf8] sm:$0xff] %v2153
        %2168 = vst [vmem:[%s297 + $0x100] sm:$0xff] %v2154
        %2169 = vst [vmem:[%s297 + $0x108] sm:$0xff] %v2155
        %2170 = vst [vmem:[%s297 + $0x110] sm:$0xff] %v2156
        %2171 = vst [vmem:[%s297 + $0x118] sm:$0xff] %v2157
        %2172 = vst [vmem:[%s297 + $0x120] sm:$0xff] %v2158
        %2173 = vst [vmem:[%s297 + $0x128] sm:$0xff] %v2159
        %2174 = vst [vmem:[%s297 + $0x130] sm:$0xff] %v2160
        %2175 = vst [vmem:[%s297 + $0x138] sm:$0xff] %v2161
        %2176 = vst [vmem:[%s297 + $0x140] sm:$0xff] %v2162
        %2177 = vst [vmem:[%s297 + $0x148] sm:$0xff] %v2163
        %v2178 = vld [vmem:[%s234 + $0xa8] sm:$0xff]
        %v2179 = vld [vmem:[%s234 + $0xb0] sm:$0xff]
        %v2180 = vld [vmem:[%s234 + $0xb8] sm:$0xff]
        %v2181 = vld [vmem:[%s234 + $0xc0] sm:$0xff]
        %v2182 = vld [vmem:[%s234 + $0xc8] sm:$0xff]
        %v2183 = vld [vmem:[%s234 + $0xd0] sm:$0xff]
        %v2184 = vld [vmem:[%s234 + $0xd8] sm:$0xff]
        %v2185 = vld [vmem:[%s234 + $0x230] sm:$0xff]
        %v2186 = vld [vmem:[%s234 + $0x238] sm:$0xff]
        %v2187 = vld [vmem:[%s234 + $0x240] sm:$0xff]
        %v2188 = vld [vmem:[%s234 + $0x248] sm:$0xff]
        %v2189 = vld [vmem:[%s234 + $0x250] sm:$0xff]
        %v2190 = vld [vmem:[%s234 + $0x258] sm:$0xff]
        %v2191 = vld [vmem:[%s234 + $0x260] sm:$0xff]
        %v2192 = vld [vmem:[%s234 + $0x3b8] sm:$0xff]
        %v2193 = vld [vmem:[%s234 + $0x3c0] sm:$0xff]
        %v2194 = vld [vmem:[%s234 + $0x3c8] sm:$0xff]
        %v2195 = vld [vmem:[%s234 + $0x3d0] sm:$0xff]
        %v2196 = vld [vmem:[%s234 + $0x3d8] sm:$0xff]
        %v2197 = vld [vmem:[%s234 + $0x3e0] sm:$0xff]
        %v2198 = vld [vmem:[%s234 + $0x3e8] sm:$0xff]
        %v2199 = vld [vmem:[%s234 + $0x540] sm:$0xff]
        %v2200 = vld [vmem:[%s234 + $0x548] sm:$0xff]
        %v2201 = vld [vmem:[%s234 + $0x550] sm:$0xff]
        %v2202 = vld [vmem:[%s234 + $0x558] sm:$0xff]
        %v2203 = vld [vmem:[%s234 + $0x560] sm:$0xff]
        %v2204 = vld [vmem:[%s234 + $0x568] sm:$0xff]
        %v2205 = vld [vmem:[%s234 + $0x570] sm:$0xff]
        %v2206 = vld [vmem:[%s234 + $0x6c8] sm:$0xff]
        %v2207 = vld [vmem:[%s234 + $0x6d0] sm:$0xff]
        %v2208 = vld [vmem:[%s234 + $0x6d8] sm:$0xff]
        %v2209 = vld [vmem:[%s234 + $0x6e0] sm:$0xff]
        %v2210 = vld [vmem:[%s234 + $0x6e8] sm:$0xff]
        %v2211 = vld [vmem:[%s234 + $0x6f0] sm:$0xff]
        %v2212 = vld [vmem:[%s234 + $0x6f8] sm:$0xff]
        %v2213 = vld [vmem:[%s234 + $0x850] sm:$0xff]
        %v2214 = vld [vmem:[%s234 + $0x858] sm:$0xff]
        %v2215 = vld [vmem:[%s234 + $0x860] sm:$0xff]
        %v2216 = vld [vmem:[%s234 + $0x868] sm:$0xff]
        %v2217 = vld [vmem:[%s234 + $0x870] sm:$0xff]
        %v2218 = vld [vmem:[%s234 + $0x878] sm:$0xff]
        %v2219 = vld [vmem:[%s234 + $0x880] sm:$0xff]
        %v2220 = vld [vmem:[%s234 + $0x9d8] sm:$0xff]
        %v2221 = vld [vmem:[%s234 + $0x9e0] sm:$0xff]
        %v2222 = vld [vmem:[%s234 + $0x9e8] sm:$0xff]
        %v2223 = vld [vmem:[%s234 + $0x9f0] sm:$0xff]
        %v2224 = vld [vmem:[%s234 + $0x9f8] sm:$0xff]
        %v2225 = vld [vmem:[%s234 + $0xa00] sm:$0xff]
        %v2226 = vld [vmem:[%s234 + $0xa08] sm:$0xff]
        %v2227 = vld [vmem:[%s234 + $0xb60] sm:$0xff]
        %v2228 = vld [vmem:[%s234 + $0xb68] sm:$0xff]
        %v2229 = vld [vmem:[%s234 + $0xb70] sm:$0xff]
        %v2230 = vld [vmem:[%s234 + $0xb78] sm:$0xff]
        %v2231 = vld [vmem:[%s234 + $0xb80] sm:$0xff]
        %v2232 = vld [vmem:[%s234 + $0xb88] sm:$0xff]
        %v2233 = vld [vmem:[%s234 + $0xb90] sm:$0xff]
        %v2290 = vunpack.c.l.b16 %v2178
        %v2291 = vunpack.c.h.b16 %v2178
        %v2292 = vunpack.c.l.b16 %v2179
        %v2293 = vunpack.c.h.b16 %v2179
        %v2294 = vunpack.c.l.b16 %v2180
        %v2295 = vunpack.c.h.b16 %v2180
        %v2296 = vunpack.c.l.b16 %v2181
        %v2297 = vunpack.c.h.b16 %v2181
        %v2298 = vunpack.c.l.b16 %v2182
        %v2299 = vunpack.c.h.b16 %v2182
        %v2300 = vunpack.c.l.b16 %v2183
        %v2301 = vunpack.c.h.b16 %v2183
        %v2302 = vunpack.c.l.b16 %v2184
        %v2303 = vunpack.c.h.b16 %v2184
        %v2304 = vunpack.c.l.b16 %v2185
        %v2305 = vunpack.c.h.b16 %v2185
        %v2306 = vunpack.c.l.b16 %v2186
        %v2307 = vunpack.c.h.b16 %v2186
        %v2308 = vunpack.c.l.b16 %v2187
        %v2309 = vunpack.c.h.b16 %v2187
        %v2310 = vunpack.c.l.b16 %v2188
        %v2311 = vunpack.c.h.b16 %v2188
        %v2312 = vunpack.c.l.b16 %v2189
        %v2313 = vunpack.c.h.b16 %v2189
        %v2314 = vunpack.c.l.b16 %v2190
        %v2315 = vunpack.c.h.b16 %v2190
        %v2316 = vunpack.c.l.b16 %v2191
        %v2317 = vunpack.c.h.b16 %v2191
        %v2318 = vunpack.c.l.b16 %v2192
        %v2319 = vunpack.c.h.b16 %v2192
        %v2320 = vunpack.c.l.b16 %v2193
        %v2321 = vunpack.c.h.b16 %v2193
        %v2322 = vunpack.c.l.b16 %v2194
        %v2323 = vunpack.c.h.b16 %v2194
        %v2324 = vunpack.c.l.b16 %v2195
        %v2325 = vunpack.c.h.b16 %v2195
        %v2326 = vunpack.c.l.b16 %v2196
        %v2327 = vunpack.c.h.b16 %v2196
        %v2328 = vunpack.c.l.b16 %v2197
        %v2329 = vunpack.c.h.b16 %v2197
        %v2330 = vunpack.c.l.b16 %v2198
        %v2331 = vunpack.c.h.b16 %v2198
        %v2332 = vunpack.c.l.b16 %v2199
        %v2333 = vunpack.c.h.b16 %v2199
        %v2334 = vunpack.c.l.b16 %v2200
        %v2335 = vunpack.c.h.b16 %v2200
        %v2336 = vunpack.c.l.b16 %v2201
        %v2337 = vunpack.c.h.b16 %v2201
        %v2338 = vunpack.c.l.b16 %v2202
        %v2339 = vunpack.c.h.b16 %v2202
        %v2340 = vunpack.c.l.b16 %v2203
        %v2341 = vunpack.c.h.b16 %v2203
        %v2342 = vunpack.c.l.b16 %v2204
        %v2343 = vunpack.c.h.b16 %v2204
        %v2344 = vunpack.c.l.b16 %v2205
        %v2345 = vunpack.c.h.b16 %v2205
        %v2346 = vunpack.c.l.b16 %v2206
        %v2347 = vunpack.c.h.b16 %v2206
        %v2348 = vunpack.c.l.b16 %v2207
        %v2349 = vunpack.c.h.b16 %v2207
        %v2350 = vunpack.c.l.b16 %v2208
        %v2351 = vunpack.c.h.b16 %v2208
        %v2352 = vunpack.c.l.b16 %v2209
        %v2353 = vunpack.c.h.b16 %v2209
        %v2354 = vunpack.c.l.b16 %v2210
        %v2355 = vunpack.c.h.b16 %v2210
        %v2356 = vunpack.c.l.b16 %v2211
        %v2357 = vunpack.c.h.b16 %v2211
        %v2358 = vunpack.c.l.b16 %v2212
        %v2359 = vunpack.c.h.b16 %v2212
        %v2360 = vunpack.c.l.b16 %v2213
        %v2361 = vunpack.c.h.b16 %v2213
        %v2362 = vunpack.c.l.b16 %v2214
        %v2363 = vunpack.c.h.b16 %v2214
        %v2364 = vunpack.c.l.b16 %v2215
        %v2365 = vunpack.c.h.b16 %v2215
        %v2366 = vunpack.c.l.b16 %v2216
        %v2367 = vunpack.c.h.b16 %v2216
        %v2368 = vunpack.c.l.b16 %v2217
        %v2369 = vunpack.c.h.b16 %v2217
        %v2370 = vunpack.c.l.b16 %v2218
        %v2371 = vunpack.c.h.b16 %v2218
        %v2372 = vunpack.c.l.b16 %v2219
        %v2373 = vunpack.c.h.b16 %v2219
        %v2374 = vunpack.c.l.b16 %v2220
        %v2375 = vunpack.c.h.b16 %v2220
        %v2376 = vunpack.c.l.b16 %v2221
        %v2377 = vunpack.c.h.b16 %v2221
        %v2378 = vunpack.c.l.b16 %v2222
        %v2379 = vunpack.c.h.b16 %v2222
        %v2380 = vunpack.c.l.b16 %v2223
        %v2381 = vunpack.c.h.b16 %v2223
        %v2382 = vunpack.c.l.b16 %v2224
        %v2383 = vunpack.c.h.b16 %v2224
        %v2384 = vunpack.c.l.b16 %v2225
        %v2385 = vunpack.c.h.b16 %v2225
        %v2386 = vunpack.c.l.b16 %v2226
        %v2387 = vunpack.c.h.b16 %v2226
        %v2388 = vunpack.c.l.b16 %v2227
        %v2389 = vunpack.c.h.b16 %v2227
        %v2390 = vunpack.c.l.b16 %v2228
        %v2391 = vunpack.c.h.b16 %v2228
        %v2392 = vunpack.c.l.b16 %v2229
        %v2393 = vunpack.c.h.b16 %v2229
        %v2394 = vunpack.c.l.b16 %v2230
        %v2395 = vunpack.c.h.b16 %v2230
        %v2396 = vunpack.c.l.b16 %v2231
        %v2397 = vunpack.c.h.b16 %v2231
        %v2398 = vunpack.c.l.b16 %v2232
        %v2399 = vunpack.c.h.b16 %v2232
        %v2400 = vunpack.c.l.b16 %v2233
        %v2401 = vunpack.c.h.b16 %v2233
        %v2402 = vpack.c.b16 %v2304, %v2290
        %v2403 = vpack.c.b16 %v2305, %v2291
        %v2404 = vpack.c.b16 %v2306, %v2292
        %v2405 = vpack.c.b16 %v2307, %v2293
        %v2406 = vpack.c.b16 %v2308, %v2294
        %v2407 = vpack.c.b16 %v2309, %v2295
        %v2408 = vpack.c.b16 %v2310, %v2296
        %v2409 = vpack.c.b16 %v2311, %v2297
        %v2410 = vpack.c.b16 %v2312, %v2298
        %v2411 = vpack.c.b16 %v2313, %v2299
        %v2412 = vpack.c.b16 %v2314, %v2300
        %v2413 = vpack.c.b16 %v2315, %v2301
        %v2414 = vpack.c.b16 %v2316, %v2302
        %v2415 = vpack.c.b16 %v2317, %v2303
        %v2416 = vpack.c.b16 %v2332, %v2318
        %v2417 = vpack.c.b16 %v2333, %v2319
        %v2418 = vpack.c.b16 %v2334, %v2320
        %v2419 = vpack.c.b16 %v2335, %v2321
        %v2420 = vpack.c.b16 %v2336, %v2322
        %v2421 = vpack.c.b16 %v2337, %v2323
        %v2422 = vpack.c.b16 %v2338, %v2324
        %v2423 = vpack.c.b16 %v2339, %v2325
        %v2424 = vpack.c.b16 %v2340, %v2326
        %v2425 = vpack.c.b16 %v2341, %v2327
        %v2426 = vpack.c.b16 %v2342, %v2328
        %v2427 = vpack.c.b16 %v2343, %v2329
        %v2428 = vpack.c.b16 %v2344, %v2330
        %v2429 = vpack.c.b16 %v2345, %v2331
        %v2430 = vpack.c.b16 %v2360, %v2346
        %v2431 = vpack.c.b16 %v2361, %v2347
        %v2432 = vpack.c.b16 %v2362, %v2348
        %v2433 = vpack.c.b16 %v2363, %v2349
        %v2434 = vpack.c.b16 %v2364, %v2350
        %v2435 = vpack.c.b16 %v2365, %v2351
        %v2436 = vpack.c.b16 %v2366, %v2352
        %v2437 = vpack.c.b16 %v2367, %v2353
        %v2438 = vpack.c.b16 %v2368, %v2354
        %v2439 = vpack.c.b16 %v2369, %v2355
        %v2440 = vpack.c.b16 %v2370, %v2356
        %v2441 = vpack.c.b16 %v2371, %v2357
        %v2442 = vpack.c.b16 %v2372, %v2358
        %v2443 = vpack.c.b16 %v2373, %v2359
        %v2444 = vpack.c.b16 %v2388, %v2374
        %v2445 = vpack.c.b16 %v2389, %v2375
        %v2446 = vpack.c.b16 %v2390, %v2376
        %v2447 = vpack.c.b16 %v2391, %v2377
        %v2448 = vpack.c.b16 %v2392, %v2378
        %v2449 = vpack.c.b16 %v2393, %v2379
        %v2450 = vpack.c.b16 %v2394, %v2380
        %v2451 = vpack.c.b16 %v2395, %v2381
        %v2452 = vpack.c.b16 %v2396, %v2382
        %v2453 = vpack.c.b16 %v2397, %v2383
        %v2454 = vpack.c.b16 %v2398, %v2384
        %v2455 = vpack.c.b16 %v2399, %v2385
        %v2456 = vpack.c.b16 %v2400, %v2386
        %v2457 = vpack.c.b16 %v2401, %v2387
        %2514 = vmatpush.bf16.msra.mxu0 0
        %2515 = vmatpush.bf16.msra.mxu0 0
        %2516 = vmatpush.bf16.msra.mxu0 0
        %2517 = vmatpush.bf16.msra.mxu0 0
        %2518 = vmatpush.bf16.msra.mxu0 %v2444
        %2519 = vmatpush.bf16.msra.mxu0 %v2430
        %2520 = vmatpush.bf16.msra.mxu0 %v2416
        %2521 = vmatpush.bf16.msra.mxu0 %v2402
        %2522 = vmatmul.bf16.gmra.mxu0 %v640
        %v2523 = vpop.f32.mrf.mxu0
        %v2524 = vadd.f32 0.0, %v2523
        %v2525 = vpop.f32.mrf.mxu0
        %2526 = vdwg.mxu0
        %2527 = vmatpush.bf16.msra.mxu0 0
        %2528 = vmatpush.bf16.msra.mxu0 0
        %2529 = vmatpush.bf16.msra.mxu0 0
        %2530 = vmatpush.bf16.msra.mxu0 0
        %2531 = vmatpush.bf16.msra.mxu0 %v2445
        %2532 = vmatpush.bf16.msra.mxu0 %v2431
        %2533 = vmatpush.bf16.msra.mxu0 %v2417
        %2534 = vmatpush.bf16.msra.mxu0 %v2403
        %2535 = vmatmul.bf16.gmra.mxu0 %v640
        %v2536 = vpop.f32.mrf.mxu0
        %v2537 = vadd.f32 0.0, %v2536
        %v2538 = vpop.f32.mrf.mxu0
        %2539 = vdwg.mxu0
        %2540 = vmatpush.bf16.msra.mxu0 0
        %2541 = vmatpush.bf16.msra.mxu0 0
        %2542 = vmatpush.bf16.msra.mxu0 0
        %2543 = vmatpush.bf16.msra.mxu0 0
        %2544 = vmatpush.bf16.msra.mxu0 %v2446
        %2545 = vmatpush.bf16.msra.mxu0 %v2432
        %2546 = vmatpush.bf16.msra.mxu0 %v2418
        %2547 = vmatpush.bf16.msra.mxu0 %v2404
        %2548 = vmatmul.bf16.gmra.mxu0 %v640
        %v2549 = vpop.f32.mrf.mxu0
        %v2550 = vadd.f32 0.0, %v2549
        %v2551 = vpop.f32.mrf.mxu0
        %2552 = vdwg.mxu0
        %2553 = vmatpush.bf16.msra.mxu0 0
        %2554 = vmatpush.bf16.msra.mxu0 0
        %2555 = vmatpush.bf16.msra.mxu0 0
        %2556 = vmatpush.bf16.msra.mxu0 0
        %2557 = vmatpush.bf16.msra.mxu0 %v2447
        %2558 = vmatpush.bf16.msra.mxu0 %v2433
        %2559 = vmatpush.bf16.msra.mxu0 %v2419
        %2560 = vmatpush.bf16.msra.mxu0 %v2405
        %2561 = vmatmul.bf16.gmra.mxu0 %v640
        %v2562 = vpop.f32.mrf.mxu0
        %v2563 = vadd.f32 0.0, %v2562
        %v2564 = vpop.f32.mrf.mxu0
        %2565 = vdwg.mxu0
        %2566 = vmatpush.bf16.msra.mxu0 0
        %2567 = vmatpush.bf16.msra.mxu0 0
        %2568 = vmatpush.bf16.msra.mxu0 0
        %2569 = vmatpush.bf16.msra.mxu0 0
        %2570 = vmatpush.bf16.msra.mxu0 %v2448
        %2571 = vmatpush.bf16.msra.mxu0 %v2434
        %2572 = vmatpush.bf16.msra.mxu0 %v2420
        %2573 = vmatpush.bf16.msra.mxu0 %v2406
        %2574 = vmatmul.bf16.gmra.mxu0 %v640
        %v2575 = vpop.f32.mrf.mxu0
        %v2576 = vadd.f32 0.0, %v2575
        %v2577 = vpop.f32.mrf.mxu0
        %2578 = vdwg.mxu0
        %2579 = vmatpush.bf16.msra.mxu0 0
        %2580 = vmatpush.bf16.msra.mxu0 0
        %2581 = vmatpush.bf16.msra.mxu0 0
        %2582 = vmatpush.bf16.msra.mxu0 0
        %2583 = vmatpush.bf16.msra.mxu0 %v2449
        %2584 = vmatpush.bf16.msra.mxu0 %v2435
        %2585 = vmatpush.bf16.msra.mxu0 %v2421
        %2586 = vmatpush.bf16.msra.mxu0 %v2407
        %2587 = vmatmul.bf16.gmra.mxu0 %v640
        %v2588 = vpop.f32.mrf.mxu0
        %v2589 = vadd.f32 0.0, %v2588
        %v2590 = vpop.f32.mrf.mxu0
        %2591 = vdwg.mxu0
        %2592 = vmatpush.bf16.msra.mxu0 0
        %2593 = vmatpush.bf16.msra.mxu0 0
        %2594 = vmatpush.bf16.msra.mxu0 0
        %2595 = vmatpush.bf16.msra.mxu0 0
        %2596 = vmatpush.bf16.msra.mxu0 %v2450
        %2597 = vmatpush.bf16.msra.mxu0 %v2436
        %2598 = vmatpush.bf16.msra.mxu0 %v2422
        %2599 = vmatpush.bf16.msra.mxu0 %v2408
        %2600 = vmatmul.bf16.gmra.mxu0 %v640
        %v2601 = vpop.f32.mrf.mxu0
        %v2602 = vadd.f32 0.0, %v2601
        %v2603 = vpop.f32.mrf.mxu0
        %2604 = vdwg.mxu0
        %2605 = vmatpush.bf16.msra.mxu0 0
        %2606 = vmatpush.bf16.msra.mxu0 0
        %2607 = vmatpush.bf16.msra.mxu0 0
        %2608 = vmatpush.bf16.msra.mxu0 0
        %2609 = vmatpush.bf16.msra.mxu0 %v2451
        %2610 = vmatpush.bf16.msra.mxu0 %v2437
        %2611 = vmatpush.bf16.msra.mxu0 %v2423
        %2612 = vmatpush.bf16.msra.mxu0 %v2409
        %2613 = vmatmul.bf16.gmra.mxu0 %v640
        %v2614 = vpop.f32.mrf.mxu0
        %v2615 = vadd.f32 0.0, %v2614
        %v2616 = vpop.f32.mrf.mxu0
        %2617 = vdwg.mxu0
        %2618 = vmatpush.bf16.msra.mxu0 0
        %2619 = vmatpush.bf16.msra.mxu0 0
        %2620 = vmatpush.bf16.msra.mxu0 0
        %2621 = vmatpush.bf16.msra.mxu0 0
        %2622 = vmatpush.bf16.msra.mxu0 %v2452
        %2623 = vmatpush.bf16.msra.mxu0 %v2438
        %2624 = vmatpush.bf16.msra.mxu0 %v2424
        %2625 = vmatpush.bf16.msra.mxu0 %v2410
        %2626 = vmatmul.bf16.gmra.mxu0 %v640
        %v2627 = vpop.f32.mrf.mxu0
        %v2628 = vadd.f32 0.0, %v2627
        %v2629 = vpop.f32.mrf.mxu0
        %2630 = vdwg.mxu0
        %2631 = vmatpush.bf16.msra.mxu0 0
        %2632 = vmatpush.bf16.msra.mxu0 0
        %2633 = vmatpush.bf16.msra.mxu0 0
        %2634 = vmatpush.bf16.msra.mxu0 0
        %2635 = vmatpush.bf16.msra.mxu0 %v2453
        %2636 = vmatpush.bf16.msra.mxu0 %v2439
        %2637 = vmatpush.bf16.msra.mxu0 %v2425
        %2638 = vmatpush.bf16.msra.mxu0 %v2411
        %2639 = vmatmul.bf16.gmra.mxu0 %v640
        %v2640 = vpop.f32.mrf.mxu0
        %v2641 = vadd.f32 0.0, %v2640
        %v2642 = vpop.f32.mrf.mxu0
        %2643 = vdwg.mxu0
        %2644 = vmatpush.bf16.msra.mxu0 0
        %2645 = vmatpush.bf16.msra.mxu0 0
        %2646 = vmatpush.bf16.msra.mxu0 0
        %2647 = vmatpush.bf16.msra.mxu0 0
        %2648 = vmatpush.bf16.msra.mxu0 %v2454
        %2649 = vmatpush.bf16.msra.mxu0 %v2440
        %2650 = vmatpush.bf16.msra.mxu0 %v2426
        %2651 = vmatpush.bf16.msra.mxu0 %v2412
        %2652 = vmatmul.bf16.gmra.mxu0 %v640
        %v2653 = vpop.f32.mrf.mxu0
        %v2654 = vadd.f32 0.0, %v2653
        %v2655 = vpop.f32.mrf.mxu0
        %2656 = vdwg.mxu0
        %2657 = vmatpush.bf16.msra.mxu0 0
        %2658 = vmatpush.bf16.msra.mxu0 0
        %2659 = vmatpush.bf16.msra.mxu0 0
        %2660 = vmatpush.bf16.msra.mxu0 0
        %2661 = vmatpush.bf16.msra.mxu0 %v2455
        %2662 = vmatpush.bf16.msra.mxu0 %v2441
        %2663 = vmatpush.bf16.msra.mxu0 %v2427
        %2664 = vmatpush.bf16.msra.mxu0 %v2413
        %2665 = vmatmul.bf16.gmra.mxu0 %v640
        %v2666 = vpop.f32.mrf.mxu0
        %v2667 = vadd.f32 0.0, %v2666
        %v2668 = vpop.f32.mrf.mxu0
        %2669 = vdwg.mxu0
        %2670 = vmatpush.bf16.msra.mxu0 0
        %2671 = vmatpush.bf16.msra.mxu0 0
        %2672 = vmatpush.bf16.msra.mxu0 0
        %2673 = vmatpush.bf16.msra.mxu0 0
        %2674 = vmatpush.bf16.msra.mxu0 %v2456
        %2675 = vmatpush.bf16.msra.mxu0 %v2442
        %2676 = vmatpush.bf16.msra.mxu0 %v2428
        %2677 = vmatpush.bf16.msra.mxu0 %v2414
        %2678 = vmatmul.bf16.gmra.mxu0 %v640
        %v2679 = vpop.f32.mrf.mxu0
        %v2680 = vadd.f32 0.0, %v2679
        %v2681 = vpop.f32.mrf.mxu0
        %2682 = vdwg.mxu0
        %2683 = vmatpush.bf16.msra.mxu0 0
        %2684 = vmatpush.bf16.msra.mxu0 0
        %2685 = vmatpush.bf16.msra.mxu0 0
        %2686 = vmatpush.bf16.msra.mxu0 0
        %2687 = vmatpush.bf16.msra.mxu0 %v2457
        %2688 = vmatpush.bf16.msra.mxu0 %v2443
        %2689 = vmatpush.bf16.msra.mxu0 %v2429
        %2690 = vmatpush.bf16.msra.mxu0 %v2415
        %2691 = vmatmul.bf16.gmra.mxu0 %v640
        %v2692 = vpop.f32.mrf.mxu0
        %v2693 = vadd.f32 0.0, %v2692
        %v2694 = vpop.f32.mrf.mxu0
        %2695 = vdwg.mxu0
        %v2696 = vld [vmem:[%s244 + $0x2a] sm:$0xff]
        %v2697 = vld [vmem:[%s244 + $0x32] sm:$0x3f]
        %v2700 = vperm.slane %v2696, 0
        %v2701 = vperm.slane %v2696, 1
        %v2702 = vperm.slane %v2696, 2
        %v2703 = vperm.slane %v2696, 3
        %v2704 = vperm.slane %v2696, 4
        %v2705 = vperm.slane %v2696, 5
        %v2706 = vperm.slane %v2696, 6
        %v2707 = vperm.slane %v2696, 7
        %v2708 = vperm.slane %v2697, 0
        %v2709 = vperm.slane %v2697, 1
        %v2710 = vperm.slane %v2697, 2
        %v2711 = vperm.slane %v2697, 3
        %v2712 = vperm.slane %v2697, 4
        %v2713 = vperm.slane %v2697, 5
        %v2728 = vmul.f32 %v2524, %v2700
        %v2729 = vmul.f32 %v2537, %v2701
        %v2730 = vmul.f32 %v2550, %v2702
        %v2731 = vmul.f32 %v2563, %v2703
        %v2732 = vmul.f32 %v2576, %v2704
        %v2733 = vmul.f32 %v2589, %v2705
        %v2734 = vmul.f32 %v2602, %v2706
        %v2735 = vmul.f32 %v2615, %v2707
        %v2736 = vmul.f32 %v2628, %v2708
        %v2737 = vmul.f32 %v2641, %v2709
        %v2738 = vmul.f32 %v2654, %v2710
        %v2739 = vmul.f32 %v2667, %v2711
        %v2740 = vmul.f32 %v2680, %v2712
        %v2741 = vmul.f32 %v2693, %v2713
        %v2742 = vld [vmem:[%s254 + $0x2a] sm:$0xff]
        %v2743 = vld [vmem:[%s254 + $0x32] sm:$0x3f]
        %v2746 = vperm.slane %v2742, 0
        %v2747 = vperm.slane %v2742, 1
        %v2748 = vperm.slane %v2742, 2
        %v2749 = vperm.slane %v2742, 3
        %v2750 = vperm.slane %v2742, 4
        %v2751 = vperm.slane %v2742, 5
        %v2752 = vperm.slane %v2742, 6
        %v2753 = vperm.slane %v2742, 7
        %v2754 = vperm.slane %v2743, 0
        %v2755 = vperm.slane %v2743, 1
        %v2756 = vperm.slane %v2743, 2
        %v2757 = vperm.slane %v2743, 3
        %v2758 = vperm.slane %v2743, 4
        %v2759 = vperm.slane %v2743, 5
        %v2774 = vadd.f32 %v2728, %v2746
        %v2775 = vadd.f32 %v2729, %v2747
        %v2776 = vadd.f32 %v2730, %v2748
        %v2777 = vadd.f32 %v2731, %v2749
        %v2778 = vadd.f32 %v2732, %v2750
        %v2779 = vadd.f32 %v2733, %v2751
        %v2780 = vadd.f32 %v2734, %v2752
        %v2781 = vadd.f32 %v2735, %v2753
        %v2782 = vadd.f32 %v2736, %v2754
        %v2783 = vadd.f32 %v2737, %v2755
        %v2784 = vadd.f32 %v2738, %v2756
        %v2785 = vadd.f32 %v2739, %v2757
        %v2786 = vadd.f32 %v2740, %v2758
        %v2787 = vadd.f32 %v2741, %v2759
        %2788 = vst [vmem:[%s297 + $0x150] sm:$0xff] %v2774
        %2789 = vst [vmem:[%s297 + $0x158] sm:$0xff] %v2775
        %2790 = vst [vmem:[%s297 + $0x160] sm:$0xff] %v2776
        %2791 = vst [vmem:[%s297 + $0x168] sm:$0xff] %v2777
        %2792 = vst [vmem:[%s297 + $0x170] sm:$0xff] %v2778
        %2793 = vst [vmem:[%s297 + $0x178] sm:$0xff] %v2779
        %2794 = vst [vmem:[%s297 + $0x180] sm:$0xff] %v2780
        %2795 = vst [vmem:[%s297 + $0x188] sm:$0xff] %v2781
        %2796 = vst [vmem:[%s297 + $0x190] sm:$0xff] %v2782
        %2797 = vst [vmem:[%s297 + $0x198] sm:$0xff] %v2783
        %2798 = vst [vmem:[%s297 + $0x1a0] sm:$0xff] %v2784
        %2799 = vst [vmem:[%s297 + $0x1a8] sm:$0xff] %v2785
        %2800 = vst [vmem:[%s297 + $0x1b0] sm:$0xff] %v2786
        %2801 = vst [vmem:[%s297 + $0x1b8] sm:$0xff] %v2787
        %v2802 = vld [vmem:[%s234 + $0xe0] sm:$0xff]
        %v2803 = vld [vmem:[%s234 + $0xe8] sm:$0xff]
        %v2804 = vld [vmem:[%s234 + $0xf0] sm:$0xff]
        %v2805 = vld [vmem:[%s234 + $0xf8] sm:$0xff]
        %v2806 = vld [vmem:[%s234 + $0x100] sm:$0xff]
        %v2807 = vld [vmem:[%s234 + $0x108] sm:$0xff]
        %v2808 = vld [vmem:[%s234 + $0x110] sm:$0xff]
        %v2809 = vld [vmem:[%s234 + $0x268] sm:$0xff]
        %v2810 = vld [vmem:[%s234 + $0x270] sm:$0xff]
        %v2811 = vld [vmem:[%s234 + $0x278] sm:$0xff]
        %v2812 = vld [vmem:[%s234 + $0x280] sm:$0xff]
        %v2813 = vld [vmem:[%s234 + $0x288] sm:$0xff]
        %v2814 = vld [vmem:[%s234 + $0x290] sm:$0xff]
        %v2815 = vld [vmem:[%s234 + $0x298] sm:$0xff]
        %v2816 = vld [vmem:[%s234 + $0x3f0] sm:$0xff]
        %v2817 = vld [vmem:[%s234 + $0x3f8] sm:$0xff]
        %v2818 = vld [vmem:[%s234 + $0x400] sm:$0xff]
        %v2819 = vld [vmem:[%s234 + $0x408] sm:$0xff]
        %v2820 = vld [vmem:[%s234 + $0x410] sm:$0xff]
        %v2821 = vld [vmem:[%s234 + $0x418] sm:$0xff]
        %v2822 = vld [vmem:[%s234 + $0x420] sm:$0xff]
        %v2823 = vld [vmem:[%s234 + $0x578] sm:$0xff]
        %v2824 = vld [vmem:[%s234 + $0x580] sm:$0xff]
        %v2825 = vld [vmem:[%s234 + $0x588] sm:$0xff]
        %v2826 = vld [vmem:[%s234 + $0x590] sm:$0xff]
        %v2827 = vld [vmem:[%s234 + $0x598] sm:$0xff]
        %v2828 = vld [vmem:[%s234 + $0x5a0] sm:$0xff]
        %v2829 = vld [vmem:[%s234 + $0x5a8] sm:$0xff]
        %v2830 = vld [vmem:[%s234 + $0x700] sm:$0xff]
        %v2831 = vld [vmem:[%s234 + $0x708] sm:$0xff]
        %v2832 = vld [vmem:[%s234 + $0x710] sm:$0xff]
        %v2833 = vld [vmem:[%s234 + $0x718] sm:$0xff]
        %v2834 = vld [vmem:[%s234 + $0x720] sm:$0xff]
        %v2835 = vld [vmem:[%s234 + $0x728] sm:$0xff]
        %v2836 = vld [vmem:[%s234 + $0x730] sm:$0xff]
        %v2837 = vld [vmem:[%s234 + $0x888] sm:$0xff]
        %v2838 = vld [vmem:[%s234 + $0x890] sm:$0xff]
        %v2839 = vld [vmem:[%s234 + $0x898] sm:$0xff]
        %v2840 = vld [vmem:[%s234 + $0x8a0] sm:$0xff]
        %v2841 = vld [vmem:[%s234 + $0x8a8] sm:$0xff]
        %v2842 = vld [vmem:[%s234 + $0x8b0] sm:$0xff]
        %v2843 = vld [vmem:[%s234 + $0x8b8] sm:$0xff]
        %v2844 = vld [vmem:[%s234 + $0xa10] sm:$0xff]
        %v2845 = vld [vmem:[%s234 + $0xa18] sm:$0xff]
        %v2846 = vld [vmem:[%s234 + $0xa20] sm:$0xff]
        %v2847 = vld [vmem:[%s234 + $0xa28] sm:$0xff]
        %v2848 = vld [vmem:[%s234 + $0xa30] sm:$0xff]
        %v2849 = vld [vmem:[%s234 + $0xa38] sm:$0xff]
        %v2850 = vld [vmem:[%s234 + $0xa40] sm:$0xff]
        %v2851 = vld [vmem:[%s234 + $0xb98] sm:$0xff]
        %v2852 = vld [vmem:[%s234 + $0xba0] sm:$0xff]
        %v2853 = vld [vmem:[%s234 + $0xba8] sm:$0xff]
        %v2854 = vld [vmem:[%s234 + $0xbb0] sm:$0xff]
        %v2855 = vld [vmem:[%s234 + $0xbb8] sm:$0xff]
        %v2856 = vld [vmem:[%s234 + $0xbc0] sm:$0xff]
        %v2857 = vld [vmem:[%s234 + $0xbc8] sm:$0xff]
        %v2914 = vunpack.c.l.b16 %v2802
        %v2915 = vunpack.c.h.b16 %v2802
        %v2916 = vunpack.c.l.b16 %v2803
        %v2917 = vunpack.c.h.b16 %v2803
        %v2918 = vunpack.c.l.b16 %v2804
        %v2919 = vunpack.c.h.b16 %v2804
        %v2920 = vunpack.c.l.b16 %v2805
        %v2921 = vunpack.c.h.b16 %v2805
        %v2922 = vunpack.c.l.b16 %v2806
        %v2923 = vunpack.c.h.b16 %v2806
        %v2924 = vunpack.c.l.b16 %v2807
        %v2925 = vunpack.c.h.b16 %v2807
        %v2926 = vunpack.c.l.b16 %v2808
        %v2927 = vunpack.c.h.b16 %v2808
        %v2928 = vunpack.c.l.b16 %v2809
        %v2929 = vunpack.c.h.b16 %v2809
        %v2930 = vunpack.c.l.b16 %v2810
        %v2931 = vunpack.c.h.b16 %v2810
        %v2932 = vunpack.c.l.b16 %v2811
        %v2933 = vunpack.c.h.b16 %v2811
        %v2934 = vunpack.c.l.b16 %v2812
        %v2935 = vunpack.c.h.b16 %v2812
        %v2936 = vunpack.c.l.b16 %v2813
        %v2937 = vunpack.c.h.b16 %v2813
        %v2938 = vunpack.c.l.b16 %v2814
        %v2939 = vunpack.c.h.b16 %v2814
        %v2940 = vunpack.c.l.b16 %v2815
        %v2941 = vunpack.c.h.b16 %v2815
        %v2942 = vunpack.c.l.b16 %v2816
        %v2943 = vunpack.c.h.b16 %v2816
        %v2944 = vunpack.c.l.b16 %v2817
        %v2945 = vunpack.c.h.b16 %v2817
        %v2946 = vunpack.c.l.b16 %v2818
        %v2947 = vunpack.c.h.b16 %v2818
        %v2948 = vunpack.c.l.b16 %v2819
        %v2949 = vunpack.c.h.b16 %v2819
        %v2950 = vunpack.c.l.b16 %v2820
        %v2951 = vunpack.c.h.b16 %v2820
        %v2952 = vunpack.c.l.b16 %v2821
        %v2953 = vunpack.c.h.b16 %v2821
        %v2954 = vunpack.c.l.b16 %v2822
        %v2955 = vunpack.c.h.b16 %v2822
        %v2956 = vunpack.c.l.b16 %v2823
        %v2957 = vunpack.c.h.b16 %v2823
        %v2958 = vunpack.c.l.b16 %v2824
        %v2959 = vunpack.c.h.b16 %v2824
        %v2960 = vunpack.c.l.b16 %v2825
        %v2961 = vunpack.c.h.b16 %v2825
        %v2962 = vunpack.c.l.b16 %v2826
        %v2963 = vunpack.c.h.b16 %v2826
        %v2964 = vunpack.c.l.b16 %v2827
        %v2965 = vunpack.c.h.b16 %v2827
        %v2966 = vunpack.c.l.b16 %v2828
        %v2967 = vunpack.c.h.b16 %v2828
        %v2968 = vunpack.c.l.b16 %v2829
        %v2969 = vunpack.c.h.b16 %v2829
        %v2970 = vunpack.c.l.b16 %v2830
        %v2971 = vunpack.c.h.b16 %v2830
        %v2972 = vunpack.c.l.b16 %v2831
        %v2973 = vunpack.c.h.b16 %v2831
        %v2974 = vunpack.c.l.b16 %v2832
        %v2975 = vunpack.c.h.b16 %v2832
        %v2976 = vunpack.c.l.b16 %v2833
        %v2977 = vunpack.c.h.b16 %v2833
        %v2978 = vunpack.c.l.b16 %v2834
        %v2979 = vunpack.c.h.b16 %v2834
        %v2980 = vunpack.c.l.b16 %v2835
        %v2981 = vunpack.c.h.b16 %v2835
        %v2982 = vunpack.c.l.b16 %v2836
        %v2983 = vunpack.c.h.b16 %v2836
        %v2984 = vunpack.c.l.b16 %v2837
        %v2985 = vunpack.c.h.b16 %v2837
        %v2986 = vunpack.c.l.b16 %v2838
        %v2987 = vunpack.c.h.b16 %v2838
        %v2988 = vunpack.c.l.b16 %v2839
        %v2989 = vunpack.c.h.b16 %v2839
        %v2990 = vunpack.c.l.b16 %v2840
        %v2991 = vunpack.c.h.b16 %v2840
        %v2992 = vunpack.c.l.b16 %v2841
        %v2993 = vunpack.c.h.b16 %v2841
        %v2994 = vunpack.c.l.b16 %v2842
        %v2995 = vunpack.c.h.b16 %v2842
        %v2996 = vunpack.c.l.b16 %v2843
        %v2997 = vunpack.c.h.b16 %v2843
        %v2998 = vunpack.c.l.b16 %v2844
        %v2999 = vunpack.c.h.b16 %v2844
        %v3000 = vunpack.c.l.b16 %v2845
        %v3001 = vunpack.c.h.b16 %v2845
        %v3002 = vunpack.c.l.b16 %v2846
        %v3003 = vunpack.c.h.b16 %v2846
        %v3004 = vunpack.c.l.b16 %v2847
        %v3005 = vunpack.c.h.b16 %v2847
        %v3006 = vunpack.c.l.b16 %v2848
        %v3007 = vunpack.c.h.b16 %v2848
        %v3008 = vunpack.c.l.b16 %v2849
        %v3009 = vunpack.c.h.b16 %v2849
        %v3010 = vunpack.c.l.b16 %v2850
        %v3011 = vunpack.c.h.b16 %v2850
        %v3012 = vunpack.c.l.b16 %v2851
        %v3013 = vunpack.c.h.b16 %v2851
        %v3014 = vunpack.c.l.b16 %v2852
        %v3015 = vunpack.c.h.b16 %v2852
        %v3016 = vunpack.c.l.b16 %v2853
        %v3017 = vunpack.c.h.b16 %v2853
        %v3018 = vunpack.c.l.b16 %v2854
        %v3019 = vunpack.c.h.b16 %v2854
        %v3020 = vunpack.c.l.b16 %v2855
        %v3021 = vunpack.c.h.b16 %v2855
        %v3022 = vunpack.c.l.b16 %v2856
        %v3023 = vunpack.c.h.b16 %v2856
        %v3024 = vunpack.c.l.b16 %v2857
        %v3025 = vunpack.c.h.b16 %v2857
        %v3026 = vpack.c.b16 %v2928, %v2914
        %v3027 = vpack.c.b16 %v2929, %v2915
        %v3028 = vpack.c.b16 %v2930, %v2916
        %v3029 = vpack.c.b16 %v2931, %v2917
        %v3030 = vpack.c.b16 %v2932, %v2918
        %v3031 = vpack.c.b16 %v2933, %v2919
        %v3032 = vpack.c.b16 %v2934, %v2920
        %v3033 = vpack.c.b16 %v2935, %v2921
        %v3034 = vpack.c.b16 %v2936, %v2922
        %v3035 = vpack.c.b16 %v2937, %v2923
        %v3036 = vpack.c.b16 %v2938, %v2924
        %v3037 = vpack.c.b16 %v2939, %v2925
        %v3038 = vpack.c.b16 %v2940, %v2926
        %v3039 = vpack.c.b16 %v2941, %v2927
        %v3040 = vpack.c.b16 %v2956, %v2942
        %v3041 = vpack.c.b16 %v2957, %v2943
        %v3042 = vpack.c.b16 %v2958, %v2944
        %v3043 = vpack.c.b16 %v2959, %v2945
        %v3044 = vpack.c.b16 %v2960, %v2946
        %v3045 = vpack.c.b16 %v2961, %v2947
        %v3046 = vpack.c.b16 %v2962, %v2948
        %v3047 = vpack.c.b16 %v2963, %v2949
        %v3048 = vpack.c.b16 %v2964, %v2950
        %v3049 = vpack.c.b16 %v2965, %v2951
        %v3050 = vpack.c.b16 %v2966, %v2952
        %v3051 = vpack.c.b16 %v2967, %v2953
        %v3052 = vpack.c.b16 %v2968, %v2954
        %v3053 = vpack.c.b16 %v2969, %v2955
        %v3054 = vpack.c.b16 %v2984, %v2970
        %v3055 = vpack.c.b16 %v2985, %v2971
        %v3056 = vpack.c.b16 %v2986, %v2972
        %v3057 = vpack.c.b16 %v2987, %v2973
        %v3058 = vpack.c.b16 %v2988, %v2974
        %v3059 = vpack.c.b16 %v2989, %v2975
        %v3060 = vpack.c.b16 %v2990, %v2976
        %v3061 = vpack.c.b16 %v2991, %v2977
        %v3062 = vpack.c.b16 %v2992, %v2978
        %v3063 = vpack.c.b16 %v2993, %v2979
        %v3064 = vpack.c.b16 %v2994, %v2980
        %v3065 = vpack.c.b16 %v2995, %v2981
        %v3066 = vpack.c.b16 %v2996, %v2982
        %v3067 = vpack.c.b16 %v2997, %v2983
        %v3068 = vpack.c.b16 %v3012, %v2998
        %v3069 = vpack.c.b16 %v3013, %v2999
        %v3070 = vpack.c.b16 %v3014, %v3000
        %v3071 = vpack.c.b16 %v3015, %v3001
        %v3072 = vpack.c.b16 %v3016, %v3002
        %v3073 = vpack.c.b16 %v3017, %v3003
        %v3074 = vpack.c.b16 %v3018, %v3004
        %v3075 = vpack.c.b16 %v3019, %v3005
        %v3076 = vpack.c.b16 %v3020, %v3006
        %v3077 = vpack.c.b16 %v3021, %v3007
        %v3078 = vpack.c.b16 %v3022, %v3008
        %v3079 = vpack.c.b16 %v3023, %v3009
        %v3080 = vpack.c.b16 %v3024, %v3010
        %v3081 = vpack.c.b16 %v3025, %v3011
        %3138 = vmatpush.bf16.msra.mxu0 0
        %3139 = vmatpush.bf16.msra.mxu0 0
        %3140 = vmatpush.bf16.msra.mxu0 0
        %3141 = vmatpush.bf16.msra.mxu0 0
        %3142 = vmatpush.bf16.msra.mxu0 %v3068
        %3143 = vmatpush.bf16.msra.mxu0 %v3054
        %3144 = vmatpush.bf16.msra.mxu0 %v3040
        %3145 = vmatpush.bf16.msra.mxu0 %v3026
        %3146 = vmatmul.bf16.gmra.mxu0 %v640
        %v3147 = vpop.f32.mrf.mxu0
        %v3148 = vadd.f32 0.0, %v3147
        %v3149 = vpop.f32.mrf.mxu0
        %3150 = vdwg.mxu0
        %3151 = vmatpush.bf16.msra.mxu0 0
        %3152 = vmatpush.bf16.msra.mxu0 0
        %3153 = vmatpush.bf16.msra.mxu0 0
        %3154 = vmatpush.bf16.msra.mxu0 0
        %3155 = vmatpush.bf16.msra.mxu0 %v3069
        %3156 = vmatpush.bf16.msra.mxu0 %v3055
        %3157 = vmatpush.bf16.msra.mxu0 %v3041
        %3158 = vmatpush.bf16.msra.mxu0 %v3027
        %3159 = vmatmul.bf16.gmra.mxu0 %v640
        %v3160 = vpop.f32.mrf.mxu0
        %v3161 = vadd.f32 0.0, %v3160
        %v3162 = vpop.f32.mrf.mxu0
        %3163 = vdwg.mxu0
        %3164 = vmatpush.bf16.msra.mxu0 0
        %3165 = vmatpush.bf16.msra.mxu0 0
        %3166 = vmatpush.bf16.msra.mxu0 0
        %3167 = vmatpush.bf16.msra.mxu0 0
        %3168 = vmatpush.bf16.msra.mxu0 %v3070
        %3169 = vmatpush.bf16.msra.mxu0 %v3056
        %3170 = vmatpush.bf16.msra.mxu0 %v3042
        %3171 = vmatpush.bf16.msra.mxu0 %v3028
        %3172 = vmatmul.bf16.gmra.mxu0 %v640
        %v3173 = vpop.f32.mrf.mxu0
        %v3174 = vadd.f32 0.0, %v3173
        %v3175 = vpop.f32.mrf.mxu0
        %3176 = vdwg.mxu0
        %3177 = vmatpush.bf16.msra.mxu0 0
        %3178 = vmatpush.bf16.msra.mxu0 0
        %3179 = vmatpush.bf16.msra.mxu0 0
        %3180 = vmatpush.bf16.msra.mxu0 0
        %3181 = vmatpush.bf16.msra.mxu0 %v3071
        %3182 = vmatpush.bf16.msra.mxu0 %v3057
        %3183 = vmatpush.bf16.msra.mxu0 %v3043
        %3184 = vmatpush.bf16.msra.mxu0 %v3029
        %3185 = vmatmul.bf16.gmra.mxu0 %v640
        %v3186 = vpop.f32.mrf.mxu0
        %v3187 = vadd.f32 0.0, %v3186
        %v3188 = vpop.f32.mrf.mxu0
        %3189 = vdwg.mxu0
        %3190 = vmatpush.bf16.msra.mxu0 0
        %3191 = vmatpush.bf16.msra.mxu0 0
        %3192 = vmatpush.bf16.msra.mxu0 0
        %3193 = vmatpush.bf16.msra.mxu0 0
        %3194 = vmatpush.bf16.msra.mxu0 %v3072
        %3195 = vmatpush.bf16.msra.mxu0 %v3058
        %3196 = vmatpush.bf16.msra.mxu0 %v3044
        %3197 = vmatpush.bf16.msra.mxu0 %v3030
        %3198 = vmatmul.bf16.gmra.mxu0 %v640
        %v3199 = vpop.f32.mrf.mxu0
        %v3200 = vadd.f32 0.0, %v3199
        %v3201 = vpop.f32.mrf.mxu0
        %3202 = vdwg.mxu0
        %3203 = vmatpush.bf16.msra.mxu0 0
        %3204 = vmatpush.bf16.msra.mxu0 0
        %3205 = vmatpush.bf16.msra.mxu0 0
        %3206 = vmatpush.bf16.msra.mxu0 0
        %3207 = vmatpush.bf16.msra.mxu0 %v3073
        %3208 = vmatpush.bf16.msra.mxu0 %v3059
        %3209 = vmatpush.bf16.msra.mxu0 %v3045
        %3210 = vmatpush.bf16.msra.mxu0 %v3031
        %3211 = vmatmul.bf16.gmra.mxu0 %v640
        %v3212 = vpop.f32.mrf.mxu0
        %v3213 = vadd.f32 0.0, %v3212
        %v3214 = vpop.f32.mrf.mxu0
        %3215 = vdwg.mxu0
        %3216 = vmatpush.bf16.msra.mxu0 0
        %3217 = vmatpush.bf16.msra.mxu0 0
        %3218 = vmatpush.bf16.msra.mxu0 0
        %3219 = vmatpush.bf16.msra.mxu0 0
        %3220 = vmatpush.bf16.msra.mxu0 %v3074
        %3221 = vmatpush.bf16.msra.mxu0 %v3060
        %3222 = vmatpush.bf16.msra.mxu0 %v3046
        %3223 = vmatpush.bf16.msra.mxu0 %v3032
        %3224 = vmatmul.bf16.gmra.mxu0 %v640
        %v3225 = vpop.f32.mrf.mxu0
        %v3226 = vadd.f32 0.0, %v3225
        %v3227 = vpop.f32.mrf.mxu0
        %3228 = vdwg.mxu0
        %3229 = vmatpush.bf16.msra.mxu0 0
        %3230 = vmatpush.bf16.msra.mxu0 0
        %3231 = vmatpush.bf16.msra.mxu0 0
        %3232 = vmatpush.bf16.msra.mxu0 0
        %3233 = vmatpush.bf16.msra.mxu0 %v3075
        %3234 = vmatpush.bf16.msra.mxu0 %v3061
        %3235 = vmatpush.bf16.msra.mxu0 %v3047
        %3236 = vmatpush.bf16.msra.mxu0 %v3033
        %3237 = vmatmul.bf16.gmra.mxu0 %v640
        %v3238 = vpop.f32.mrf.mxu0
        %v3239 = vadd.f32 0.0, %v3238
        %v3240 = vpop.f32.mrf.mxu0
        %3241 = vdwg.mxu0
        %3242 = vmatpush.bf16.msra.mxu0 0
        %3243 = vmatpush.bf16.msra.mxu0 0
        %3244 = vmatpush.bf16.msra.mxu0 0
        %3245 = vmatpush.bf16.msra.mxu0 0
        %3246 = vmatpush.bf16.msra.mxu0 %v3076
        %3247 = vmatpush.bf16.msra.mxu0 %v3062
        %3248 = vmatpush.bf16.msra.mxu0 %v3048
        %3249 = vmatpush.bf16.msra.mxu0 %v3034
        %3250 = vmatmul.bf16.gmra.mxu0 %v640
        %v3251 = vpop.f32.mrf.mxu0
        %v3252 = vadd.f32 0.0, %v3251
        %v3253 = vpop.f32.mrf.mxu0
        %3254 = vdwg.mxu0
        %3255 = vmatpush.bf16.msra.mxu0 0
        %3256 = vmatpush.bf16.msra.mxu0 0
        %3257 = vmatpush.bf16.msra.mxu0 0
        %3258 = vmatpush.bf16.msra.mxu0 0
        %3259 = vmatpush.bf16.msra.mxu0 %v3077
        %3260 = vmatpush.bf16.msra.mxu0 %v3063
        %3261 = vmatpush.bf16.msra.mxu0 %v3049
        %3262 = vmatpush.bf16.msra.mxu0 %v3035
        %3263 = vmatmul.bf16.gmra.mxu0 %v640
        %v3264 = vpop.f32.mrf.mxu0
        %v3265 = vadd.f32 0.0, %v3264
        %v3266 = vpop.f32.mrf.mxu0
        %3267 = vdwg.mxu0
        %3268 = vmatpush.bf16.msra.mxu0 0
        %3269 = vmatpush.bf16.msra.mxu0 0
        %3270 = vmatpush.bf16.msra.mxu0 0
        %3271 = vmatpush.bf16.msra.mxu0 0
        %3272 = vmatpush.bf16.msra.mxu0 %v3078
        %3273 = vmatpush.bf16.msra.mxu0 %v3064
        %3274 = vmatpush.bf16.msra.mxu0 %v3050
        %3275 = vmatpush.bf16.msra.mxu0 %v3036
        %3276 = vmatmul.bf16.gmra.mxu0 %v640
        %v3277 = vpop.f32.mrf.mxu0
        %v3278 = vadd.f32 0.0, %v3277
        %v3279 = vpop.f32.mrf.mxu0
        %3280 = vdwg.mxu0
        %3281 = vmatpush.bf16.msra.mxu0 0
        %3282 = vmatpush.bf16.msra.mxu0 0
        %3283 = vmatpush.bf16.msra.mxu0 0
        %3284 = vmatpush.bf16.msra.mxu0 0
        %3285 = vmatpush.bf16.msra.mxu0 %v3079
        %3286 = vmatpush.bf16.msra.mxu0 %v3065
        %3287 = vmatpush.bf16.msra.mxu0 %v3051
        %3288 = vmatpush.bf16.msra.mxu0 %v3037
        %3289 = vmatmul.bf16.gmra.mxu0 %v640
        %v3290 = vpop.f32.mrf.mxu0
        %v3291 = vadd.f32 0.0, %v3290
        %v3292 = vpop.f32.mrf.mxu0
        %3293 = vdwg.mxu0
        %3294 = vmatpush.bf16.msra.mxu0 0
        %3295 = vmatpush.bf16.msra.mxu0 0
        %3296 = vmatpush.bf16.msra.mxu0 0
        %3297 = vmatpush.bf16.msra.mxu0 0
        %3298 = vmatpush.bf16.msra.mxu0 %v3080
        %3299 = vmatpush.bf16.msra.mxu0 %v3066
        %3300 = vmatpush.bf16.msra.mxu0 %v3052
        %3301 = vmatpush.bf16.msra.mxu0 %v3038
        %3302 = vmatmul.bf16.gmra.mxu0 %v640
        %v3303 = vpop.f32.mrf.mxu0
        %v3304 = vadd.f32 0.0, %v3303
        %v3305 = vpop.f32.mrf.mxu0
        %3306 = vdwg.mxu0
        %3307 = vmatpush.bf16.msra.mxu0 0
        %3308 = vmatpush.bf16.msra.mxu0 0
        %3309 = vmatpush.bf16.msra.mxu0 0
        %3310 = vmatpush.bf16.msra.mxu0 0
        %3311 = vmatpush.bf16.msra.mxu0 %v3081
        %3312 = vmatpush.bf16.msra.mxu0 %v3067
        %3313 = vmatpush.bf16.msra.mxu0 %v3053
        %3314 = vmatpush.bf16.msra.mxu0 %v3039
        %3315 = vmatmul.bf16.gmra.mxu0 %v640
        %v3316 = vpop.f32.mrf.mxu0
        %v3317 = vadd.f32 0.0, %v3316
        %v3318 = vpop.f32.mrf.mxu0
        %3319 = vdwg.mxu0
        %v3320 = vld [vmem:[%s244 + $0x38] sm:$0xff]
        %v3321 = vld [vmem:[%s244 + $0x40] sm:$0x3f]
        %v3324 = vperm.slane %v3320, 0
        %v3325 = vperm.slane %v3320, 1
        %v3326 = vperm.slane %v3320, 2
        %v3327 = vperm.slane %v3320, 3
        %v3328 = vperm.slane %v3320, 4
        %v3329 = vperm.slane %v3320, 5
        %v3330 = vperm.slane %v3320, 6
        %v3331 = vperm.slane %v3320, 7
        %v3332 = vperm.slane %v3321, 0
        %v3333 = vperm.slane %v3321, 1
        %v3334 = vperm.slane %v3321, 2
        %v3335 = vperm.slane %v3321, 3
        %v3336 = vperm.slane %v3321, 4
        %v3337 = vperm.slane %v3321, 5
        %v3352 = vmul.f32 %v3148, %v3324
        %v3353 = vmul.f32 %v3161, %v3325
        %v3354 = vmul.f32 %v3174, %v3326
        %v3355 = vmul.f32 %v3187, %v3327
        %v3356 = vmul.f32 %v3200, %v3328
        %v3357 = vmul.f32 %v3213, %v3329
        %v3358 = vmul.f32 %v3226, %v3330
        %v3359 = vmul.f32 %v3239, %v3331
        %v3360 = vmul.f32 %v3252, %v3332
        %v3361 = vmul.f32 %v3265, %v3333
        %v3362 = vmul.f32 %v3278, %v3334
        %v3363 = vmul.f32 %v3291, %v3335
        %v3364 = vmul.f32 %v3304, %v3336
        %v3365 = vmul.f32 %v3317, %v3337
        %v3366 = vld [vmem:[%s254 + $0x38] sm:$0xff]
        %v3367 = vld [vmem:[%s254 + $0x40] sm:$0x3f]
        %v3370 = vperm.slane %v3366, 0
        %v3371 = vperm.slane %v3366, 1
        %v3372 = vperm.slane %v3366, 2
        %v3373 = vperm.slane %v3366, 3
        %v3374 = vperm.slane %v3366, 4
        %v3375 = vperm.slane %v3366, 5
        %v3376 = vperm.slane %v3366, 6
        %v3377 = vperm.slane %v3366, 7
        %v3378 = vperm.slane %v3367, 0
        %v3379 = vperm.slane %v3367, 1
        %v3380 = vperm.slane %v3367, 2
        %v3381 = vperm.slane %v3367, 3
        %v3382 = vperm.slane %v3367, 4
        %v3383 = vperm.slane %v3367, 5
        %v3398 = vadd.f32 %v3352, %v3370
        %v3399 = vadd.f32 %v3353, %v3371
        %v3400 = vadd.f32 %v3354, %v3372
        %v3401 = vadd.f32 %v3355, %v3373
        %v3402 = vadd.f32 %v3356, %v3374
        %v3403 = vadd.f32 %v3357, %v3375
        %v3404 = vadd.f32 %v3358, %v3376
        %v3405 = vadd.f32 %v3359, %v3377
        %v3406 = vadd.f32 %v3360, %v3378
        %v3407 = vadd.f32 %v3361, %v3379
        %v3408 = vadd.f32 %v3362, %v3380
        %v3409 = vadd.f32 %v3363, %v3381
        %v3410 = vadd.f32 %v3364, %v3382
        %v3411 = vadd.f32 %v3365, %v3383
        %3412 = vst [vmem:[%s297 + $0x1c0] sm:$0xff] %v3398
        %3413 = vst [vmem:[%s297 + $0x1c8] sm:$0xff] %v3399
        %3414 = vst [vmem:[%s297 + $0x1d0] sm:$0xff] %v3400
        %3415 = vst [vmem:[%s297 + $0x1d8] sm:$0xff] %v3401
        %3416 = vst [vmem:[%s297 + $0x1e0] sm:$0xff] %v3402
        %3417 = vst [vmem:[%s297 + $0x1e8] sm:$0xff] %v3403
        %3418 = vst [vmem:[%s297 + $0x1f0] sm:$0xff] %v3404
        %3419 = vst [vmem:[%s297 + $0x1f8] sm:$0xff] %v3405
        %3420 = vst [vmem:[%s297 + $0x200] sm:$0xff] %v3406
        %3421 = vst [vmem:[%s297 + $0x208] sm:$0xff] %v3407
        %3422 = vst [vmem:[%s297 + $0x210] sm:$0xff] %v3408
        %3423 = vst [vmem:[%s297 + $0x218] sm:$0xff] %v3409
        %3424 = vst [vmem:[%s297 + $0x220] sm:$0xff] %v3410
        %3425 = vst [vmem:[%s297 + $0x228] sm:$0xff] %v3411
        %v3426 = vld [vmem:[%s234 + $0x118] sm:$0xff]
        %v3427 = vld [vmem:[%s234 + $0x120] sm:$0xff]
        %v3428 = vld [vmem:[%s234 + $0x128] sm:$0xff]
        %v3429 = vld [vmem:[%s234 + $0x130] sm:$0xff]
        %v3430 = vld [vmem:[%s234 + $0x138] sm:$0xff]
        %v3431 = vld [vmem:[%s234 + $0x140] sm:$0xff]
        %v3432 = vld [vmem:[%s234 + $0x148] sm:$0xff]
        %v3433 = vld [vmem:[%s234 + $0x2a0] sm:$0xff]
        %v3434 = vld [vmem:[%s234 + $0x2a8] sm:$0xff]
        %v3435 = vld [vmem:[%s234 + $0x2b0] sm:$0xff]
        %v3436 = vld [vmem:[%s234 + $0x2b8] sm:$0xff]
        %v3437 = vld [vmem:[%s234 + $0x2c0] sm:$0xff]
        %v3438 = vld [vmem:[%s234 + $0x2c8] sm:$0xff]
        %v3439 = vld [vmem:[%s234 + $0x2d0] sm:$0xff]
        %v3440 = vld [vmem:[%s234 + $0x428] sm:$0xff]
        %v3441 = vld [vmem:[%s234 + $0x430] sm:$0xff]
        %v3442 = vld [vmem:[%s234 + $0x438] sm:$0xff]
        %v3443 = vld [vmem:[%s234 + $0x440] sm:$0xff]
        %v3444 = vld [vmem:[%s234 + $0x448] sm:$0xff]
        %v3445 = vld [vmem:[%s234 + $0x450] sm:$0xff]
        %v3446 = vld [vmem:[%s234 + $0x458] sm:$0xff]
        %v3447 = vld [vmem:[%s234 + $0x5b0] sm:$0xff]
        %v3448 = vld [vmem:[%s234 + $0x5b8] sm:$0xff]
        %v3449 = vld [vmem:[%s234 + $0x5c0] sm:$0xff]
        %v3450 = vld [vmem:[%s234 + $0x5c8] sm:$0xff]
        %v3451 = vld [vmem:[%s234 + $0x5d0] sm:$0xff]
        %v3452 = vld [vmem:[%s234 + $0x5d8] sm:$0xff]
        %v3453 = vld [vmem:[%s234 + $0x5e0] sm:$0xff]
        %v3454 = vld [vmem:[%s234 + $0x738] sm:$0xff]
        %v3455 = vld [vmem:[%s234 + $0x740] sm:$0xff]
        %v3456 = vld [vmem:[%s234 + $0x748] sm:$0xff]
        %v3457 = vld [vmem:[%s234 + $0x750] sm:$0xff]
        %v3458 = vld [vmem:[%s234 + $0x758] sm:$0xff]
        %v3459 = vld [vmem:[%s234 + $0x760] sm:$0xff]
        %v3460 = vld [vmem:[%s234 + $0x768] sm:$0xff]
        %v3461 = vld [vmem:[%s234 + $0x8c0] sm:$0xff]
        %v3462 = vld [vmem:[%s234 + $0x8c8] sm:$0xff]
        %v3463 = vld [vmem:[%s234 + $0x8d0] sm:$0xff]
        %v3464 = vld [vmem:[%s234 + $0x8d8] sm:$0xff]
        %v3465 = vld [vmem:[%s234 + $0x8e0] sm:$0xff]
        %v3466 = vld [vmem:[%s234 + $0x8e8] sm:$0xff]
        %v3467 = vld [vmem:[%s234 + $0x8f0] sm:$0xff]
        %v3468 = vld [vmem:[%s234 + $0xa48] sm:$0xff]
        %v3469 = vld [vmem:[%s234 + $0xa50] sm:$0xff]
        %v3470 = vld [vmem:[%s234 + $0xa58] sm:$0xff]
        %v3471 = vld [vmem:[%s234 + $0xa60] sm:$0xff]
        %v3472 = vld [vmem:[%s234 + $0xa68] sm:$0xff]
        %v3473 = vld [vmem:[%s234 + $0xa70] sm:$0xff]
        %v3474 = vld [vmem:[%s234 + $0xa78] sm:$0xff]
        %v3475 = vld [vmem:[%s234 + $0xbd0] sm:$0xff]
        %v3476 = vld [vmem:[%s234 + $0xbd8] sm:$0xff]
        %v3477 = vld [vmem:[%s234 + $0xbe0] sm:$0xff]
        %v3478 = vld [vmem:[%s234 + $0xbe8] sm:$0xff]
        %v3479 = vld [vmem:[%s234 + $0xbf0] sm:$0xff]
        %v3480 = vld [vmem:[%s234 + $0xbf8] sm:$0xff]
        %v3481 = vld [vmem:[%s234 + $0xc00] sm:$0xff]
        %v3538 = vunpack.c.l.b16 %v3426
        %v3539 = vunpack.c.h.b16 %v3426
        %v3540 = vunpack.c.l.b16 %v3427
        %v3541 = vunpack.c.h.b16 %v3427
        %v3542 = vunpack.c.l.b16 %v3428
        %v3543 = vunpack.c.h.b16 %v3428
        %v3544 = vunpack.c.l.b16 %v3429
        %v3545 = vunpack.c.h.b16 %v3429
        %v3546 = vunpack.c.l.b16 %v3430
        %v3547 = vunpack.c.h.b16 %v3430
        %v3548 = vunpack.c.l.b16 %v3431
        %v3549 = vunpack.c.h.b16 %v3431
        %v3550 = vunpack.c.l.b16 %v3432
        %v3551 = vunpack.c.h.b16 %v3432
        %v3552 = vunpack.c.l.b16 %v3433
        %v3553 = vunpack.c.h.b16 %v3433
        %v3554 = vunpack.c.l.b16 %v3434
        %v3555 = vunpack.c.h.b16 %v3434
        %v3556 = vunpack.c.l.b16 %v3435
        %v3557 = vunpack.c.h.b16 %v3435
        %v3558 = vunpack.c.l.b16 %v3436
        %v3559 = vunpack.c.h.b16 %v3436
        %v3560 = vunpack.c.l.b16 %v3437
        %v3561 = vunpack.c.h.b16 %v3437
        %v3562 = vunpack.c.l.b16 %v3438
        %v3563 = vunpack.c.h.b16 %v3438
        %v3564 = vunpack.c.l.b16 %v3439
        %v3565 = vunpack.c.h.b16 %v3439
        %v3566 = vunpack.c.l.b16 %v3440
        %v3567 = vunpack.c.h.b16 %v3440
        %v3568 = vunpack.c.l.b16 %v3441
        %v3569 = vunpack.c.h.b16 %v3441
        %v3570 = vunpack.c.l.b16 %v3442
        %v3571 = vunpack.c.h.b16 %v3442
        %v3572 = vunpack.c.l.b16 %v3443
        %v3573 = vunpack.c.h.b16 %v3443
        %v3574 = vunpack.c.l.b16 %v3444
        %v3575 = vunpack.c.h.b16 %v3444
        %v3576 = vunpack.c.l.b16 %v3445
        %v3577 = vunpack.c.h.b16 %v3445
        %v3578 = vunpack.c.l.b16 %v3446
        %v3579 = vunpack.c.h.b16 %v3446
        %v3580 = vunpack.c.l.b16 %v3447
        %v3581 = vunpack.c.h.b16 %v3447
        %v3582 = vunpack.c.l.b16 %v3448
        %v3583 = vunpack.c.h.b16 %v3448
        %v3584 = vunpack.c.l.b16 %v3449
        %v3585 = vunpack.c.h.b16 %v3449
        %v3586 = vunpack.c.l.b16 %v3450
        %v3587 = vunpack.c.h.b16 %v3450
        %v3588 = vunpack.c.l.b16 %v3451
        %v3589 = vunpack.c.h.b16 %v3451
        %v3590 = vunpack.c.l.b16 %v3452
        %v3591 = vunpack.c.h.b16 %v3452
        %v3592 = vunpack.c.l.b16 %v3453
        %v3593 = vunpack.c.h.b16 %v3453
        %v3594 = vunpack.c.l.b16 %v3454
        %v3595 = vunpack.c.h.b16 %v3454
        %v3596 = vunpack.c.l.b16 %v3455
        %v3597 = vunpack.c.h.b16 %v3455
        %v3598 = vunpack.c.l.b16 %v3456
        %v3599 = vunpack.c.h.b16 %v3456
        %v3600 = vunpack.c.l.b16 %v3457
        %v3601 = vunpack.c.h.b16 %v3457
        %v3602 = vunpack.c.l.b16 %v3458
        %v3603 = vunpack.c.h.b16 %v3458
        %v3604 = vunpack.c.l.b16 %v3459
        %v3605 = vunpack.c.h.b16 %v3459
        %v3606 = vunpack.c.l.b16 %v3460
        %v3607 = vunpack.c.h.b16 %v3460
        %v3608 = vunpack.c.l.b16 %v3461
        %v3609 = vunpack.c.h.b16 %v3461
        %v3610 = vunpack.c.l.b16 %v3462
        %v3611 = vunpack.c.h.b16 %v3462
        %v3612 = vunpack.c.l.b16 %v3463
        %v3613 = vunpack.c.h.b16 %v3463
        %v3614 = vunpack.c.l.b16 %v3464
        %v3615 = vunpack.c.h.b16 %v3464
        %v3616 = vunpack.c.l.b16 %v3465
        %v3617 = vunpack.c.h.b16 %v3465
        %v3618 = vunpack.c.l.b16 %v3466
        %v3619 = vunpack.c.h.b16 %v3466
        %v3620 = vunpack.c.l.b16 %v3467
        %v3621 = vunpack.c.h.b16 %v3467
        %v3622 = vunpack.c.l.b16 %v3468
        %v3623 = vunpack.c.h.b16 %v3468
        %v3624 = vunpack.c.l.b16 %v3469
        %v3625 = vunpack.c.h.b16 %v3469
        %v3626 = vunpack.c.l.b16 %v3470
        %v3627 = vunpack.c.h.b16 %v3470
        %v3628 = vunpack.c.l.b16 %v3471
        %v3629 = vunpack.c.h.b16 %v3471
        %v3630 = vunpack.c.l.b16 %v3472
        %v3631 = vunpack.c.h.b16 %v3472
        %v3632 = vunpack.c.l.b16 %v3473
        %v3633 = vunpack.c.h.b16 %v3473
        %v3634 = vunpack.c.l.b16 %v3474
        %v3635 = vunpack.c.h.b16 %v3474
        %v3636 = vunpack.c.l.b16 %v3475
        %v3637 = vunpack.c.h.b16 %v3475
        %v3638 = vunpack.c.l.b16 %v3476
        %v3639 = vunpack.c.h.b16 %v3476
        %v3640 = vunpack.c.l.b16 %v3477
        %v3641 = vunpack.c.h.b16 %v3477
        %v3642 = vunpack.c.l.b16 %v3478
        %v3643 = vunpack.c.h.b16 %v3478
        %v3644 = vunpack.c.l.b16 %v3479
        %v3645 = vunpack.c.h.b16 %v3479
        %v3646 = vunpack.c.l.b16 %v3480
        %v3647 = vunpack.c.h.b16 %v3480
        %v3648 = vunpack.c.l.b16 %v3481
        %v3649 = vunpack.c.h.b16 %v3481
        %v3650 = vpack.c.b16 %v3552, %v3538
        %v3651 = vpack.c.b16 %v3553, %v3539
        %v3652 = vpack.c.b16 %v3554, %v3540
        %v3653 = vpack.c.b16 %v3555, %v3541
        %v3654 = vpack.c.b16 %v3556, %v3542
        %v3655 = vpack.c.b16 %v3557, %v3543
        %v3656 = vpack.c.b16 %v3558, %v3544
        %v3657 = vpack.c.b16 %v3559, %v3545
        %v3658 = vpack.c.b16 %v3560, %v3546
        %v3659 = vpack.c.b16 %v3561, %v3547
        %v3660 = vpack.c.b16 %v3562, %v3548
        %v3661 = vpack.c.b16 %v3563, %v3549
        %v3662 = vpack.c.b16 %v3564, %v3550
        %v3663 = vpack.c.b16 %v3565, %v3551
        %v3664 = vpack.c.b16 %v3580, %v3566
        %v3665 = vpack.c.b16 %v3581, %v3567
        %v3666 = vpack.c.b16 %v3582, %v3568
        %v3667 = vpack.c.b16 %v3583, %v3569
        %v3668 = vpack.c.b16 %v3584, %v3570
        %v3669 = vpack.c.b16 %v3585, %v3571
        %v3670 = vpack.c.b16 %v3586, %v3572
        %v3671 = vpack.c.b16 %v3587, %v3573
        %v3672 = vpack.c.b16 %v3588, %v3574
        %v3673 = vpack.c.b16 %v3589, %v3575
        %v3674 = vpack.c.b16 %v3590, %v3576
        %v3675 = vpack.c.b16 %v3591, %v3577
        %v3676 = vpack.c.b16 %v3592, %v3578
        %v3677 = vpack.c.b16 %v3593, %v3579
        %v3678 = vpack.c.b16 %v3608, %v3594
        %v3679 = vpack.c.b16 %v3609, %v3595
        %v3680 = vpack.c.b16 %v3610, %v3596
        %v3681 = vpack.c.b16 %v3611, %v3597
        %v3682 = vpack.c.b16 %v3612, %v3598
        %v3683 = vpack.c.b16 %v3613, %v3599
        %v3684 = vpack.c.b16 %v3614, %v3600
        %v3685 = vpack.c.b16 %v3615, %v3601
        %v3686 = vpack.c.b16 %v3616, %v3602
        %v3687 = vpack.c.b16 %v3617, %v3603
        %v3688 = vpack.c.b16 %v3618, %v3604
        %v3689 = vpack.c.b16 %v3619, %v3605
        %v3690 = vpack.c.b16 %v3620, %v3606
        %v3691 = vpack.c.b16 %v3621, %v3607
        %v3692 = vpack.c.b16 %v3636, %v3622
        %v3693 = vpack.c.b16 %v3637, %v3623
        %v3694 = vpack.c.b16 %v3638, %v3624
        %v3695 = vpack.c.b16 %v3639, %v3625
        %v3696 = vpack.c.b16 %v3640, %v3626
        %v3697 = vpack.c.b16 %v3641, %v3627
        %v3698 = vpack.c.b16 %v3642, %v3628
        %v3699 = vpack.c.b16 %v3643, %v3629
        %v3700 = vpack.c.b16 %v3644, %v3630
        %v3701 = vpack.c.b16 %v3645, %v3631
        %v3702 = vpack.c.b16 %v3646, %v3632
        %v3703 = vpack.c.b16 %v3647, %v3633
        %v3704 = vpack.c.b16 %v3648, %v3634
        %v3705 = vpack.c.b16 %v3649, %v3635
        %3762 = vmatpush.bf16.msra.mxu0 0
        %3763 = vmatpush.bf16.msra.mxu0 0
        %3764 = vmatpush.bf16.msra.mxu0 0
        %3765 = vmatpush.bf16.msra.mxu0 0
        %3766 = vmatpush.bf16.msra.mxu0 %v3692
        %3767 = vmatpush.bf16.msra.mxu0 %v3678
        %3768 = vmatpush.bf16.msra.mxu0 %v3664
        %3769 = vmatpush.bf16.msra.mxu0 %v3650
        %3770 = vmatmul.bf16.gmra.mxu0 %v640
        %v3771 = vpop.f32.mrf.mxu0
        %v3772 = vadd.f32 0.0, %v3771
        %v3773 = vpop.f32.mrf.mxu0
        %3774 = vdwg.mxu0
        %3775 = vmatpush.bf16.msra.mxu0 0
        %3776 = vmatpush.bf16.msra.mxu0 0
        %3777 = vmatpush.bf16.msra.mxu0 0
        %3778 = vmatpush.bf16.msra.mxu0 0
        %3779 = vmatpush.bf16.msra.mxu0 %v3693
        %3780 = vmatpush.bf16.msra.mxu0 %v3679
        %3781 = vmatpush.bf16.msra.mxu0 %v3665
        %3782 = vmatpush.bf16.msra.mxu0 %v3651
        %3783 = vmatmul.bf16.gmra.mxu0 %v640
        %v3784 = vpop.f32.mrf.mxu0
        %v3785 = vadd.f32 0.0, %v3784
        %v3786 = vpop.f32.mrf.mxu0
        %3787 = vdwg.mxu0
        %3788 = vmatpush.bf16.msra.mxu0 0
        %3789 = vmatpush.bf16.msra.mxu0 0
        %3790 = vmatpush.bf16.msra.mxu0 0
        %3791 = vmatpush.bf16.msra.mxu0 0
        %3792 = vmatpush.bf16.msra.mxu0 %v3694
        %3793 = vmatpush.bf16.msra.mxu0 %v3680
        %3794 = vmatpush.bf16.msra.mxu0 %v3666
        %3795 = vmatpush.bf16.msra.mxu0 %v3652
        %3796 = vmatmul.bf16.gmra.mxu0 %v640
        %v3797 = vpop.f32.mrf.mxu0
        %v3798 = vadd.f32 0.0, %v3797
        %v3799 = vpop.f32.mrf.mxu0
        %3800 = vdwg.mxu0
        %3801 = vmatpush.bf16.msra.mxu0 0
        %3802 = vmatpush.bf16.msra.mxu0 0
        %3803 = vmatpush.bf16.msra.mxu0 0
        %3804 = vmatpush.bf16.msra.mxu0 0
        %3805 = vmatpush.bf16.msra.mxu0 %v3695
        %3806 = vmatpush.bf16.msra.mxu0 %v3681
        %3807 = vmatpush.bf16.msra.mxu0 %v3667
        %3808 = vmatpush.bf16.msra.mxu0 %v3653
        %3809 = vmatmul.bf16.gmra.mxu0 %v640
        %v3810 = vpop.f32.mrf.mxu0
        %v3811 = vadd.f32 0.0, %v3810
        %v3812 = vpop.f32.mrf.mxu0
        %3813 = vdwg.mxu0
        %3814 = vmatpush.bf16.msra.mxu0 0
        %3815 = vmatpush.bf16.msra.mxu0 0
        %3816 = vmatpush.bf16.msra.mxu0 0
        %3817 = vmatpush.bf16.msra.mxu0 0
        %3818 = vmatpush.bf16.msra.mxu0 %v3696
        %3819 = vmatpush.bf16.msra.mxu0 %v3682
        %3820 = vmatpush.bf16.msra.mxu0 %v3668
        %3821 = vmatpush.bf16.msra.mxu0 %v3654
        %3822 = vmatmul.bf16.gmra.mxu0 %v640
        %v3823 = vpop.f32.mrf.mxu0
        %v3824 = vadd.f32 0.0, %v3823
        %v3825 = vpop.f32.mrf.mxu0
        %3826 = vdwg.mxu0
        %3827 = vmatpush.bf16.msra.mxu0 0
        %3828 = vmatpush.bf16.msra.mxu0 0
        %3829 = vmatpush.bf16.msra.mxu0 0
        %3830 = vmatpush.bf16.msra.mxu0 0
        %3831 = vmatpush.bf16.msra.mxu0 %v3697
        %3832 = vmatpush.bf16.msra.mxu0 %v3683
        %3833 = vmatpush.bf16.msra.mxu0 %v3669
        %3834 = vmatpush.bf16.msra.mxu0 %v3655
        %3835 = vmatmul.bf16.gmra.mxu0 %v640
        %v3836 = vpop.f32.mrf.mxu0
        %v3837 = vadd.f32 0.0, %v3836
        %v3838 = vpop.f32.mrf.mxu0
        %3839 = vdwg.mxu0
        %3840 = vmatpush.bf16.msra.mxu0 0
        %3841 = vmatpush.bf16.msra.mxu0 0
        %3842 = vmatpush.bf16.msra.mxu0 0
        %3843 = vmatpush.bf16.msra.mxu0 0
        %3844 = vmatpush.bf16.msra.mxu0 %v3698
        %3845 = vmatpush.bf16.msra.mxu0 %v3684
        %3846 = vmatpush.bf16.msra.mxu0 %v3670
        %3847 = vmatpush.bf16.msra.mxu0 %v3656
        %3848 = vmatmul.bf16.gmra.mxu0 %v640
        %v3849 = vpop.f32.mrf.mxu0
        %v3850 = vadd.f32 0.0, %v3849
        %v3851 = vpop.f32.mrf.mxu0
        %3852 = vdwg.mxu0
        %3853 = vmatpush.bf16.msra.mxu0 0
        %3854 = vmatpush.bf16.msra.mxu0 0
        %3855 = vmatpush.bf16.msra.mxu0 0
        %3856 = vmatpush.bf16.msra.mxu0 0
        %3857 = vmatpush.bf16.msra.mxu0 %v3699
        %3858 = vmatpush.bf16.msra.mxu0 %v3685
        %3859 = vmatpush.bf16.msra.mxu0 %v3671
        %3860 = vmatpush.bf16.msra.mxu0 %v3657
        %3861 = vmatmul.bf16.gmra.mxu0 %v640
        %v3862 = vpop.f32.mrf.mxu0
        %v3863 = vadd.f32 0.0, %v3862
        %v3864 = vpop.f32.mrf.mxu0
        %3865 = vdwg.mxu0
        %3866 = vmatpush.bf16.msra.mxu0 0
        %3867 = vmatpush.bf16.msra.mxu0 0
        %3868 = vmatpush.bf16.msra.mxu0 0
        %3869 = vmatpush.bf16.msra.mxu0 0
        %3870 = vmatpush.bf16.msra.mxu0 %v3700
        %3871 = vmatpush.bf16.msra.mxu0 %v3686
        %3872 = vmatpush.bf16.msra.mxu0 %v3672
        %3873 = vmatpush.bf16.msra.mxu0 %v3658
        %3874 = vmatmul.bf16.gmra.mxu0 %v640
        %v3875 = vpop.f32.mrf.mxu0
        %v3876 = vadd.f32 0.0, %v3875
        %v3877 = vpop.f32.mrf.mxu0
        %3878 = vdwg.mxu0
        %3879 = vmatpush.bf16.msra.mxu0 0
        %3880 = vmatpush.bf16.msra.mxu0 0
        %3881 = vmatpush.bf16.msra.mxu0 0
        %3882 = vmatpush.bf16.msra.mxu0 0
        %3883 = vmatpush.bf16.msra.mxu0 %v3701
        %3884 = vmatpush.bf16.msra.mxu0 %v3687
        %3885 = vmatpush.bf16.msra.mxu0 %v3673
        %3886 = vmatpush.bf16.msra.mxu0 %v3659
        %3887 = vmatmul.bf16.gmra.mxu0 %v640
        %v3888 = vpop.f32.mrf.mxu0
        %v3889 = vadd.f32 0.0, %v3888
        %v3890 = vpop.f32.mrf.mxu0
        %3891 = vdwg.mxu0
        %3892 = vmatpush.bf16.msra.mxu0 0
        %3893 = vmatpush.bf16.msra.mxu0 0
        %3894 = vmatpush.bf16.msra.mxu0 0
        %3895 = vmatpush.bf16.msra.mxu0 0
        %3896 = vmatpush.bf16.msra.mxu0 %v3702
        %3897 = vmatpush.bf16.msra.mxu0 %v3688
        %3898 = vmatpush.bf16.msra.mxu0 %v3674
        %3899 = vmatpush.bf16.msra.mxu0 %v3660
        %3900 = vmatmul.bf16.gmra.mxu0 %v640
        %v3901 = vpop.f32.mrf.mxu0
        %v3902 = vadd.f32 0.0, %v3901
        %v3903 = vpop.f32.mrf.mxu0
        %3904 = vdwg.mxu0
        %3905 = vmatpush.bf16.msra.mxu0 0
        %3906 = vmatpush.bf16.msra.mxu0 0
        %3907 = vmatpush.bf16.msra.mxu0 0
        %3908 = vmatpush.bf16.msra.mxu0 0
        %3909 = vmatpush.bf16.msra.mxu0 %v3703
        %3910 = vmatpush.bf16.msra.mxu0 %v3689
        %3911 = vmatpush.bf16.msra.mxu0 %v3675
        %3912 = vmatpush.bf16.msra.mxu0 %v3661
        %3913 = vmatmul.bf16.gmra.mxu0 %v640
        %v3914 = vpop.f32.mrf.mxu0
        %v3915 = vadd.f32 0.0, %v3914
        %v3916 = vpop.f32.mrf.mxu0
        %3917 = vdwg.mxu0
        %3918 = vmatpush.bf16.msra.mxu0 0
        %3919 = vmatpush.bf16.msra.mxu0 0
        %3920 = vmatpush.bf16.msra.mxu0 0
        %3921 = vmatpush.bf16.msra.mxu0 0
        %3922 = vmatpush.bf16.msra.mxu0 %v3704
        %3923 = vmatpush.bf16.msra.mxu0 %v3690
        %3924 = vmatpush.bf16.msra.mxu0 %v3676
        %3925 = vmatpush.bf16.msra.mxu0 %v3662
        %3926 = vmatmul.bf16.gmra.mxu0 %v640
        %v3927 = vpop.f32.mrf.mxu0
        %v3928 = vadd.f32 0.0, %v3927
        %v3929 = vpop.f32.mrf.mxu0
        %3930 = vdwg.mxu0
        %3931 = vmatpush.bf16.msra.mxu0 0
        %3932 = vmatpush.bf16.msra.mxu0 0
        %3933 = vmatpush.bf16.msra.mxu0 0
        %3934 = vmatpush.bf16.msra.mxu0 0
        %3935 = vmatpush.bf16.msra.mxu0 %v3705
        %3936 = vmatpush.bf16.msra.mxu0 %v3691
        %3937 = vmatpush.bf16.msra.mxu0 %v3677
        %3938 = vmatpush.bf16.msra.mxu0 %v3663
        %3939 = vmatmul.bf16.gmra.mxu0 %v640
        %v3940 = vpop.f32.mrf.mxu0
        %v3941 = vadd.f32 0.0, %v3940
        %v3942 = vpop.f32.mrf.mxu0
        %3943 = vdwg.mxu0
        %v3944 = vld [vmem:[%s244 + $0x46] sm:$0xff]
        %v3945 = vld [vmem:[%s244 + $0x4e] sm:$0x3f]
        %v3948 = vperm.slane %v3944, 0
        %v3949 = vperm.slane %v3944, 1
        %v3950 = vperm.slane %v3944, 2
        %v3951 = vperm.slane %v3944, 3
        %v3952 = vperm.slane %v3944, 4
        %v3953 = vperm.slane %v3944, 5
        %v3954 = vperm.slane %v3944, 6
        %v3955 = vperm.slane %v3944, 7
        %v3956 = vperm.slane %v3945, 0
        %v3957 = vperm.slane %v3945, 1
        %v3958 = vperm.slane %v3945, 2
        %v3959 = vperm.slane %v3945, 3
        %v3960 = vperm.slane %v3945, 4
        %v3961 = vperm.slane %v3945, 5
        %v3976 = vmul.f32 %v3772, %v3948
        %v3977 = vmul.f32 %v3785, %v3949
        %v3978 = vmul.f32 %v3798, %v3950
        %v3979 = vmul.f32 %v3811, %v3951
        %v3980 = vmul.f32 %v3824, %v3952
        %v3981 = vmul.f32 %v3837, %v3953
        %v3982 = vmul.f32 %v3850, %v3954
        %v3983 = vmul.f32 %v3863, %v3955
        %v3984 = vmul.f32 %v3876, %v3956
        %v3985 = vmul.f32 %v3889, %v3957
        %v3986 = vmul.f32 %v3902, %v3958
        %v3987 = vmul.f32 %v3915, %v3959
        %v3988 = vmul.f32 %v3928, %v3960
        %v3989 = vmul.f32 %v3941, %v3961
        %v3990 = vld [vmem:[%s254 + $0x46] sm:$0xff]
        %v3991 = vld [vmem:[%s254 + $0x4e] sm:$0x3f]
        %v3994 = vperm.slane %v3990, 0
        %v3995 = vperm.slane %v3990, 1
        %v3996 = vperm.slane %v3990, 2
        %v3997 = vperm.slane %v3990, 3
        %v3998 = vperm.slane %v3990, 4
        %v3999 = vperm.slane %v3990, 5
        %v4000 = vperm.slane %v3990, 6
        %v4001 = vperm.slane %v3990, 7
        %v4002 = vperm.slane %v3991, 0
        %v4003 = vperm.slane %v3991, 1
        %v4004 = vperm.slane %v3991, 2
        %v4005 = vperm.slane %v3991, 3
        %v4006 = vperm.slane %v3991, 4
        %v4007 = vperm.slane %v3991, 5
        %v4022 = vadd.f32 %v3976, %v3994
        %v4023 = vadd.f32 %v3977, %v3995
        %v4024 = vadd.f32 %v3978, %v3996
        %v4025 = vadd.f32 %v3979, %v3997
        %v4026 = vadd.f32 %v3980, %v3998
        %v4027 = vadd.f32 %v3981, %v3999
        %v4028 = vadd.f32 %v3982, %v4000
        %v4029 = vadd.f32 %v3983, %v4001
        %v4030 = vadd.f32 %v3984, %v4002
        %v4031 = vadd.f32 %v3985, %v4003
        %v4032 = vadd.f32 %v3986, %v4004
        %v4033 = vadd.f32 %v3987, %v4005
        %v4034 = vadd.f32 %v3988, %v4006
        %v4035 = vadd.f32 %v3989, %v4007
        %4036 = vst [vmem:[%s297 + $0x230] sm:$0xff] %v4022
        %4037 = vst [vmem:[%s297 + $0x238] sm:$0xff] %v4023
        %4038 = vst [vmem:[%s297 + $0x240] sm:$0xff] %v4024
        %4039 = vst [vmem:[%s297 + $0x248] sm:$0xff] %v4025
        %4040 = vst [vmem:[%s297 + $0x250] sm:$0xff] %v4026
        %4041 = vst [vmem:[%s297 + $0x258] sm:$0xff] %v4027
        %4042 = vst [vmem:[%s297 + $0x260] sm:$0xff] %v4028
        %4043 = vst [vmem:[%s297 + $0x268] sm:$0xff] %v4029
        %4044 = vst [vmem:[%s297 + $0x270] sm:$0xff] %v4030
        %4045 = vst [vmem:[%s297 + $0x278] sm:$0xff] %v4031
        %4046 = vst [vmem:[%s297 + $0x280] sm:$0xff] %v4032
        %4047 = vst [vmem:[%s297 + $0x288] sm:$0xff] %v4033
        %4048 = vst [vmem:[%s297 + $0x290] sm:$0xff] %v4034
        %4049 = vst [vmem:[%s297 + $0x298] sm:$0xff] %v4035
        %v4050 = vld [vmem:[%s234 + $0x150] sm:$0xff]
        %v4051 = vld [vmem:[%s234 + $0x158] sm:$0xff]
        %v4052 = vld [vmem:[%s234 + $0x160] sm:$0xff]
        %v4053 = vld [vmem:[%s234 + $0x168] sm:$0xff]
        %v4054 = vld [vmem:[%s234 + $0x170] sm:$0xff]
        %v4055 = vld [vmem:[%s234 + $0x178] sm:$0xff]
        %v4056 = vld [vmem:[%s234 + $0x180] sm:$0xff]
        %v4057 = vld [vmem:[%s234 + $0x2d8] sm:$0xff]
        %v4058 = vld [vmem:[%s234 + $0x2e0] sm:$0xff]
        %v4059 = vld [vmem:[%s234 + $0x2e8] sm:$0xff]
        %v4060 = vld [vmem:[%s234 + $0x2f0] sm:$0xff]
        %v4061 = vld [vmem:[%s234 + $0x2f8] sm:$0xff]
        %v4062 = vld [vmem:[%s234 + $0x300] sm:$0xff]
        %v4063 = vld [vmem:[%s234 + $0x308] sm:$0xff]
        %v4064 = vld [vmem:[%s234 + $0x460] sm:$0xff]
        %v4065 = vld [vmem:[%s234 + $0x468] sm:$0xff]
        %v4066 = vld [vmem:[%s234 + $0x470] sm:$0xff]
        %v4067 = vld [vmem:[%s234 + $0x478] sm:$0xff]
        %v4068 = vld [vmem:[%s234 + $0x480] sm:$0xff]
        %v4069 = vld [vmem:[%s234 + $0x488] sm:$0xff]
        %v4070 = vld [vmem:[%s234 + $0x490] sm:$0xff]
        %v4071 = vld [vmem:[%s234 + $0x5e8] sm:$0xff]
        %v4072 = vld [vmem:[%s234 + $0x5f0] sm:$0xff]
        %v4073 = vld [vmem:[%s234 + $0x5f8] sm:$0xff]
        %v4074 = vld [vmem:[%s234 + $0x600] sm:$0xff]
        %v4075 = vld [vmem:[%s234 + $0x608] sm:$0xff]
        %v4076 = vld [vmem:[%s234 + $0x610] sm:$0xff]
        %v4077 = vld [vmem:[%s234 + $0x618] sm:$0xff]
        %v4078 = vld [vmem:[%s234 + $0x770] sm:$0xff]
        %v4079 = vld [vmem:[%s234 + $0x778] sm:$0xff]
        %v4080 = vld [vmem:[%s234 + $0x780] sm:$0xff]
        %v4081 = vld [vmem:[%s234 + $0x788] sm:$0xff]
        %v4082 = vld [vmem:[%s234 + $0x790] sm:$0xff]
        %v4083 = vld [vmem:[%s234 + $0x798] sm:$0xff]
        %v4084 = vld [vmem:[%s234 + $0x7a0] sm:$0xff]
        %v4085 = vld [vmem:[%s234 + $0x8f8] sm:$0xff]
        %v4086 = vld [vmem:[%s234 + $0x900] sm:$0xff]
        %v4087 = vld [vmem:[%s234 + $0x908] sm:$0xff]
        %v4088 = vld [vmem:[%s234 + $0x910] sm:$0xff]
        %v4089 = vld [vmem:[%s234 + $0x918] sm:$0xff]
        %v4090 = vld [vmem:[%s234 + $0x920] sm:$0xff]
        %v4091 = vld [vmem:[%s234 + $0x928] sm:$0xff]
        %v4092 = vld [vmem:[%s234 + $0xa80] sm:$0xff]
        %v4093 = vld [vmem:[%s234 + $0xa88] sm:$0xff]
        %v4094 = vld [vmem:[%s234 + $0xa90] sm:$0xff]
        %v4095 = vld [vmem:[%s234 + $0xa98] sm:$0xff]
        %v4096 = vld [vmem:[%s234 + $0xaa0] sm:$0xff]
        %v4097 = vld [vmem:[%s234 + $0xaa8] sm:$0xff]
        %v4098 = vld [vmem:[%s234 + $0xab0] sm:$0xff]
        %v4099 = vld [vmem:[%s234 + $0xc08] sm:$0xff]
        %v4100 = vld [vmem:[%s234 + $0xc10] sm:$0xff]
        %v4101 = vld [vmem:[%s234 + $0xc18] sm:$0xff]
        %v4102 = vld [vmem:[%s234 + $0xc20] sm:$0xff]
        %v4103 = vld [vmem:[%s234 + $0xc28] sm:$0xff]
        %v4104 = vld [vmem:[%s234 + $0xc30] sm:$0xff]
        %v4105 = vld [vmem:[%s234 + $0xc38] sm:$0xff]
        %v4162 = vunpack.c.l.b16 %v4050
        %v4163 = vunpack.c.h.b16 %v4050
        %v4164 = vunpack.c.l.b16 %v4051
        %v4165 = vunpack.c.h.b16 %v4051
        %v4166 = vunpack.c.l.b16 %v4052
        %v4167 = vunpack.c.h.b16 %v4052
        %v4168 = vunpack.c.l.b16 %v4053
        %v4169 = vunpack.c.h.b16 %v4053
        %v4170 = vunpack.c.l.b16 %v4054
        %v4171 = vunpack.c.h.b16 %v4054
        %v4172 = vunpack.c.l.b16 %v4055
        %v4173 = vunpack.c.h.b16 %v4055
        %v4174 = vunpack.c.l.b16 %v4056
        %v4175 = vunpack.c.h.b16 %v4056
        %v4176 = vunpack.c.l.b16 %v4057
        %v4177 = vunpack.c.h.b16 %v4057
        %v4178 = vunpack.c.l.b16 %v4058
        %v4179 = vunpack.c.h.b16 %v4058
        %v4180 = vunpack.c.l.b16 %v4059
        %v4181 = vunpack.c.h.b16 %v4059
        %v4182 = vunpack.c.l.b16 %v4060
        %v4183 = vunpack.c.h.b16 %v4060
        %v4184 = vunpack.c.l.b16 %v4061
        %v4185 = vunpack.c.h.b16 %v4061
        %v4186 = vunpack.c.l.b16 %v4062
        %v4187 = vunpack.c.h.b16 %v4062
        %v4188 = vunpack.c.l.b16 %v4063
        %v4189 = vunpack.c.h.b16 %v4063
        %v4190 = vunpack.c.l.b16 %v4064
        %v4191 = vunpack.c.h.b16 %v4064
        %v4192 = vunpack.c.l.b16 %v4065
        %v4193 = vunpack.c.h.b16 %v4065
        %v4194 = vunpack.c.l.b16 %v4066
        %v4195 = vunpack.c.h.b16 %v4066
        %v4196 = vunpack.c.l.b16 %v4067
        %v4197 = vunpack.c.h.b16 %v4067
        %v4198 = vunpack.c.l.b16 %v4068
        %v4199 = vunpack.c.h.b16 %v4068
        %v4200 = vunpack.c.l.b16 %v4069
        %v4201 = vunpack.c.h.b16 %v4069
        %v4202 = vunpack.c.l.b16 %v4070
        %v4203 = vunpack.c.h.b16 %v4070
        %v4204 = vunpack.c.l.b16 %v4071
        %v4205 = vunpack.c.h.b16 %v4071
        %v4206 = vunpack.c.l.b16 %v4072
        %v4207 = vunpack.c.h.b16 %v4072
        %v4208 = vunpack.c.l.b16 %v4073
        %v4209 = vunpack.c.h.b16 %v4073
        %v4210 = vunpack.c.l.b16 %v4074
        %v4211 = vunpack.c.h.b16 %v4074
        %v4212 = vunpack.c.l.b16 %v4075
        %v4213 = vunpack.c.h.b16 %v4075
        %v4214 = vunpack.c.l.b16 %v4076
        %v4215 = vunpack.c.h.b16 %v4076
        %v4216 = vunpack.c.l.b16 %v4077
        %v4217 = vunpack.c.h.b16 %v4077
        %v4218 = vunpack.c.l.b16 %v4078
        %v4219 = vunpack.c.h.b16 %v4078
        %v4220 = vunpack.c.l.b16 %v4079
        %v4221 = vunpack.c.h.b16 %v4079
        %v4222 = vunpack.c.l.b16 %v4080
        %v4223 = vunpack.c.h.b16 %v4080
        %v4224 = vunpack.c.l.b16 %v4081
        %v4225 = vunpack.c.h.b16 %v4081
        %v4226 = vunpack.c.l.b16 %v4082
        %v4227 = vunpack.c.h.b16 %v4082
        %v4228 = vunpack.c.l.b16 %v4083
        %v4229 = vunpack.c.h.b16 %v4083
        %v4230 = vunpack.c.l.b16 %v4084
        %v4231 = vunpack.c.h.b16 %v4084
        %v4232 = vunpack.c.l.b16 %v4085
        %v4233 = vunpack.c.h.b16 %v4085
        %v4234 = vunpack.c.l.b16 %v4086
        %v4235 = vunpack.c.h.b16 %v4086
        %v4236 = vunpack.c.l.b16 %v4087
        %v4237 = vunpack.c.h.b16 %v4087
        %v4238 = vunpack.c.l.b16 %v4088
        %v4239 = vunpack.c.h.b16 %v4088
        %v4240 = vunpack.c.l.b16 %v4089
        %v4241 = vunpack.c.h.b16 %v4089
        %v4242 = vunpack.c.l.b16 %v4090
        %v4243 = vunpack.c.h.b16 %v4090
        %v4244 = vunpack.c.l.b16 %v4091
        %v4245 = vunpack.c.h.b16 %v4091
        %v4246 = vunpack.c.l.b16 %v4092
        %v4247 = vunpack.c.h.b16 %v4092
        %v4248 = vunpack.c.l.b16 %v4093
        %v4249 = vunpack.c.h.b16 %v4093
        %v4250 = vunpack.c.l.b16 %v4094
        %v4251 = vunpack.c.h.b16 %v4094
        %v4252 = vunpack.c.l.b16 %v4095
        %v4253 = vunpack.c.h.b16 %v4095
        %v4254 = vunpack.c.l.b16 %v4096
        %v4255 = vunpack.c.h.b16 %v4096
        %v4256 = vunpack.c.l.b16 %v4097
        %v4257 = vunpack.c.h.b16 %v4097
        %v4258 = vunpack.c.l.b16 %v4098
        %v4259 = vunpack.c.h.b16 %v4098
        %v4260 = vunpack.c.l.b16 %v4099
        %v4261 = vunpack.c.h.b16 %v4099
        %v4262 = vunpack.c.l.b16 %v4100
        %v4263 = vunpack.c.h.b16 %v4100
        %v4264 = vunpack.c.l.b16 %v4101
        %v4265 = vunpack.c.h.b16 %v4101
        %v4266 = vunpack.c.l.b16 %v4102
        %v4267 = vunpack.c.h.b16 %v4102
        %v4268 = vunpack.c.l.b16 %v4103
        %v4269 = vunpack.c.h.b16 %v4103
        %v4270 = vunpack.c.l.b16 %v4104
        %v4271 = vunpack.c.h.b16 %v4104
        %v4272 = vunpack.c.l.b16 %v4105
        %v4273 = vunpack.c.h.b16 %v4105
        %v4274 = vpack.c.b16 %v4176, %v4162
        %v4275 = vpack.c.b16 %v4177, %v4163
        %v4276 = vpack.c.b16 %v4178, %v4164
        %v4277 = vpack.c.b16 %v4179, %v4165
        %v4278 = vpack.c.b16 %v4180, %v4166
        %v4279 = vpack.c.b16 %v4181, %v4167
        %v4280 = vpack.c.b16 %v4182, %v4168
        %v4281 = vpack.c.b16 %v4183, %v4169
        %v4282 = vpack.c.b16 %v4184, %v4170
        %v4283 = vpack.c.b16 %v4185, %v4171
        %v4284 = vpack.c.b16 %v4186, %v4172
        %v4285 = vpack.c.b16 %v4187, %v4173
        %v4286 = vpack.c.b16 %v4188, %v4174
        %v4287 = vpack.c.b16 %v4189, %v4175
        %v4288 = vpack.c.b16 %v4204, %v4190
        %v4289 = vpack.c.b16 %v4205, %v4191
        %v4290 = vpack.c.b16 %v4206, %v4192
        %v4291 = vpack.c.b16 %v4207, %v4193
        %v4292 = vpack.c.b16 %v4208, %v4194
        %v4293 = vpack.c.b16 %v4209, %v4195
        %v4294 = vpack.c.b16 %v4210, %v4196
        %v4295 = vpack.c.b16 %v4211, %v4197
        %v4296 = vpack.c.b16 %v4212, %v4198
        %v4297 = vpack.c.b16 %v4213, %v4199
        %v4298 = vpack.c.b16 %v4214, %v4200
        %v4299 = vpack.c.b16 %v4215, %v4201
        %v4300 = vpack.c.b16 %v4216, %v4202
        %v4301 = vpack.c.b16 %v4217, %v4203
        %v4302 = vpack.c.b16 %v4232, %v4218
        %v4303 = vpack.c.b16 %v4233, %v4219
        %v4304 = vpack.c.b16 %v4234, %v4220
        %v4305 = vpack.c.b16 %v4235, %v4221
        %v4306 = vpack.c.b16 %v4236, %v4222
        %v4307 = vpack.c.b16 %v4237, %v4223
        %v4308 = vpack.c.b16 %v4238, %v4224
        %v4309 = vpack.c.b16 %v4239, %v4225
        %v4310 = vpack.c.b16 %v4240, %v4226
        %v4311 = vpack.c.b16 %v4241, %v4227
        %v4312 = vpack.c.b16 %v4242, %v4228
        %v4313 = vpack.c.b16 %v4243, %v4229
        %v4314 = vpack.c.b16 %v4244, %v4230
        %v4315 = vpack.c.b16 %v4245, %v4231
        %v4316 = vpack.c.b16 %v4260, %v4246
        %v4317 = vpack.c.b16 %v4261, %v4247
        %v4318 = vpack.c.b16 %v4262, %v4248
        %v4319 = vpack.c.b16 %v4263, %v4249
        %v4320 = vpack.c.b16 %v4264, %v4250
        %v4321 = vpack.c.b16 %v4265, %v4251
        %v4322 = vpack.c.b16 %v4266, %v4252
        %v4323 = vpack.c.b16 %v4267, %v4253
        %v4324 = vpack.c.b16 %v4268, %v4254
        %v4325 = vpack.c.b16 %v4269, %v4255
        %v4326 = vpack.c.b16 %v4270, %v4256
        %v4327 = vpack.c.b16 %v4271, %v4257
        %v4328 = vpack.c.b16 %v4272, %v4258
        %v4329 = vpack.c.b16 %v4273, %v4259
        %4386 = vmatpush.bf16.msra.mxu0 0
        %4387 = vmatpush.bf16.msra.mxu0 0
        %4388 = vmatpush.bf16.msra.mxu0 0
        %4389 = vmatpush.bf16.msra.mxu0 0
        %4390 = vmatpush.bf16.msra.mxu0 %v4316
        %4391 = vmatpush.bf16.msra.mxu0 %v4302
        %4392 = vmatpush.bf16.msra.mxu0 %v4288
        %4393 = vmatpush.bf16.msra.mxu0 %v4274
        %4394 = vmatmul.bf16.gmra.mxu0 %v640
        %v4395 = vpop.f32.mrf.mxu0
        %v4396 = vadd.f32 0.0, %v4395
        %v4397 = vpop.f32.mrf.mxu0
        %4398 = vdwg.mxu0
        %4399 = vmatpush.bf16.msra.mxu0 0
        %4400 = vmatpush.bf16.msra.mxu0 0
        %4401 = vmatpush.bf16.msra.mxu0 0
        %4402 = vmatpush.bf16.msra.mxu0 0
        %4403 = vmatpush.bf16.msra.mxu0 %v4317
        %4404 = vmatpush.bf16.msra.mxu0 %v4303
        %4405 = vmatpush.bf16.msra.mxu0 %v4289
        %4406 = vmatpush.bf16.msra.mxu0 %v4275
        %4407 = vmatmul.bf16.gmra.mxu0 %v640
        %v4408 = vpop.f32.mrf.mxu0
        %v4409 = vadd.f32 0.0, %v4408
        %v4410 = vpop.f32.mrf.mxu0
        %4411 = vdwg.mxu0
        %4412 = vmatpush.bf16.msra.mxu0 0
        %4413 = vmatpush.bf16.msra.mxu0 0
        %4414 = vmatpush.bf16.msra.mxu0 0
        %4415 = vmatpush.bf16.msra.mxu0 0
        %4416 = vmatpush.bf16.msra.mxu0 %v4318
        %4417 = vmatpush.bf16.msra.mxu0 %v4304
        %4418 = vmatpush.bf16.msra.mxu0 %v4290
        %4419 = vmatpush.bf16.msra.mxu0 %v4276
        %4420 = vmatmul.bf16.gmra.mxu0 %v640
        %v4421 = vpop.f32.mrf.mxu0
        %v4422 = vadd.f32 0.0, %v4421
        %v4423 = vpop.f32.mrf.mxu0
        %4424 = vdwg.mxu0
        %4425 = vmatpush.bf16.msra.mxu0 0
        %4426 = vmatpush.bf16.msra.mxu0 0
        %4427 = vmatpush.bf16.msra.mxu0 0
        %4428 = vmatpush.bf16.msra.mxu0 0
        %4429 = vmatpush.bf16.msra.mxu0 %v4319
        %4430 = vmatpush.bf16.msra.mxu0 %v4305
        %4431 = vmatpush.bf16.msra.mxu0 %v4291
        %4432 = vmatpush.bf16.msra.mxu0 %v4277
        %4433 = vmatmul.bf16.gmra.mxu0 %v640
        %v4434 = vpop.f32.mrf.mxu0
        %v4435 = vadd.f32 0.0, %v4434
        %v4436 = vpop.f32.mrf.mxu0
        %4437 = vdwg.mxu0
        %4438 = vmatpush.bf16.msra.mxu0 0
        %4439 = vmatpush.bf16.msra.mxu0 0
        %4440 = vmatpush.bf16.msra.mxu0 0
        %4441 = vmatpush.bf16.msra.mxu0 0
        %4442 = vmatpush.bf16.msra.mxu0 %v4320
        %4443 = vmatpush.bf16.msra.mxu0 %v4306
        %4444 = vmatpush.bf16.msra.mxu0 %v4292
        %4445 = vmatpush.bf16.msra.mxu0 %v4278
        %4446 = vmatmul.bf16.gmra.mxu0 %v640
        %v4447 = vpop.f32.mrf.mxu0
        %v4448 = vadd.f32 0.0, %v4447
        %v4449 = vpop.f32.mrf.mxu0
        %4450 = vdwg.mxu0
        %4451 = vmatpush.bf16.msra.mxu0 0
        %4452 = vmatpush.bf16.msra.mxu0 0
        %4453 = vmatpush.bf16.msra.mxu0 0
        %4454 = vmatpush.bf16.msra.mxu0 0
        %4455 = vmatpush.bf16.msra.mxu0 %v4321
        %4456 = vmatpush.bf16.msra.mxu0 %v4307
        %4457 = vmatpush.bf16.msra.mxu0 %v4293
        %4458 = vmatpush.bf16.msra.mxu0 %v4279
        %4459 = vmatmul.bf16.gmra.mxu0 %v640
        %v4460 = vpop.f32.mrf.mxu0
        %v4461 = vadd.f32 0.0, %v4460
        %v4462 = vpop.f32.mrf.mxu0
        %4463 = vdwg.mxu0
        %4464 = vmatpush.bf16.msra.mxu0 0
        %4465 = vmatpush.bf16.msra.mxu0 0
        %4466 = vmatpush.bf16.msra.mxu0 0
        %4467 = vmatpush.bf16.msra.mxu0 0
        %4468 = vmatpush.bf16.msra.mxu0 %v4322
        %4469 = vmatpush.bf16.msra.mxu0 %v4308
        %4470 = vmatpush.bf16.msra.mxu0 %v4294
        %4471 = vmatpush.bf16.msra.mxu0 %v4280
        %4472 = vmatmul.bf16.gmra.mxu0 %v640
        %v4473 = vpop.f32.mrf.mxu0
        %v4474 = vadd.f32 0.0, %v4473
        %v4475 = vpop.f32.mrf.mxu0
        %4476 = vdwg.mxu0
        %4477 = vmatpush.bf16.msra.mxu0 0
        %4478 = vmatpush.bf16.msra.mxu0 0
        %4479 = vmatpush.bf16.msra.mxu0 0
        %4480 = vmatpush.bf16.msra.mxu0 0
        %4481 = vmatpush.bf16.msra.mxu0 %v4323
        %4482 = vmatpush.bf16.msra.mxu0 %v4309
        %4483 = vmatpush.bf16.msra.mxu0 %v4295
        %4484 = vmatpush.bf16.msra.mxu0 %v4281
        %4485 = vmatmul.bf16.gmra.mxu0 %v640
        %v4486 = vpop.f32.mrf.mxu0
        %v4487 = vadd.f32 0.0, %v4486
        %v4488 = vpop.f32.mrf.mxu0
        %4489 = vdwg.mxu0
        %4490 = vmatpush.bf16.msra.mxu0 0
        %4491 = vmatpush.bf16.msra.mxu0 0
        %4492 = vmatpush.bf16.msra.mxu0 0
        %4493 = vmatpush.bf16.msra.mxu0 0
        %4494 = vmatpush.bf16.msra.mxu0 %v4324
        %4495 = vmatpush.bf16.msra.mxu0 %v4310
        %4496 = vmatpush.bf16.msra.mxu0 %v4296
        %4497 = vmatpush.bf16.msra.mxu0 %v4282
        %4498 = vmatmul.bf16.gmra.mxu0 %v640
        %v4499 = vpop.f32.mrf.mxu0
        %v4500 = vadd.f32 0.0, %v4499
        %v4501 = vpop.f32.mrf.mxu0
        %4502 = vdwg.mxu0
        %4503 = vmatpush.bf16.msra.mxu0 0
        %4504 = vmatpush.bf16.msra.mxu0 0
        %4505 = vmatpush.bf16.msra.mxu0 0
        %4506 = vmatpush.bf16.msra.mxu0 0
        %4507 = vmatpush.bf16.msra.mxu0 %v4325
        %4508 = vmatpush.bf16.msra.mxu0 %v4311
        %4509 = vmatpush.bf16.msra.mxu0 %v4297
        %4510 = vmatpush.bf16.msra.mxu0 %v4283
        %4511 = vmatmul.bf16.gmra.mxu0 %v640
        %v4512 = vpop.f32.mrf.mxu0
        %v4513 = vadd.f32 0.0, %v4512
        %v4514 = vpop.f32.mrf.mxu0
        %4515 = vdwg.mxu0
        %4516 = vmatpush.bf16.msra.mxu0 0
        %4517 = vmatpush.bf16.msra.mxu0 0
        %4518 = vmatpush.bf16.msra.mxu0 0
        %4519 = vmatpush.bf16.msra.mxu0 0
        %4520 = vmatpush.bf16.msra.mxu0 %v4326
        %4521 = vmatpush.bf16.msra.mxu0 %v4312
        %4522 = vmatpush.bf16.msra.mxu0 %v4298
        %4523 = vmatpush.bf16.msra.mxu0 %v4284
        %4524 = vmatmul.bf16.gmra.mxu0 %v640
        %v4525 = vpop.f32.mrf.mxu0
        %v4526 = vadd.f32 0.0, %v4525
        %v4527 = vpop.f32.mrf.mxu0
        %4528 = vdwg.mxu0
        %4529 = vmatpush.bf16.msra.mxu0 0
        %4530 = vmatpush.bf16.msra.mxu0 0
        %4531 = vmatpush.bf16.msra.mxu0 0
        %4532 = vmatpush.bf16.msra.mxu0 0
        %4533 = vmatpush.bf16.msra.mxu0 %v4327
        %4534 = vmatpush.bf16.msra.mxu0 %v4313
        %4535 = vmatpush.bf16.msra.mxu0 %v4299
        %4536 = vmatpush.bf16.msra.mxu0 %v4285
        %4537 = vmatmul.bf16.gmra.mxu0 %v640
        %v4538 = vpop.f32.mrf.mxu0
        %v4539 = vadd.f32 0.0, %v4538
        %v4540 = vpop.f32.mrf.mxu0
        %4541 = vdwg.mxu0
        %4542 = vmatpush.bf16.msra.mxu0 0
        %4543 = vmatpush.bf16.msra.mxu0 0
        %4544 = vmatpush.bf16.msra.mxu0 0
        %4545 = vmatpush.bf16.msra.mxu0 0
        %4546 = vmatpush.bf16.msra.mxu0 %v4328
        %4547 = vmatpush.bf16.msra.mxu0 %v4314
        %4548 = vmatpush.bf16.msra.mxu0 %v4300
        %4549 = vmatpush.bf16.msra.mxu0 %v4286
        %4550 = vmatmul.bf16.gmra.mxu0 %v640
        %v4551 = vpop.f32.mrf.mxu0
        %v4552 = vadd.f32 0.0, %v4551
        %v4553 = vpop.f32.mrf.mxu0
        %4554 = vdwg.mxu0
        %4555 = vmatpush.bf16.msra.mxu0 0
        %4556 = vmatpush.bf16.msra.mxu0 0
        %4557 = vmatpush.bf16.msra.mxu0 0
        %4558 = vmatpush.bf16.msra.mxu0 0
        %4559 = vmatpush.bf16.msra.mxu0 %v4329
        %4560 = vmatpush.bf16.msra.mxu0 %v4315
        %4561 = vmatpush.bf16.msra.mxu0 %v4301
        %4562 = vmatpush.bf16.msra.mxu0 %v4287
        %4563 = vmatmul.bf16.gmra.mxu0 %v640
        %v4564 = vpop.f32.mrf.mxu0
        %v4565 = vadd.f32 0.0, %v4564
        %v4566 = vpop.f32.mrf.mxu0
        %4567 = vdwg.mxu0
        %v4568 = vld [vmem:[%s244 + $0x54] sm:$0xff]
        %v4569 = vld [vmem:[%s244 + $0x5c] sm:$0x3f]
        %v4572 = vperm.slane %v4568, 0
        %v4573 = vperm.slane %v4568, 1
        %v4574 = vperm.slane %v4568, 2
        %v4575 = vperm.slane %v4568, 3
        %v4576 = vperm.slane %v4568, 4
        %v4577 = vperm.slane %v4568, 5
        %v4578 = vperm.slane %v4568, 6
        %v4579 = vperm.slane %v4568, 7
        %v4580 = vperm.slane %v4569, 0
        %v4581 = vperm.slane %v4569, 1
        %v4582 = vperm.slane %v4569, 2
        %v4583 = vperm.slane %v4569, 3
        %v4584 = vperm.slane %v4569, 4
        %v4585 = vperm.slane %v4569, 5
        %v4600 = vmul.f32 %v4396, %v4572
        %v4601 = vmul.f32 %v4409, %v4573
        %v4602 = vmul.f32 %v4422, %v4574
        %v4603 = vmul.f32 %v4435, %v4575
        %v4604 = vmul.f32 %v4448, %v4576
        %v4605 = vmul.f32 %v4461, %v4577
        %v4606 = vmul.f32 %v4474, %v4578
        %v4607 = vmul.f32 %v4487, %v4579
        %v4608 = vmul.f32 %v4500, %v4580
        %v4609 = vmul.f32 %v4513, %v4581
        %v4610 = vmul.f32 %v4526, %v4582
        %v4611 = vmul.f32 %v4539, %v4583
        %v4612 = vmul.f32 %v4552, %v4584
        %v4613 = vmul.f32 %v4565, %v4585
        %v4614 = vld [vmem:[%s254 + $0x54] sm:$0xff]
        %v4615 = vld [vmem:[%s254 + $0x5c] sm:$0x3f]
        %v4618 = vperm.slane %v4614, 0
        %v4619 = vperm.slane %v4614, 1
        %v4620 = vperm.slane %v4614, 2
        %v4621 = vperm.slane %v4614, 3
        %v4622 = vperm.slane %v4614, 4
        %v4623 = vperm.slane %v4614, 5
        %v4624 = vperm.slane %v4614, 6
        %v4625 = vperm.slane %v4614, 7
        %v4626 = vperm.slane %v4615, 0
        %v4627 = vperm.slane %v4615, 1
        %v4628 = vperm.slane %v4615, 2
        %v4629 = vperm.slane %v4615, 3
        %v4630 = vperm.slane %v4615, 4
        %v4631 = vperm.slane %v4615, 5
        %v4646 = vadd.f32 %v4600, %v4618
        %v4647 = vadd.f32 %v4601, %v4619
        %v4648 = vadd.f32 %v4602, %v4620
        %v4649 = vadd.f32 %v4603, %v4621
        %v4650 = vadd.f32 %v4604, %v4622
        %v4651 = vadd.f32 %v4605, %v4623
        %v4652 = vadd.f32 %v4606, %v4624
        %v4653 = vadd.f32 %v4607, %v4625
        %v4654 = vadd.f32 %v4608, %v4626
        %v4655 = vadd.f32 %v4609, %v4627
        %v4656 = vadd.f32 %v4610, %v4628
        %v4657 = vadd.f32 %v4611, %v4629
        %v4658 = vadd.f32 %v4612, %v4630
        %v4659 = vadd.f32 %v4613, %v4631
        %4660 = vst [vmem:[%s297 + $0x2a0] sm:$0xff] %v4646
        %4661 = vst [vmem:[%s297 + $0x2a8] sm:$0xff] %v4647
        %4662 = vst [vmem:[%s297 + $0x2b0] sm:$0xff] %v4648
        %4663 = vst [vmem:[%s297 + $0x2b8] sm:$0xff] %v4649
        %4664 = vst [vmem:[%s297 + $0x2c0] sm:$0xff] %v4650
        %4665 = vst [vmem:[%s297 + $0x2c8] sm:$0xff] %v4651
        %4666 = vst [vmem:[%s297 + $0x2d0] sm:$0xff] %v4652
        %4667 = vst [vmem:[%s297 + $0x2d8] sm:$0xff] %v4653
        %4668 = vst [vmem:[%s297 + $0x2e0] sm:$0xff] %v4654
        %4669 = vst [vmem:[%s297 + $0x2e8] sm:$0xff] %v4655
        %4670 = vst [vmem:[%s297 + $0x2f0] sm:$0xff] %v4656
        %4671 = vst [vmem:[%s297 + $0x2f8] sm:$0xff] %v4657
        %4672 = vst [vmem:[%s297 + $0x300] sm:$0xff] %v4658
        %4673 = vst [vmem:[%s297 + $0x308] sm:$0xff] %v4659
        %s4674 = smul.u32 98, %s21
        %p4675 = scmp.lt.s32.totalorder %s4674, 391
        %s4676 = scalar_select %p4675, %s4674, 391
        %s4677 = smul.addr %s4676, 8
        %s4678 = scalar_lea.vmem %s4, %s4677
        // Predicated region
        $region49: #{classifier_forward.9} parent=35 // pred_check
          %p4679 = pneg %p138
        $region50: #{classifier_forward.9} parent=35 // pred_check_branch
          %4681 = sbr.rel (%p4679) target = $region52
        $region51: #{classifier_forward.9} parent=35 // pred_region
          %s4682 = smul.u32 98, %s21
        $region52: #{classifier_forward.9} parent=35 // pred_fallthru
          _
      $region36: #{classifier_forward.9} parent=5 // pred_fallthru
        _
      %p4683 = scmp.le.s32.totalorder 2, %s16
      // Predicated region
      $region53: #{classifier_forward.9} parent=5 // pred_check
        %p4684 = pneg %p4683
      $region54: #{classifier_forward.9} parent=5 // pred_check_branch
        %4686 = sbr.rel (%p4684) target = $region56
      $region55: #{classifier_forward.9} parent=5 // pred_region
        %s4687 = ssub.s32 %s16, 2
        // Predicated region
        $region57: #{classifier_forward.9} parent=55 // pred_check
          %p4688 = pneg %p144
        $region58: #{classifier_forward.9} parent=55 // pred_check_branch
          %4690 = sbr.rel (%p4688) target = $region60
        $region59: #{classifier_forward.9} parent=55 // pred_region
          %s4691 = smul.u32 98, %s22
          %p4692 = scmp.lt.s32.totalorder %s4691, 391
          %s4693 = scalar_select %p4692, %s4691, 391
          %s4694 = smul.addr %s4693, 8
          %s4695 = scalar_lea.vmem %s4, %s4694
        $region60: #{classifier_forward.9} parent=55 // pred_fallthru
          _
      $region56: #{classifier_forward.9} parent=5 // pred_fallthru
        _
    $region6: #{classifier_forward.9} parent=1 // loop_footer
      %s20 = sadd.s32 1, %s16
    $region7: #{classifier_forward.9} parent=1 // loop_footer_branch
      %15 = sbr.rel target = $region3
    $region8: #{classifier_forward.9} parent=1 // loop_exit
      _
    %4696 = vsyncpa [#allocation3], 1
    %s4697 = scalar_lea.sflag [#allocation3], 1
    %4698 = vsyncpa %s4697, 1
    %4699 = vsyncpa [#allocation5], 1
    %s4700 = scalar_lea.sflag [#allocation5], 1
    %4701 = vsyncpa %s4700, 1

</llo_original>
